<compile_context>
chip_gen: v5e
topology: v5e:2x2
jax: 0.10.0
libtpu: 0.0.40
codegen_flags: <defaults>
</compile_context>

<pallas_src>
import functools
import math

import jax
import jax.numpy as jnp
from jax.experimental import pallas as pl
from jax.experimental.pallas import tpu as pltpu


OUT_FEATURES = 1000      # true nn.Linear(4096, 1000) output width
OUT_PADDED = 1024        # lane-dense padded width used inside the kernel


def _linear_kernel(x_ref, w_ref, b_ref, o_ref, acc_ref, *, apply_relu):
    """One (B, tn) output tile; grid axis 1 reduces over K (accumulator in fp32)."""
    k = pl.program_id(1)

    @pl.when(k == 0)
    def _():
        acc_ref[...] = jnp.zeros_like(acc_ref)

    acc_ref[...] += jnp.dot(
        x_ref[...], w_ref[...], preferred_element_type=jnp.float32
    )

    @pl.when(k == pl.num_programs(1) - 1)
    def _():
        out = acc_ref[...] + b_ref[...]          # fp32 bias add
        if apply_relu:
            out = jnp.maximum(out, 0.0)          # fp32 ReLU
        o_ref[...] = out.astype(o_ref.dtype)


def linear_pallas(x, w, b, *, apply_relu, tn, tk, out_dtype):
    """y = relu?(x @ w + b) via a tiled Pallas matmul.

    x: (B, K) bf16   w: (K, N) bf16   b: (N,) fp32   ->  (B, N) out_dtype
    """
    B, K = x.shape
    K2, N = w.shape
    assert K == K2
    assert K % tk == 0, (K, tk)
    assert N % tn == 0, (N, tn)
    b2d = b.reshape(1, N).astype(jnp.float32)

    kernel = functools.partial(_linear_kernel, apply_relu=apply_relu)
    return pl.pallas_call(
        kernel,
        out_shape=jax.ShapeDtypeStruct((B, N), out_dtype),
        grid_spec=pltpu.PrefetchScalarGridSpec(
            num_scalar_prefetch=0,
            grid=(N // tn, K // tk),
            in_specs=[
                # x K-chunk: tiny at B=2 (a few KB per step), weight stream dominates.
                pl.BlockSpec((B, tk), lambda j, k: (0, k)),
                # weight tile: the hot HBM stream (bf16, 2-7.5 MB per DMA).
                pl.BlockSpec((tk, tn), lambda j, k: (k, j)),
                # bias tile (fp32).
                pl.BlockSpec((1, tn), lambda j, k: (0, j)),
            ],
            out_specs=pl.BlockSpec((B, tn), lambda j, k: (0, j)),
            scratch_shapes=[pltpu.VMEM((B, tn), jnp.float32)],
        ),
        compiler_params=pltpu.CompilerParams(
            dimension_semantics=("parallel", "arbitrary"),
            vmem_limit_bytes=32 * 1024 * 1024,
        ),
    )(x, w, b2d)


def init_vgg_classifier_params(key, weight_dtype=jnp.bfloat16):
    """Synthetic params matching nn.Linear shapes in __init__.

    Weights are stored bf16 (memory-bandwidth optimization), biases fp32.
    The last layer is zero-padded from 1000 to 1024 output columns so the
    kernel sees lane-dense tiles; the forward pass slices back to 1000.
    """
    dims = [(512 * 7 * 7, 4096), (4096, 4096), (4096, OUT_FEATURES)]
    params = []
    for fan_in, fan_out in dims:
        kw, kb, key = jax.random.split(key, 3)
        std = 1.0 / math.sqrt(fan_in)
        w = jax.random.normal(kw, (fan_in, fan_out), jnp.float32) * std
        bias = jax.random.normal(kb, (fan_out,), jnp.float32) * std
        if fan_out == OUT_FEATURES:
            pad = OUT_PADDED - OUT_FEATURES
            w = jnp.pad(w, ((0, 0), (0, pad)))
            bias = jnp.pad(bias, (0, pad))
        params.append((w.astype(weight_dtype), bias.astype(jnp.float32)))
    return params


def vgg_forward(x_nchw, params, end_mode=0):
    """Pallas implementation of VGG.forward for the end_mode==0 path."""
    if end_mode in (1, 2):
        # TODO(synk): oralign1d/oralign2d and the conv feature stack are
        # undefined external symbols in the reference source.
        raise NotImplementedError("end_mode 1/2 require ORConv2d/oralign*")
    B = x_nchw.shape[0]
    x = x_nchw.reshape(B, -1).astype(jnp.bfloat16)   # == torch x.view(B, -1)
    (w0, b0), (w1, b1), (w2, b2) = params
    # Linear(25088, 4096) + ReLU   (Dropout == identity at inference)
    x = linear_pallas(x, w0, b0, apply_relu=True, tn=1024, tk=3584,
                      out_dtype=jnp.bfloat16)
    # Linear(4096, 4096) + ReLU
    x = linear_pallas(x, w1, b1, apply_relu=True, tn=1024, tk=2048,
                      out_dtype=jnp.bfloat16)
    # Linear(4096, 1000)  (computed padded to 1024, then sliced — exact)
    y = linear_pallas(x, w2, b2, apply_relu=False, tn=512, tk=2048,
                      out_dtype=jnp.float32)
    return y[:, :OUT_FEATURES]


def _reference_forward(x_nchw, params):
    """Pure-JAX reference with identical bf16 weights / fp32 accumulation."""
    x = x_nchw.reshape(x_nchw.shape[0], -1).astype(jnp.bfloat16)
    (w0, b0), (w1, b1), (w2, b2) = params
    h = jnp.dot(x, w0, preferred_element_type=jnp.float32) + b0
    h = jnp.maximum(h, 0.0).astype(jnp.bfloat16)
    h = jnp.dot(h, w1, preferred_element_type=jnp.float32) + b1
    h = jnp.maximum(h, 0.0).astype(jnp.bfloat16)
    y = jnp.dot(h, w2, preferred_element_type=jnp.float32) + b2
    return y[:, :OUT_FEATURES]


if __name__ == "__main__":
    key = jax.random.PRNGKey(0)
    kx, kp = jax.random.split(key)
    # Smallest input consistent with the hard-coded classifier: (B, 512, 7, 7)
    x = jax.random.normal(kx, (2, 512, 7, 7), jnp.float32)
    params = init_vgg_classifier_params(kp)

    out = jax.block_until_ready(vgg_forward(x, params, end_mode=0))
    assert out.shape == (2, 1000), out.shape

    ref = jax.block_until_ready(_reference_forward(x, params))
    max_err = float(jnp.max(jnp.abs(out - ref)))
    assert jnp.allclose(out, ref, rtol=1e-2, atol=1e-2), max_err
    print("KERNEL_OK")
</pallas_src>

<mosaic_0001>
module attributes {stable_mosaic.version = 11 : i64} {
  func.func @_linear_kernel(%arg0: i32, %arg1: i32, %arg2: memref<2x3584xbf16, #tpu.memory_space<vmem>>, %arg3: memref<3584x1024xbf16, #tpu.memory_space<vmem>>, %arg4: memref<1x1024xf32, #tpu.memory_space<vmem>>, %arg5: memref<2x1024xbf16, #tpu.memory_space<vmem>>, %arg6: memref<2x1024xf32, #tpu.memory_space<vmem>>) attributes {dimension_semantics = [#tpu.dimension_semantics<parallel>, #tpu.dimension_semantics<arbitrary>], iteration_bounds = array<i64: 4, 7>, scalar_prefetch = 0 : i64, scratch_operands = 1 : i64, tpu.core_type = #tpu.core_type<tc>, window_params = [{transform_indices = @transform_0, window_bounds = array<i64: 2, 3584>}, {transform_indices = @transform_1, window_bounds = array<i64: 3584, 1024>}, {transform_indices = @transform_2, window_bounds = array<i64: 1, 1024>}, {transform_indices = @transform_3, window_bounds = array<i64: 2, 1024>}]} {
    %c0_i32 = arith.constant 0 : i32
    %0 = arith.cmpi eq, %arg1, %c0_i32 : i32
    %1 = arith.extui %0 : i1 to i32
    %c0_i32_0 = arith.constant 0 : i32
    %2 = arith.cmpi ne, %1, %c0_i32_0 : i32
    scf.if %2 {
      %cst_9 = arith.constant 0.000000e+00 : f32
      %12 = vector.broadcast %cst_9 : f32 to vector<2x1024xf32>
      %c0_10 = arith.constant 0 : index
      %c0_11 = arith.constant 0 : index
      %13 = vector.load %arg6[%c0_10, %c0_11] : memref<2x1024xf32, #tpu.memory_space<vmem>>, vector<2x1024xf32>
      tpu.vector_store %arg6[%c0_10, %c0_11], %12 {strides = array<i32>} : memref<2x1024xf32, #tpu.memory_space<vmem>>, vector<2x1024xf32>,
    } else {
    }
    %c0 = arith.constant 0 : index
    %c0_1 = arith.constant 0 : index
    %3 = vector.load %arg6[%c0, %c0_1] : memref<2x1024xf32, #tpu.memory_space<vmem>>, vector<2x1024xf32>
    %c0_2 = arith.constant 0 : index
    %c0_3 = arith.constant 0 : index
    %4 = vector.load %arg2[%c0_2, %c0_3] : memref<2x3584xbf16, #tpu.memory_space<vmem>>, vector<2x3584xbf16>
    %c0_4 = arith.constant 0 : index
    %c0_5 = arith.constant 0 : index
    %5 = vector.load %arg3[%c0_4, %c0_5] : memref<3584x1024xbf16, #tpu.memory_space<vmem>>, vector<3584x1024xbf16>
    %cst = arith.constant dense<0.000000e+00> : vector<2x1024xf32>
    %6 = tpu.matmul %4, %5, %cst {dimension_numbers = #tpu.dot_dimension_numbers<[1], [0], [0], [1], [0, 0, 1, 1], [], []>} : vector<2x3584xbf16>, vector<3584x1024xbf16>, vector<2x1024xf32> -> vector<2x1024xf32>
    %7 = arith.addf %3, %6 : vector<2x1024xf32>
    %c0_6 = arith.constant 0 : index
    %c0_7 = arith.constant 0 : index
    %8 = vector.load %arg6[%c0_6, %c0_7] : memref<2x1024xf32, #tpu.memory_space<vmem>>, vector<2x1024xf32>
    tpu.vector_store %arg6[%c0_6, %c0_7], %7 {strides = array<i32>} : memref<2x1024xf32, #tpu.memory_space<vmem>>, vector<2x1024xf32>,
    %c6_i32 = arith.constant 6 : i32
    %9 = arith.cmpi eq, %arg1, %c6_i32 : i32
    %10 = arith.extui %9 : i1 to i32
    %c0_i32_8 = arith.constant 0 : i32
    %11 = arith.cmpi ne, %10, %c0_i32_8 : i32
    scf.if %11 {
      %c0_9 = arith.constant 0 : index
      %c0_10 = arith.constant 0 : index
      %12 = vector.load %arg6[%c0_9, %c0_10] : memref<2x1024xf32, #tpu.memory_space<vmem>>, vector<2x1024xf32>
      %c0_11 = arith.constant 0 : index
      %c0_12 = arith.constant 0 : index
      %13 = vector.load %arg4[%c0_11, %c0_12] : memref<1x1024xf32, #tpu.memory_space<vmem>>, vector<1x1024xf32>
      %14 = vector.broadcast %13 : vector<1x1024xf32> to vector<2x1024xf32>
      %15 = arith.addf %12, %14 : vector<2x1024xf32>
      %cst_13 = arith.constant 0.000000e+00 : f32
      %16 = vector.broadcast %cst_13 : f32 to vector<2x1024xf32>
      %17 = arith.maximumf %15, %16 : vector<2x1024xf32>
      %18 = arith.truncf %17 : vector<2x1024xf32> to vector<2x1024xbf16>
      %c0_14 = arith.constant 0 : index
      %c0_15 = arith.constant 0 : index
      %19 = vector.load %arg5[%c0_14, %c0_15] : memref<2x1024xbf16, #tpu.memory_space<vmem>>, vector<2x1024xbf16>
      tpu.vector_store %arg5[%c0_14, %c0_15], %18 {strides = array<i32>} : memref<2x1024xbf16, #tpu.memory_space<vmem>>, vector<2x1024xbf16>,
    } else {
    }
    return
  }
  func.func @transform_0(%arg0: i32, %arg1: i32) -> (i32, i32) {
    %c0_i32 = arith.constant 0 : i32
    %c0_i32_0 = arith.constant 0 : i32
    return %c0_i32, %arg1 : i32, i32
  }
  func.func @transform_1(%arg0: i32, %arg1: i32) -> (i32, i32) {
    %c0_i32 = arith.constant 0 : i32
    return %arg1, %arg0 : i32, i32
  }
  func.func @transform_2(%arg0: i32, %arg1: i32) -> (i32, i32) {
    %c0_i32 = arith.constant 0 : i32
    %c0_i32_0 = arith.constant 0 : i32
    return %c0_i32, %arg0 : i32, i32
  }
  func.func @transform_3(%arg0: i32, %arg1: i32) -> (i32, i32) {
    %c0_i32 = arith.constant 0 : i32
    %c0_i32_0 = arith.constant 0 : i32
    return %c0_i32, %arg0 : i32, i32
  }
}

</mosaic_0001>

<llo_original>
// kernel: tpu_custom_call.1
$region0: #{tpu_custom_call.1}
  #allocation0 [shape = 'u32[]', space=smem, size = 0x4, offset = 0x4, fixed_abs, tag = 'smem constant byte address 0x4 - core index']
  #allocation1 [shape = 'u32[72,128]{1,0:T(1,128)}', space=vmem, size = 0x9000, scoped, tag = 'internal scratch']
  #allocation2 [shape = 'f32[2,1024]{1,0:T(2,128)}', space=vmem, size = 0x2000, scoped, tag = 'scratch operand']
  %s0 = inlined_call_operand.hbm [shape: bf16[2,25088], index: 0, kind: input, shape index: {}]
  %s1 = inlined_call_operand.hbm [shape: bf16[25088,4096], index: 1, kind: input, shape index: {}]
  %s2 = inlined_call_operand.hbm [shape: f32[1,4096], index: 2, kind: input, shape index: {}]
  %s3 = inlined_call_operand.hbm [shape: bf16[2,4096], index: 3, kind: output, shape index: {}]
  %s4 = sld [smem:[#allocation0]]
  $region65: #{tpu_custom_call.1} parent=0
    _
  %s6 = ssub.s32 1, %s4
  %s7 = scalar_select 0, %s6, %s4
  $region1: #{tpu_custom_call.1} parent=0
    #allocation3 [shape = 'u8[28672]{0}', space=vmem, size = 0x7000, scoped, tag = 'input window, operand 0']
    #allocation4 [shape = 's32[2]{0}', space=sflag, size = 0x8, scoped, tag = 'scoped memory for tpu_custom_call.1']
    #allocation5 [shape = 's32[2]{0}', space=sflag, size = 0x8, scoped, tag = 'scoped memory for tpu_custom_call.1']
    #allocation6 [shape = 'u8[14680064]{0}', space=vmem, size = 0xe00000, scoped, tag = 'input window, operand 1']
    #allocation7 [shape = 's32[2]{0}', space=sflag, size = 0x8, scoped, tag = 'scoped memory for tpu_custom_call.1']
    #allocation8 [shape = 'u8[8192]{0}', space=vmem, size = 0x2000, scoped, tag = 'input window, operand 2']
    #allocation9 [shape = 'u8[8192]{0}', space=vmem, size = 0x2000, scoped, tag = 'output window, operand 0']
    %8 = vsyncpa [#allocation4], 0
    %s9 = scalar_lea.sflag [#allocation4], 1
    %10 = vsyncpa %s9, 0
    %11 = vsyncpa [#allocation7], 0
    %s12 = scalar_lea.sflag [#allocation7], 1
    %13 = vsyncpa %s12, 0
    %14 = vsyncpa [#allocation5], 0
    %s15 = scalar_lea.sflag [#allocation5], 1
    %16 = vsyncpa %s15, 0
    loop: start=0, step=1, limit=30
    $region2: #{tpu_custom_call.1} parent=1 // loop_pre_header
      _
    $region3: #{tpu_custom_call.1} parent=1 // loop_header
      %s18 = sphi 0, %s22
      %p19 = scmp.ge.s32.totalorder %s18, 30
      %s25 = sphi 0, %s37
      %s26 = sphi 0, %s33
      %s27 = sphi 0, %s25
      %s28 = sphi 0, %s26
      %s29 = sphi 0, %s27
      %s30 = sphi 0, %s28
      %s40 = sphi 0, %s42
      %s43 = sphi 0, %s40
      %s44 = sphi 0, %s43
      %s60 = sphi 0, %s44
      %s68 = sphi 0, %s70
      %s71 = sphi 0, %s68
      %s72 = sphi 0, %s71
      %s88 = sphi 0, %s72
      %s94 = sphi 0, %s96
      %s97 = sphi 0, %s94
      %s98 = sphi 0, %s97
      %s114 = sphi 0, %s98
      %s120 = sphi 0, %s122
      %s123 = sphi 0, %s120
      %s124 = sphi 0, %s123
      %s140 = sphi 0, %s124
    $region4: #{tpu_custom_call.1} parent=1 // loop_header_branch
      %21 = sbr.rel (%p19) target = $region8
    $region5: #{tpu_custom_call.1} parent=1 // loop_body
      %s23 = ssub.s32 %s18, 1
      %s24 = ssub.s32 %s18, 2
      %s31 = sadd.s32 1, %s26
      %p32 = scmp.ge.s32.totalorder %s31, 7
      %s33 = scalar_select %p32, 0, %s31
      %s34 = sadd.s32 1, %s25
      %s35 = scalar_select %p32, %s34, %s25
      %p36 = scmp.ge.s32.totalorder %s35, 4
      %s37 = scalar_select %p36, 0, %s35
      %s38 = ssub.s32 %s26, %s33
      %p39 = scmp.eq.s32.totalorder %s38, 0
      %s41 = sadd.s32 %s40, 1
      %s42 = scalar_select %p39, %s40, %s41
      %p45 = pneg %p39
      %p46 = scmp.eq.s32.totalorder %s18, 27
      %p47 = por %p45, %p46
      %p48 = scmp.ne.s32.totalorder %s40, %s43
      %p49 = scmp.eq.s32.totalorder %s18, 0
      %p50 = por %p48, %p49
      %p51 = scmp.ne.s32.totalorder %s40, %s43
      %p52 = scmp.eq.s32.totalorder %s23, 27
      %p53 = por %p51, %p52
      %p54 = scmp.ne.s32.totalorder %s43, %s44
      %p55 = scmp.eq.s32.totalorder %s23, 0
      %p56 = por %p54, %p55
      %p57 = scmp.ne.s32.totalorder %s43, %s44
      %p58 = scmp.eq.s32.totalorder %s24, 27
      %p59 = por %p57, %p58
      %p61 = scmp.ne.s32.totalorder %s44, %s60
      %p62 = scmp.eq.s32.totalorder %s24, 0
      %p63 = por %p61, %p62
      %s64 = ssub.s32 %s26, %s33
      %s65 = ssub.s32 %s25, %s37
      %s66 = sor.u32 %s64, %s65
      %p67 = scmp.eq.s32.totalorder %s66, 0
      %s69 = sadd.s32 %s68, 1
      %s70 = scalar_select %p67, %s68, %s69
      %p73 = pneg %p67
      %p74 = scmp.eq.s32.totalorder %s18, 27
      %p75 = por %p73, %p74
      %p76 = scmp.ne.s32.totalorder %s68, %s71
      %p77 = scmp.eq.s32.totalorder %s18, 0
      %p78 = por %p76, %p77
      %p79 = scmp.ne.s32.totalorder %s68, %s71
      %p80 = scmp.eq.s32.totalorder %s23, 27
      %p81 = por %p79, %p80
      %p82 = scmp.ne.s32.totalorder %s71, %s72
      %p83 = scmp.eq.s32.totalorder %s23, 0
      %p84 = por %p82, %p83
      %p85 = scmp.ne.s32.totalorder %s71, %s72
      %p86 = scmp.eq.s32.totalorder %s24, 27
      %p87 = por %p85, %p86
      %p89 = scmp.ne.s32.totalorder %s72, %s88
      %p90 = scmp.eq.s32.totalorder %s24, 0
      %p91 = por %p89, %p90
      %s92 = ssub.s32 %s25, %s37
      %p93 = scmp.eq.s32.totalorder %s92, 0
      %s95 = sadd.s32 %s94, 1
      %s96 = scalar_select %p93, %s94, %s95
      %p99 = pneg %p93
      %p100 = scmp.eq.s32.totalorder %s18, 27
      %p101 = por %p99, %p100
      %p102 = scmp.ne.s32.totalorder %s94, %s97
      %p103 = scmp.eq.s32.totalorder %s18, 0
      %p104 = por %p102, %p103
      %p105 = scmp.ne.s32.totalorder %s94, %s97
      %p106 = scmp.eq.s32.totalorder %s23, 27
      %p107 = por %p105, %p106
      %p108 = scmp.ne.s32.totalorder %s97, %s98
      %p109 = scmp.eq.s32.totalorder %s23, 0
      %p110 = por %p108, %p109
      %p111 = scmp.ne.s32.totalorder %s97, %s98
      %p112 = scmp.eq.s32.totalorder %s24, 27
      %p113 = por %p111, %p112
      %p115 = scmp.ne.s32.totalorder %s98, %s114
      %p116 = scmp.eq.s32.totalorder %s24, 0
      %p117 = por %p115, %p116
      %s118 = ssub.s32 %s25, %s37
      %p119 = scmp.eq.s32.totalorder %s118, 0
      %s121 = sadd.s32 %s120, 1
      %s122 = scalar_select %p119, %s120, %s121
      %p125 = pneg %p119
      %p126 = scmp.eq.s32.totalorder %s18, 27
      %p127 = por %p125, %p126
      %p128 = scmp.ne.s32.totalorder %s120, %s123
      %p129 = scmp.eq.s32.totalorder %s18, 0
      %p130 = por %p128, %p129
      %p131 = scmp.ne.s32.totalorder %s120, %s123
      %p132 = scmp.eq.s32.totalorder %s23, 27
      %p133 = por %p131, %p132
      %p134 = scmp.ne.s32.totalorder %s123, %s124
      %p135 = scmp.eq.s32.totalorder %s23, 0
      %p136 = por %p134, %p135
      %p137 = scmp.ne.s32.totalorder %s123, %s124
      %p138 = scmp.eq.s32.totalorder %s24, 27
      %p139 = por %p137, %p138
      %p141 = scmp.ne.s32.totalorder %s124, %s140
      %p142 = scmp.eq.s32.totalorder %s24, 0
      %p143 = por %p141, %p142
      %p144 = scmp.le.s32.totalorder 1, %s18
      %p145 = scmp.lt.s32.totalorder %s18, 29
      %p146 = pnand %p144, %p145
      %p147 = pneg %p146
      // Predicated region
      $region9: #{tpu_custom_call.1} parent=5 // pred_check
        _
      $region10: #{tpu_custom_call.1} parent=5 // pred_check_branch
        %149 = sbr.rel (%p146) target = $region12
      $region11: #{tpu_custom_call.1} parent=5 // pred_region
        %s150 = ssub.s32 %s18, 1
      $region12: #{tpu_custom_call.1} parent=5 // pred_fallthru
        _
      %p151 = scmp.lt.s32.totalorder %s18, 28
      // Predicated region
      $region13: #{tpu_custom_call.1} parent=5 // pred_check
        %p152 = pneg %p151
      $region14: #{tpu_custom_call.1} parent=5 // pred_check_branch
        %154 = sbr.rel (%p152) target = $region16
      $region15: #{tpu_custom_call.1} parent=5 // pred_region
        // Predicated region
        $region17: #{tpu_custom_call.1} parent=15 // pred_check
          %p155 = pneg %p50
        $region18: #{tpu_custom_call.1} parent=15 // pred_check_branch
          %157 = sbr.rel (%p155) target = $region20
        $region19: #{tpu_custom_call.1} parent=15 // pred_region
          %s158 = sand.u32 %s40, 1
          %s159 = scalar_lea.sflag [#allocation4], %s158
          %s160 = sand.u32 %s40, 1
          %s161 = smul.addr %s160, 28
          %s162 = scalar_lea.vmem [#allocation3], %s161
          %s163 = smul.u32 28, %s26
          %165 = vsyncadd %s159, 0
          %s166 = scalar_lea.hbm %s0, %s163
          %s168 = sshll.u32 %s166, 4
          %s169 = int_to_ptr.hbm [resolvable:$true] %s168
          %s170 = sshll.u32 %s162, 4
          %s171 = int_to_ptr.vmem [resolvable:$true] %s170
          %173 = dma.hbm_to_vmem [thread:$0]  %s169, 448, %s171, %s159
        $region20: #{tpu_custom_call.1} parent=15 // pred_fallthru
          _
        // Predicated region
        $region21: #{tpu_custom_call.1} parent=15 // pred_check
          %p174 = pneg %p78
        $region22: #{tpu_custom_call.1} parent=15 // pred_check_branch
          %176 = sbr.rel (%p174) target = $region24
        $region23: #{tpu_custom_call.1} parent=15 // pred_region
          %s177 = sand.u32 %s18, 1
          %s178 = scalar_lea.sflag [#allocation7], %s177
          %s179 = sand.u32 %s68, 1
          %s180 = smul.addr %s179, 14336
          %s181 = scalar_lea.vmem [#allocation6], %s180
          %s182 = smul.u32 448, %s26
          %s183 = smul.u32 8, %s25
          %185 = vsyncadd %s178, 0
          %s186 = smul.addr %s182, 32
          %s187 = sadd.s32 %s183, %s186
          %s188 = smul.addr %s187, 4
          %s189 = scalar_lea.hbm %s1, %s188
          %s190 = sshll.u32 %s189, 4
          %s191 = int_to_ptr.hbm [resolvable:$true] %s190
          %s192 = sshll.u32 %s181, 4
          %s193 = int_to_ptr.vmem [resolvable:$true] %s192
          %198 = dma.hbm_to_vmem [thread:$0]  %s191, 229376, %s193, %s178, 2048, 512, 32
        $region24: #{tpu_custom_call.1} parent=15 // pred_fallthru
          _
        // Predicated region
        $region25: #{tpu_custom_call.1} parent=15 // pred_check
          %p199 = pneg %p104
        $region26: #{tpu_custom_call.1} parent=15 // pred_check_branch
          %201 = sbr.rel (%p199) target = $region28
        $region27: #{tpu_custom_call.1} parent=15 // pred_region
          %s202 = sand.u32 %s18, 1
          %s203 = scalar_lea.sflag [#allocation7], %s202
          %s204 = sand.u32 %s94, 1
          %s205 = smul.addr %s204, 8
          %s206 = scalar_lea.vmem [#allocation8], %s205
          %s207 = smul.u32 8, %s25
          %209 = vsyncadd %s203, 0
          %s210 = scalar_lea.hbm %s2, %s207
          %s212 = sshll.u32 %s210, 4
          %s213 = int_to_ptr.hbm [resolvable:$true] %s212
          %s214 = sshll.u32 %s206, 4
          %s215 = int_to_ptr.vmem [resolvable:$true] %s214
          %217 = dma.hbm_to_vmem [thread:$0]  %s213, 128, %s215, %s203
        $region28: #{tpu_custom_call.1} parent=15 // pred_fallthru
          _
      $region16: #{tpu_custom_call.1} parent=5 // pred_fallthru
        _
      %p218 = scmp.le.s32.totalorder 1, %s18
      %p219 = scmp.lt.s32.totalorder %s18, 29
      %p220 = pnand %p218, %p219
      %p221 = pneg %p220
      // Predicated region
      $region29: #{tpu_custom_call.1} parent=5 // pred_check
        _
      $region30: #{tpu_custom_call.1} parent=5 // pred_check_branch
        %223 = sbr.rel (%p220) target = $region32
      $region31: #{tpu_custom_call.1} parent=5 // pred_region
        %s224 = ssub.s32 %s18, 1
        %s225 = sand.u32 %s43, 1
        %s226 = scalar_lea.sflag [#allocation4], %s225
        %s227 = sand.u32 %s43, 1
        %s228 = smul.addr %s227, 28
        %s229 = scalar_lea.vmem [#allocation3], %s228
        // Predicated region
        $region33: #{tpu_custom_call.1} parent=31 // pred_check
          %p230 = pneg %p56
        $region34: #{tpu_custom_call.1} parent=31 // pred_check_branch
          %232 = sbr.rel (%p230) target = $region36
        $region35: #{tpu_custom_call.1} parent=31 // pred_region
          %234 = dma.done %s226, 448
        $region36: #{tpu_custom_call.1} parent=31 // pred_fallthru
          _
        %s235 = sand.u32 %s23, 1
        %s236 = scalar_lea.sflag [#allocation7], %s235
        %s237 = sand.u32 %s71, 1
        %s238 = smul.addr %s237, 14336
        %s239 = scalar_lea.vmem [#allocation6], %s238
        // Predicated region
        $region37: #{tpu_custom_call.1} parent=31 // pred_check
          %p240 = pneg %p84
        $region38: #{tpu_custom_call.1} parent=31 // pred_check_branch
          %242 = sbr.rel (%p240) target = $region40
        $region39: #{tpu_custom_call.1} parent=31 // pred_region
          %244 = dma.done %s236, 229376
        $region40: #{tpu_custom_call.1} parent=31 // pred_fallthru
          _
        %s245 = sand.u32 %s23, 1
        %s246 = scalar_lea.sflag [#allocation7], %s245
        %s247 = sand.u32 %s97, 1
        %s248 = smul.addr %s247, 8
        %s249 = scalar_lea.vmem [#allocation8], %s248
        // Predicated region
        $region41: #{tpu_custom_call.1} parent=31 // pred_check
          %p250 = pneg %p110
        $region42: #{tpu_custom_call.1} parent=31 // pred_check_branch
          %252 = sbr.rel (%p250) target = $region44
        $region43: #{tpu_custom_call.1} parent=31 // pred_region
          %254 = dma.done %s246, 128
        $region44: #{tpu_custom_call.1} parent=31 // pred_fallthru
          _
        %s255 = sand.u32 %s43, 1
        %s256 = scalar_lea.sflag [#allocation4], %s255
        %s257 = sand.u32 %s43, 1
        %s258 = smul.addr %s257, 28
        %s259 = scalar_lea.vmem [#allocation3], %s258
        %p260 = pneg %p56
        %p261 = pneg %p53
        %s262 = sand.u32 %s23, 1
        %s263 = scalar_lea.sflag [#allocation7], %s262
        %s264 = sand.u32 %s71, 1
        %s265 = smul.addr %s264, 14336
        %s266 = scalar_lea.vmem [#allocation6], %s265
        %p267 = pneg %p84
        %p268 = pneg %p81
        %s269 = sand.u32 %s23, 1
        %s270 = scalar_lea.sflag [#allocation7], %s269
        %s271 = sand.u32 %s97, 1
        %s272 = smul.addr %s271, 8
        %s273 = scalar_lea.vmem [#allocation8], %s272
        %p274 = pneg %p110
        %p275 = pneg %p107
        %p276 = pneg %p136
        %p277 = pneg %p133
        %s278 = sand.u32 %s123, 1
        %s279 = scalar_lea.sflag [#allocation5], %s278
        %s280 = sand.u32 %s123, 1
        %s281 = smul.addr %s280, 8
        %s282 = scalar_lea.vmem [#allocation9], %s281
        %s283 = smul.u32 28, %s28
        %s284 = smul.u32 448, %s28
        %s285 = smul.u32 8, %s27
        %s286 = smul.u32 8, %s27
        %s287 = smul.u32 8, %s27
        %p288 = scmp.eq.s32.totalorder %s28, 0
        // Predicated region
        $region45: #{tpu_custom_call.1} parent=31 // pred_check
          %p289 = pneg %p288
        $region46: #{tpu_custom_call.1} parent=31 // pred_check_branch
          %291 = sbr.rel (%p289) target = $region48
        $region47: #{tpu_custom_call.1} parent=31 // pred_region
          %292 = vst [vmem:[#allocation2] sm:$0xff] 0.0
          %293 = vst [vmem:[#allocation2 + $0x8] sm:$0xff] 0.0
        $region48: #{tpu_custom_call.1} parent=31 // pred_fallthru
          _
        %v294 = vld [vmem:[#allocation2] sm:$0xff]
        %v295 = vld [vmem:[#allocation2 + $0x8] sm:$0xff]
        %v296 = vld [vmem:[%s229] sm:$0xff]
        %v297 = vld [vmem:[%s229 + $0x8] sm:$0xff]
        %v298 = vld [vmem:[%s229 + $0x10] sm:$0xff]
        %v299 = vld [vmem:[%s229 + $0x18] sm:$0xf]
        %v300 = vld [vmem:[%s239] sm:$0xff]
        %v301 = vld [vmem:[%s239 + $0x8] sm:$0xff]
        %v302 = vld [vmem:[%s239 + $0x10] sm:$0xff]
        %v303 = vld [vmem:[%s239 + $0x18] sm:$0xff]
        %v304 = vld [vmem:[%s239 + $0x20] sm:$0xff]
        %v305 = vld [vmem:[%s239 + $0x28] sm:$0xff]
        %v306 = vld [vmem:[%s239 + $0x30] sm:$0xff]
        %v307 = vld [vmem:[%s239 + $0x38] sm:$0xff]
        %v308 = vld [vmem:[%s239 + $0x40] sm:$0xff]
        %v309 = vld [vmem:[%s239 + $0x48] sm:$0xff]
        %v310 = vld [vmem:[%s239 + $0x50] sm:$0xff]
        %v311 = vld [vmem:[%s239 + $0x58] sm:$0xff]
        %v312 = vld [vmem:[%s239 + $0x60] sm:$0xff]
        %v313 = vld [vmem:[%s239 + $0x68] sm:$0xff]
        %v314 = vld [vmem:[%s239 + $0x70] sm:$0xff]
        %v315 = vld [vmem:[%s239 + $0x78] sm:$0xff]
        %v316 = vld [vmem:[%s239 + $0x80] sm:$0xff]
        %v317 = vld [vmem:[%s239 + $0x88] sm:$0xff]
        %v318 = vld [vmem:[%s239 + $0x90] sm:$0xff]
        %v319 = vld [vmem:[%s239 + $0x98] sm:$0xff]
        %v320 = vld [vmem:[%s239 + $0xa0] sm:$0xff]
        %v321 = vld [vmem:[%s239 + $0xa8] sm:$0xff]
        %v322 = vld [vmem:[%s239 + $0xb0] sm:$0xff]
        %v323 = vld [vmem:[%s239 + $0xb8] sm:$0xff]
        %v324 = vld [vmem:[%s239 + $0xc0] sm:$0xff]
        %v325 = vld [vmem:[%s239 + $0xc8] sm:$0xff]
        %v326 = vld [vmem:[%s239 + $0xd0] sm:$0xff]
        %v327 = vld [vmem:[%s239 + $0xd8] sm:$0xff]
        %v328 = vld [vmem:[%s239 + $0xe0] sm:$0xff]
        %v329 = vld [vmem:[%s239 + $0xe8] sm:$0xff]
        %v330 = vld [vmem:[%s239 + $0xf0] sm:$0xff]
        %v331 = vld [vmem:[%s239 + $0xf8] sm:$0xff]
        %v332 = vld [vmem:[%s239 + $0x100] sm:$0xff]
        %v333 = vld [vmem:[%s239 + $0x108] sm:$0xff]
        %v334 = vld [vmem:[%s239 + $0x110] sm:$0xff]
        %v335 = vld [vmem:[%s239 + $0x118] sm:$0xff]
        %v336 = vld [vmem:[%s239 + $0x120] sm:$0xff]
        %v337 = vld [vmem:[%s239 + $0x128] sm:$0xff]
        %v338 = vld [vmem:[%s239 + $0x130] sm:$0xff]
        %v339 = vld [vmem:[%s239 + $0x138] sm:$0xff]
        %v340 = vld [vmem:[%s239 + $0x140] sm:$0xff]
        %v341 = vld [vmem:[%s239 + $0x148] sm:$0xff]
        %v342 = vld [vmem:[%s239 + $0x150] sm:$0xff]
        %v343 = vld [vmem:[%s239 + $0x158] sm:$0xff]
        %v344 = vld [vmem:[%s239 + $0x160] sm:$0xff]
        %v345 = vld [vmem:[%s239 + $0x168] sm:$0xff]
        %v346 = vld [vmem:[%s239 + $0x170] sm:$0xff]
        %v347 = vld [vmem:[%s239 + $0x178] sm:$0xff]
        %v348 = vld [vmem:[%s239 + $0x180] sm:$0xff]
        %v349 = vld [vmem:[%s239 + $0x188] sm:$0xff]
        %v350 = vld [vmem:[%s239 + $0x190] sm:$0xff]
        %v351 = vld [vmem:[%s239 + $0x198] sm:$0xff]
        %v352 = vld [vmem:[%s239 + $0x1a0] sm:$0xff]
        %v353 = vld [vmem:[%s239 + $0x1a8] sm:$0xff]
        %v354 = vld [vmem:[%s239 + $0x1b0] sm:$0xff]
        %v355 = vld [vmem:[%s239 + $0x1b8] sm:$0xff]
        %v356 = vld [vmem:[%s239 + $0x1c0] sm:$0xff]
        %v357 = vld [vmem:[%s239 + $0x1c8] sm:$0xff]
        %v358 = vld [vmem:[%s239 + $0x1d0] sm:$0xff]
        %v359 = vld [vmem:[%s239 + $0x1d8] sm:$0xff]
        %v360 = vld [vmem:[%s239 + $0x1e0] sm:$0xff]
        %v361 = vld [vmem:[%s239 + $0x1e8] sm:$0xff]
        %v362 = vld [vmem:[%s239 + $0x1f0] sm:$0xff]
        %v363 = vld [vmem:[%s239 + $0x1f8] sm:$0xff]
        %v364 = vld [vmem:[%s239 + $0x200] sm:$0xff]
        %v365 = vld [vmem:[%s239 + $0x208] sm:$0xff]
        %v366 = vld [vmem:[%s239 + $0x210] sm:$0xff]
        %v367 = vld [vmem:[%s239 + $0x218] sm:$0xff]
        %v368 = vld [vmem:[%s239 + $0x220] sm:$0xff]
        %v369 = vld [vmem:[%s239 + $0x228] sm:$0xff]
        %v370 = vld [vmem:[%s239 + $0x230] sm:$0xff]
        %v371 = vld [vmem:[%s239 + $0x238] sm:$0xff]
        %v372 = vld [vmem:[%s239 + $0x240] sm:$0xff]
        %v373 = vld [vmem:[%s239 + $0x248] sm:$0xff]
        %v374 = vld [vmem:[%s239 + $0x250] sm:$0xff]
        %v375 = vld [vmem:[%s239 + $0x258] sm:$0xff]
        %v376 = vld [vmem:[%s239 + $0x260] sm:$0xff]
        %v377 = vld [vmem:[%s239 + $0x268] sm:$0xff]
        %v378 = vld [vmem:[%s239 + $0x270] sm:$0xff]
        %v379 = vld [vmem:[%s239 + $0x278] sm:$0xff]
        %v380 = vld [vmem:[%s239 + $0x280] sm:$0xff]
        %v381 = vld [vmem:[%s239 + $0x288] sm:$0xff]
        %v382 = vld [vmem:[%s239 + $0x290] sm:$0xff]
        %v383 = vld [vmem:[%s239 + $0x298] sm:$0xff]
        %v384 = vld [vmem:[%s239 + $0x2a0] sm:$0xff]
        %v385 = vld [vmem:[%s239 + $0x2a8] sm:$0xff]
        %v386 = vld [vmem:[%s239 + $0x2b0] sm:$0xff]
        %v387 = vld [vmem:[%s239 + $0x2b8] sm:$0xff]
        %v388 = vld [vmem:[%s239 + $0x2c0] sm:$0xff]
        %v389 = vld [vmem:[%s239 + $0x2c8] sm:$0xff]
        %v390 = vld [vmem:[%s239 + $0x2d0] sm:$0xff]
        %v391 = vld [vmem:[%s239 + $0x2d8] sm:$0xff]
        %v392 = vld [vmem:[%s239 + $0x2e0] sm:$0xff]
        %v393 = vld [vmem:[%s239 + $0x2e8] sm:$0xff]
        %v394 = vld [vmem:[%s239 + $0x2f0] sm:$0xff]
        %v395 = vld [vmem:[%s239 + $0x2f8] sm:$0xff]
        %v396 = vld [vmem:[%s239 + $0x300] sm:$0xff]
        %v397 = vld [vmem:[%s239 + $0x308] sm:$0xff]
        %v398 = vld [vmem:[%s239 + $0x310] sm:$0xff]
        %v399 = vld [vmem:[%s239 + $0x318] sm:$0xff]
        %v400 = vld [vmem:[%s239 + $0x320] sm:$0xff]
        %v401 = vld [vmem:[%s239 + $0x328] sm:$0xff]
        %v402 = vld [vmem:[%s239 + $0x330] sm:$0xff]
        %v403 = vld [vmem:[%s239 + $0x338] sm:$0xff]
        %v404 = vld [vmem:[%s239 + $0x340] sm:$0xff]
        %v405 = vld [vmem:[%s239 + $0x348] sm:$0xff]
        %v406 = vld [vmem:[%s239 + $0x350] sm:$0xff]
        %v407 = vld [vmem:[%s239 + $0x358] sm:$0xff]
        %v408 = vld [vmem:[%s239 + $0x360] sm:$0xff]
        %v409 = vld [vmem:[%s239 + $0x368] sm:$0xff]
        %v410 = vld [vmem:[%s239 + $0x370] sm:$0xff]
        %v411 = vld [vmem:[%s239 + $0x378] sm:$0xff]
        %v412 = vld [vmem:[%s239 + $0x380] sm:$0xff]
        %v413 = vld [vmem:[%s239 + $0x388] sm:$0xff]
        %v414 = vld [vmem:[%s239 + $0x390] sm:$0xff]
        %v415 = vld [vmem:[%s239 + $0x398] sm:$0xff]
        %v416 = vld [vmem:[%s239 + $0x3a0] sm:$0xff]
        %v417 = vld [vmem:[%s239 + $0x3a8] sm:$0xff]
        %v418 = vld [vmem:[%s239 + $0x3b0] sm:$0xff]
        %v419 = vld [vmem:[%s239 + $0x3b8] sm:$0xff]
        %v420 = vld [vmem:[%s239 + $0x3c0] sm:$0xff]
        %v421 = vld [vmem:[%s239 + $0x3c8] sm:$0xff]
        %v422 = vld [vmem:[%s239 + $0x3d0] sm:$0xff]
        %v423 = vld [vmem:[%s239 + $0x3d8] sm:$0xff]
        %v424 = vld [vmem:[%s239 + $0x3e0] sm:$0xff]
        %v425 = vld [vmem:[%s239 + $0x3e8] sm:$0xff]
        %v426 = vld [vmem:[%s239 + $0x3f0] sm:$0xff]
        %v427 = vld [vmem:[%s239 + $0x3f8] sm:$0xff]
        %v428 = vld [vmem:[%s239 + $0x400] sm:$0xff]
        %v429 = vld [vmem:[%s239 + $0x408] sm:$0xff]
        %v430 = vld [vmem:[%s239 + $0x410] sm:$0xff]
        %v431 = vld [vmem:[%s239 + $0x418] sm:$0xff]
        %v432 = vld [vmem:[%s239 + $0x420] sm:$0xff]
        %v433 = vld [vmem:[%s239 + $0x428] sm:$0xff]
        %v434 = vld [vmem:[%s239 + $0x430] sm:$0xff]
        %v435 = vld [vmem:[%s239 + $0x438] sm:$0xff]
        %v436 = vld [vmem:[%s239 + $0x440] sm:$0xff]
        %v437 = vld [vmem:[%s239 + $0x448] sm:$0xff]
        %v438 = vld [vmem:[%s239 + $0x450] sm:$0xff]
        %v439 = vld [vmem:[%s239 + $0x458] sm:$0xff]
        %v440 = vld [vmem:[%s239 + $0x460] sm:$0xff]
        %v441 = vld [vmem:[%s239 + $0x468] sm:$0xff]
        %v442 = vld [vmem:[%s239 + $0x470] sm:$0xff]
        %v443 = vld [vmem:[%s239 + $0x478] sm:$0xff]
        %v444 = vld [vmem:[%s239 + $0x480] sm:$0xff]
        %v445 = vld [vmem:[%s239 + $0x488] sm:$0xff]
        %v446 = vld [vmem:[%s239 + $0x490] sm:$0xff]
        %v447 = vld [vmem:[%s239 + $0x498] sm:$0xff]
        %v448 = vld [vmem:[%s239 + $0x4a0] sm:$0xff]
        %v449 = vld [vmem:[%s239 + $0x4a8] sm:$0xff]
        %v450 = vld [vmem:[%s239 + $0x4b0] sm:$0xff]
        %v451 = vld [vmem:[%s239 + $0x4b8] sm:$0xff]
        %v452 = vld [vmem:[%s239 + $0x4c0] sm:$0xff]
        %v453 = vld [vmem:[%s239 + $0x4c8] sm:$0xff]
        %v454 = vld [vmem:[%s239 + $0x4d0] sm:$0xff]
        %v455 = vld [vmem:[%s239 + $0x4d8] sm:$0xff]
        %v456 = vld [vmem:[%s239 + $0x4e0] sm:$0xff]
        %v457 = vld [vmem:[%s239 + $0x4e8] sm:$0xff]
        %v458 = vld [vmem:[%s239 + $0x4f0] sm:$0xff]
        %v459 = vld [vmem:[%s239 + $0x4f8] sm:$0xff]
        %v460 = vld [vmem:[%s239 + $0x500] sm:$0xff]
        %v461 = vld [vmem:[%s239 + $0x508] sm:$0xff]
        %v462 = vld [vmem:[%s239 + $0x510] sm:$0xff]
        %v463 = vld [vmem:[%s239 + $0x518] sm:$0xff]
        %v464 = vld [vmem:[%s239 + $0x520] sm:$0xff]
        %v465 = vld [vmem:[%s239 + $0x528] sm:$0xff]
        %v466 = vld [vmem:[%s239 + $0x530] sm:$0xff]
        %v467 = vld [vmem:[%s239 + $0x538] sm:$0xff]
        %v468 = vld [vmem:[%s239 + $0x540] sm:$0xff]
        %v469 = vld [vmem:[%s239 + $0x548] sm:$0xff]
        %v470 = vld [vmem:[%s239 + $0x550] sm:$0xff]
        %v471 = vld [vmem:[%s239 + $0x558] sm:$0xff]
        %v472 = vld [vmem:[%s239 + $0x560] sm:$0xff]
        %v473 = vld [vmem:[%s239 + $0x568] sm:$0xff]
        %v474 = vld [vmem:[%s239 + $0x570] sm:$0xff]
        %v475 = vld [vmem:[%s239 + $0x578] sm:$0xff]
        %v476 = vld [vmem:[%s239 + $0x580] sm:$0xff]
        %v477 = vld [vmem:[%s239 + $0x588] sm:$0xff]
        %v478 = vld [vmem:[%s239 + $0x590] sm:$0xff]
        %v479 = vld [vmem:[%s239 + $0x598] sm:$0xff]
        %v480 = vld [vmem:[%s239 + $0x5a0] sm:$0xff]
        %v481 = vld [vmem:[%s239 + $0x5a8] sm:$0xff]
        %v482 = vld [vmem:[%s239 + $0x5b0] sm:$0xff]
        %v483 = vld [vmem:[%s239 + $0x5b8] sm:$0xff]
        %v484 = vld [vmem:[%s239 + $0x5c0] sm:$0xff]
        %v485 = vld [vmem:[%s239 + $0x5c8] sm:$0xff]
        %v486 = vld [vmem:[%s239 + $0x5d0] sm:$0xff]
        %v487 = vld [vmem:[%s239 + $0x5d8] sm:$0xff]
        %v488 = vld [vmem:[%s239 + $0x5e0] sm:$0xff]
        %v489 = vld [vmem:[%s239 + $0x5e8] sm:$0xff]
        %v490 = vld [vmem:[%s239 + $0x5f0] sm:$0xff]
        %v491 = vld [vmem:[%s239 + $0x5f8] sm:$0xff]
        %v492 = vld [vmem:[%s239 + $0x600] sm:$0xff]
        %v493 = vld [vmem:[%s239 + $0x608] sm:$0xff]
        %v494 = vld [vmem:[%s239 + $0x610] sm:$0xff]
        %v495 = vld [vmem:[%s239 + $0x618] sm:$0xff]
        %v496 = vld [vmem:[%s239 + $0x620] sm:$0xff]
        %v497 = vld [vmem:[%s239 + $0x628] sm:$0xff]
        %v498 = vld [vmem:[%s239 + $0x630] sm:$0xff]
        %v499 = vld [vmem:[%s239 + $0x638] sm:$0xff]
        %v500 = vld [vmem:[%s239 + $0x640] sm:$0xff]
        %v501 = vld [vmem:[%s239 + $0x648] sm:$0xff]
        %v502 = vld [vmem:[%s239 + $0x650] sm:$0xff]
        %v503 = vld [vmem:[%s239 + $0x658] sm:$0xff]
        %v504 = vld [vmem:[%s239 + $0x660] sm:$0xff]
        %v505 = vld [vmem:[%s239 + $0x668] sm:$0xff]
        %v506 = vld [vmem:[%s239 + $0x670] sm:$0xff]
        %v507 = vld [vmem:[%s239 + $0x678] sm:$0xff]
        %v508 = vld [vmem:[%s239 + $0x680] sm:$0xff]
        %v509 = vld [vmem:[%s239 + $0x688] sm:$0xff]
        %v510 = vld [vmem:[%s239 + $0x690] sm:$0xff]
        %v511 = vld [vmem:[%s239 + $0x698] sm:$0xff]
        %v512 = vld [vmem:[%s239 + $0x6a0] sm:$0xff]
        %v513 = vld [vmem:[%s239 + $0x6a8] sm:$0xff]
        %v514 = vld [vmem:[%s239 + $0x6b0] sm:$0xff]
        %v515 = vld [vmem:[%s239 + $0x6b8] sm:$0xff]
        %v516 = vld [vmem:[%s239 + $0x6c0] sm:$0xff]
        %v517 = vld [vmem:[%s239 + $0x6c8] sm:$0xff]
        %v518 = vld [vmem:[%s239 + $0x6d0] sm:$0xff]
        %v519 = vld [vmem:[%s239 + $0x6d8] sm:$0xff]
        %v520 = vld [vmem:[%s239 + $0x6e0] sm:$0xff]
        %v521 = vld [vmem:[%s239 + $0x6e8] sm:$0xff]
        %v522 = vld [vmem:[%s239 + $0x6f0] sm:$0xff]
        %v523 = vld [vmem:[%s239 + $0x6f8] sm:$0xff]
        %v524 = vld [vmem:[%s239 + $0x700] sm:$0xff]
        %v525 = vld [vmem:[%s239 + $0x708] sm:$0xff]
        %v526 = vld [vmem:[%s239 + $0x710] sm:$0xff]
        %v527 = vld [vmem:[%s239 + $0x718] sm:$0xff]
        %v528 = vld [vmem:[%s239 + $0x720] sm:$0xff]
        %v529 = vld [vmem:[%s239 + $0x728] sm:$0xff]
        %v530 = vld [vmem:[%s239 + $0x730] sm:$0xff]
        %v531 = vld [vmem:[%s239 + $0x738] sm:$0xff]
        %v532 = vld [vmem:[%s239 + $0x740] sm:$0xff]
        %v533 = vld [vmem:[%s239 + $0x748] sm:$0xff]
        %v534 = vld [vmem:[%s239 + $0x750] sm:$0xff]
        %v535 = vld [vmem:[%s239 + $0x758] sm:$0xff]
        %v536 = vld [vmem:[%s239 + $0x760] sm:$0xff]
        %v537 = vld [vmem:[%s239 + $0x768] sm:$0xff]
        %v538 = vld [vmem:[%s239 + $0x770] sm:$0xff]
        %v539 = vld [vmem:[%s239 + $0x778] sm:$0xff]
        %v540 = vld [vmem:[%s239 + $0x780] sm:$0xff]
        %v541 = vld [vmem:[%s239 + $0x788] sm:$0xff]
        %v542 = vld [vmem:[%s239 + $0x790] sm:$0xff]
        %v543 = vld [vmem:[%s239 + $0x798] sm:$0xff]
        %v544 = vld [vmem:[%s239 + $0x7a0] sm:$0xff]
        %v545 = vld [vmem:[%s239 + $0x7a8] sm:$0xff]
        %v546 = vld [vmem:[%s239 + $0x7b0] sm:$0xff]
        %v547 = vld [vmem:[%s239 + $0x7b8] sm:$0xff]
        %v548 = vld [vmem:[%s239 + $0x7c0] sm:$0xff]
        %v549 = vld [vmem:[%s239 + $0x7c8] sm:$0xff]
        %v550 = vld [vmem:[%s239 + $0x7d0] sm:$0xff]
        %v551 = vld [vmem:[%s239 + $0x7d8] sm:$0xff]
        %v552 = vld [vmem:[%s239 + $0x7e0] sm:$0xff]
        %v553 = vld [vmem:[%s239 + $0x7e8] sm:$0xff]
        %v554 = vld [vmem:[%s239 + $0x7f0] sm:$0xff]
        %v555 = vld [vmem:[%s239 + $0x7f8] sm:$0xff]
        %v556 = vld [vmem:[%s239 + $0x800] sm:$0xff]
        %v557 = vld [vmem:[%s239 + $0x808] sm:$0xff]
        %v558 = vld [vmem:[%s239 + $0x810] sm:$0xff]
        %v559 = vld [vmem:[%s239 + $0x818] sm:$0xff]
        %v560 = vld [vmem:[%s239 + $0x820] sm:$0xff]
        %v561 = vld [vmem:[%s239 + $0x828] sm:$0xff]
        %v562 = vld [vmem:[%s239 + $0x830] sm:$0xff]
        %v563 = vld [vmem:[%s239 + $0x838] sm:$0xff]
        %v564 = vld [vmem:[%s239 + $0x840] sm:$0xff]
        %v565 = vld [vmem:[%s239 + $0x848] sm:$0xff]
        %v566 = vld [vmem:[%s239 + $0x850] sm:$0xff]
        %v567 = vld [vmem:[%s239 + $0x858] sm:$0xff]
        %v568 = vld [vmem:[%s239 + $0x860] sm:$0xff]
        %v569 = vld [vmem:[%s239 + $0x868] sm:$0xff]
        %v570 = vld [vmem:[%s239 + $0x870] sm:$0xff]
        %v571 = vld [vmem:[%s239 + $0x878] sm:$0xff]
        %v572 = vld [vmem:[%s239 + $0x880] sm:$0xff]
        %v573 = vld [vmem:[%s239 + $0x888] sm:$0xff]
        %v574 = vld [vmem:[%s239 + $0x890] sm:$0xff]
        %v575 = vld [vmem:[%s239 + $0x898] sm:$0xff]
        %v576 = vld [vmem:[%s239 + $0x8a0] sm:$0xff]
        %v577 = vld [vmem:[%s239 + $0x8a8] sm:$0xff]
        %v578 = vld [vmem:[%s239 + $0x8b0] sm:$0xff]
        %v579 = vld [vmem:[%s239 + $0x8b8] sm:$0xff]
        %v580 = vld [vmem:[%s239 + $0x8c0] sm:$0xff]
        %v581 = vld [vmem:[%s239 + $0x8c8] sm:$0xff]
        %v582 = vld [vmem:[%s239 + $0x8d0] sm:$0xff]
        %v583 = vld [vmem:[%s239 + $0x8d8] sm:$0xff]
        %v584 = vld [vmem:[%s239 + $0x8e0] sm:$0xff]
        %v585 = vld [vmem:[%s239 + $0x8e8] sm:$0xff]
        %v586 = vld [vmem:[%s239 + $0x8f0] sm:$0xff]
        %v587 = vld [vmem:[%s239 + $0x8f8] sm:$0xff]
        %v588 = vld [vmem:[%s239 + $0x900] sm:$0xff]
        %v589 = vld [vmem:[%s239 + $0x908] sm:$0xff]
        %v590 = vld [vmem:[%s239 + $0x910] sm:$0xff]
        %v591 = vld [vmem:[%s239 + $0x918] sm:$0xff]
        %v592 = vld [vmem:[%s239 + $0x920] sm:$0xff]
        %v593 = vld [vmem:[%s239 + $0x928] sm:$0xff]
        %v594 = vld [vmem:[%s239 + $0x930] sm:$0xff]
        %v595 = vld [vmem:[%s239 + $0x938] sm:$0xff]
        %v596 = vld [vmem:[%s239 + $0x940] sm:$0xff]
        %v597 = vld [vmem:[%s239 + $0x948] sm:$0xff]
        %v598 = vld [vmem:[%s239 + $0x950] sm:$0xff]
        %v599 = vld [vmem:[%s239 + $0x958] sm:$0xff]
        %v600 = vld [vmem:[%s239 + $0x960] sm:$0xff]
        %v601 = vld [vmem:[%s239 + $0x968] sm:$0xff]
        %v602 = vld [vmem:[%s239 + $0x970] sm:$0xff]
        %v603 = vld [vmem:[%s239 + $0x978] sm:$0xff]
        %v604 = vld [vmem:[%s239 + $0x980] sm:$0xff]
        %v605 = vld [vmem:[%s239 + $0x988] sm:$0xff]
        %v606 = vld [vmem:[%s239 + $0x990] sm:$0xff]
        %v607 = vld [vmem:[%s239 + $0x998] sm:$0xff]
        %v608 = vld [vmem:[%s239 + $0x9a0] sm:$0xff]
        %v609 = vld [vmem:[%s239 + $0x9a8] sm:$0xff]
        %v610 = vld [vmem:[%s239 + $0x9b0] sm:$0xff]
        %v611 = vld [vmem:[%s239 + $0x9b8] sm:$0xff]
        %v612 = vld [vmem:[%s239 + $0x9c0] sm:$0xff]
        %v613 = vld [vmem:[%s239 + $0x9c8] sm:$0xff]
        %v614 = vld [vmem:[%s239 + $0x9d0] sm:$0xff]
        %v615 = vld [vmem:[%s239 + $0x9d8] sm:$0xff]
        %v616 = vld [vmem:[%s239 + $0x9e0] sm:$0xff]
        %v617 = vld [vmem:[%s239 + $0x9e8] sm:$0xff]
        %v618 = vld [vmem:[%s239 + $0x9f0] sm:$0xff]
        %v619 = vld [vmem:[%s239 + $0x9f8] sm:$0xff]
        %v620 = vld [vmem:[%s239 + $0xa00] sm:$0xff]
        %v621 = vld [vmem:[%s239 + $0xa08] sm:$0xff]
        %v622 = vld [vmem:[%s239 + $0xa10] sm:$0xff]
        %v623 = vld [vmem:[%s239 + $0xa18] sm:$0xff]
        %v624 = vld [vmem:[%s239 + $0xa20] sm:$0xff]
        %v625 = vld [vmem:[%s239 + $0xa28] sm:$0xff]
        %v626 = vld [vmem:[%s239 + $0xa30] sm:$0xff]
        %v627 = vld [vmem:[%s239 + $0xa38] sm:$0xff]
        %v628 = vld [vmem:[%s239 + $0xa40] sm:$0xff]
        %v629 = vld [vmem:[%s239 + $0xa48] sm:$0xff]
        %v630 = vld [vmem:[%s239 + $0xa50] sm:$0xff]
        %v631 = vld [vmem:[%s239 + $0xa58] sm:$0xff]
        %v632 = vld [vmem:[%s239 + $0xa60] sm:$0xff]
        %v633 = vld [vmem:[%s239 + $0xa68] sm:$0xff]
        %v634 = vld [vmem:[%s239 + $0xa70] sm:$0xff]
        %v635 = vld [vmem:[%s239 + $0xa78] sm:$0xff]
        %v636 = vld [vmem:[%s239 + $0xa80] sm:$0xff]
        %v637 = vld [vmem:[%s239 + $0xa88] sm:$0xff]
        %v638 = vld [vmem:[%s239 + $0xa90] sm:$0xff]
        %v639 = vld [vmem:[%s239 + $0xa98] sm:$0xff]
        %v640 = vld [vmem:[%s239 + $0xaa0] sm:$0xff]
        %v641 = vld [vmem:[%s239 + $0xaa8] sm:$0xff]
        %v642 = vld [vmem:[%s239 + $0xab0] sm:$0xff]
        %v643 = vld [vmem:[%s239 + $0xab8] sm:$0xff]
        %v644 = vld [vmem:[%s239 + $0xac0] sm:$0xff]
        %v645 = vld [vmem:[%s239 + $0xac8] sm:$0xff]
        %v646 = vld [vmem:[%s239 + $0xad0] sm:$0xff]
        %v647 = vld [vmem:[%s239 + $0xad8] sm:$0xff]
        %v648 = vld [vmem:[%s239 + $0xae0] sm:$0xff]
        %v649 = vld [vmem:[%s239 + $0xae8] sm:$0xff]
        %v650 = vld [vmem:[%s239 + $0xaf0] sm:$0xff]
        %v651 = vld [vmem:[%s239 + $0xaf8] sm:$0xff]
        %v652 = vld [vmem:[%s239 + $0xb00] sm:$0xff]
        %v653 = vld [vmem:[%s239 + $0xb08] sm:$0xff]
        %v654 = vld [vmem:[%s239 + $0xb10] sm:$0xff]
        %v655 = vld [vmem:[%s239 + $0xb18] sm:$0xff]
        %v656 = vld [vmem:[%s239 + $0xb20] sm:$0xff]
        %v657 = vld [vmem:[%s239 + $0xb28] sm:$0xff]
        %v658 = vld [vmem:[%s239 + $0xb30] sm:$0xff]
        %v659 = vld [vmem:[%s239 + $0xb38] sm:$0xff]
        %v660 = vld [vmem:[%s239 + $0xb40] sm:$0xff]
        %v661 = vld [vmem:[%s239 + $0xb48] sm:$0xff]
        %v662 = vld [vmem:[%s239 + $0xb50] sm:$0xff]
        %v663 = vld [vmem:[%s239 + $0xb58] sm:$0xff]
        %v664 = vld [vmem:[%s239 + $0xb60] sm:$0xff]
        %v665 = vld [vmem:[%s239 + $0xb68] sm:$0xff]
        %v666 = vld [vmem:[%s239 + $0xb70] sm:$0xff]
        %v667 = vld [vmem:[%s239 + $0xb78] sm:$0xff]
        %v668 = vld [vmem:[%s239 + $0xb80] sm:$0xff]
        %v669 = vld [vmem:[%s239 + $0xb88] sm:$0xff]
        %v670 = vld [vmem:[%s239 + $0xb90] sm:$0xff]
        %v671 = vld [vmem:[%s239 + $0xb98] sm:$0xff]
        %v672 = vld [vmem:[%s239 + $0xba0] sm:$0xff]
        %v673 = vld [vmem:[%s239 + $0xba8] sm:$0xff]
        %v674 = vld [vmem:[%s239 + $0xbb0] sm:$0xff]
        %v675 = vld [vmem:[%s239 + $0xbb8] sm:$0xff]
        %v676 = vld [vmem:[%s239 + $0xbc0] sm:$0xff]
        %v677 = vld [vmem:[%s239 + $0xbc8] sm:$0xff]
        %v678 = vld [vmem:[%s239 + $0xbd0] sm:$0xff]
        %v679 = vld [vmem:[%s239 + $0xbd8] sm:$0xff]
        %v680 = vld [vmem:[%s239 + $0xbe0] sm:$0xff]
        %v681 = vld [vmem:[%s239 + $0xbe8] sm:$0xff]
        %v682 = vld [vmem:[%s239 + $0xbf0] sm:$0xff]
        %v683 = vld [vmem:[%s239 + $0xbf8] sm:$0xff]
        %v684 = vld [vmem:[%s239 + $0xc00] sm:$0xff]
        %v685 = vld [vmem:[%s239 + $0xc08] sm:$0xff]
        %v686 = vld [vmem:[%s239 + $0xc10] sm:$0xff]
        %v687 = vld [vmem:[%s239 + $0xc18] sm:$0xff]
        %v688 = vld [vmem:[%s239 + $0xc20] sm:$0xff]
        %v689 = vld [vmem:[%s239 + $0xc28] sm:$0xff]
        %v690 = vld [vmem:[%s239 + $0xc30] sm:$0xff]
        %v691 = vld [vmem:[%s239 + $0xc38] sm:$0xff]
        %v692 = vld [vmem:[%s239 + $0xc40] sm:$0xff]
        %v693 = vld [vmem:[%s239 + $0xc48] sm:$0xff]
        %v694 = vld [vmem:[%s239 + $0xc50] sm:$0xff]
        %v695 = vld [vmem:[%s239 + $0xc58] sm:$0xff]
        %v696 = vld [vmem:[%s239 + $0xc60] sm:$0xff]
        %v697 = vld [vmem:[%s239 + $0xc68] sm:$0xff]
        %v698 = vld [vmem:[%s239 + $0xc70] sm:$0xff]
        %v699 = vld [vmem:[%s239 + $0xc78] sm:$0xff]
        %v700 = vld [vmem:[%s239 + $0xc80] sm:$0xff]
        %v701 = vld [vmem:[%s239 + $0xc88] sm:$0xff]
        %v702 = vld [vmem:[%s239 + $0xc90] sm:$0xff]
        %v703 = vld [vmem:[%s239 + $0xc98] sm:$0xff]
        %v704 = vld [vmem:[%s239 + $0xca0] sm:$0xff]
        %v705 = vld [vmem:[%s239 + $0xca8] sm:$0xff]
        %v706 = vld [vmem:[%s239 + $0xcb0] sm:$0xff]
        %v707 = vld [vmem:[%s239 + $0xcb8] sm:$0xff]
        %v708 = vld [vmem:[%s239 + $0xcc0] sm:$0xff]
        %v709 = vld [vmem:[%s239 + $0xcc8] sm:$0xff]
        %v710 = vld [vmem:[%s239 + $0xcd0] sm:$0xff]
        %v711 = vld [vmem:[%s239 + $0xcd8] sm:$0xff]
        %v712 = vld [vmem:[%s239 + $0xce0] sm:$0xff]
        %v713 = vld [vmem:[%s239 + $0xce8] sm:$0xff]
        %v714 = vld [vmem:[%s239 + $0xcf0] sm:$0xff]
        %v715 = vld [vmem:[%s239 + $0xcf8] sm:$0xff]
        %v716 = vld [vmem:[%s239 + $0xd00] sm:$0xff]
        %v717 = vld [vmem:[%s239 + $0xd08] sm:$0xff]
        %v718 = vld [vmem:[%s239 + $0xd10] sm:$0xff]
        %v719 = vld [vmem:[%s239 + $0xd18] sm:$0xff]
        %v720 = vld [vmem:[%s239 + $0xd20] sm:$0xff]
        %v721 = vld [vmem:[%s239 + $0xd28] sm:$0xff]
        %v722 = vld [vmem:[%s239 + $0xd30] sm:$0xff]
        %v723 = vld [vmem:[%s239 + $0xd38] sm:$0xff]
        %v724 = vld [vmem:[%s239 + $0xd40] sm:$0xff]
        %v725 = vld [vmem:[%s239 + $0xd48] sm:$0xff]
        %v726 = vld [vmem:[%s239 + $0xd50] sm:$0xff]
        %v727 = vld [vmem:[%s239 + $0xd58] sm:$0xff]
        %v728 = vld [vmem:[%s239 + $0xd60] sm:$0xff]
        %v729 = vld [vmem:[%s239 + $0xd68] sm:$0xff]
        %v730 = vld [vmem:[%s239 + $0xd70] sm:$0xff]
        %v731 = vld [vmem:[%s239 + $0xd78] sm:$0xff]
        %v732 = vld [vmem:[%s239 + $0xd80] sm:$0xff]
        %v733 = vld [vmem:[%s239 + $0xd88] sm:$0xff]
        %v734 = vld [vmem:[%s239 + $0xd90] sm:$0xff]
        %v735 = vld [vmem:[%s239 + $0xd98] sm:$0xff]
        %v736 = vld [vmem:[%s239 + $0xda0] sm:$0xff]
        %v737 = vld [vmem:[%s239 + $0xda8] sm:$0xff]
        %v738 = vld [vmem:[%s239 + $0xdb0] sm:$0xff]
        %v739 = vld [vmem:[%s239 + $0xdb8] sm:$0xff]
        %v740 = vld [vmem:[%s239 + $0xdc0] sm:$0xff]
        %v741 = vld [vmem:[%s239 + $0xdc8] sm:$0xff]
        %v742 = vld [vmem:[%s239 + $0xdd0] sm:$0xff]
        %v743 = vld [vmem:[%s239 + $0xdd8] sm:$0xff]
        %v744 = vld [vmem:[%s239 + $0xde0] sm:$0xff]
        %v745 = vld [vmem:[%s239 + $0xde8] sm:$0xff]
        %v746 = vld [vmem:[%s239 + $0xdf0] sm:$0xff]
        %v747 = vld [vmem:[%s239 + $0xdf8] sm:$0xff]
        %v748 = vld [vmem:[%s239 + $0xe00] sm:$0xff]
        %v749 = vld [vmem:[%s239 + $0xe08] sm:$0xff]
        %v750 = vld [vmem:[%s239 + $0xe10] sm:$0xff]
        %v751 = vld [vmem:[%s239 + $0xe18] sm:$0xff]
        %v752 = vld [vmem:[%s239 + $0xe20] sm:$0xff]
        %v753 = vld [vmem:[%s239 + $0xe28] sm:$0xff]
        %v754 = vld [vmem:[%s239 + $0xe30] sm:$0xff]
        %v755 = vld [vmem:[%s239 + $0xe38] sm:$0xff]
        %v756 = vld [vmem:[%s239 + $0xe40] sm:$0xff]
        %v757 = vld [vmem:[%s239 + $0xe48] sm:$0xff]
        %v758 = vld [vmem:[%s239 + $0xe50] sm:$0xff]
        %v759 = vld [vmem:[%s239 + $0xe58] sm:$0xff]
        %v760 = vld [vmem:[%s239 + $0xe60] sm:$0xff]
        %v761 = vld [vmem:[%s239 + $0xe68] sm:$0xff]
        %v762 = vld [vmem:[%s239 + $0xe70] sm:$0xff]
        %v763 = vld [vmem:[%s239 + $0xe78] sm:$0xff]
        %v764 = vld [vmem:[%s239 + $0xe80] sm:$0xff]
        %v765 = vld [vmem:[%s239 + $0xe88] sm:$0xff]
        %v766 = vld [vmem:[%s239 + $0xe90] sm:$0xff]
        %v767 = vld [vmem:[%s239 + $0xe98] sm:$0xff]
        %v768 = vld [vmem:[%s239 + $0xea0] sm:$0xff]
        %v769 = vld [vmem:[%s239 + $0xea8] sm:$0xff]
        %v770 = vld [vmem:[%s239 + $0xeb0] sm:$0xff]
        %v771 = vld [vmem:[%s239 + $0xeb8] sm:$0xff]
        %v772 = vld [vmem:[%s239 + $0xec0] sm:$0xff]
        %v773 = vld [vmem:[%s239 + $0xec8] sm:$0xff]
        %v774 = vld [vmem:[%s239 + $0xed0] sm:$0xff]
        %v775 = vld [vmem:[%s239 + $0xed8] sm:$0xff]
        %v776 = vld [vmem:[%s239 + $0xee0] sm:$0xff]
        %v777 = vld [vmem:[%s239 + $0xee8] sm:$0xff]
        %v778 = vld [vmem:[%s239 + $0xef0] sm:$0xff]
        %v779 = vld [vmem:[%s239 + $0xef8] sm:$0xff]
        %v780 = vld [vmem:[%s239 + $0xf00] sm:$0xff]
        %v781 = vld [vmem:[%s239 + $0xf08] sm:$0xff]
        %v782 = vld [vmem:[%s239 + $0xf10] sm:$0xff]
        %v783 = vld [vmem:[%s239 + $0xf18] sm:$0xff]
        %v784 = vld [vmem:[%s239 + $0xf20] sm:$0xff]
        %v785 = vld [vmem:[%s239 + $0xf28] sm:$0xff]
        %v786 = vld [vmem:[%s239 + $0xf30] sm:$0xff]
        %v787 = vld [vmem:[%s239 + $0xf38] sm:$0xff]
        %v788 = vld [vmem:[%s239 + $0xf40] sm:$0xff]
        %v789 = vld [vmem:[%s239 + $0xf48] sm:$0xff]
        %v790 = vld [vmem:[%s239 + $0xf50] sm:$0xff]
        %v791 = vld [vmem:[%s239 + $0xf58] sm:$0xff]
        %v792 = vld [vmem:[%s239 + $0xf60] sm:$0xff]
        %v793 = vld [vmem:[%s239 + $0xf68] sm:$0xff]
        %v794 = vld [vmem:[%s239 + $0xf70] sm:$0xff]
        %v795 = vld [vmem:[%s239 + $0xf78] sm:$0xff]
        %v796 = vld [vmem:[%s239 + $0xf80] sm:$0xff]
        %v797 = vld [vmem:[%s239 + $0xf88] sm:$0xff]
        %v798 = vld [vmem:[%s239 + $0xf90] sm:$0xff]
        %v799 = vld [vmem:[%s239 + $0xf98] sm:$0xff]
        %v800 = vld [vmem:[%s239 + $0xfa0] sm:$0xff]
        %v801 = vld [vmem:[%s239 + $0xfa8] sm:$0xff]
        %v802 = vld [vmem:[%s239 + $0xfb0] sm:$0xff]
        %v803 = vld [vmem:[%s239 + $0xfb8] sm:$0xff]
        %v804 = vld [vmem:[%s239 + $0xfc0] sm:$0xff]
        %v805 = vld [vmem:[%s239 + $0xfc8] sm:$0xff]
        %v806 = vld [vmem:[%s239 + $0xfd0] sm:$0xff]
        %v807 = vld [vmem:[%s239 + $0xfd8] sm:$0xff]
        %v808 = vld [vmem:[%s239 + $0xfe0] sm:$0xff]
        %v809 = vld [vmem:[%s239 + $0xfe8] sm:$0xff]
        %v810 = vld [vmem:[%s239 + $0xff0] sm:$0xff]
        %v811 = vld [vmem:[%s239 + $0xff8] sm:$0xff]
        %v812 = vld [vmem:[%s239 + $0x1000] sm:$0xff]
        %v813 = vld [vmem:[%s239 + $0x1008] sm:$0xff]
        %v814 = vld [vmem:[%s239 + $0x1010] sm:$0xff]
        %v815 = vld [vmem:[%s239 + $0x1018] sm:$0xff]
        %v816 = vld [vmem:[%s239 + $0x1020] sm:$0xff]
        %v817 = vld [vmem:[%s239 + $0x1028] sm:$0xff]
        %v818 = vld [vmem:[%s239 + $0x1030] sm:$0xff]
        %v819 = vld [vmem:[%s239 + $0x1038] sm:$0xff]
        %v820 = vld [vmem:[%s239 + $0x1040] sm:$0xff]
        %v821 = vld [vmem:[%s239 + $0x1048] sm:$0xff]
        %v822 = vld [vmem:[%s239 + $0x1050] sm:$0xff]
        %v823 = vld [vmem:[%s239 + $0x1058] sm:$0xff]
        %v824 = vld [vmem:[%s239 + $0x1060] sm:$0xff]
        %v825 = vld [vmem:[%s239 + $0x1068] sm:$0xff]
        %v826 = vld [vmem:[%s239 + $0x1070] sm:$0xff]
        %v827 = vld [vmem:[%s239 + $0x1078] sm:$0xff]
        %v828 = vld [vmem:[%s239 + $0x1080] sm:$0xff]
        %v829 = vld [vmem:[%s239 + $0x1088] sm:$0xff]
        %v830 = vld [vmem:[%s239 + $0x1090] sm:$0xff]
        %v831 = vld [vmem:[%s239 + $0x1098] sm:$0xff]
        %v832 = vld [vmem:[%s239 + $0x10a0] sm:$0xff]
        %v833 = vld [vmem:[%s239 + $0x10a8] sm:$0xff]
        %v834 = vld [vmem:[%s239 + $0x10b0] sm:$0xff]
        %v835 = vld [vmem:[%s239 + $0x10b8] sm:$0xff]
        %v836 = vld [vmem:[%s239 + $0x10c0] sm:$0xff]
        %v837 = vld [vmem:[%s239 + $0x10c8] sm:$0xff]
        %v838 = vld [vmem:[%s239 + $0x10d0] sm:$0xff]
        %v839 = vld [vmem:[%s239 + $0x10d8] sm:$0xff]
        %v840 = vld [vmem:[%s239 + $0x10e0] sm:$0xff]
        %v841 = vld [vmem:[%s239 + $0x10e8] sm:$0xff]
        %v842 = vld [vmem:[%s239 + $0x10f0] sm:$0xff]
        %v843 = vld [vmem:[%s239 + $0x10f8] sm:$0xff]
        %v844 = vld [vmem:[%s239 + $0x1100] sm:$0xff]
        %v845 = vld [vmem:[%s239 + $0x1108] sm:$0xff]
        %v846 = vld [vmem:[%s239 + $0x1110] sm:$0xff]
        %v847 = vld [vmem:[%s239 + $0x1118] sm:$0xff]
        %v848 = vld [vmem:[%s239 + $0x1120] sm:$0xff]
        %v849 = vld [vmem:[%s239 + $0x1128] sm:$0xff]
        %v850 = vld [vmem:[%s239 + $0x1130] sm:$0xff]
        %v851 = vld [vmem:[%s239 + $0x1138] sm:$0xff]
        %v852 = vld [vmem:[%s239 + $0x1140] sm:$0xff]
        %v853 = vld [vmem:[%s239 + $0x1148] sm:$0xff]
        %v854 = vld [vmem:[%s239 + $0x1150] sm:$0xff]
        %v855 = vld [vmem:[%s239 + $0x1158] sm:$0xff]
        %v856 = vld [vmem:[%s239 + $0x1160] sm:$0xff]
        %v857 = vld [vmem:[%s239 + $0x1168] sm:$0xff]
        %v858 = vld [vmem:[%s239 + $0x1170] sm:$0xff]
        %v859 = vld [vmem:[%s239 + $0x1178] sm:$0xff]
        %v860 = vld [vmem:[%s239 + $0x1180] sm:$0xff]
        %v861 = vld [vmem:[%s239 + $0x1188] sm:$0xff]
        %v862 = vld [vmem:[%s239 + $0x1190] sm:$0xff]
        %v863 = vld [vmem:[%s239 + $0x1198] sm:$0xff]
        %v864 = vld [vmem:[%s239 + $0x11a0] sm:$0xff]
        %v865 = vld [vmem:[%s239 + $0x11a8] sm:$0xff]
        %v866 = vld [vmem:[%s239 + $0x11b0] sm:$0xff]
        %v867 = vld [vmem:[%s239 + $0x11b8] sm:$0xff]
        %v868 = vld [vmem:[%s239 + $0x11c0] sm:$0xff]
        %v869 = vld [vmem:[%s239 + $0x11c8] sm:$0xff]
        %v870 = vld [vmem:[%s239 + $0x11d0] sm:$0xff]
        %v871 = vld [vmem:[%s239 + $0x11d8] sm:$0xff]
        %v872 = vld [vmem:[%s239 + $0x11e0] sm:$0xff]
        %v873 = vld [vmem:[%s239 + $0x11e8] sm:$0xff]
        %v874 = vld [vmem:[%s239 + $0x11f0] sm:$0xff]
        %v875 = vld [vmem:[%s239 + $0x11f8] sm:$0xff]
        %v876 = vld [vmem:[%s239 + $0x1200] sm:$0xff]
        %v877 = vld [vmem:[%s239 + $0x1208] sm:$0xff]
        %v878 = vld [vmem:[%s239 + $0x1210] sm:$0xff]
        %v879 = vld [vmem:[%s239 + $0x1218] sm:$0xff]
        %v880 = vld [vmem:[%s239 + $0x1220] sm:$0xff]
        %v881 = vld [vmem:[%s239 + $0x1228] sm:$0xff]
        %v882 = vld [vmem:[%s239 + $0x1230] sm:$0xff]
        %v883 = vld [vmem:[%s239 + $0x1238] sm:$0xff]
        %v884 = vld [vmem:[%s239 + $0x1240] sm:$0xff]
        %v885 = vld [vmem:[%s239 + $0x1248] sm:$0xff]
        %v886 = vld [vmem:[%s239 + $0x1250] sm:$0xff]
        %v887 = vld [vmem:[%s239 + $0x1258] sm:$0xff]
        %v888 = vld [vmem:[%s239 + $0x1260] sm:$0xff]
        %v889 = vld [vmem:[%s239 + $0x1268] sm:$0xff]
        %v890 = vld [vmem:[%s239 + $0x1270] sm:$0xff]
        %v891 = vld [vmem:[%s239 + $0x1278] sm:$0xff]
        %v892 = vld [vmem:[%s239 + $0x1280] sm:$0xff]
        %v893 = vld [vmem:[%s239 + $0x1288] sm:$0xff]
        %v894 = vld [vmem:[%s239 + $0x1290] sm:$0xff]
        %v895 = vld [vmem:[%s239 + $0x1298] sm:$0xff]
        %v896 = vld [vmem:[%s239 + $0x12a0] sm:$0xff]
        %v897 = vld [vmem:[%s239 + $0x12a8] sm:$0xff]
        %v898 = vld [vmem:[%s239 + $0x12b0] sm:$0xff]
        %v899 = vld [vmem:[%s239 + $0x12b8] sm:$0xff]
        %v900 = vld [vmem:[%s239 + $0x12c0] sm:$0xff]
        %v901 = vld [vmem:[%s239 + $0x12c8] sm:$0xff]
        %v902 = vld [vmem:[%s239 + $0x12d0] sm:$0xff]
        %v903 = vld [vmem:[%s239 + $0x12d8] sm:$0xff]
        %v904 = vld [vmem:[%s239 + $0x12e0] sm:$0xff]
        %v905 = vld [vmem:[%s239 + $0x12e8] sm:$0xff]
        %v906 = vld [vmem:[%s239 + $0x12f0] sm:$0xff]
        %v907 = vld [vmem:[%s239 + $0x12f8] sm:$0xff]
        %v908 = vld [vmem:[%s239 + $0x1300] sm:$0xff]
        %v909 = vld [vmem:[%s239 + $0x1308] sm:$0xff]
        %v910 = vld [vmem:[%s239 + $0x1310] sm:$0xff]
        %v911 = vld [vmem:[%s239 + $0x1318] sm:$0xff]
        %v912 = vld [vmem:[%s239 + $0x1320] sm:$0xff]
        %v913 = vld [vmem:[%s239 + $0x1328] sm:$0xff]
        %v914 = vld [vmem:[%s239 + $0x1330] sm:$0xff]
        %v915 = vld [vmem:[%s239 + $0x1338] sm:$0xff]
        %v916 = vld [vmem:[%s239 + $0x1340] sm:$0xff]
        %v917 = vld [vmem:[%s239 + $0x1348] sm:$0xff]
        %v918 = vld [vmem:[%s239 + $0x1350] sm:$0xff]
        %v919 = vld [vmem:[%s239 + $0x1358] sm:$0xff]
        %v920 = vld [vmem:[%s239 + $0x1360] sm:$0xff]
        %v921 = vld [vmem:[%s239 + $0x1368] sm:$0xff]
        %v922 = vld [vmem:[%s239 + $0x1370] sm:$0xff]
        %v923 = vld [vmem:[%s239 + $0x1378] sm:$0xff]
        %v924 = vld [vmem:[%s239 + $0x1380] sm:$0xff]
        %v925 = vld [vmem:[%s239 + $0x1388] sm:$0xff]
        %v926 = vld [vmem:[%s239 + $0x1390] sm:$0xff]
        %v927 = vld [vmem:[%s239 + $0x1398] sm:$0xff]
        %v928 = vld [vmem:[%s239 + $0x13a0] sm:$0xff]
        %v929 = vld [vmem:[%s239 + $0x13a8] sm:$0xff]
        %v930 = vld [vmem:[%s239 + $0x13b0] sm:$0xff]
        %v931 = vld [vmem:[%s239 + $0x13b8] sm:$0xff]
        %v932 = vld [vmem:[%s239 + $0x13c0] sm:$0xff]
        %v933 = vld [vmem:[%s239 + $0x13c8] sm:$0xff]
        %v934 = vld [vmem:[%s239 + $0x13d0] sm:$0xff]
        %v935 = vld [vmem:[%s239 + $0x13d8] sm:$0xff]
        %v936 = vld [vmem:[%s239 + $0x13e0] sm:$0xff]
        %v937 = vld [vmem:[%s239 + $0x13e8] sm:$0xff]
        %v938 = vld [vmem:[%s239 + $0x13f0] sm:$0xff]
        %v939 = vld [vmem:[%s239 + $0x13f8] sm:$0xff]
        %v940 = vld [vmem:[%s239 + $0x1400] sm:$0xff]
        %v941 = vld [vmem:[%s239 + $0x1408] sm:$0xff]
        %v942 = vld [vmem:[%s239 + $0x1410] sm:$0xff]
        %v943 = vld [vmem:[%s239 + $0x1418] sm:$0xff]
        %v944 = vld [vmem:[%s239 + $0x1420] sm:$0xff]
        %v945 = vld [vmem:[%s239 + $0x1428] sm:$0xff]
        %v946 = vld [vmem:[%s239 + $0x1430] sm:$0xff]
        %v947 = vld [vmem:[%s239 + $0x1438] sm:$0xff]
        %v948 = vld [vmem:[%s239 + $0x1440] sm:$0xff]
        %v949 = vld [vmem:[%s239 + $0x1448] sm:$0xff]
        %v950 = vld [vmem:[%s239 + $0x1450] sm:$0xff]
        %v951 = vld [vmem:[%s239 + $0x1458] sm:$0xff]
        %v952 = vld [vmem:[%s239 + $0x1460] sm:$0xff]
        %v953 = vld [vmem:[%s239 + $0x1468] sm:$0xff]
        %v954 = vld [vmem:[%s239 + $0x1470] sm:$0xff]
        %v955 = vld [vmem:[%s239 + $0x1478] sm:$0xff]
        %v956 = vld [vmem:[%s239 + $0x1480] sm:$0xff]
        %v957 = vld [vmem:[%s239 + $0x1488] sm:$0xff]
        %v958 = vld [vmem:[%s239 + $0x1490] sm:$0xff]
        %v959 = vld [vmem:[%s239 + $0x1498] sm:$0xff]
        %v960 = vld [vmem:[%s239 + $0x14a0] sm:$0xff]
        %v961 = vld [vmem:[%s239 + $0x14a8] sm:$0xff]
        %v962 = vld [vmem:[%s239 + $0x14b0] sm:$0xff]
        %v963 = vld [vmem:[%s239 + $0x14b8] sm:$0xff]
        %v964 = vld [vmem:[%s239 + $0x14c0] sm:$0xff]
        %v965 = vld [vmem:[%s239 + $0x14c8] sm:$0xff]
        %v966 = vld [vmem:[%s239 + $0x14d0] sm:$0xff]
        %v967 = vld [vmem:[%s239 + $0x14d8] sm:$0xff]
        %v968 = vld [vmem:[%s239 + $0x14e0] sm:$0xff]
        %v969 = vld [vmem:[%s239 + $0x14e8] sm:$0xff]
        %v970 = vld [vmem:[%s239 + $0x14f0] sm:$0xff]
        %v971 = vld [vmem:[%s239 + $0x14f8] sm:$0xff]
        %v972 = vld [vmem:[%s239 + $0x1500] sm:$0xff]
        %v973 = vld [vmem:[%s239 + $0x1508] sm:$0xff]
        %v974 = vld [vmem:[%s239 + $0x1510] sm:$0xff]
        %v975 = vld [vmem:[%s239 + $0x1518] sm:$0xff]
        %v976 = vld [vmem:[%s239 + $0x1520] sm:$0xff]
        %v977 = vld [vmem:[%s239 + $0x1528] sm:$0xff]
        %v978 = vld [vmem:[%s239 + $0x1530] sm:$0xff]
        %v979 = vld [vmem:[%s239 + $0x1538] sm:$0xff]
        %v980 = vld [vmem:[%s239 + $0x1540] sm:$0xff]
        %v981 = vld [vmem:[%s239 + $0x1548] sm:$0xff]
        %v982 = vld [vmem:[%s239 + $0x1550] sm:$0xff]
        %v983 = vld [vmem:[%s239 + $0x1558] sm:$0xff]
        %v984 = vld [vmem:[%s239 + $0x1560] sm:$0xff]
        %v985 = vld [vmem:[%s239 + $0x1568] sm:$0xff]
        %v986 = vld [vmem:[%s239 + $0x1570] sm:$0xff]
        %v987 = vld [vmem:[%s239 + $0x1578] sm:$0xff]
        %v988 = vld [vmem:[%s239 + $0x1580] sm:$0xff]
        %v989 = vld [vmem:[%s239 + $0x1588] sm:$0xff]
        %v990 = vld [vmem:[%s239 + $0x1590] sm:$0xff]
        %v991 = vld [vmem:[%s239 + $0x1598] sm:$0xff]
        %v992 = vld [vmem:[%s239 + $0x15a0] sm:$0xff]
        %v993 = vld [vmem:[%s239 + $0x15a8] sm:$0xff]
        %v994 = vld [vmem:[%s239 + $0x15b0] sm:$0xff]
        %v995 = vld [vmem:[%s239 + $0x15b8] sm:$0xff]
        %v996 = vld [vmem:[%s239 + $0x15c0] sm:$0xff]
        %v997 = vld [vmem:[%s239 + $0x15c8] sm:$0xff]
        %v998 = vld [vmem:[%s239 + $0x15d0] sm:$0xff]
        %v999 = vld [vmem:[%s239 + $0x15d8] sm:$0xff]
        %v1000 = vld [vmem:[%s239 + $0x15e0] sm:$0xff]
        %v1001 = vld [vmem:[%s239 + $0x15e8] sm:$0xff]
        %v1002 = vld [vmem:[%s239 + $0x15f0] sm:$0xff]
        %v1003 = vld [vmem:[%s239 + $0x15f8] sm:$0xff]
        %v1004 = vld [vmem:[%s239 + $0x1600] sm:$0xff]
        %v1005 = vld [vmem:[%s239 + $0x1608] sm:$0xff]
        %v1006 = vld [vmem:[%s239 + $0x1610] sm:$0xff]
        %v1007 = vld [vmem:[%s239 + $0x1618] sm:$0xff]
        %v1008 = vld [vmem:[%s239 + $0x1620] sm:$0xff]
        %v1009 = vld [vmem:[%s239 + $0x1628] sm:$0xff]
        %v1010 = vld [vmem:[%s239 + $0x1630] sm:$0xff]
        %v1011 = vld [vmem:[%s239 + $0x1638] sm:$0xff]
        %v1012 = vld [vmem:[%s239 + $0x1640] sm:$0xff]
        %v1013 = vld [vmem:[%s239 + $0x1648] sm:$0xff]
        %v1014 = vld [vmem:[%s239 + $0x1650] sm:$0xff]
        %v1015 = vld [vmem:[%s239 + $0x1658] sm:$0xff]
        %v1016 = vld [vmem:[%s239 + $0x1660] sm:$0xff]
        %v1017 = vld [vmem:[%s239 + $0x1668] sm:$0xff]
        %v1018 = vld [vmem:[%s239 + $0x1670] sm:$0xff]
        %v1019 = vld [vmem:[%s239 + $0x1678] sm:$0xff]
        %v1020 = vld [vmem:[%s239 + $0x1680] sm:$0xff]
        %v1021 = vld [vmem:[%s239 + $0x1688] sm:$0xff]
        %v1022 = vld [vmem:[%s239 + $0x1690] sm:$0xff]
        %v1023 = vld [vmem:[%s239 + $0x1698] sm:$0xff]
        %v1024 = vld [vmem:[%s239 + $0x16a0] sm:$0xff]
        %v1025 = vld [vmem:[%s239 + $0x16a8] sm:$0xff]
        %v1026 = vld [vmem:[%s239 + $0x16b0] sm:$0xff]
        %v1027 = vld [vmem:[%s239 + $0x16b8] sm:$0xff]
        %v1028 = vld [vmem:[%s239 + $0x16c0] sm:$0xff]
        %v1029 = vld [vmem:[%s239 + $0x16c8] sm:$0xff]
        %v1030 = vld [vmem:[%s239 + $0x16d0] sm:$0xff]
        %v1031 = vld [vmem:[%s239 + $0x16d8] sm:$0xff]
        %v1032 = vld [vmem:[%s239 + $0x16e0] sm:$0xff]
        %v1033 = vld [vmem:[%s239 + $0x16e8] sm:$0xff]
        %v1034 = vld [vmem:[%s239 + $0x16f0] sm:$0xff]
        %v1035 = vld [vmem:[%s239 + $0x16f8] sm:$0xff]
        %v1036 = vld [vmem:[%s239 + $0x1700] sm:$0xff]
        %v1037 = vld [vmem:[%s239 + $0x1708] sm:$0xff]
        %v1038 = vld [vmem:[%s239 + $0x1710] sm:$0xff]
        %v1039 = vld [vmem:[%s239 + $0x1718] sm:$0xff]
        %v1040 = vld [vmem:[%s239 + $0x1720] sm:$0xff]
        %v1041 = vld [vmem:[%s239 + $0x1728] sm:$0xff]
        %v1042 = vld [vmem:[%s239 + $0x1730] sm:$0xff]
        %v1043 = vld [vmem:[%s239 + $0x1738] sm:$0xff]
        %v1044 = vld [vmem:[%s239 + $0x1740] sm:$0xff]
        %v1045 = vld [vmem:[%s239 + $0x1748] sm:$0xff]
        %v1046 = vld [vmem:[%s239 + $0x1750] sm:$0xff]
        %v1047 = vld [vmem:[%s239 + $0x1758] sm:$0xff]
        %v1048 = vld [vmem:[%s239 + $0x1760] sm:$0xff]
        %v1049 = vld [vmem:[%s239 + $0x1768] sm:$0xff]
        %v1050 = vld [vmem:[%s239 + $0x1770] sm:$0xff]
        %v1051 = vld [vmem:[%s239 + $0x1778] sm:$0xff]
        %v1052 = vld [vmem:[%s239 + $0x1780] sm:$0xff]
        %v1053 = vld [vmem:[%s239 + $0x1788] sm:$0xff]
        %v1054 = vld [vmem:[%s239 + $0x1790] sm:$0xff]
        %v1055 = vld [vmem:[%s239 + $0x1798] sm:$0xff]
        %v1056 = vld [vmem:[%s239 + $0x17a0] sm:$0xff]
        %v1057 = vld [vmem:[%s239 + $0x17a8] sm:$0xff]
        %v1058 = vld [vmem:[%s239 + $0x17b0] sm:$0xff]
        %v1059 = vld [vmem:[%s239 + $0x17b8] sm:$0xff]
        %v1060 = vld [vmem:[%s239 + $0x17c0] sm:$0xff]
        %v1061 = vld [vmem:[%s239 + $0x17c8] sm:$0xff]
        %v1062 = vld [vmem:[%s239 + $0x17d0] sm:$0xff]
        %v1063 = vld [vmem:[%s239 + $0x17d8] sm:$0xff]
        %v1064 = vld [vmem:[%s239 + $0x17e0] sm:$0xff]
        %v1065 = vld [vmem:[%s239 + $0x17e8] sm:$0xff]
        %v1066 = vld [vmem:[%s239 + $0x17f0] sm:$0xff]
        %v1067 = vld [vmem:[%s239 + $0x17f8] sm:$0xff]
        %v1068 = vld [vmem:[%s239 + $0x1800] sm:$0xff]
        %v1069 = vld [vmem:[%s239 + $0x1808] sm:$0xff]
        %v1070 = vld [vmem:[%s239 + $0x1810] sm:$0xff]
        %v1071 = vld [vmem:[%s239 + $0x1818] sm:$0xff]
        %v1072 = vld [vmem:[%s239 + $0x1820] sm:$0xff]
        %v1073 = vld [vmem:[%s239 + $0x1828] sm:$0xff]
        %v1074 = vld [vmem:[%s239 + $0x1830] sm:$0xff]
        %v1075 = vld [vmem:[%s239 + $0x1838] sm:$0xff]
        %v1076 = vld [vmem:[%s239 + $0x1840] sm:$0xff]
        %v1077 = vld [vmem:[%s239 + $0x1848] sm:$0xff]
        %v1078 = vld [vmem:[%s239 + $0x1850] sm:$0xff]
        %v1079 = vld [vmem:[%s239 + $0x1858] sm:$0xff]
        %v1080 = vld [vmem:[%s239 + $0x1860] sm:$0xff]
        %v1081 = vld [vmem:[%s239 + $0x1868] sm:$0xff]
        %v1082 = vld [vmem:[%s239 + $0x1870] sm:$0xff]
        %v1083 = vld [vmem:[%s239 + $0x1878] sm:$0xff]
        %v1084 = vld [vmem:[%s239 + $0x1880] sm:$0xff]
        %v1085 = vld [vmem:[%s239 + $0x1888] sm:$0xff]
        %v1086 = vld [vmem:[%s239 + $0x1890] sm:$0xff]
        %v1087 = vld [vmem:[%s239 + $0x1898] sm:$0xff]
        %v1088 = vld [vmem:[%s239 + $0x18a0] sm:$0xff]
        %v1089 = vld [vmem:[%s239 + $0x18a8] sm:$0xff]
        %v1090 = vld [vmem:[%s239 + $0x18b0] sm:$0xff]
        %v1091 = vld [vmem:[%s239 + $0x18b8] sm:$0xff]
        %v1092 = vld [vmem:[%s239 + $0x18c0] sm:$0xff]
        %v1093 = vld [vmem:[%s239 + $0x18c8] sm:$0xff]
        %v1094 = vld [vmem:[%s239 + $0x18d0] sm:$0xff]
        %v1095 = vld [vmem:[%s239 + $0x18d8] sm:$0xff]
        %v1096 = vld [vmem:[%s239 + $0x18e0] sm:$0xff]
        %v1097 = vld [vmem:[%s239 + $0x18e8] sm:$0xff]
        %v1098 = vld [vmem:[%s239 + $0x18f0] sm:$0xff]
        %v1099 = vld [vmem:[%s239 + $0x18f8] sm:$0xff]
        %v1100 = vld [vmem:[%s239 + $0x1900] sm:$0xff]
        %v1101 = vld [vmem:[%s239 + $0x1908] sm:$0xff]
        %v1102 = vld [vmem:[%s239 + $0x1910] sm:$0xff]
        %v1103 = vld [vmem:[%s239 + $0x1918] sm:$0xff]
        %v1104 = vld [vmem:[%s239 + $0x1920] sm:$0xff]
        %v1105 = vld [vmem:[%s239 + $0x1928] sm:$0xff]
        %v1106 = vld [vmem:[%s239 + $0x1930] sm:$0xff]
        %v1107 = vld [vmem:[%s239 + $0x1938] sm:$0xff]
        %v1108 = vld [vmem:[%s239 + $0x1940] sm:$0xff]
        %v1109 = vld [vmem:[%s239 + $0x1948] sm:$0xff]
        %v1110 = vld [vmem:[%s239 + $0x1950] sm:$0xff]
        %v1111 = vld [vmem:[%s239 + $0x1958] sm:$0xff]
        %v1112 = vld [vmem:[%s239 + $0x1960] sm:$0xff]
        %v1113 = vld [vmem:[%s239 + $0x1968] sm:$0xff]
        %v1114 = vld [vmem:[%s239 + $0x1970] sm:$0xff]
        %v1115 = vld [vmem:[%s239 + $0x1978] sm:$0xff]
        %v1116 = vld [vmem:[%s239 + $0x1980] sm:$0xff]
        %v1117 = vld [vmem:[%s239 + $0x1988] sm:$0xff]
        %v1118 = vld [vmem:[%s239 + $0x1990] sm:$0xff]
        %v1119 = vld [vmem:[%s239 + $0x1998] sm:$0xff]
        %v1120 = vld [vmem:[%s239 + $0x19a0] sm:$0xff]
        %v1121 = vld [vmem:[%s239 + $0x19a8] sm:$0xff]
        %v1122 = vld [vmem:[%s239 + $0x19b0] sm:$0xff]
        %v1123 = vld [vmem:[%s239 + $0x19b8] sm:$0xff]
        %v1124 = vld [vmem:[%s239 + $0x19c0] sm:$0xff]
        %v1125 = vld [vmem:[%s239 + $0x19c8] sm:$0xff]
        %v1126 = vld [vmem:[%s239 + $0x19d0] sm:$0xff]
        %v1127 = vld [vmem:[%s239 + $0x19d8] sm:$0xff]
        %v1128 = vld [vmem:[%s239 + $0x19e0] sm:$0xff]
        %v1129 = vld [vmem:[%s239 + $0x19e8] sm:$0xff]
        %v1130 = vld [vmem:[%s239 + $0x19f0] sm:$0xff]
        %v1131 = vld [vmem:[%s239 + $0x19f8] sm:$0xff]
        %v1132 = vld [vmem:[%s239 + $0x1a00] sm:$0xff]
        %v1133 = vld [vmem:[%s239 + $0x1a08] sm:$0xff]
        %v1134 = vld [vmem:[%s239 + $0x1a10] sm:$0xff]
        %v1135 = vld [vmem:[%s239 + $0x1a18] sm:$0xff]
        %v1136 = vld [vmem:[%s239 + $0x1a20] sm:$0xff]
        %v1137 = vld [vmem:[%s239 + $0x1a28] sm:$0xff]
        %v1138 = vld [vmem:[%s239 + $0x1a30] sm:$0xff]
        %v1139 = vld [vmem:[%s239 + $0x1a38] sm:$0xff]
        %v1140 = vld [vmem:[%s239 + $0x1a40] sm:$0xff]
        %v1141 = vld [vmem:[%s239 + $0x1a48] sm:$0xff]
        %v1142 = vld [vmem:[%s239 + $0x1a50] sm:$0xff]
        %v1143 = vld [vmem:[%s239 + $0x1a58] sm:$0xff]
        %v1144 = vld [vmem:[%s239 + $0x1a60] sm:$0xff]
        %v1145 = vld [vmem:[%s239 + $0x1a68] sm:$0xff]
        %v1146 = vld [vmem:[%s239 + $0x1a70] sm:$0xff]
        %v1147 = vld [vmem:[%s239 + $0x1a78] sm:$0xff]
        %v1148 = vld [vmem:[%s239 + $0x1a80] sm:$0xff]
        %v1149 = vld [vmem:[%s239 + $0x1a88] sm:$0xff]
        %v1150 = vld [vmem:[%s239 + $0x1a90] sm:$0xff]
        %v1151 = vld [vmem:[%s239 + $0x1a98] sm:$0xff]
        %v1152 = vld [vmem:[%s239 + $0x1aa0] sm:$0xff]
        %v1153 = vld [vmem:[%s239 + $0x1aa8] sm:$0xff]
        %v1154 = vld [vmem:[%s239 + $0x1ab0] sm:$0xff]
        %v1155 = vld [vmem:[%s239 + $0x1ab8] sm:$0xff]
        %v1156 = vld [vmem:[%s239 + $0x1ac0] sm:$0xff]
        %v1157 = vld [vmem:[%s239 + $0x1ac8] sm:$0xff]
        %v1158 = vld [vmem:[%s239 + $0x1ad0] sm:$0xff]
        %v1159 = vld [vmem:[%s239 + $0x1ad8] sm:$0xff]
        %v1160 = vld [vmem:[%s239 + $0x1ae0] sm:$0xff]
        %v1161 = vld [vmem:[%s239 + $0x1ae8] sm:$0xff]
        %v1162 = vld [vmem:[%s239 + $0x1af0] sm:$0xff]
        %v1163 = vld [vmem:[%s239 + $0x1af8] sm:$0xff]
        %v1164 = vld [vmem:[%s239 + $0x1b00] sm:$0xff]
        %v1165 = vld [vmem:[%s239 + $0x1b08] sm:$0xff]
        %v1166 = vld [vmem:[%s239 + $0x1b10] sm:$0xff]
        %v1167 = vld [vmem:[%s239 + $0x1b18] sm:$0xff]
        %v1168 = vld [vmem:[%s239 + $0x1b20] sm:$0xff]
        %v1169 = vld [vmem:[%s239 + $0x1b28] sm:$0xff]
        %v1170 = vld [vmem:[%s239 + $0x1b30] sm:$0xff]
        %v1171 = vld [vmem:[%s239 + $0x1b38] sm:$0xff]
        %v1172 = vld [vmem:[%s239 + $0x1b40] sm:$0xff]
        %v1173 = vld [vmem:[%s239 + $0x1b48] sm:$0xff]
        %v1174 = vld [vmem:[%s239 + $0x1b50] sm:$0xff]
        %v1175 = vld [vmem:[%s239 + $0x1b58] sm:$0xff]
        %v1176 = vld [vmem:[%s239 + $0x1b60] sm:$0xff]
        %v1177 = vld [vmem:[%s239 + $0x1b68] sm:$0xff]
        %v1178 = vld [vmem:[%s239 + $0x1b70] sm:$0xff]
        %v1179 = vld [vmem:[%s239 + $0x1b78] sm:$0xff]
        %v1180 = vld [vmem:[%s239 + $0x1b80] sm:$0xff]
        %v1181 = vld [vmem:[%s239 + $0x1b88] sm:$0xff]
        %v1182 = vld [vmem:[%s239 + $0x1b90] sm:$0xff]
        %v1183 = vld [vmem:[%s239 + $0x1b98] sm:$0xff]
        %v1184 = vld [vmem:[%s239 + $0x1ba0] sm:$0xff]
        %v1185 = vld [vmem:[%s239 + $0x1ba8] sm:$0xff]
        %v1186 = vld [vmem:[%s239 + $0x1bb0] sm:$0xff]
        %v1187 = vld [vmem:[%s239 + $0x1bb8] sm:$0xff]
        %v1188 = vld [vmem:[%s239 + $0x1bc0] sm:$0xff]
        %v1189 = vld [vmem:[%s239 + $0x1bc8] sm:$0xff]
        %v1190 = vld [vmem:[%s239 + $0x1bd0] sm:$0xff]
        %v1191 = vld [vmem:[%s239 + $0x1bd8] sm:$0xff]
        %v1192 = vld [vmem:[%s239 + $0x1be0] sm:$0xff]
        %v1193 = vld [vmem:[%s239 + $0x1be8] sm:$0xff]
        %v1194 = vld [vmem:[%s239 + $0x1bf0] sm:$0xff]
        %v1195 = vld [vmem:[%s239 + $0x1bf8] sm:$0xff]
        %v1196 = vld [vmem:[%s239 + $0x1c00] sm:$0xff]
        %v1197 = vld [vmem:[%s239 + $0x1c08] sm:$0xff]
        %v1198 = vld [vmem:[%s239 + $0x1c10] sm:$0xff]
        %v1199 = vld [vmem:[%s239 + $0x1c18] sm:$0xff]
        %v1200 = vld [vmem:[%s239 + $0x1c20] sm:$0xff]
        %v1201 = vld [vmem:[%s239 + $0x1c28] sm:$0xff]
        %v1202 = vld [vmem:[%s239 + $0x1c30] sm:$0xff]
        %v1203 = vld [vmem:[%s239 + $0x1c38] sm:$0xff]
        %v1204 = vld [vmem:[%s239 + $0x1c40] sm:$0xff]
        %v1205 = vld [vmem:[%s239 + $0x1c48] sm:$0xff]
        %v1206 = vld [vmem:[%s239 + $0x1c50] sm:$0xff]
        %v1207 = vld [vmem:[%s239 + $0x1c58] sm:$0xff]
        %v1208 = vld [vmem:[%s239 + $0x1c60] sm:$0xff]
        %v1209 = vld [vmem:[%s239 + $0x1c68] sm:$0xff]
        %v1210 = vld [vmem:[%s239 + $0x1c70] sm:$0xff]
        %v1211 = vld [vmem:[%s239 + $0x1c78] sm:$0xff]
        %v1212 = vld [vmem:[%s239 + $0x1c80] sm:$0xff]
        %v1213 = vld [vmem:[%s239 + $0x1c88] sm:$0xff]
        %v1214 = vld [vmem:[%s239 + $0x1c90] sm:$0xff]
        %v1215 = vld [vmem:[%s239 + $0x1c98] sm:$0xff]
        %v1216 = vld [vmem:[%s239 + $0x1ca0] sm:$0xff]
        %v1217 = vld [vmem:[%s239 + $0x1ca8] sm:$0xff]
        %v1218 = vld [vmem:[%s239 + $0x1cb0] sm:$0xff]
        %v1219 = vld [vmem:[%s239 + $0x1cb8] sm:$0xff]
        %v1220 = vld [vmem:[%s239 + $0x1cc0] sm:$0xff]
        %v1221 = vld [vmem:[%s239 + $0x1cc8] sm:$0xff]
        %v1222 = vld [vmem:[%s239 + $0x1cd0] sm:$0xff]
        %v1223 = vld [vmem:[%s239 + $0x1cd8] sm:$0xff]
        %v1224 = vld [vmem:[%s239 + $0x1ce0] sm:$0xff]
        %v1225 = vld [vmem:[%s239 + $0x1ce8] sm:$0xff]
        %v1226 = vld [vmem:[%s239 + $0x1cf0] sm:$0xff]
        %v1227 = vld [vmem:[%s239 + $0x1cf8] sm:$0xff]
        %v1228 = vld [vmem:[%s239 + $0x1d00] sm:$0xff]
        %v1229 = vld [vmem:[%s239 + $0x1d08] sm:$0xff]
        %v1230 = vld [vmem:[%s239 + $0x1d10] sm:$0xff]
        %v1231 = vld [vmem:[%s239 + $0x1d18] sm:$0xff]
        %v1232 = vld [vmem:[%s239 + $0x1d20] sm:$0xff]
        %v1233 = vld [vmem:[%s239 + $0x1d28] sm:$0xff]
        %v1234 = vld [vmem:[%s239 + $0x1d30] sm:$0xff]
        %v1235 = vld [vmem:[%s239 + $0x1d38] sm:$0xff]
        %v1236 = vld [vmem:[%s239 + $0x1d40] sm:$0xff]
        %v1237 = vld [vmem:[%s239 + $0x1d48] sm:$0xff]
        %v1238 = vld [vmem:[%s239 + $0x1d50] sm:$0xff]
        %v1239 = vld [vmem:[%s239 + $0x1d58] sm:$0xff]
        %v1240 = vld [vmem:[%s239 + $0x1d60] sm:$0xff]
        %v1241 = vld [vmem:[%s239 + $0x1d68] sm:$0xff]
        %v1242 = vld [vmem:[%s239 + $0x1d70] sm:$0xff]
        %v1243 = vld [vmem:[%s239 + $0x1d78] sm:$0xff]
        %v1244 = vld [vmem:[%s239 + $0x1d80] sm:$0xff]
        %v1245 = vld [vmem:[%s239 + $0x1d88] sm:$0xff]
        %v1246 = vld [vmem:[%s239 + $0x1d90] sm:$0xff]
        %v1247 = vld [vmem:[%s239 + $0x1d98] sm:$0xff]
        %v1248 = vld [vmem:[%s239 + $0x1da0] sm:$0xff]
        %v1249 = vld [vmem:[%s239 + $0x1da8] sm:$0xff]
        %v1250 = vld [vmem:[%s239 + $0x1db0] sm:$0xff]
        %v1251 = vld [vmem:[%s239 + $0x1db8] sm:$0xff]
        %v1252 = vld [vmem:[%s239 + $0x1dc0] sm:$0xff]
        %v1253 = vld [vmem:[%s239 + $0x1dc8] sm:$0xff]
        %v1254 = vld [vmem:[%s239 + $0x1dd0] sm:$0xff]
        %v1255 = vld [vmem:[%s239 + $0x1dd8] sm:$0xff]
        %v1256 = vld [vmem:[%s239 + $0x1de0] sm:$0xff]
        %v1257 = vld [vmem:[%s239 + $0x1de8] sm:$0xff]
        %v1258 = vld [vmem:[%s239 + $0x1df0] sm:$0xff]
        %v1259 = vld [vmem:[%s239 + $0x1df8] sm:$0xff]
        %v1260 = vld [vmem:[%s239 + $0x1e00] sm:$0xff]
        %v1261 = vld [vmem:[%s239 + $0x1e08] sm:$0xff]
        %v1262 = vld [vmem:[%s239 + $0x1e10] sm:$0xff]
        %v1263 = vld [vmem:[%s239 + $0x1e18] sm:$0xff]
        %v1264 = vld [vmem:[%s239 + $0x1e20] sm:$0xff]
        %v1265 = vld [vmem:[%s239 + $0x1e28] sm:$0xff]
        %v1266 = vld [vmem:[%s239 + $0x1e30] sm:$0xff]
        %v1267 = vld [vmem:[%s239 + $0x1e38] sm:$0xff]
        %v1268 = vld [vmem:[%s239 + $0x1e40] sm:$0xff]
        %v1269 = vld [vmem:[%s239 + $0x1e48] sm:$0xff]
        %v1270 = vld [vmem:[%s239 + $0x1e50] sm:$0xff]
        %v1271 = vld [vmem:[%s239 + $0x1e58] sm:$0xff]
        %v1272 = vld [vmem:[%s239 + $0x1e60] sm:$0xff]
        %v1273 = vld [vmem:[%s239 + $0x1e68] sm:$0xff]
        %v1274 = vld [vmem:[%s239 + $0x1e70] sm:$0xff]
        %v1275 = vld [vmem:[%s239 + $0x1e78] sm:$0xff]
        %v1276 = vld [vmem:[%s239 + $0x1e80] sm:$0xff]
        %v1277 = vld [vmem:[%s239 + $0x1e88] sm:$0xff]
        %v1278 = vld [vmem:[%s239 + $0x1e90] sm:$0xff]
        %v1279 = vld [vmem:[%s239 + $0x1e98] sm:$0xff]
        %v1280 = vld [vmem:[%s239 + $0x1ea0] sm:$0xff]
        %v1281 = vld [vmem:[%s239 + $0x1ea8] sm:$0xff]
        %v1282 = vld [vmem:[%s239 + $0x1eb0] sm:$0xff]
        %v1283 = vld [vmem:[%s239 + $0x1eb8] sm:$0xff]
        %v1284 = vld [vmem:[%s239 + $0x1ec0] sm:$0xff]
        %v1285 = vld [vmem:[%s239 + $0x1ec8] sm:$0xff]
        %v1286 = vld [vmem:[%s239 + $0x1ed0] sm:$0xff]
        %v1287 = vld [vmem:[%s239 + $0x1ed8] sm:$0xff]
        %v1288 = vld [vmem:[%s239 + $0x1ee0] sm:$0xff]
        %v1289 = vld [vmem:[%s239 + $0x1ee8] sm:$0xff]
        %v1290 = vld [vmem:[%s239 + $0x1ef0] sm:$0xff]
        %v1291 = vld [vmem:[%s239 + $0x1ef8] sm:$0xff]
        %v1292 = vld [vmem:[%s239 + $0x1f00] sm:$0xff]
        %v1293 = vld [vmem:[%s239 + $0x1f08] sm:$0xff]
        %v1294 = vld [vmem:[%s239 + $0x1f10] sm:$0xff]
        %v1295 = vld [vmem:[%s239 + $0x1f18] sm:$0xff]
        %v1296 = vld [vmem:[%s239 + $0x1f20] sm:$0xff]
        %v1297 = vld [vmem:[%s239 + $0x1f28] sm:$0xff]
        %v1298 = vld [vmem:[%s239 + $0x1f30] sm:$0xff]
        %v1299 = vld [vmem:[%s239 + $0x1f38] sm:$0xff]
        %v1300 = vld [vmem:[%s239 + $0x1f40] sm:$0xff]
        %v1301 = vld [vmem:[%s239 + $0x1f48] sm:$0xff]
        %v1302 = vld [vmem:[%s239 + $0x1f50] sm:$0xff]
        %v1303 = vld [vmem:[%s239 + $0x1f58] sm:$0xff]
        %v1304 = vld [vmem:[%s239 + $0x1f60] sm:$0xff]
        %v1305 = vld [vmem:[%s239 + $0x1f68] sm:$0xff]
        %v1306 = vld [vmem:[%s239 + $0x1f70] sm:$0xff]
        %v1307 = vld [vmem:[%s239 + $0x1f78] sm:$0xff]
        %v1308 = vld [vmem:[%s239 + $0x1f80] sm:$0xff]
        %v1309 = vld [vmem:[%s239 + $0x1f88] sm:$0xff]
        %v1310 = vld [vmem:[%s239 + $0x1f90] sm:$0xff]
        %v1311 = vld [vmem:[%s239 + $0x1f98] sm:$0xff]
        %v1312 = vld [vmem:[%s239 + $0x1fa0] sm:$0xff]
        %v1313 = vld [vmem:[%s239 + $0x1fa8] sm:$0xff]
        %v1314 = vld [vmem:[%s239 + $0x1fb0] sm:$0xff]
        %v1315 = vld [vmem:[%s239 + $0x1fb8] sm:$0xff]
        %v1316 = vld [vmem:[%s239 + $0x1fc0] sm:$0xff]
        %v1317 = vld [vmem:[%s239 + $0x1fc8] sm:$0xff]
        %v1318 = vld [vmem:[%s239 + $0x1fd0] sm:$0xff]
        %v1319 = vld [vmem:[%s239 + $0x1fd8] sm:$0xff]
        %v1320 = vld [vmem:[%s239 + $0x1fe0] sm:$0xff]
        %v1321 = vld [vmem:[%s239 + $0x1fe8] sm:$0xff]
        %v1322 = vld [vmem:[%s239 + $0x1ff0] sm:$0xff]
        %v1323 = vld [vmem:[%s239 + $0x1ff8] sm:$0xff]
        %v1324 = vld [vmem:[%s239 + $0x2000] sm:$0xff]
        %v1325 = vld [vmem:[%s239 + $0x2008] sm:$0xff]
        %v1326 = vld [vmem:[%s239 + $0x2010] sm:$0xff]
        %v1327 = vld [vmem:[%s239 + $0x2018] sm:$0xff]
        %v1328 = vld [vmem:[%s239 + $0x2020] sm:$0xff]
        %v1329 = vld [vmem:[%s239 + $0x2028] sm:$0xff]
        %v1330 = vld [vmem:[%s239 + $0x2030] sm:$0xff]
        %v1331 = vld [vmem:[%s239 + $0x2038] sm:$0xff]
        %v1332 = vld [vmem:[%s239 + $0x2040] sm:$0xff]
        %v1333 = vld [vmem:[%s239 + $0x2048] sm:$0xff]
        %v1334 = vld [vmem:[%s239 + $0x2050] sm:$0xff]
        %v1335 = vld [vmem:[%s239 + $0x2058] sm:$0xff]
        %v1336 = vld [vmem:[%s239 + $0x2060] sm:$0xff]
        %v1337 = vld [vmem:[%s239 + $0x2068] sm:$0xff]
        %v1338 = vld [vmem:[%s239 + $0x2070] sm:$0xff]
        %v1339 = vld [vmem:[%s239 + $0x2078] sm:$0xff]
        %v1340 = vld [vmem:[%s239 + $0x2080] sm:$0xff]
        %v1341 = vld [vmem:[%s239 + $0x2088] sm:$0xff]
        %v1342 = vld [vmem:[%s239 + $0x2090] sm:$0xff]
        %v1343 = vld [vmem:[%s239 + $0x2098] sm:$0xff]
        %v1344 = vld [vmem:[%s239 + $0x20a0] sm:$0xff]
        %v1345 = vld [vmem:[%s239 + $0x20a8] sm:$0xff]
        %v1346 = vld [vmem:[%s239 + $0x20b0] sm:$0xff]
        %v1347 = vld [vmem:[%s239 + $0x20b8] sm:$0xff]
        %v1348 = vld [vmem:[%s239 + $0x20c0] sm:$0xff]
        %v1349 = vld [vmem:[%s239 + $0x20c8] sm:$0xff]
        %v1350 = vld [vmem:[%s239 + $0x20d0] sm:$0xff]
        %v1351 = vld [vmem:[%s239 + $0x20d8] sm:$0xff]
        %v1352 = vld [vmem:[%s239 + $0x20e0] sm:$0xff]
        %v1353 = vld [vmem:[%s239 + $0x20e8] sm:$0xff]
        %v1354 = vld [vmem:[%s239 + $0x20f0] sm:$0xff]
        %v1355 = vld [vmem:[%s239 + $0x20f8] sm:$0xff]
        %v1356 = vld [vmem:[%s239 + $0x2100] sm:$0xff]
        %v1357 = vld [vmem:[%s239 + $0x2108] sm:$0xff]
        %v1358 = vld [vmem:[%s239 + $0x2110] sm:$0xff]
        %v1359 = vld [vmem:[%s239 + $0x2118] sm:$0xff]
        %v1360 = vld [vmem:[%s239 + $0x2120] sm:$0xff]
        %v1361 = vld [vmem:[%s239 + $0x2128] sm:$0xff]
        %v1362 = vld [vmem:[%s239 + $0x2130] sm:$0xff]
        %v1363 = vld [vmem:[%s239 + $0x2138] sm:$0xff]
        %v1364 = vld [vmem:[%s239 + $0x2140] sm:$0xff]
        %v1365 = vld [vmem:[%s239 + $0x2148] sm:$0xff]
        %v1366 = vld [vmem:[%s239 + $0x2150] sm:$0xff]
        %v1367 = vld [vmem:[%s239 + $0x2158] sm:$0xff]
        %v1368 = vld [vmem:[%s239 + $0x2160] sm:$0xff]
        %v1369 = vld [vmem:[%s239 + $0x2168] sm:$0xff]
        %v1370 = vld [vmem:[%s239 + $0x2170] sm:$0xff]
        %v1371 = vld [vmem:[%s239 + $0x2178] sm:$0xff]
        %v1372 = vld [vmem:[%s239 + $0x2180] sm:$0xff]
        %v1373 = vld [vmem:[%s239 + $0x2188] sm:$0xff]
        %v1374 = vld [vmem:[%s239 + $0x2190] sm:$0xff]
        %v1375 = vld [vmem:[%s239 + $0x2198] sm:$0xff]
        %v1376 = vld [vmem:[%s239 + $0x21a0] sm:$0xff]
        %v1377 = vld [vmem:[%s239 + $0x21a8] sm:$0xff]
        %v1378 = vld [vmem:[%s239 + $0x21b0] sm:$0xff]
        %v1379 = vld [vmem:[%s239 + $0x21b8] sm:$0xff]
        %v1380 = vld [vmem:[%s239 + $0x21c0] sm:$0xff]
        %v1381 = vld [vmem:[%s239 + $0x21c8] sm:$0xff]
        %v1382 = vld [vmem:[%s239 + $0x21d0] sm:$0xff]
        %v1383 = vld [vmem:[%s239 + $0x21d8] sm:$0xff]
        %v1384 = vld [vmem:[%s239 + $0x21e0] sm:$0xff]
        %v1385 = vld [vmem:[%s239 + $0x21e8] sm:$0xff]
        %v1386 = vld [vmem:[%s239 + $0x21f0] sm:$0xff]
        %v1387 = vld [vmem:[%s239 + $0x21f8] sm:$0xff]
        %v1388 = vld [vmem:[%s239 + $0x2200] sm:$0xff]
        %v1389 = vld [vmem:[%s239 + $0x2208] sm:$0xff]
        %v1390 = vld [vmem:[%s239 + $0x2210] sm:$0xff]
        %v1391 = vld [vmem:[%s239 + $0x2218] sm:$0xff]
        %v1392 = vld [vmem:[%s239 + $0x2220] sm:$0xff]
        %v1393 = vld [vmem:[%s239 + $0x2228] sm:$0xff]
        %v1394 = vld [vmem:[%s239 + $0x2230] sm:$0xff]
        %v1395 = vld [vmem:[%s239 + $0x2238] sm:$0xff]
        %v1396 = vld [vmem:[%s239 + $0x2240] sm:$0xff]
        %v1397 = vld [vmem:[%s239 + $0x2248] sm:$0xff]
        %v1398 = vld [vmem:[%s239 + $0x2250] sm:$0xff]
        %v1399 = vld [vmem:[%s239 + $0x2258] sm:$0xff]
        %v1400 = vld [vmem:[%s239 + $0x2260] sm:$0xff]
        %v1401 = vld [vmem:[%s239 + $0x2268] sm:$0xff]
        %v1402 = vld [vmem:[%s239 + $0x2270] sm:$0xff]
        %v1403 = vld [vmem:[%s239 + $0x2278] sm:$0xff]
        %v1404 = vld [vmem:[%s239 + $0x2280] sm:$0xff]
        %v1405 = vld [vmem:[%s239 + $0x2288] sm:$0xff]
        %v1406 = vld [vmem:[%s239 + $0x2290] sm:$0xff]
        %v1407 = vld [vmem:[%s239 + $0x2298] sm:$0xff]
        %v1408 = vld [vmem:[%s239 + $0x22a0] sm:$0xff]
        %v1409 = vld [vmem:[%s239 + $0x22a8] sm:$0xff]
        %v1410 = vld [vmem:[%s239 + $0x22b0] sm:$0xff]
        %v1411 = vld [vmem:[%s239 + $0x22b8] sm:$0xff]
        %v1412 = vld [vmem:[%s239 + $0x22c0] sm:$0xff]
        %v1413 = vld [vmem:[%s239 + $0x22c8] sm:$0xff]
        %v1414 = vld [vmem:[%s239 + $0x22d0] sm:$0xff]
        %v1415 = vld [vmem:[%s239 + $0x22d8] sm:$0xff]
        %v1416 = vld [vmem:[%s239 + $0x22e0] sm:$0xff]
        %v1417 = vld [vmem:[%s239 + $0x22e8] sm:$0xff]
        %v1418 = vld [vmem:[%s239 + $0x22f0] sm:$0xff]
        %v1419 = vld [vmem:[%s239 + $0x22f8] sm:$0xff]
        %v1420 = vld [vmem:[%s239 + $0x2300] sm:$0xff]
        %v1421 = vld [vmem:[%s239 + $0x2308] sm:$0xff]
        %v1422 = vld [vmem:[%s239 + $0x2310] sm:$0xff]
        %v1423 = vld [vmem:[%s239 + $0x2318] sm:$0xff]
        %v1424 = vld [vmem:[%s239 + $0x2320] sm:$0xff]
        %v1425 = vld [vmem:[%s239 + $0x2328] sm:$0xff]
        %v1426 = vld [vmem:[%s239 + $0x2330] sm:$0xff]
        %v1427 = vld [vmem:[%s239 + $0x2338] sm:$0xff]
        %v1428 = vld [vmem:[%s239 + $0x2340] sm:$0xff]
        %v1429 = vld [vmem:[%s239 + $0x2348] sm:$0xff]
        %v1430 = vld [vmem:[%s239 + $0x2350] sm:$0xff]
        %v1431 = vld [vmem:[%s239 + $0x2358] sm:$0xff]
        %v1432 = vld [vmem:[%s239 + $0x2360] sm:$0xff]
        %v1433 = vld [vmem:[%s239 + $0x2368] sm:$0xff]
        %v1434 = vld [vmem:[%s239 + $0x2370] sm:$0xff]
        %v1435 = vld [vmem:[%s239 + $0x2378] sm:$0xff]
        %v1436 = vld [vmem:[%s239 + $0x2380] sm:$0xff]
        %v1437 = vld [vmem:[%s239 + $0x2388] sm:$0xff]
        %v1438 = vld [vmem:[%s239 + $0x2390] sm:$0xff]
        %v1439 = vld [vmem:[%s239 + $0x2398] sm:$0xff]
        %v1440 = vld [vmem:[%s239 + $0x23a0] sm:$0xff]
        %v1441 = vld [vmem:[%s239 + $0x23a8] sm:$0xff]
        %v1442 = vld [vmem:[%s239 + $0x23b0] sm:$0xff]
        %v1443 = vld [vmem:[%s239 + $0x23b8] sm:$0xff]
        %v1444 = vld [vmem:[%s239 + $0x23c0] sm:$0xff]
        %v1445 = vld [vmem:[%s239 + $0x23c8] sm:$0xff]
        %v1446 = vld [vmem:[%s239 + $0x23d0] sm:$0xff]
        %v1447 = vld [vmem:[%s239 + $0x23d8] sm:$0xff]
        %v1448 = vld [vmem:[%s239 + $0x23e0] sm:$0xff]
        %v1449 = vld [vmem:[%s239 + $0x23e8] sm:$0xff]
        %v1450 = vld [vmem:[%s239 + $0x23f0] sm:$0xff]
        %v1451 = vld [vmem:[%s239 + $0x23f8] sm:$0xff]
        %v1452 = vld [vmem:[%s239 + $0x2400] sm:$0xff]
        %v1453 = vld [vmem:[%s239 + $0x2408] sm:$0xff]
        %v1454 = vld [vmem:[%s239 + $0x2410] sm:$0xff]
        %v1455 = vld [vmem:[%s239 + $0x2418] sm:$0xff]
        %v1456 = vld [vmem:[%s239 + $0x2420] sm:$0xff]
        %v1457 = vld [vmem:[%s239 + $0x2428] sm:$0xff]
        %v1458 = vld [vmem:[%s239 + $0x2430] sm:$0xff]
        %v1459 = vld [vmem:[%s239 + $0x2438] sm:$0xff]
        %v1460 = vld [vmem:[%s239 + $0x2440] sm:$0xff]
        %v1461 = vld [vmem:[%s239 + $0x2448] sm:$0xff]
        %v1462 = vld [vmem:[%s239 + $0x2450] sm:$0xff]
        %v1463 = vld [vmem:[%s239 + $0x2458] sm:$0xff]
        %v1464 = vld [vmem:[%s239 + $0x2460] sm:$0xff]
        %v1465 = vld [vmem:[%s239 + $0x2468] sm:$0xff]
        %v1466 = vld [vmem:[%s239 + $0x2470] sm:$0xff]
        %v1467 = vld [vmem:[%s239 + $0x2478] sm:$0xff]
        %v1468 = vld [vmem:[%s239 + $0x2480] sm:$0xff]
        %v1469 = vld [vmem:[%s239 + $0x2488] sm:$0xff]
        %v1470 = vld [vmem:[%s239 + $0x2490] sm:$0xff]
        %v1471 = vld [vmem:[%s239 + $0x2498] sm:$0xff]
        %v1472 = vld [vmem:[%s239 + $0x24a0] sm:$0xff]
        %v1473 = vld [vmem:[%s239 + $0x24a8] sm:$0xff]
        %v1474 = vld [vmem:[%s239 + $0x24b0] sm:$0xff]
        %v1475 = vld [vmem:[%s239 + $0x24b8] sm:$0xff]
        %v1476 = vld [vmem:[%s239 + $0x24c0] sm:$0xff]
        %v1477 = vld [vmem:[%s239 + $0x24c8] sm:$0xff]
        %v1478 = vld [vmem:[%s239 + $0x24d0] sm:$0xff]
        %v1479 = vld [vmem:[%s239 + $0x24d8] sm:$0xff]
        %v1480 = vld [vmem:[%s239 + $0x24e0] sm:$0xff]
        %v1481 = vld [vmem:[%s239 + $0x24e8] sm:$0xff]
        %v1482 = vld [vmem:[%s239 + $0x24f0] sm:$0xff]
        %v1483 = vld [vmem:[%s239 + $0x24f8] sm:$0xff]
        %v1484 = vld [vmem:[%s239 + $0x2500] sm:$0xff]
        %v1485 = vld [vmem:[%s239 + $0x2508] sm:$0xff]
        %v1486 = vld [vmem:[%s239 + $0x2510] sm:$0xff]
        %v1487 = vld [vmem:[%s239 + $0x2518] sm:$0xff]
        %v1488 = vld [vmem:[%s239 + $0x2520] sm:$0xff]
        %v1489 = vld [vmem:[%s239 + $0x2528] sm:$0xff]
        %v1490 = vld [vmem:[%s239 + $0x2530] sm:$0xff]
        %v1491 = vld [vmem:[%s239 + $0x2538] sm:$0xff]
        %v1492 = vld [vmem:[%s239 + $0x2540] sm:$0xff]
        %v1493 = vld [vmem:[%s239 + $0x2548] sm:$0xff]
        %v1494 = vld [vmem:[%s239 + $0x2550] sm:$0xff]
        %v1495 = vld [vmem:[%s239 + $0x2558] sm:$0xff]
        %v1496 = vld [vmem:[%s239 + $0x2560] sm:$0xff]
        %v1497 = vld [vmem:[%s239 + $0x2568] sm:$0xff]
        %v1498 = vld [vmem:[%s239 + $0x2570] sm:$0xff]
        %v1499 = vld [vmem:[%s239 + $0x2578] sm:$0xff]
        %v1500 = vld [vmem:[%s239 + $0x2580] sm:$0xff]
        %v1501 = vld [vmem:[%s239 + $0x2588] sm:$0xff]
        %v1502 = vld [vmem:[%s239 + $0x2590] sm:$0xff]
        %v1503 = vld [vmem:[%s239 + $0x2598] sm:$0xff]
        %v1504 = vld [vmem:[%s239 + $0x25a0] sm:$0xff]
        %v1505 = vld [vmem:[%s239 + $0x25a8] sm:$0xff]
        %v1506 = vld [vmem:[%s239 + $0x25b0] sm:$0xff]
        %v1507 = vld [vmem:[%s239 + $0x25b8] sm:$0xff]
        %v1508 = vld [vmem:[%s239 + $0x25c0] sm:$0xff]
        %v1509 = vld [vmem:[%s239 + $0x25c8] sm:$0xff]
        %v1510 = vld [vmem:[%s239 + $0x25d0] sm:$0xff]
        %v1511 = vld [vmem:[%s239 + $0x25d8] sm:$0xff]
        %v1512 = vld [vmem:[%s239 + $0x25e0] sm:$0xff]
        %v1513 = vld [vmem:[%s239 + $0x25e8] sm:$0xff]
        %v1514 = vld [vmem:[%s239 + $0x25f0] sm:$0xff]
        %v1515 = vld [vmem:[%s239 + $0x25f8] sm:$0xff]
        %v1516 = vld [vmem:[%s239 + $0x2600] sm:$0xff]
        %v1517 = vld [vmem:[%s239 + $0x2608] sm:$0xff]
        %v1518 = vld [vmem:[%s239 + $0x2610] sm:$0xff]
        %v1519 = vld [vmem:[%s239 + $0x2618] sm:$0xff]
        %v1520 = vld [vmem:[%s239 + $0x2620] sm:$0xff]
        %v1521 = vld [vmem:[%s239 + $0x2628] sm:$0xff]
        %v1522 = vld [vmem:[%s239 + $0x2630] sm:$0xff]
        %v1523 = vld [vmem:[%s239 + $0x2638] sm:$0xff]
        %v1524 = vld [vmem:[%s239 + $0x2640] sm:$0xff]
        %v1525 = vld [vmem:[%s239 + $0x2648] sm:$0xff]
        %v1526 = vld [vmem:[%s239 + $0x2650] sm:$0xff]
        %v1527 = vld [vmem:[%s239 + $0x2658] sm:$0xff]
        %v1528 = vld [vmem:[%s239 + $0x2660] sm:$0xff]
        %v1529 = vld [vmem:[%s239 + $0x2668] sm:$0xff]
        %v1530 = vld [vmem:[%s239 + $0x2670] sm:$0xff]
        %v1531 = vld [vmem:[%s239 + $0x2678] sm:$0xff]
        %v1532 = vld [vmem:[%s239 + $0x2680] sm:$0xff]
        %v1533 = vld [vmem:[%s239 + $0x2688] sm:$0xff]
        %v1534 = vld [vmem:[%s239 + $0x2690] sm:$0xff]
        %v1535 = vld [vmem:[%s239 + $0x2698] sm:$0xff]
        %v1536 = vld [vmem:[%s239 + $0x26a0] sm:$0xff]
        %v1537 = vld [vmem:[%s239 + $0x26a8] sm:$0xff]
        %v1538 = vld [vmem:[%s239 + $0x26b0] sm:$0xff]
        %v1539 = vld [vmem:[%s239 + $0x26b8] sm:$0xff]
        %v1540 = vld [vmem:[%s239 + $0x26c0] sm:$0xff]
        %v1541 = vld [vmem:[%s239 + $0x26c8] sm:$0xff]
        %v1542 = vld [vmem:[%s239 + $0x26d0] sm:$0xff]
        %v1543 = vld [vmem:[%s239 + $0x26d8] sm:$0xff]
        %v1544 = vld [vmem:[%s239 + $0x26e0] sm:$0xff]
        %v1545 = vld [vmem:[%s239 + $0x26e8] sm:$0xff]
        %v1546 = vld [vmem:[%s239 + $0x26f0] sm:$0xff]
        %v1547 = vld [vmem:[%s239 + $0x26f8] sm:$0xff]
        %v1548 = vld [vmem:[%s239 + $0x2700] sm:$0xff]
        %v1549 = vld [vmem:[%s239 + $0x2708] sm:$0xff]
        %v1550 = vld [vmem:[%s239 + $0x2710] sm:$0xff]
        %v1551 = vld [vmem:[%s239 + $0x2718] sm:$0xff]
        %v1552 = vld [vmem:[%s239 + $0x2720] sm:$0xff]
        %v1553 = vld [vmem:[%s239 + $0x2728] sm:$0xff]
        %v1554 = vld [vmem:[%s239 + $0x2730] sm:$0xff]
        %v1555 = vld [vmem:[%s239 + $0x2738] sm:$0xff]
        %v1556 = vld [vmem:[%s239 + $0x2740] sm:$0xff]
        %v1557 = vld [vmem:[%s239 + $0x2748] sm:$0xff]
        %v1558 = vld [vmem:[%s239 + $0x2750] sm:$0xff]
        %v1559 = vld [vmem:[%s239 + $0x2758] sm:$0xff]
        %v1560 = vld [vmem:[%s239 + $0x2760] sm:$0xff]
        %v1561 = vld [vmem:[%s239 + $0x2768] sm:$0xff]
        %v1562 = vld [vmem:[%s239 + $0x2770] sm:$0xff]
        %v1563 = vld [vmem:[%s239 + $0x2778] sm:$0xff]
        %v1564 = vld [vmem:[%s239 + $0x2780] sm:$0xff]
        %v1565 = vld [vmem:[%s239 + $0x2788] sm:$0xff]
        %v1566 = vld [vmem:[%s239 + $0x2790] sm:$0xff]
        %v1567 = vld [vmem:[%s239 + $0x2798] sm:$0xff]
        %v1568 = vld [vmem:[%s239 + $0x27a0] sm:$0xff]
        %v1569 = vld [vmem:[%s239 + $0x27a8] sm:$0xff]
        %v1570 = vld [vmem:[%s239 + $0x27b0] sm:$0xff]
        %v1571 = vld [vmem:[%s239 + $0x27b8] sm:$0xff]
        %v1572 = vld [vmem:[%s239 + $0x27c0] sm:$0xff]
        %v1573 = vld [vmem:[%s239 + $0x27c8] sm:$0xff]
        %v1574 = vld [vmem:[%s239 + $0x27d0] sm:$0xff]
        %v1575 = vld [vmem:[%s239 + $0x27d8] sm:$0xff]
        %v1576 = vld [vmem:[%s239 + $0x27e0] sm:$0xff]
        %v1577 = vld [vmem:[%s239 + $0x27e8] sm:$0xff]
        %v1578 = vld [vmem:[%s239 + $0x27f0] sm:$0xff]
        %v1579 = vld [vmem:[%s239 + $0x27f8] sm:$0xff]
        %v1580 = vld [vmem:[%s239 + $0x2800] sm:$0xff]
        %v1581 = vld [vmem:[%s239 + $0x2808] sm:$0xff]
        %v1582 = vld [vmem:[%s239 + $0x2810] sm:$0xff]
        %v1583 = vld [vmem:[%s239 + $0x2818] sm:$0xff]
        %v1584 = vld [vmem:[%s239 + $0x2820] sm:$0xff]
        %v1585 = vld [vmem:[%s239 + $0x2828] sm:$0xff]
        %v1586 = vld [vmem:[%s239 + $0x2830] sm:$0xff]
        %v1587 = vld [vmem:[%s239 + $0x2838] sm:$0xff]
        %v1588 = vld [vmem:[%s239 + $0x2840] sm:$0xff]
        %v1589 = vld [vmem:[%s239 + $0x2848] sm:$0xff]
        %v1590 = vld [vmem:[%s239 + $0x2850] sm:$0xff]
        %v1591 = vld [vmem:[%s239 + $0x2858] sm:$0xff]
        %v1592 = vld [vmem:[%s239 + $0x2860] sm:$0xff]
        %v1593 = vld [vmem:[%s239 + $0x2868] sm:$0xff]
        %v1594 = vld [vmem:[%s239 + $0x2870] sm:$0xff]
        %v1595 = vld [vmem:[%s239 + $0x2878] sm:$0xff]
        %v1596 = vld [vmem:[%s239 + $0x2880] sm:$0xff]
        %v1597 = vld [vmem:[%s239 + $0x2888] sm:$0xff]
        %v1598 = vld [vmem:[%s239 + $0x2890] sm:$0xff]
        %v1599 = vld [vmem:[%s239 + $0x2898] sm:$0xff]
        %v1600 = vld [vmem:[%s239 + $0x28a0] sm:$0xff]
        %v1601 = vld [vmem:[%s239 + $0x28a8] sm:$0xff]
        %v1602 = vld [vmem:[%s239 + $0x28b0] sm:$0xff]
        %v1603 = vld [vmem:[%s239 + $0x28b8] sm:$0xff]
        %v1604 = vld [vmem:[%s239 + $0x28c0] sm:$0xff]
        %v1605 = vld [vmem:[%s239 + $0x28c8] sm:$0xff]
        %v1606 = vld [vmem:[%s239 + $0x28d0] sm:$0xff]
        %v1607 = vld [vmem:[%s239 + $0x28d8] sm:$0xff]
        %v1608 = vld [vmem:[%s239 + $0x28e0] sm:$0xff]
        %v1609 = vld [vmem:[%s239 + $0x28e8] sm:$0xff]
        %v1610 = vld [vmem:[%s239 + $0x28f0] sm:$0xff]
        %v1611 = vld [vmem:[%s239 + $0x28f8] sm:$0xff]
        %v1612 = vld [vmem:[%s239 + $0x2900] sm:$0xff]
        %v1613 = vld [vmem:[%s239 + $0x2908] sm:$0xff]
        %v1614 = vld [vmem:[%s239 + $0x2910] sm:$0xff]
        %v1615 = vld [vmem:[%s239 + $0x2918] sm:$0xff]
        %v1616 = vld [vmem:[%s239 + $0x2920] sm:$0xff]
        %v1617 = vld [vmem:[%s239 + $0x2928] sm:$0xff]
        %v1618 = vld [vmem:[%s239 + $0x2930] sm:$0xff]
        %v1619 = vld [vmem:[%s239 + $0x2938] sm:$0xff]
        %v1620 = vld [vmem:[%s239 + $0x2940] sm:$0xff]
        %v1621 = vld [vmem:[%s239 + $0x2948] sm:$0xff]
        %v1622 = vld [vmem:[%s239 + $0x2950] sm:$0xff]
        %v1623 = vld [vmem:[%s239 + $0x2958] sm:$0xff]
        %v1624 = vld [vmem:[%s239 + $0x2960] sm:$0xff]
        %v1625 = vld [vmem:[%s239 + $0x2968] sm:$0xff]
        %v1626 = vld [vmem:[%s239 + $0x2970] sm:$0xff]
        %v1627 = vld [vmem:[%s239 + $0x2978] sm:$0xff]
        %v1628 = vld [vmem:[%s239 + $0x2980] sm:$0xff]
        %v1629 = vld [vmem:[%s239 + $0x2988] sm:$0xff]
        %v1630 = vld [vmem:[%s239 + $0x2990] sm:$0xff]
        %v1631 = vld [vmem:[%s239 + $0x2998] sm:$0xff]
        %v1632 = vld [vmem:[%s239 + $0x29a0] sm:$0xff]
        %v1633 = vld [vmem:[%s239 + $0x29a8] sm:$0xff]
        %v1634 = vld [vmem:[%s239 + $0x29b0] sm:$0xff]
        %v1635 = vld [vmem:[%s239 + $0x29b8] sm:$0xff]
        %v1636 = vld [vmem:[%s239 + $0x29c0] sm:$0xff]
        %v1637 = vld [vmem:[%s239 + $0x29c8] sm:$0xff]
        %v1638 = vld [vmem:[%s239 + $0x29d0] sm:$0xff]
        %v1639 = vld [vmem:[%s239 + $0x29d8] sm:$0xff]
        %v1640 = vld [vmem:[%s239 + $0x29e0] sm:$0xff]
        %v1641 = vld [vmem:[%s239 + $0x29e8] sm:$0xff]
        %v1642 = vld [vmem:[%s239 + $0x29f0] sm:$0xff]
        %v1643 = vld [vmem:[%s239 + $0x29f8] sm:$0xff]
        %v1644 = vld [vmem:[%s239 + $0x2a00] sm:$0xff]
        %v1645 = vld [vmem:[%s239 + $0x2a08] sm:$0xff]
        %v1646 = vld [vmem:[%s239 + $0x2a10] sm:$0xff]
        %v1647 = vld [vmem:[%s239 + $0x2a18] sm:$0xff]
        %v1648 = vld [vmem:[%s239 + $0x2a20] sm:$0xff]
        %v1649 = vld [vmem:[%s239 + $0x2a28] sm:$0xff]
        %v1650 = vld [vmem:[%s239 + $0x2a30] sm:$0xff]
        %v1651 = vld [vmem:[%s239 + $0x2a38] sm:$0xff]
        %v1652 = vld [vmem:[%s239 + $0x2a40] sm:$0xff]
        %v1653 = vld [vmem:[%s239 + $0x2a48] sm:$0xff]
        %v1654 = vld [vmem:[%s239 + $0x2a50] sm:$0xff]
        %v1655 = vld [vmem:[%s239 + $0x2a58] sm:$0xff]
        %v1656 = vld [vmem:[%s239 + $0x2a60] sm:$0xff]
        %v1657 = vld [vmem:[%s239 + $0x2a68] sm:$0xff]
        %v1658 = vld [vmem:[%s239 + $0x2a70] sm:$0xff]
        %v1659 = vld [vmem:[%s239 + $0x2a78] sm:$0xff]
        %v1660 = vld [vmem:[%s239 + $0x2a80] sm:$0xff]
        %v1661 = vld [vmem:[%s239 + $0x2a88] sm:$0xff]
        %v1662 = vld [vmem:[%s239 + $0x2a90] sm:$0xff]
        %v1663 = vld [vmem:[%s239 + $0x2a98] sm:$0xff]
        %v1664 = vld [vmem:[%s239 + $0x2aa0] sm:$0xff]
        %v1665 = vld [vmem:[%s239 + $0x2aa8] sm:$0xff]
        %v1666 = vld [vmem:[%s239 + $0x2ab0] sm:$0xff]
        %v1667 = vld [vmem:[%s239 + $0x2ab8] sm:$0xff]
        %v1668 = vld [vmem:[%s239 + $0x2ac0] sm:$0xff]
        %v1669 = vld [vmem:[%s239 + $0x2ac8] sm:$0xff]
        %v1670 = vld [vmem:[%s239 + $0x2ad0] sm:$0xff]
        %v1671 = vld [vmem:[%s239 + $0x2ad8] sm:$0xff]
        %v1672 = vld [vmem:[%s239 + $0x2ae0] sm:$0xff]
        %v1673 = vld [vmem:[%s239 + $0x2ae8] sm:$0xff]
        %v1674 = vld [vmem:[%s239 + $0x2af0] sm:$0xff]
        %v1675 = vld [vmem:[%s239 + $0x2af8] sm:$0xff]
        %v1676 = vld [vmem:[%s239 + $0x2b00] sm:$0xff]
        %v1677 = vld [vmem:[%s239 + $0x2b08] sm:$0xff]
        %v1678 = vld [vmem:[%s239 + $0x2b10] sm:$0xff]
        %v1679 = vld [vmem:[%s239 + $0x2b18] sm:$0xff]
        %v1680 = vld [vmem:[%s239 + $0x2b20] sm:$0xff]
        %v1681 = vld [vmem:[%s239 + $0x2b28] sm:$0xff]
        %v1682 = vld [vmem:[%s239 + $0x2b30] sm:$0xff]
        %v1683 = vld [vmem:[%s239 + $0x2b38] sm:$0xff]
        %v1684 = vld [vmem:[%s239 + $0x2b40] sm:$0xff]
        %v1685 = vld [vmem:[%s239 + $0x2b48] sm:$0xff]
        %v1686 = vld [vmem:[%s239 + $0x2b50] sm:$0xff]
        %v1687 = vld [vmem:[%s239 + $0x2b58] sm:$0xff]
        %v1688 = vld [vmem:[%s239 + $0x2b60] sm:$0xff]
        %v1689 = vld [vmem:[%s239 + $0x2b68] sm:$0xff]
        %v1690 = vld [vmem:[%s239 + $0x2b70] sm:$0xff]
        %v1691 = vld [vmem:[%s239 + $0x2b78] sm:$0xff]
        %v1692 = vld [vmem:[%s239 + $0x2b80] sm:$0xff]
        %v1693 = vld [vmem:[%s239 + $0x2b88] sm:$0xff]
        %v1694 = vld [vmem:[%s239 + $0x2b90] sm:$0xff]
        %v1695 = vld [vmem:[%s239 + $0x2b98] sm:$0xff]
        %v1696 = vld [vmem:[%s239 + $0x2ba0] sm:$0xff]
        %v1697 = vld [vmem:[%s239 + $0x2ba8] sm:$0xff]
        %v1698 = vld [vmem:[%s239 + $0x2bb0] sm:$0xff]
        %v1699 = vld [vmem:[%s239 + $0x2bb8] sm:$0xff]
        %v1700 = vld [vmem:[%s239 + $0x2bc0] sm:$0xff]
        %v1701 = vld [vmem:[%s239 + $0x2bc8] sm:$0xff]
        %v1702 = vld [vmem:[%s239 + $0x2bd0] sm:$0xff]
        %v1703 = vld [vmem:[%s239 + $0x2bd8] sm:$0xff]
        %v1704 = vld [vmem:[%s239 + $0x2be0] sm:$0xff]
        %v1705 = vld [vmem:[%s239 + $0x2be8] sm:$0xff]
        %v1706 = vld [vmem:[%s239 + $0x2bf0] sm:$0xff]
        %v1707 = vld [vmem:[%s239 + $0x2bf8] sm:$0xff]
        %v1708 = vld [vmem:[%s239 + $0x2c00] sm:$0xff]
        %v1709 = vld [vmem:[%s239 + $0x2c08] sm:$0xff]
        %v1710 = vld [vmem:[%s239 + $0x2c10] sm:$0xff]
        %v1711 = vld [vmem:[%s239 + $0x2c18] sm:$0xff]
        %v1712 = vld [vmem:[%s239 + $0x2c20] sm:$0xff]
        %v1713 = vld [vmem:[%s239 + $0x2c28] sm:$0xff]
        %v1714 = vld [vmem:[%s239 + $0x2c30] sm:$0xff]
        %v1715 = vld [vmem:[%s239 + $0x2c38] sm:$0xff]
        %v1716 = vld [vmem:[%s239 + $0x2c40] sm:$0xff]
        %v1717 = vld [vmem:[%s239 + $0x2c48] sm:$0xff]
        %v1718 = vld [vmem:[%s239 + $0x2c50] sm:$0xff]
        %v1719 = vld [vmem:[%s239 + $0x2c58] sm:$0xff]
        %v1720 = vld [vmem:[%s239 + $0x2c60] sm:$0xff]
        %v1721 = vld [vmem:[%s239 + $0x2c68] sm:$0xff]
        %v1722 = vld [vmem:[%s239 + $0x2c70] sm:$0xff]
        %v1723 = vld [vmem:[%s239 + $0x2c78] sm:$0xff]
        %v1724 = vld [vmem:[%s239 + $0x2c80] sm:$0xff]
        %v1725 = vld [vmem:[%s239 + $0x2c88] sm:$0xff]
        %v1726 = vld [vmem:[%s239 + $0x2c90] sm:$0xff]
        %v1727 = vld [vmem:[%s239 + $0x2c98] sm:$0xff]
        %v1728 = vld [vmem:[%s239 + $0x2ca0] sm:$0xff]
        %v1729 = vld [vmem:[%s239 + $0x2ca8] sm:$0xff]
        %v1730 = vld [vmem:[%s239 + $0x2cb0] sm:$0xff]
        %v1731 = vld [vmem:[%s239 + $0x2cb8] sm:$0xff]
        %v1732 = vld [vmem:[%s239 + $0x2cc0] sm:$0xff]
        %v1733 = vld [vmem:[%s239 + $0x2cc8] sm:$0xff]
        %v1734 = vld [vmem:[%s239 + $0x2cd0] sm:$0xff]
        %v1735 = vld [vmem:[%s239 + $0x2cd8] sm:$0xff]
        %v1736 = vld [vmem:[%s239 + $0x2ce0] sm:$0xff]
        %v1737 = vld [vmem:[%s239 + $0x2ce8] sm:$0xff]
        %v1738 = vld [vmem:[%s239 + $0x2cf0] sm:$0xff]
        %v1739 = vld [vmem:[%s239 + $0x2cf8] sm:$0xff]
        %v1740 = vld [vmem:[%s239 + $0x2d00] sm:$0xff]
        %v1741 = vld [vmem:[%s239 + $0x2d08] sm:$0xff]
        %v1742 = vld [vmem:[%s239 + $0x2d10] sm:$0xff]
        %v1743 = vld [vmem:[%s239 + $0x2d18] sm:$0xff]
        %v1744 = vld [vmem:[%s239 + $0x2d20] sm:$0xff]
        %v1745 = vld [vmem:[%s239 + $0x2d28] sm:$0xff]
        %v1746 = vld [vmem:[%s239 + $0x2d30] sm:$0xff]
        %v1747 = vld [vmem:[%s239 + $0x2d38] sm:$0xff]
        %v1748 = vld [vmem:[%s239 + $0x2d40] sm:$0xff]
        %v1749 = vld [vmem:[%s239 + $0x2d48] sm:$0xff]
        %v1750 = vld [vmem:[%s239 + $0x2d50] sm:$0xff]
        %v1751 = vld [vmem:[%s239 + $0x2d58] sm:$0xff]
        %v1752 = vld [vmem:[%s239 + $0x2d60] sm:$0xff]
        %v1753 = vld [vmem:[%s239 + $0x2d68] sm:$0xff]
        %v1754 = vld [vmem:[%s239 + $0x2d70] sm:$0xff]
        %v1755 = vld [vmem:[%s239 + $0x2d78] sm:$0xff]
        %v1756 = vld [vmem:[%s239 + $0x2d80] sm:$0xff]
        %v1757 = vld [vmem:[%s239 + $0x2d88] sm:$0xff]
        %v1758 = vld [vmem:[%s239 + $0x2d90] sm:$0xff]
        %v1759 = vld [vmem:[%s239 + $0x2d98] sm:$0xff]
        %v1760 = vld [vmem:[%s239 + $0x2da0] sm:$0xff]
        %v1761 = vld [vmem:[%s239 + $0x2da8] sm:$0xff]
        %v1762 = vld [vmem:[%s239 + $0x2db0] sm:$0xff]
        %v1763 = vld [vmem:[%s239 + $0x2db8] sm:$0xff]
        %v1764 = vld [vmem:[%s239 + $0x2dc0] sm:$0xff]
        %v1765 = vld [vmem:[%s239 + $0x2dc8] sm:$0xff]
        %v1766 = vld [vmem:[%s239 + $0x2dd0] sm:$0xff]
        %v1767 = vld [vmem:[%s239 + $0x2dd8] sm:$0xff]
        %v1768 = vld [vmem:[%s239 + $0x2de0] sm:$0xff]
        %v1769 = vld [vmem:[%s239 + $0x2de8] sm:$0xff]
        %v1770 = vld [vmem:[%s239 + $0x2df0] sm:$0xff]
        %v1771 = vld [vmem:[%s239 + $0x2df8] sm:$0xff]
        %v1772 = vld [vmem:[%s239 + $0x2e00] sm:$0xff]
        %v1773 = vld [vmem:[%s239 + $0x2e08] sm:$0xff]
        %v1774 = vld [vmem:[%s239 + $0x2e10] sm:$0xff]
        %v1775 = vld [vmem:[%s239 + $0x2e18] sm:$0xff]
        %v1776 = vld [vmem:[%s239 + $0x2e20] sm:$0xff]
        %v1777 = vld [vmem:[%s239 + $0x2e28] sm:$0xff]
        %v1778 = vld [vmem:[%s239 + $0x2e30] sm:$0xff]
        %v1779 = vld [vmem:[%s239 + $0x2e38] sm:$0xff]
        %v1780 = vld [vmem:[%s239 + $0x2e40] sm:$0xff]
        %v1781 = vld [vmem:[%s239 + $0x2e48] sm:$0xff]
        %v1782 = vld [vmem:[%s239 + $0x2e50] sm:$0xff]
        %v1783 = vld [vmem:[%s239 + $0x2e58] sm:$0xff]
        %v1784 = vld [vmem:[%s239 + $0x2e60] sm:$0xff]
        %v1785 = vld [vmem:[%s239 + $0x2e68] sm:$0xff]
        %v1786 = vld [vmem:[%s239 + $0x2e70] sm:$0xff]
        %v1787 = vld [vmem:[%s239 + $0x2e78] sm:$0xff]
        %v1788 = vld [vmem:[%s239 + $0x2e80] sm:$0xff]
        %v1789 = vld [vmem:[%s239 + $0x2e88] sm:$0xff]
        %v1790 = vld [vmem:[%s239 + $0x2e90] sm:$0xff]
        %v1791 = vld [vmem:[%s239 + $0x2e98] sm:$0xff]
        %v1792 = vld [vmem:[%s239 + $0x2ea0] sm:$0xff]
        %v1793 = vld [vmem:[%s239 + $0x2ea8] sm:$0xff]
        %v1794 = vld [vmem:[%s239 + $0x2eb0] sm:$0xff]
        %v1795 = vld [vmem:[%s239 + $0x2eb8] sm:$0xff]
        %v1796 = vld [vmem:[%s239 + $0x2ec0] sm:$0xff]
        %v1797 = vld [vmem:[%s239 + $0x2ec8] sm:$0xff]
        %v1798 = vld [vmem:[%s239 + $0x2ed0] sm:$0xff]
        %v1799 = vld [vmem:[%s239 + $0x2ed8] sm:$0xff]
        %v1800 = vld [vmem:[%s239 + $0x2ee0] sm:$0xff]
        %v1801 = vld [vmem:[%s239 + $0x2ee8] sm:$0xff]
        %v1802 = vld [vmem:[%s239 + $0x2ef0] sm:$0xff]
        %v1803 = vld [vmem:[%s239 + $0x2ef8] sm:$0xff]
        %v1804 = vld [vmem:[%s239 + $0x2f00] sm:$0xff]
        %v1805 = vld [vmem:[%s239 + $0x2f08] sm:$0xff]
        %v1806 = vld [vmem:[%s239 + $0x2f10] sm:$0xff]
        %v1807 = vld [vmem:[%s239 + $0x2f18] sm:$0xff]
        %v1808 = vld [vmem:[%s239 + $0x2f20] sm:$0xff]
        %v1809 = vld [vmem:[%s239 + $0x2f28] sm:$0xff]
        %v1810 = vld [vmem:[%s239 + $0x2f30] sm:$0xff]
        %v1811 = vld [vmem:[%s239 + $0x2f38] sm:$0xff]
        %v1812 = vld [vmem:[%s239 + $0x2f40] sm:$0xff]
        %v1813 = vld [vmem:[%s239 + $0x2f48] sm:$0xff]
        %v1814 = vld [vmem:[%s239 + $0x2f50] sm:$0xff]
        %v1815 = vld [vmem:[%s239 + $0x2f58] sm:$0xff]
        %v1816 = vld [vmem:[%s239 + $0x2f60] sm:$0xff]
        %v1817 = vld [vmem:[%s239 + $0x2f68] sm:$0xff]
        %v1818 = vld [vmem:[%s239 + $0x2f70] sm:$0xff]
        %v1819 = vld [vmem:[%s239 + $0x2f78] sm:$0xff]
        %v1820 = vld [vmem:[%s239 + $0x2f80] sm:$0xff]
        %v1821 = vld [vmem:[%s239 + $0x2f88] sm:$0xff]
        %v1822 = vld [vmem:[%s239 + $0x2f90] sm:$0xff]
        %v1823 = vld [vmem:[%s239 + $0x2f98] sm:$0xff]
        %v1824 = vld [vmem:[%s239 + $0x2fa0] sm:$0xff]
        %v1825 = vld [vmem:[%s239 + $0x2fa8] sm:$0xff]
        %v1826 = vld [vmem:[%s239 + $0x2fb0] sm:$0xff]
        %v1827 = vld [vmem:[%s239 + $0x2fb8] sm:$0xff]
        %v1828 = vld [vmem:[%s239 + $0x2fc0] sm:$0xff]
        %v1829 = vld [vmem:[%s239 + $0x2fc8] sm:$0xff]
        %v1830 = vld [vmem:[%s239 + $0x2fd0] sm:$0xff]
        %v1831 = vld [vmem:[%s239 + $0x2fd8] sm:$0xff]
        %v1832 = vld [vmem:[%s239 + $0x2fe0] sm:$0xff]
        %v1833 = vld [vmem:[%s239 + $0x2fe8] sm:$0xff]
        %v1834 = vld [vmem:[%s239 + $0x2ff0] sm:$0xff]
        %v1835 = vld [vmem:[%s239 + $0x2ff8] sm:$0xff]
        %v1836 = vld [vmem:[%s239 + $0x3000] sm:$0xff]
        %v1837 = vld [vmem:[%s239 + $0x3008] sm:$0xff]
        %v1838 = vld [vmem:[%s239 + $0x3010] sm:$0xff]
        %v1839 = vld [vmem:[%s239 + $0x3018] sm:$0xff]
        %v1840 = vld [vmem:[%s239 + $0x3020] sm:$0xff]
        %v1841 = vld [vmem:[%s239 + $0x3028] sm:$0xff]
        %v1842 = vld [vmem:[%s239 + $0x3030] sm:$0xff]
        %v1843 = vld [vmem:[%s239 + $0x3038] sm:$0xff]
        %v1844 = vld [vmem:[%s239 + $0x3040] sm:$0xff]
        %v1845 = vld [vmem:[%s239 + $0x3048] sm:$0xff]
        %v1846 = vld [vmem:[%s239 + $0x3050] sm:$0xff]
        %v1847 = vld [vmem:[%s239 + $0x3058] sm:$0xff]
        %v1848 = vld [vmem:[%s239 + $0x3060] sm:$0xff]
        %v1849 = vld [vmem:[%s239 + $0x3068] sm:$0xff]
        %v1850 = vld [vmem:[%s239 + $0x3070] sm:$0xff]
        %v1851 = vld [vmem:[%s239 + $0x3078] sm:$0xff]
        %v1852 = vld [vmem:[%s239 + $0x3080] sm:$0xff]
        %v1853 = vld [vmem:[%s239 + $0x3088] sm:$0xff]
        %v1854 = vld [vmem:[%s239 + $0x3090] sm:$0xff]
        %v1855 = vld [vmem:[%s239 + $0x3098] sm:$0xff]
        %v1856 = vld [vmem:[%s239 + $0x30a0] sm:$0xff]
        %v1857 = vld [vmem:[%s239 + $0x30a8] sm:$0xff]
        %v1858 = vld [vmem:[%s239 + $0x30b0] sm:$0xff]
        %v1859 = vld [vmem:[%s239 + $0x30b8] sm:$0xff]
        %v1860 = vld [vmem:[%s239 + $0x30c0] sm:$0xff]
        %v1861 = vld [vmem:[%s239 + $0x30c8] sm:$0xff]
        %v1862 = vld [vmem:[%s239 + $0x30d0] sm:$0xff]
        %v1863 = vld [vmem:[%s239 + $0x30d8] sm:$0xff]
        %v1864 = vld [vmem:[%s239 + $0x30e0] sm:$0xff]
        %v1865 = vld [vmem:[%s239 + $0x30e8] sm:$0xff]
        %v1866 = vld [vmem:[%s239 + $0x30f0] sm:$0xff]
        %v1867 = vld [vmem:[%s239 + $0x30f8] sm:$0xff]
        %v1868 = vld [vmem:[%s239 + $0x3100] sm:$0xff]
        %v1869 = vld [vmem:[%s239 + $0x3108] sm:$0xff]
        %v1870 = vld [vmem:[%s239 + $0x3110] sm:$0xff]
        %v1871 = vld [vmem:[%s239 + $0x3118] sm:$0xff]
        %v1872 = vld [vmem:[%s239 + $0x3120] sm:$0xff]
        %v1873 = vld [vmem:[%s239 + $0x3128] sm:$0xff]
        %v1874 = vld [vmem:[%s239 + $0x3130] sm:$0xff]
        %v1875 = vld [vmem:[%s239 + $0x3138] sm:$0xff]
        %v1876 = vld [vmem:[%s239 + $0x3140] sm:$0xff]
        %v1877 = vld [vmem:[%s239 + $0x3148] sm:$0xff]
        %v1878 = vld [vmem:[%s239 + $0x3150] sm:$0xff]
        %v1879 = vld [vmem:[%s239 + $0x3158] sm:$0xff]
        %v1880 = vld [vmem:[%s239 + $0x3160] sm:$0xff]
        %v1881 = vld [vmem:[%s239 + $0x3168] sm:$0xff]
        %v1882 = vld [vmem:[%s239 + $0x3170] sm:$0xff]
        %v1883 = vld [vmem:[%s239 + $0x3178] sm:$0xff]
        %v1884 = vld [vmem:[%s239 + $0x3180] sm:$0xff]
        %v1885 = vld [vmem:[%s239 + $0x3188] sm:$0xff]
        %v1886 = vld [vmem:[%s239 + $0x3190] sm:$0xff]
        %v1887 = vld [vmem:[%s239 + $0x3198] sm:$0xff]
        %v1888 = vld [vmem:[%s239 + $0x31a0] sm:$0xff]
        %v1889 = vld [vmem:[%s239 + $0x31a8] sm:$0xff]
        %v1890 = vld [vmem:[%s239 + $0x31b0] sm:$0xff]
        %v1891 = vld [vmem:[%s239 + $0x31b8] sm:$0xff]
        %v1892 = vld [vmem:[%s239 + $0x31c0] sm:$0xff]
        %v1893 = vld [vmem:[%s239 + $0x31c8] sm:$0xff]
        %v1894 = vld [vmem:[%s239 + $0x31d0] sm:$0xff]
        %v1895 = vld [vmem:[%s239 + $0x31d8] sm:$0xff]
        %v1896 = vld [vmem:[%s239 + $0x31e0] sm:$0xff]
        %v1897 = vld [vmem:[%s239 + $0x31e8] sm:$0xff]
        %v1898 = vld [vmem:[%s239 + $0x31f0] sm:$0xff]
        %v1899 = vld [vmem:[%s239 + $0x31f8] sm:$0xff]
        %v1900 = vld [vmem:[%s239 + $0x3200] sm:$0xff]
        %v1901 = vld [vmem:[%s239 + $0x3208] sm:$0xff]
        %v1902 = vld [vmem:[%s239 + $0x3210] sm:$0xff]
        %v1903 = vld [vmem:[%s239 + $0x3218] sm:$0xff]
        %v1904 = vld [vmem:[%s239 + $0x3220] sm:$0xff]
        %v1905 = vld [vmem:[%s239 + $0x3228] sm:$0xff]
        %v1906 = vld [vmem:[%s239 + $0x3230] sm:$0xff]
        %v1907 = vld [vmem:[%s239 + $0x3238] sm:$0xff]
        %v1908 = vld [vmem:[%s239 + $0x3240] sm:$0xff]
        %v1909 = vld [vmem:[%s239 + $0x3248] sm:$0xff]
        %v1910 = vld [vmem:[%s239 + $0x3250] sm:$0xff]
        %v1911 = vld [vmem:[%s239 + $0x3258] sm:$0xff]
        %v1912 = vld [vmem:[%s239 + $0x3260] sm:$0xff]
        %v1913 = vld [vmem:[%s239 + $0x3268] sm:$0xff]
        %v1914 = vld [vmem:[%s239 + $0x3270] sm:$0xff]
        %v1915 = vld [vmem:[%s239 + $0x3278] sm:$0xff]
        %v1916 = vld [vmem:[%s239 + $0x3280] sm:$0xff]
        %v1917 = vld [vmem:[%s239 + $0x3288] sm:$0xff]
        %v1918 = vld [vmem:[%s239 + $0x3290] sm:$0xff]
        %v1919 = vld [vmem:[%s239 + $0x3298] sm:$0xff]
        %v1920 = vld [vmem:[%s239 + $0x32a0] sm:$0xff]
        %v1921 = vld [vmem:[%s239 + $0x32a8] sm:$0xff]
        %v1922 = vld [vmem:[%s239 + $0x32b0] sm:$0xff]
        %v1923 = vld [vmem:[%s239 + $0x32b8] sm:$0xff]
        %v1924 = vld [vmem:[%s239 + $0x32c0] sm:$0xff]
        %v1925 = vld [vmem:[%s239 + $0x32c8] sm:$0xff]
        %v1926 = vld [vmem:[%s239 + $0x32d0] sm:$0xff]
        %v1927 = vld [vmem:[%s239 + $0x32d8] sm:$0xff]
        %v1928 = vld [vmem:[%s239 + $0x32e0] sm:$0xff]
        %v1929 = vld [vmem:[%s239 + $0x32e8] sm:$0xff]
        %v1930 = vld [vmem:[%s239 + $0x32f0] sm:$0xff]
        %v1931 = vld [vmem:[%s239 + $0x32f8] sm:$0xff]
        %v1932 = vld [vmem:[%s239 + $0x3300] sm:$0xff]
        %v1933 = vld [vmem:[%s239 + $0x3308] sm:$0xff]
        %v1934 = vld [vmem:[%s239 + $0x3310] sm:$0xff]
        %v1935 = vld [vmem:[%s239 + $0x3318] sm:$0xff]
        %v1936 = vld [vmem:[%s239 + $0x3320] sm:$0xff]
        %v1937 = vld [vmem:[%s239 + $0x3328] sm:$0xff]
        %v1938 = vld [vmem:[%s239 + $0x3330] sm:$0xff]
        %v1939 = vld [vmem:[%s239 + $0x3338] sm:$0xff]
        %v1940 = vld [vmem:[%s239 + $0x3340] sm:$0xff]
        %v1941 = vld [vmem:[%s239 + $0x3348] sm:$0xff]
        %v1942 = vld [vmem:[%s239 + $0x3350] sm:$0xff]
        %v1943 = vld [vmem:[%s239 + $0x3358] sm:$0xff]
        %v1944 = vld [vmem:[%s239 + $0x3360] sm:$0xff]
        %v1945 = vld [vmem:[%s239 + $0x3368] sm:$0xff]
        %v1946 = vld [vmem:[%s239 + $0x3370] sm:$0xff]
        %v1947 = vld [vmem:[%s239 + $0x3378] sm:$0xff]
        %v1948 = vld [vmem:[%s239 + $0x3380] sm:$0xff]
        %v1949 = vld [vmem:[%s239 + $0x3388] sm:$0xff]
        %v1950 = vld [vmem:[%s239 + $0x3390] sm:$0xff]
        %v1951 = vld [vmem:[%s239 + $0x3398] sm:$0xff]
        %v1952 = vld [vmem:[%s239 + $0x33a0] sm:$0xff]
        %v1953 = vld [vmem:[%s239 + $0x33a8] sm:$0xff]
        %v1954 = vld [vmem:[%s239 + $0x33b0] sm:$0xff]
        %v1955 = vld [vmem:[%s239 + $0x33b8] sm:$0xff]
        %v1956 = vld [vmem:[%s239 + $0x33c0] sm:$0xff]
        %v1957 = vld [vmem:[%s239 + $0x33c8] sm:$0xff]
        %v1958 = vld [vmem:[%s239 + $0x33d0] sm:$0xff]
        %v1959 = vld [vmem:[%s239 + $0x33d8] sm:$0xff]
        %v1960 = vld [vmem:[%s239 + $0x33e0] sm:$0xff]
        %v1961 = vld [vmem:[%s239 + $0x33e8] sm:$0xff]
        %v1962 = vld [vmem:[%s239 + $0x33f0] sm:$0xff]
        %v1963 = vld [vmem:[%s239 + $0x33f8] sm:$0xff]
        %v1964 = vld [vmem:[%s239 + $0x3400] sm:$0xff]
        %v1965 = vld [vmem:[%s239 + $0x3408] sm:$0xff]
        %v1966 = vld [vmem:[%s239 + $0x3410] sm:$0xff]
        %v1967 = vld [vmem:[%s239 + $0x3418] sm:$0xff]
        %v1968 = vld [vmem:[%s239 + $0x3420] sm:$0xff]
        %v1969 = vld [vmem:[%s239 + $0x3428] sm:$0xff]
        %v1970 = vld [vmem:[%s239 + $0x3430] sm:$0xff]
        %v1971 = vld [vmem:[%s239 + $0x3438] sm:$0xff]
        %v1972 = vld [vmem:[%s239 + $0x3440] sm:$0xff]
        %v1973 = vld [vmem:[%s239 + $0x3448] sm:$0xff]
        %v1974 = vld [vmem:[%s239 + $0x3450] sm:$0xff]
        %v1975 = vld [vmem:[%s239 + $0x3458] sm:$0xff]
        %v1976 = vld [vmem:[%s239 + $0x3460] sm:$0xff]
        %v1977 = vld [vmem:[%s239 + $0x3468] sm:$0xff]
        %v1978 = vld [vmem:[%s239 + $0x3470] sm:$0xff]
        %v1979 = vld [vmem:[%s239 + $0x3478] sm:$0xff]
        %v1980 = vld [vmem:[%s239 + $0x3480] sm:$0xff]
        %v1981 = vld [vmem:[%s239 + $0x3488] sm:$0xff]
        %v1982 = vld [vmem:[%s239 + $0x3490] sm:$0xff]
        %v1983 = vld [vmem:[%s239 + $0x3498] sm:$0xff]
        %v1984 = vld [vmem:[%s239 + $0x34a0] sm:$0xff]
        %v1985 = vld [vmem:[%s239 + $0x34a8] sm:$0xff]
        %v1986 = vld [vmem:[%s239 + $0x34b0] sm:$0xff]
        %v1987 = vld [vmem:[%s239 + $0x34b8] sm:$0xff]
        %v1988 = vld [vmem:[%s239 + $0x34c0] sm:$0xff]
        %v1989 = vld [vmem:[%s239 + $0x34c8] sm:$0xff]
        %v1990 = vld [vmem:[%s239 + $0x34d0] sm:$0xff]
        %v1991 = vld [vmem:[%s239 + $0x34d8] sm:$0xff]
        %v1992 = vld [vmem:[%s239 + $0x34e0] sm:$0xff]
        %v1993 = vld [vmem:[%s239 + $0x34e8] sm:$0xff]
        %v1994 = vld [vmem:[%s239 + $0x34f0] sm:$0xff]
        %v1995 = vld [vmem:[%s239 + $0x34f8] sm:$0xff]
        %v1996 = vld [vmem:[%s239 + $0x3500] sm:$0xff]
        %v1997 = vld [vmem:[%s239 + $0x3508] sm:$0xff]
        %v1998 = vld [vmem:[%s239 + $0x3510] sm:$0xff]
        %v1999 = vld [vmem:[%s239 + $0x3518] sm:$0xff]
        %v2000 = vld [vmem:[%s239 + $0x3520] sm:$0xff]
        %v2001 = vld [vmem:[%s239 + $0x3528] sm:$0xff]
        %v2002 = vld [vmem:[%s239 + $0x3530] sm:$0xff]
        %v2003 = vld [vmem:[%s239 + $0x3538] sm:$0xff]
        %v2004 = vld [vmem:[%s239 + $0x3540] sm:$0xff]
        %v2005 = vld [vmem:[%s239 + $0x3548] sm:$0xff]
        %v2006 = vld [vmem:[%s239 + $0x3550] sm:$0xff]
        %v2007 = vld [vmem:[%s239 + $0x3558] sm:$0xff]
        %v2008 = vld [vmem:[%s239 + $0x3560] sm:$0xff]
        %v2009 = vld [vmem:[%s239 + $0x3568] sm:$0xff]
        %v2010 = vld [vmem:[%s239 + $0x3570] sm:$0xff]
        %v2011 = vld [vmem:[%s239 + $0x3578] sm:$0xff]
        %v2012 = vld [vmem:[%s239 + $0x3580] sm:$0xff]
        %v2013 = vld [vmem:[%s239 + $0x3588] sm:$0xff]
        %v2014 = vld [vmem:[%s239 + $0x3590] sm:$0xff]
        %v2015 = vld [vmem:[%s239 + $0x3598] sm:$0xff]
        %v2016 = vld [vmem:[%s239 + $0x35a0] sm:$0xff]
        %v2017 = vld [vmem:[%s239 + $0x35a8] sm:$0xff]
        %v2018 = vld [vmem:[%s239 + $0x35b0] sm:$0xff]
        %v2019 = vld [vmem:[%s239 + $0x35b8] sm:$0xff]
        %v2020 = vld [vmem:[%s239 + $0x35c0] sm:$0xff]
        %v2021 = vld [vmem:[%s239 + $0x35c8] sm:$0xff]
        %v2022 = vld [vmem:[%s239 + $0x35d0] sm:$0xff]
        %v2023 = vld [vmem:[%s239 + $0x35d8] sm:$0xff]
        %v2024 = vld [vmem:[%s239 + $0x35e0] sm:$0xff]
        %v2025 = vld [vmem:[%s239 + $0x35e8] sm:$0xff]
        %v2026 = vld [vmem:[%s239 + $0x35f0] sm:$0xff]
        %v2027 = vld [vmem:[%s239 + $0x35f8] sm:$0xff]
        %v2028 = vld [vmem:[%s239 + $0x3600] sm:$0xff]
        %v2029 = vld [vmem:[%s239 + $0x3608] sm:$0xff]
        %v2030 = vld [vmem:[%s239 + $0x3610] sm:$0xff]
        %v2031 = vld [vmem:[%s239 + $0x3618] sm:$0xff]
        %v2032 = vld [vmem:[%s239 + $0x3620] sm:$0xff]
        %v2033 = vld [vmem:[%s239 + $0x3628] sm:$0xff]
        %v2034 = vld [vmem:[%s239 + $0x3630] sm:$0xff]
        %v2035 = vld [vmem:[%s239 + $0x3638] sm:$0xff]
        %v2036 = vld [vmem:[%s239 + $0x3640] sm:$0xff]
        %v2037 = vld [vmem:[%s239 + $0x3648] sm:$0xff]
        %v2038 = vld [vmem:[%s239 + $0x3650] sm:$0xff]
        %v2039 = vld [vmem:[%s239 + $0x3658] sm:$0xff]
        %v2040 = vld [vmem:[%s239 + $0x3660] sm:$0xff]
        %v2041 = vld [vmem:[%s239 + $0x3668] sm:$0xff]
        %v2042 = vld [vmem:[%s239 + $0x3670] sm:$0xff]
        %v2043 = vld [vmem:[%s239 + $0x3678] sm:$0xff]
        %v2044 = vld [vmem:[%s239 + $0x3680] sm:$0xff]
        %v2045 = vld [vmem:[%s239 + $0x3688] sm:$0xff]
        %v2046 = vld [vmem:[%s239 + $0x3690] sm:$0xff]
        %v2047 = vld [vmem:[%s239 + $0x3698] sm:$0xff]
        %v2048 = vld [vmem:[%s239 + $0x36a0] sm:$0xff]
        %v2049 = vld [vmem:[%s239 + $0x36a8] sm:$0xff]
        %v2050 = vld [vmem:[%s239 + $0x36b0] sm:$0xff]
        %v2051 = vld [vmem:[%s239 + $0x36b8] sm:$0xff]
        %v2052 = vld [vmem:[%s239 + $0x36c0] sm:$0xff]
        %v2053 = vld [vmem:[%s239 + $0x36c8] sm:$0xff]
        %v2054 = vld [vmem:[%s239 + $0x36d0] sm:$0xff]
        %v2055 = vld [vmem:[%s239 + $0x36d8] sm:$0xff]
        %v2056 = vld [vmem:[%s239 + $0x36e0] sm:$0xff]
        %v2057 = vld [vmem:[%s239 + $0x36e8] sm:$0xff]
        %v2058 = vld [vmem:[%s239 + $0x36f0] sm:$0xff]
        %v2059 = vld [vmem:[%s239 + $0x36f8] sm:$0xff]
        %v2060 = vld [vmem:[%s239 + $0x3700] sm:$0xff]
        %v2061 = vld [vmem:[%s239 + $0x3708] sm:$0xff]
        %v2062 = vld [vmem:[%s239 + $0x3710] sm:$0xff]
        %v2063 = vld [vmem:[%s239 + $0x3718] sm:$0xff]
        %v2064 = vld [vmem:[%s239 + $0x3720] sm:$0xff]
        %v2065 = vld [vmem:[%s239 + $0x3728] sm:$0xff]
        %v2066 = vld [vmem:[%s239 + $0x3730] sm:$0xff]
        %v2067 = vld [vmem:[%s239 + $0x3738] sm:$0xff]
        %v2068 = vld [vmem:[%s239 + $0x3740] sm:$0xff]
        %v2069 = vld [vmem:[%s239 + $0x3748] sm:$0xff]
        %v2070 = vld [vmem:[%s239 + $0x3750] sm:$0xff]
        %v2071 = vld [vmem:[%s239 + $0x3758] sm:$0xff]
        %v2072 = vld [vmem:[%s239 + $0x3760] sm:$0xff]
        %v2073 = vld [vmem:[%s239 + $0x3768] sm:$0xff]
        %v2074 = vld [vmem:[%s239 + $0x3770] sm:$0xff]
        %v2075 = vld [vmem:[%s239 + $0x3778] sm:$0xff]
        %v2076 = vld [vmem:[%s239 + $0x3780] sm:$0xff]
        %v2077 = vld [vmem:[%s239 + $0x3788] sm:$0xff]
        %v2078 = vld [vmem:[%s239 + $0x3790] sm:$0xff]
        %v2079 = vld [vmem:[%s239 + $0x3798] sm:$0xff]
        %v2080 = vld [vmem:[%s239 + $0x37a0] sm:$0xff]
        %v2081 = vld [vmem:[%s239 + $0x37a8] sm:$0xff]
        %v2082 = vld [vmem:[%s239 + $0x37b0] sm:$0xff]
        %v2083 = vld [vmem:[%s239 + $0x37b8] sm:$0xff]
        %v2084 = vld [vmem:[%s239 + $0x37c0] sm:$0xff]
        %v2085 = vld [vmem:[%s239 + $0x37c8] sm:$0xff]
        %v2086 = vld [vmem:[%s239 + $0x37d0] sm:$0xff]
        %v2087 = vld [vmem:[%s239 + $0x37d8] sm:$0xff]
        %v2088 = vld [vmem:[%s239 + $0x37e0] sm:$0xff]
        %v2089 = vld [vmem:[%s239 + $0x37e8] sm:$0xff]
        %v2090 = vld [vmem:[%s239 + $0x37f0] sm:$0xff]
        %v2091 = vld [vmem:[%s239 + $0x37f8] sm:$0xff]
        %2093 = vst [vmem:[#allocation1] ss:$9 sm:$0xff] %v296
        %v2094 = vld [vmem:[#allocation1] sm:$0xff]
        %v2095 = vld [vmem:[#allocation1 + $0x9] sm:$0xff]
        %v2096 = vld [vmem:[#allocation1 + $0x12] sm:$0xff]
        %v2097 = vld [vmem:[#allocation1 + $0x1b] sm:$0xff]
        %v2098 = vld [vmem:[#allocation1 + $0x24] sm:$0xff]
        %v2099 = vld [vmem:[#allocation1 + $0x2d] sm:$0xff]
        %v2100 = vld [vmem:[#allocation1 + $0x36] sm:$0xff]
        %v2101 = vld [vmem:[#allocation1 + $0x3f] sm:$0xff]
        %2103 = vst [vmem:[#allocation1] ss:$9 sm:$0xff] %v297
        %v2104 = vld [vmem:[#allocation1] sm:$0xff]
        %v2105 = vld [vmem:[#allocation1 + $0x9] sm:$0xff]
        %v2106 = vld [vmem:[#allocation1 + $0x12] sm:$0xff]
        %v2107 = vld [vmem:[#allocation1 + $0x1b] sm:$0xff]
        %v2108 = vld [vmem:[#allocation1 + $0x24] sm:$0xff]
        %v2109 = vld [vmem:[#allocation1 + $0x2d] sm:$0xff]
        %v2110 = vld [vmem:[#allocation1 + $0x36] sm:$0xff]
        %v2111 = vld [vmem:[#allocation1 + $0x3f] sm:$0xff]
        %2113 = vst [vmem:[#allocation1] ss:$9 sm:$0xff] %v298
        %v2114 = vld [vmem:[#allocation1] sm:$0xff]
        %v2115 = vld [vmem:[#allocation1 + $0x9] sm:$0xff]
        %v2116 = vld [vmem:[#allocation1 + $0x12] sm:$0xff]
        %v2117 = vld [vmem:[#allocation1 + $0x1b] sm:$0xff]
        %v2118 = vld [vmem:[#allocation1 + $0x24] sm:$0xff]
        %v2119 = vld [vmem:[#allocation1 + $0x2d] sm:$0xff]
        %v2120 = vld [vmem:[#allocation1 + $0x36] sm:$0xff]
        %v2121 = vld [vmem:[#allocation1 + $0x3f] sm:$0xff]
        %2123 = vst [vmem:[#allocation1] ss:$9 sm:$0xff] %v299
        %v2124 = vld [vmem:[#allocation1] sm:$0xff]
        %v2125 = vld [vmem:[#allocation1 + $0x9] sm:$0xff]
        %v2126 = vld [vmem:[#allocation1 + $0x12] sm:$0xff]
        %v2127 = vld [vmem:[#allocation1 + $0x1b] sm:$0xff]
        %v3948 = vunpack.c.l.b16 %v300
        %v3949 = vunpack.c.h.b16 %v300
        %v3950 = vunpack.c.l.b16 %v301
        %v3951 = vunpack.c.h.b16 %v301
        %v3952 = vunpack.c.l.b16 %v302
        %v3953 = vunpack.c.h.b16 %v302
        %v3954 = vunpack.c.l.b16 %v303
        %v3955 = vunpack.c.h.b16 %v303
        %v3956 = vunpack.c.l.b16 %v304
        %v3957 = vunpack.c.h.b16 %v304
        %v3958 = vunpack.c.l.b16 %v305
        %v3959 = vunpack.c.h.b16 %v305
        %v3960 = vunpack.c.l.b16 %v306
        %v3961 = vunpack.c.h.b16 %v306
        %v3962 = vunpack.c.l.b16 %v307
        %v3963 = vunpack.c.h.b16 %v307
        %v3964 = vunpack.c.l.b16 %v308
        %v3965 = vunpack.c.h.b16 %v308
        %v3966 = vunpack.c.l.b16 %v309
        %v3967 = vunpack.c.h.b16 %v309
        %v3968 = vunpack.c.l.b16 %v310
        %v3969 = vunpack.c.h.b16 %v310
        %v3970 = vunpack.c.l.b16 %v311
        %v3971 = vunpack.c.h.b16 %v311
        %v3972 = vunpack.c.l.b16 %v312
        %v3973 = vunpack.c.h.b16 %v312
        %v3974 = vunpack.c.l.b16 %v313
        %v3975 = vunpack.c.h.b16 %v313
        %v3976 = vunpack.c.l.b16 %v314
        %v3977 = vunpack.c.h.b16 %v314
        %v3978 = vunpack.c.l.b16 %v315
        %v3979 = vunpack.c.h.b16 %v315
        %v3980 = vunpack.c.l.b16 %v316
        %v3981 = vunpack.c.h.b16 %v316
        %v3982 = vunpack.c.l.b16 %v317
        %v3983 = vunpack.c.h.b16 %v317
        %v3984 = vunpack.c.l.b16 %v318
        %v3985 = vunpack.c.h.b16 %v318
        %v3986 = vunpack.c.l.b16 %v319
        %v3987 = vunpack.c.h.b16 %v319
        %v3988 = vunpack.c.l.b16 %v320
        %v3989 = vunpack.c.h.b16 %v320
        %v3990 = vunpack.c.l.b16 %v321
        %v3991 = vunpack.c.h.b16 %v321
        %v3992 = vunpack.c.l.b16 %v322
        %v3993 = vunpack.c.h.b16 %v322
        %v3994 = vunpack.c.l.b16 %v323
        %v3995 = vunpack.c.h.b16 %v323
        %v3996 = vunpack.c.l.b16 %v324
        %v3997 = vunpack.c.h.b16 %v324
        %v3998 = vunpack.c.l.b16 %v325
        %v3999 = vunpack.c.h.b16 %v325
        %v4000 = vunpack.c.l.b16 %v326
        %v4001 = vunpack.c.h.b16 %v326
        %v4002 = vunpack.c.l.b16 %v327
        %v4003 = vunpack.c.h.b16 %v327
        %v4004 = vunpack.c.l.b16 %v328
        %v4005 = vunpack.c.h.b16 %v328
        %v4006 = vunpack.c.l.b16 %v329
        %v4007 = vunpack.c.h.b16 %v329
        %v4008 = vunpack.c.l.b16 %v330
        %v4009 = vunpack.c.h.b16 %v330
        %v4010 = vunpack.c.l.b16 %v331
        %v4011 = vunpack.c.h.b16 %v331
        %v4012 = vunpack.c.l.b16 %v332
        %v4013 = vunpack.c.h.b16 %v332
        %v4014 = vunpack.c.l.b16 %v333
        %v4015 = vunpack.c.h.b16 %v333
        %v4016 = vunpack.c.l.b16 %v334
        %v4017 = vunpack.c.h.b16 %v334
        %v4018 = vunpack.c.l.b16 %v335
        %v4019 = vunpack.c.h.b16 %v335
        %v4020 = vunpack.c.l.b16 %v336
        %v4021 = vunpack.c.h.b16 %v336
        %v4022 = vunpack.c.l.b16 %v337
        %v4023 = vunpack.c.h.b16 %v337
        %v4024 = vunpack.c.l.b16 %v338
        %v4025 = vunpack.c.h.b16 %v338
        %v4026 = vunpack.c.l.b16 %v339
        %v4027 = vunpack.c.h.b16 %v339
        %v4028 = vunpack.c.l.b16 %v340
        %v4029 = vunpack.c.h.b16 %v340
        %v4030 = vunpack.c.l.b16 %v341
        %v4031 = vunpack.c.h.b16 %v341
        %v4032 = vunpack.c.l.b16 %v342
        %v4033 = vunpack.c.h.b16 %v342
        %v4034 = vunpack.c.l.b16 %v343
        %v4035 = vunpack.c.h.b16 %v343
        %v4036 = vunpack.c.l.b16 %v344
        %v4037 = vunpack.c.h.b16 %v344
        %v4038 = vunpack.c.l.b16 %v345
        %v4039 = vunpack.c.h.b16 %v345
        %v4040 = vunpack.c.l.b16 %v346
        %v4041 = vunpack.c.h.b16 %v346
        %v4042 = vunpack.c.l.b16 %v347
        %v4043 = vunpack.c.h.b16 %v347
        %v4044 = vunpack.c.l.b16 %v348
        %v4045 = vunpack.c.h.b16 %v348
        %v4046 = vunpack.c.l.b16 %v349
        %v4047 = vunpack.c.h.b16 %v349
        %v4048 = vunpack.c.l.b16 %v350
        %v4049 = vunpack.c.h.b16 %v350
        %v4050 = vunpack.c.l.b16 %v351
        %v4051 = vunpack.c.h.b16 %v351
        %v4052 = vunpack.c.l.b16 %v352
        %v4053 = vunpack.c.h.b16 %v352
        %v4054 = vunpack.c.l.b16 %v353
        %v4055 = vunpack.c.h.b16 %v353
        %v4056 = vunpack.c.l.b16 %v354
        %v4057 = vunpack.c.h.b16 %v354
        %v4058 = vunpack.c.l.b16 %v355
        %v4059 = vunpack.c.h.b16 %v355
        %v4060 = vunpack.c.l.b16 %v356
        %v4061 = vunpack.c.h.b16 %v356
        %v4062 = vunpack.c.l.b16 %v357
        %v4063 = vunpack.c.h.b16 %v357
        %v4064 = vunpack.c.l.b16 %v358
        %v4065 = vunpack.c.h.b16 %v358
        %v4066 = vunpack.c.l.b16 %v359
        %v4067 = vunpack.c.h.b16 %v359
        %v4068 = vunpack.c.l.b16 %v360
        %v4069 = vunpack.c.h.b16 %v360
        %v4070 = vunpack.c.l.b16 %v361
        %v4071 = vunpack.c.h.b16 %v361
        %v4072 = vunpack.c.l.b16 %v362
        %v4073 = vunpack.c.h.b16 %v362
        %v4074 = vunpack.c.l.b16 %v363
        %v4075 = vunpack.c.h.b16 %v363
        %v4076 = vunpack.c.l.b16 %v364
        %v4077 = vunpack.c.h.b16 %v364
        %v4078 = vunpack.c.l.b16 %v365
        %v4079 = vunpack.c.h.b16 %v365
        %v4080 = vunpack.c.l.b16 %v366
        %v4081 = vunpack.c.h.b16 %v366
        %v4082 = vunpack.c.l.b16 %v367
        %v4083 = vunpack.c.h.b16 %v367
        %v4084 = vunpack.c.l.b16 %v368
        %v4085 = vunpack.c.h.b16 %v368
        %v4086 = vunpack.c.l.b16 %v369
        %v4087 = vunpack.c.h.b16 %v369
        %v4088 = vunpack.c.l.b16 %v370
        %v4089 = vunpack.c.h.b16 %v370
        %v4090 = vunpack.c.l.b16 %v371
        %v4091 = vunpack.c.h.b16 %v371
        %v4092 = vunpack.c.l.b16 %v372
        %v4093 = vunpack.c.h.b16 %v372
        %v4094 = vunpack.c.l.b16 %v373
        %v4095 = vunpack.c.h.b16 %v373
        %v4096 = vunpack.c.l.b16 %v374
        %v4097 = vunpack.c.h.b16 %v374
        %v4098 = vunpack.c.l.b16 %v375
        %v4099 = vunpack.c.h.b16 %v375
        %v4100 = vunpack.c.l.b16 %v376
        %v4101 = vunpack.c.h.b16 %v376
        %v4102 = vunpack.c.l.b16 %v377
        %v4103 = vunpack.c.h.b16 %v377
        %v4104 = vunpack.c.l.b16 %v378
        %v4105 = vunpack.c.h.b16 %v378
        %v4106 = vunpack.c.l.b16 %v379
        %v4107 = vunpack.c.h.b16 %v379
        %v4108 = vunpack.c.l.b16 %v380
        %v4109 = vunpack.c.h.b16 %v380
        %v4110 = vunpack.c.l.b16 %v381
        %v4111 = vunpack.c.h.b16 %v381
        %v4112 = vunpack.c.l.b16 %v382
        %v4113 = vunpack.c.h.b16 %v382
        %v4114 = vunpack.c.l.b16 %v383
        %v4115 = vunpack.c.h.b16 %v383
        %v4116 = vunpack.c.l.b16 %v384
        %v4117 = vunpack.c.h.b16 %v384
        %v4118 = vunpack.c.l.b16 %v385
        %v4119 = vunpack.c.h.b16 %v385
        %v4120 = vunpack.c.l.b16 %v386
        %v4121 = vunpack.c.h.b16 %v386
        %v4122 = vunpack.c.l.b16 %v387
        %v4123 = vunpack.c.h.b16 %v387
        %v4124 = vunpack.c.l.b16 %v388
        %v4125 = vunpack.c.h.b16 %v388
        %v4126 = vunpack.c.l.b16 %v389
        %v4127 = vunpack.c.h.b16 %v389
        %v4128 = vunpack.c.l.b16 %v390
        %v4129 = vunpack.c.h.b16 %v390
        %v4130 = vunpack.c.l.b16 %v391
        %v4131 = vunpack.c.h.b16 %v391
        %v4132 = vunpack.c.l.b16 %v392
        %v4133 = vunpack.c.h.b16 %v392
        %v4134 = vunpack.c.l.b16 %v393
        %v4135 = vunpack.c.h.b16 %v393
        %v4136 = vunpack.c.l.b16 %v394
        %v4137 = vunpack.c.h.b16 %v394
        %v4138 = vunpack.c.l.b16 %v395
        %v4139 = vunpack.c.h.b16 %v395
        %v4140 = vunpack.c.l.b16 %v396
        %v4141 = vunpack.c.h.b16 %v396
        %v4142 = vunpack.c.l.b16 %v397
        %v4143 = vunpack.c.h.b16 %v397
        %v4144 = vunpack.c.l.b16 %v398
        %v4145 = vunpack.c.h.b16 %v398
        %v4146 = vunpack.c.l.b16 %v399
        %v4147 = vunpack.c.h.b16 %v399
        %v4148 = vunpack.c.l.b16 %v400
        %v4149 = vunpack.c.h.b16 %v400
        %v4150 = vunpack.c.l.b16 %v401
        %v4151 = vunpack.c.h.b16 %v401
        %v4152 = vunpack.c.l.b16 %v402
        %v4153 = vunpack.c.h.b16 %v402
        %v4154 = vunpack.c.l.b16 %v403
        %v4155 = vunpack.c.h.b16 %v403
        %v4156 = vunpack.c.l.b16 %v404
        %v4157 = vunpack.c.h.b16 %v404
        %v4158 = vunpack.c.l.b16 %v405
        %v4159 = vunpack.c.h.b16 %v405
        %v4160 = vunpack.c.l.b16 %v406
        %v4161 = vunpack.c.h.b16 %v406
        %v4162 = vunpack.c.l.b16 %v407
        %v4163 = vunpack.c.h.b16 %v407
        %v4164 = vunpack.c.l.b16 %v408
        %v4165 = vunpack.c.h.b16 %v408
        %v4166 = vunpack.c.l.b16 %v409
        %v4167 = vunpack.c.h.b16 %v409
        %v4168 = vunpack.c.l.b16 %v410
        %v4169 = vunpack.c.h.b16 %v410
        %v4170 = vunpack.c.l.b16 %v411
        %v4171 = vunpack.c.h.b16 %v411
        %v4172 = vunpack.c.l.b16 %v412
        %v4173 = vunpack.c.h.b16 %v412
        %v4174 = vunpack.c.l.b16 %v413
        %v4175 = vunpack.c.h.b16 %v413
        %v4176 = vunpack.c.l.b16 %v414
        %v4177 = vunpack.c.h.b16 %v414
        %v4178 = vunpack.c.l.b16 %v415
        %v4179 = vunpack.c.h.b16 %v415
        %v4180 = vunpack.c.l.b16 %v416
        %v4181 = vunpack.c.h.b16 %v416
        %v4182 = vunpack.c.l.b16 %v417
        %v4183 = vunpack.c.h.b16 %v417
        %v4184 = vunpack.c.l.b16 %v418
        %v4185 = vunpack.c.h.b16 %v418
        %v4186 = vunpack.c.l.b16 %v419
        %v4187 = vunpack.c.h.b16 %v419
        %v4188 = vunpack.c.l.b16 %v420
        %v4189 = vunpack.c.h.b16 %v420
        %v4190 = vunpack.c.l.b16 %v421
        %v4191 = vunpack.c.h.b16 %v421
        %v4192 = vunpack.c.l.b16 %v422
        %v4193 = vunpack.c.h.b16 %v422
        %v4194 = vunpack.c.l.b16 %v423
        %v4195 = vunpack.c.h.b16 %v423
        %v4196 = vunpack.c.l.b16 %v424
        %v4197 = vunpack.c.h.b16 %v424
        %v4198 = vunpack.c.l.b16 %v425
        %v4199 = vunpack.c.h.b16 %v425
        %v4200 = vunpack.c.l.b16 %v426
        %v4201 = vunpack.c.h.b16 %v426
        %v4202 = vunpack.c.l.b16 %v427
        %v4203 = vunpack.c.h.b16 %v427
        %v4204 = vunpack.c.l.b16 %v428
        %v4205 = vunpack.c.h.b16 %v428
        %v4206 = vunpack.c.l.b16 %v429
        %v4207 = vunpack.c.h.b16 %v429
        %v4208 = vunpack.c.l.b16 %v430
        %v4209 = vunpack.c.h.b16 %v430
        %v4210 = vunpack.c.l.b16 %v431
        %v4211 = vunpack.c.h.b16 %v431
        %v4212 = vunpack.c.l.b16 %v432
        %v4213 = vunpack.c.h.b16 %v432
        %v4214 = vunpack.c.l.b16 %v433
        %v4215 = vunpack.c.h.b16 %v433
        %v4216 = vunpack.c.l.b16 %v434
        %v4217 = vunpack.c.h.b16 %v434
        %v4218 = vunpack.c.l.b16 %v435
        %v4219 = vunpack.c.h.b16 %v435
        %v4220 = vunpack.c.l.b16 %v436
        %v4221 = vunpack.c.h.b16 %v436
        %v4222 = vunpack.c.l.b16 %v437
        %v4223 = vunpack.c.h.b16 %v437
        %v4224 = vunpack.c.l.b16 %v438
        %v4225 = vunpack.c.h.b16 %v438
        %v4226 = vunpack.c.l.b16 %v439
        %v4227 = vunpack.c.h.b16 %v439
        %v4228 = vunpack.c.l.b16 %v440
        %v4229 = vunpack.c.h.b16 %v440
        %v4230 = vunpack.c.l.b16 %v441
        %v4231 = vunpack.c.h.b16 %v441
        %v4232 = vunpack.c.l.b16 %v442
        %v4233 = vunpack.c.h.b16 %v442
        %v4234 = vunpack.c.l.b16 %v443
        %v4235 = vunpack.c.h.b16 %v443
        %v4236 = vunpack.c.l.b16 %v444
        %v4237 = vunpack.c.h.b16 %v444
        %v4238 = vunpack.c.l.b16 %v445
        %v4239 = vunpack.c.h.b16 %v445
        %v4240 = vunpack.c.l.b16 %v446
        %v4241 = vunpack.c.h.b16 %v446
        %v4242 = vunpack.c.l.b16 %v447
        %v4243 = vunpack.c.h.b16 %v447
        %v4244 = vunpack.c.l.b16 %v448
        %v4245 = vunpack.c.h.b16 %v448
        %v4246 = vunpack.c.l.b16 %v449
        %v4247 = vunpack.c.h.b16 %v449
        %v4248 = vunpack.c.l.b16 %v450
        %v4249 = vunpack.c.h.b16 %v450
        %v4250 = vunpack.c.l.b16 %v451
        %v4251 = vunpack.c.h.b16 %v451
        %v4252 = vunpack.c.l.b16 %v452
        %v4253 = vunpack.c.h.b16 %v452
        %v4254 = vunpack.c.l.b16 %v453
        %v4255 = vunpack.c.h.b16 %v453
        %v4256 = vunpack.c.l.b16 %v454
        %v4257 = vunpack.c.h.b16 %v454
        %v4258 = vunpack.c.l.b16 %v455
        %v4259 = vunpack.c.h.b16 %v455
        %v4260 = vunpack.c.l.b16 %v456
        %v4261 = vunpack.c.h.b16 %v456
        %v4262 = vunpack.c.l.b16 %v457
        %v4263 = vunpack.c.h.b16 %v457
        %v4264 = vunpack.c.l.b16 %v458
        %v4265 = vunpack.c.h.b16 %v458
        %v4266 = vunpack.c.l.b16 %v459
        %v4267 = vunpack.c.h.b16 %v459
        %v4268 = vunpack.c.l.b16 %v460
        %v4269 = vunpack.c.h.b16 %v460
        %v4270 = vunpack.c.l.b16 %v461
        %v4271 = vunpack.c.h.b16 %v461
        %v4272 = vunpack.c.l.b16 %v462
        %v4273 = vunpack.c.h.b16 %v462
        %v4274 = vunpack.c.l.b16 %v463
        %v4275 = vunpack.c.h.b16 %v463
        %v4276 = vunpack.c.l.b16 %v464
        %v4277 = vunpack.c.h.b16 %v464
        %v4278 = vunpack.c.l.b16 %v465
        %v4279 = vunpack.c.h.b16 %v465
        %v4280 = vunpack.c.l.b16 %v466
        %v4281 = vunpack.c.h.b16 %v466
        %v4282 = vunpack.c.l.b16 %v467
        %v4283 = vunpack.c.h.b16 %v467
        %v4284 = vunpack.c.l.b16 %v468
        %v4285 = vunpack.c.h.b16 %v468
        %v4286 = vunpack.c.l.b16 %v469
        %v4287 = vunpack.c.h.b16 %v469
        %v4288 = vunpack.c.l.b16 %v470
        %v4289 = vunpack.c.h.b16 %v470
        %v4290 = vunpack.c.l.b16 %v471
        %v4291 = vunpack.c.h.b16 %v471
        %v4292 = vunpack.c.l.b16 %v472
        %v4293 = vunpack.c.h.b16 %v472
        %v4294 = vunpack.c.l.b16 %v473
        %v4295 = vunpack.c.h.b16 %v473
        %v4296 = vunpack.c.l.b16 %v474
        %v4297 = vunpack.c.h.b16 %v474
        %v4298 = vunpack.c.l.b16 %v475
        %v4299 = vunpack.c.h.b16 %v475
        %v4300 = vunpack.c.l.b16 %v476
        %v4301 = vunpack.c.h.b16 %v476
        %v4302 = vunpack.c.l.b16 %v477
        %v4303 = vunpack.c.h.b16 %v477
        %v4304 = vunpack.c.l.b16 %v478
        %v4305 = vunpack.c.h.b16 %v478
        %v4306 = vunpack.c.l.b16 %v479
        %v4307 = vunpack.c.h.b16 %v479
        %v4308 = vunpack.c.l.b16 %v480
        %v4309 = vunpack.c.h.b16 %v480
        %v4310 = vunpack.c.l.b16 %v481
        %v4311 = vunpack.c.h.b16 %v481
        %v4312 = vunpack.c.l.b16 %v482
        %v4313 = vunpack.c.h.b16 %v482
        %v4314 = vunpack.c.l.b16 %v483
        %v4315 = vunpack.c.h.b16 %v483
        %v4316 = vunpack.c.l.b16 %v484
        %v4317 = vunpack.c.h.b16 %v484
        %v4318 = vunpack.c.l.b16 %v485
        %v4319 = vunpack.c.h.b16 %v485
        %v4320 = vunpack.c.l.b16 %v486
        %v4321 = vunpack.c.h.b16 %v486
        %v4322 = vunpack.c.l.b16 %v487
        %v4323 = vunpack.c.h.b16 %v487
        %v4324 = vunpack.c.l.b16 %v488
        %v4325 = vunpack.c.h.b16 %v488
        %v4326 = vunpack.c.l.b16 %v489
        %v4327 = vunpack.c.h.b16 %v489
        %v4328 = vunpack.c.l.b16 %v490
        %v4329 = vunpack.c.h.b16 %v490
        %v4330 = vunpack.c.l.b16 %v491
        %v4331 = vunpack.c.h.b16 %v491
        %v4332 = vunpack.c.l.b16 %v492
        %v4333 = vunpack.c.h.b16 %v492
        %v4334 = vunpack.c.l.b16 %v493
        %v4335 = vunpack.c.h.b16 %v493
        %v4336 = vunpack.c.l.b16 %v494
        %v4337 = vunpack.c.h.b16 %v494
        %v4338 = vunpack.c.l.b16 %v495
        %v4339 = vunpack.c.h.b16 %v495
        %v4340 = vunpack.c.l.b16 %v496
        %v4341 = vunpack.c.h.b16 %v496
        %v4342 = vunpack.c.l.b16 %v497
        %v4343 = vunpack.c.h.b16 %v497
        %v4344 = vunpack.c.l.b16 %v498
        %v4345 = vunpack.c.h.b16 %v498
        %v4346 = vunpack.c.l.b16 %v499
        %v4347 = vunpack.c.h.b16 %v499
        %v4348 = vunpack.c.l.b16 %v500
        %v4349 = vunpack.c.h.b16 %v500
        %v4350 = vunpack.c.l.b16 %v501
        %v4351 = vunpack.c.h.b16 %v501
        %v4352 = vunpack.c.l.b16 %v502
        %v4353 = vunpack.c.h.b16 %v502
        %v4354 = vunpack.c.l.b16 %v503
        %v4355 = vunpack.c.h.b16 %v503
        %v4356 = vunpack.c.l.b16 %v504
        %v4357 = vunpack.c.h.b16 %v504
        %v4358 = vunpack.c.l.b16 %v505
        %v4359 = vunpack.c.h.b16 %v505
        %v4360 = vunpack.c.l.b16 %v506
        %v4361 = vunpack.c.h.b16 %v506
        %v4362 = vunpack.c.l.b16 %v507
        %v4363 = vunpack.c.h.b16 %v507
        %v4364 = vunpack.c.l.b16 %v508
        %v4365 = vunpack.c.h.b16 %v508
        %v4366 = vunpack.c.l.b16 %v509
        %v4367 = vunpack.c.h.b16 %v509
        %v4368 = vunpack.c.l.b16 %v510
        %v4369 = vunpack.c.h.b16 %v510
        %v4370 = vunpack.c.l.b16 %v511
        %v4371 = vunpack.c.h.b16 %v511
        %v4372 = vunpack.c.l.b16 %v512
        %v4373 = vunpack.c.h.b16 %v512
        %v4374 = vunpack.c.l.b16 %v513
        %v4375 = vunpack.c.h.b16 %v513
        %v4376 = vunpack.c.l.b16 %v514
        %v4377 = vunpack.c.h.b16 %v514
        %v4378 = vunpack.c.l.b16 %v515
        %v4379 = vunpack.c.h.b16 %v515
        %v4380 = vunpack.c.l.b16 %v516
        %v4381 = vunpack.c.h.b16 %v516
        %v4382 = vunpack.c.l.b16 %v517
        %v4383 = vunpack.c.h.b16 %v517
        %v4384 = vunpack.c.l.b16 %v518
        %v4385 = vunpack.c.h.b16 %v518
        %v4386 = vunpack.c.l.b16 %v519
        %v4387 = vunpack.c.h.b16 %v519
        %v4388 = vunpack.c.l.b16 %v520
        %v4389 = vunpack.c.h.b16 %v520
        %v4390 = vunpack.c.l.b16 %v521
        %v4391 = vunpack.c.h.b16 %v521
        %v4392 = vunpack.c.l.b16 %v522
        %v4393 = vunpack.c.h.b16 %v522
        %v4394 = vunpack.c.l.b16 %v523
        %v4395 = vunpack.c.h.b16 %v523
        %v4396 = vunpack.c.l.b16 %v524
        %v4397 = vunpack.c.h.b16 %v524
        %v4398 = vunpack.c.l.b16 %v525
        %v4399 = vunpack.c.h.b16 %v525
        %v4400 = vunpack.c.l.b16 %v526
        %v4401 = vunpack.c.h.b16 %v526
        %v4402 = vunpack.c.l.b16 %v527
        %v4403 = vunpack.c.h.b16 %v527
        %v4404 = vunpack.c.l.b16 %v528
        %v4405 = vunpack.c.h.b16 %v528
        %v4406 = vunpack.c.l.b16 %v529
        %v4407 = vunpack.c.h.b16 %v529
        %v4408 = vunpack.c.l.b16 %v530
        %v4409 = vunpack.c.h.b16 %v530
        %v4410 = vunpack.c.l.b16 %v531
        %v4411 = vunpack.c.h.b16 %v531
        %v4412 = vunpack.c.l.b16 %v532
        %v4413 = vunpack.c.h.b16 %v532
        %v4414 = vunpack.c.l.b16 %v533
        %v4415 = vunpack.c.h.b16 %v533
        %v4416 = vunpack.c.l.b16 %v534
        %v4417 = vunpack.c.h.b16 %v534
        %v4418 = vunpack.c.l.b16 %v535
        %v4419 = vunpack.c.h.b16 %v535
        %v4420 = vunpack.c.l.b16 %v536
        %v4421 = vunpack.c.h.b16 %v536
        %v4422 = vunpack.c.l.b16 %v537
        %v4423 = vunpack.c.h.b16 %v537
        %v4424 = vunpack.c.l.b16 %v538
        %v4425 = vunpack.c.h.b16 %v538
        %v4426 = vunpack.c.l.b16 %v539
        %v4427 = vunpack.c.h.b16 %v539
        %v4428 = vunpack.c.l.b16 %v540
        %v4429 = vunpack.c.h.b16 %v540
        %v4430 = vunpack.c.l.b16 %v541
        %v4431 = vunpack.c.h.b16 %v541
        %v4432 = vunpack.c.l.b16 %v542
        %v4433 = vunpack.c.h.b16 %v542
        %v4434 = vunpack.c.l.b16 %v543
        %v4435 = vunpack.c.h.b16 %v543
        %v4436 = vunpack.c.l.b16 %v544
        %v4437 = vunpack.c.h.b16 %v544
        %v4438 = vunpack.c.l.b16 %v545
        %v4439 = vunpack.c.h.b16 %v545
        %v4440 = vunpack.c.l.b16 %v546
        %v4441 = vunpack.c.h.b16 %v546
        %v4442 = vunpack.c.l.b16 %v547
        %v4443 = vunpack.c.h.b16 %v547
        %v4444 = vunpack.c.l.b16 %v548
        %v4445 = vunpack.c.h.b16 %v548
        %v4446 = vunpack.c.l.b16 %v549
        %v4447 = vunpack.c.h.b16 %v549
        %v4448 = vunpack.c.l.b16 %v550
        %v4449 = vunpack.c.h.b16 %v550
        %v4450 = vunpack.c.l.b16 %v551
        %v4451 = vunpack.c.h.b16 %v551
        %v4452 = vunpack.c.l.b16 %v552
        %v4453 = vunpack.c.h.b16 %v552
        %v4454 = vunpack.c.l.b16 %v553
        %v4455 = vunpack.c.h.b16 %v553
        %v4456 = vunpack.c.l.b16 %v554
        %v4457 = vunpack.c.h.b16 %v554
        %v4458 = vunpack.c.l.b16 %v555
        %v4459 = vunpack.c.h.b16 %v555
        %v4460 = vunpack.c.l.b16 %v556
        %v4461 = vunpack.c.h.b16 %v556
        %v4462 = vunpack.c.l.b16 %v557
        %v4463 = vunpack.c.h.b16 %v557
        %v4464 = vunpack.c.l.b16 %v558
        %v4465 = vunpack.c.h.b16 %v558
        %v4466 = vunpack.c.l.b16 %v559
        %v4467 = vunpack.c.h.b16 %v559
        %v4468 = vunpack.c.l.b16 %v560
        %v4469 = vunpack.c.h.b16 %v560
        %v4470 = vunpack.c.l.b16 %v561
        %v4471 = vunpack.c.h.b16 %v561
        %v4472 = vunpack.c.l.b16 %v562
        %v4473 = vunpack.c.h.b16 %v562
        %v4474 = vunpack.c.l.b16 %v563
        %v4475 = vunpack.c.h.b16 %v563
        %v4476 = vunpack.c.l.b16 %v564
        %v4477 = vunpack.c.h.b16 %v564
        %v4478 = vunpack.c.l.b16 %v565
        %v4479 = vunpack.c.h.b16 %v565
        %v4480 = vunpack.c.l.b16 %v566
        %v4481 = vunpack.c.h.b16 %v566
        %v4482 = vunpack.c.l.b16 %v567
        %v4483 = vunpack.c.h.b16 %v567
        %v4484 = vunpack.c.l.b16 %v568
        %v4485 = vunpack.c.h.b16 %v568
        %v4486 = vunpack.c.l.b16 %v569
        %v4487 = vunpack.c.h.b16 %v569
        %v4488 = vunpack.c.l.b16 %v570
        %v4489 = vunpack.c.h.b16 %v570
        %v4490 = vunpack.c.l.b16 %v571
        %v4491 = vunpack.c.h.b16 %v571
        %v4492 = vunpack.c.l.b16 %v572
        %v4493 = vunpack.c.h.b16 %v572
        %v4494 = vunpack.c.l.b16 %v573
        %v4495 = vunpack.c.h.b16 %v573
        %v4496 = vunpack.c.l.b16 %v574
        %v4497 = vunpack.c.h.b16 %v574
        %v4498 = vunpack.c.l.b16 %v575
        %v4499 = vunpack.c.h.b16 %v575
        %v4500 = vunpack.c.l.b16 %v576
        %v4501 = vunpack.c.h.b16 %v576
        %v4502 = vunpack.c.l.b16 %v577
        %v4503 = vunpack.c.h.b16 %v577
        %v4504 = vunpack.c.l.b16 %v578
        %v4505 = vunpack.c.h.b16 %v578
        %v4506 = vunpack.c.l.b16 %v579
        %v4507 = vunpack.c.h.b16 %v579
        %v4508 = vunpack.c.l.b16 %v580
        %v4509 = vunpack.c.h.b16 %v580
        %v4510 = vunpack.c.l.b16 %v581
        %v4511 = vunpack.c.h.b16 %v581
        %v4512 = vunpack.c.l.b16 %v582
        %v4513 = vunpack.c.h.b16 %v582
        %v4514 = vunpack.c.l.b16 %v583
        %v4515 = vunpack.c.h.b16 %v583
        %v4516 = vunpack.c.l.b16 %v584
        %v4517 = vunpack.c.h.b16 %v584
        %v4518 = vunpack.c.l.b16 %v585
        %v4519 = vunpack.c.h.b16 %v585
        %v4520 = vunpack.c.l.b16 %v586
        %v4521 = vunpack.c.h.b16 %v586
        %v4522 = vunpack.c.l.b16 %v587
        %v4523 = vunpack.c.h.b16 %v587
        %v4524 = vunpack.c.l.b16 %v588
        %v4525 = vunpack.c.h.b16 %v588
        %v4526 = vunpack.c.l.b16 %v589
        %v4527 = vunpack.c.h.b16 %v589
        %v4528 = vunpack.c.l.b16 %v590
        %v4529 = vunpack.c.h.b16 %v590
        %v4530 = vunpack.c.l.b16 %v591
        %v4531 = vunpack.c.h.b16 %v591
        %v4532 = vunpack.c.l.b16 %v592
        %v4533 = vunpack.c.h.b16 %v592
        %v4534 = vunpack.c.l.b16 %v593
        %v4535 = vunpack.c.h.b16 %v593
        %v4536 = vunpack.c.l.b16 %v594
        %v4537 = vunpack.c.h.b16 %v594
        %v4538 = vunpack.c.l.b16 %v595
        %v4539 = vunpack.c.h.b16 %v595
        %v4540 = vunpack.c.l.b16 %v596
        %v4541 = vunpack.c.h.b16 %v596
        %v4542 = vunpack.c.l.b16 %v597
        %v4543 = vunpack.c.h.b16 %v597
        %v4544 = vunpack.c.l.b16 %v598
        %v4545 = vunpack.c.h.b16 %v598
        %v4546 = vunpack.c.l.b16 %v599
        %v4547 = vunpack.c.h.b16 %v599
        %v4548 = vunpack.c.l.b16 %v600
        %v4549 = vunpack.c.h.b16 %v600
        %v4550 = vunpack.c.l.b16 %v601
        %v4551 = vunpack.c.h.b16 %v601
        %v4552 = vunpack.c.l.b16 %v602
        %v4553 = vunpack.c.h.b16 %v602
        %v4554 = vunpack.c.l.b16 %v603
        %v4555 = vunpack.c.h.b16 %v603
        %v4556 = vunpack.c.l.b16 %v604
        %v4557 = vunpack.c.h.b16 %v604
        %v4558 = vunpack.c.l.b16 %v605
        %v4559 = vunpack.c.h.b16 %v605
        %v4560 = vunpack.c.l.b16 %v606
        %v4561 = vunpack.c.h.b16 %v606
        %v4562 = vunpack.c.l.b16 %v607
        %v4563 = vunpack.c.h.b16 %v607
        %v4564 = vunpack.c.l.b16 %v608
        %v4565 = vunpack.c.h.b16 %v608
        %v4566 = vunpack.c.l.b16 %v609
        %v4567 = vunpack.c.h.b16 %v609
        %v4568 = vunpack.c.l.b16 %v610
        %v4569 = vunpack.c.h.b16 %v610
        %v4570 = vunpack.c.l.b16 %v611
        %v4571 = vunpack.c.h.b16 %v611
        %v4572 = vunpack.c.l.b16 %v612
        %v4573 = vunpack.c.h.b16 %v612
        %v4574 = vunpack.c.l.b16 %v613
        %v4575 = vunpack.c.h.b16 %v613
        %v4576 = vunpack.c.l.b16 %v614
        %v4577 = vunpack.c.h.b16 %v614
        %v4578 = vunpack.c.l.b16 %v615
        %v4579 = vunpack.c.h.b16 %v615
        %v4580 = vunpack.c.l.b16 %v616
        %v4581 = vunpack.c.h.b16 %v616
        %v4582 = vunpack.c.l.b16 %v617
        %v4583 = vunpack.c.h.b16 %v617
        %v4584 = vunpack.c.l.b16 %v618
        %v4585 = vunpack.c.h.b16 %v618
        %v4586 = vunpack.c.l.b16 %v619
        %v4587 = vunpack.c.h.b16 %v619
        %v4588 = vunpack.c.l.b16 %v620
        %v4589 = vunpack.c.h.b16 %v620
        %v4590 = vunpack.c.l.b16 %v621
        %v4591 = vunpack.c.h.b16 %v621
        %v4592 = vunpack.c.l.b16 %v622
        %v4593 = vunpack.c.h.b16 %v622
        %v4594 = vunpack.c.l.b16 %v623
        %v4595 = vunpack.c.h.b16 %v623
        %v4596 = vunpack.c.l.b16 %v624
        %v4597 = vunpack.c.h.b16 %v624
        %v4598 = vunpack.c.l.b16 %v625
        %v4599 = vunpack.c.h.b16 %v625
        %v4600 = vunpack.c.l.b16 %v626
        %v4601 = vunpack.c.h.b16 %v626
        %v4602 = vunpack.c.l.b16 %v627
        %v4603 = vunpack.c.h.b16 %v627
        %v4604 = vunpack.c.l.b16 %v628
        %v4605 = vunpack.c.h.b16 %v628
        %v4606 = vunpack.c.l.b16 %v629
        %v4607 = vunpack.c.h.b16 %v629
        %v4608 = vunpack.c.l.b16 %v630
        %v4609 = vunpack.c.h.b16 %v630
        %v4610 = vunpack.c.l.b16 %v631
        %v4611 = vunpack.c.h.b16 %v631
        %v4612 = vunpack.c.l.b16 %v632
        %v4613 = vunpack.c.h.b16 %v632
        %v4614 = vunpack.c.l.b16 %v633
        %v4615 = vunpack.c.h.b16 %v633
        %v4616 = vunpack.c.l.b16 %v634
        %v4617 = vunpack.c.h.b16 %v634
        %v4618 = vunpack.c.l.b16 %v635
        %v4619 = vunpack.c.h.b16 %v635
        %v4620 = vunpack.c.l.b16 %v636
        %v4621 = vunpack.c.h.b16 %v636
        %v4622 = vunpack.c.l.b16 %v637
        %v4623 = vunpack.c.h.b16 %v637
        %v4624 = vunpack.c.l.b16 %v638
        %v4625 = vunpack.c.h.b16 %v638
        %v4626 = vunpack.c.l.b16 %v639
        %v4627 = vunpack.c.h.b16 %v639
        %v4628 = vunpack.c.l.b16 %v640
        %v4629 = vunpack.c.h.b16 %v640
        %v4630 = vunpack.c.l.b16 %v641
        %v4631 = vunpack.c.h.b16 %v641
        %v4632 = vunpack.c.l.b16 %v642
        %v4633 = vunpack.c.h.b16 %v642
        %v4634 = vunpack.c.l.b16 %v643
        %v4635 = vunpack.c.h.b16 %v643
        %v4636 = vunpack.c.l.b16 %v644
        %v4637 = vunpack.c.h.b16 %v644
        %v4638 = vunpack.c.l.b16 %v645
        %v4639 = vunpack.c.h.b16 %v645
        %v4640 = vunpack.c.l.b16 %v646
        %v4641 = vunpack.c.h.b16 %v646
        %v4642 = vunpack.c.l.b16 %v647
        %v4643 = vunpack.c.h.b16 %v647
        %v4644 = vunpack.c.l.b16 %v648
        %v4645 = vunpack.c.h.b16 %v648
        %v4646 = vunpack.c.l.b16 %v649
        %v4647 = vunpack.c.h.b16 %v649
        %v4648 = vunpack.c.l.b16 %v650
        %v4649 = vunpack.c.h.b16 %v650
        %v4650 = vunpack.c.l.b16 %v651
        %v4651 = vunpack.c.h.b16 %v651
        %v4652 = vunpack.c.l.b16 %v652
        %v4653 = vunpack.c.h.b16 %v652
        %v4654 = vunpack.c.l.b16 %v653
        %v4655 = vunpack.c.h.b16 %v653
        %v4656 = vunpack.c.l.b16 %v654
        %v4657 = vunpack.c.h.b16 %v654
        %v4658 = vunpack.c.l.b16 %v655
        %v4659 = vunpack.c.h.b16 %v655
        %v4660 = vunpack.c.l.b16 %v656
        %v4661 = vunpack.c.h.b16 %v656
        %v4662 = vunpack.c.l.b16 %v657
        %v4663 = vunpack.c.h.b16 %v657
        %v4664 = vunpack.c.l.b16 %v658
        %v4665 = vunpack.c.h.b16 %v658
        %v4666 = vunpack.c.l.b16 %v659
        %v4667 = vunpack.c.h.b16 %v659
        %v4668 = vunpack.c.l.b16 %v660
        %v4669 = vunpack.c.h.b16 %v660
        %v4670 = vunpack.c.l.b16 %v661
        %v4671 = vunpack.c.h.b16 %v661
        %v4672 = vunpack.c.l.b16 %v662
        %v4673 = vunpack.c.h.b16 %v662
        %v4674 = vunpack.c.l.b16 %v663
        %v4675 = vunpack.c.h.b16 %v663
        %v4676 = vunpack.c.l.b16 %v664
        %v4677 = vunpack.c.h.b16 %v664
        %v4678 = vunpack.c.l.b16 %v665
        %v4679 = vunpack.c.h.b16 %v665
        %v4680 = vunpack.c.l.b16 %v666
        %v4681 = vunpack.c.h.b16 %v666
        %v4682 = vunpack.c.l.b16 %v667
        %v4683 = vunpack.c.h.b16 %v667
        %v4684 = vunpack.c.l.b16 %v668
        %v4685 = vunpack.c.h.b16 %v668
        %v4686 = vunpack.c.l.b16 %v669
        %v4687 = vunpack.c.h.b16 %v669
        %v4688 = vunpack.c.l.b16 %v670
        %v4689 = vunpack.c.h.b16 %v670
        %v4690 = vunpack.c.l.b16 %v671
        %v4691 = vunpack.c.h.b16 %v671
        %v4692 = vunpack.c.l.b16 %v672
        %v4693 = vunpack.c.h.b16 %v672
        %v4694 = vunpack.c.l.b16 %v673
        %v4695 = vunpack.c.h.b16 %v673
        %v4696 = vunpack.c.l.b16 %v674
        %v4697 = vunpack.c.h.b16 %v674
        %v4698 = vunpack.c.l.b16 %v675
        %v4699 = vunpack.c.h.b16 %v675
        %v4700 = vunpack.c.l.b16 %v676
        %v4701 = vunpack.c.h.b16 %v676
        %v4702 = vunpack.c.l.b16 %v677
        %v4703 = vunpack.c.h.b16 %v677
        %v4704 = vunpack.c.l.b16 %v678
        %v4705 = vunpack.c.h.b16 %v678
        %v4706 = vunpack.c.l.b16 %v679
        %v4707 = vunpack.c.h.b16 %v679
        %v4708 = vunpack.c.l.b16 %v680
        %v4709 = vunpack.c.h.b16 %v680
        %v4710 = vunpack.c.l.b16 %v681
        %v4711 = vunpack.c.h.b16 %v681
        %v4712 = vunpack.c.l.b16 %v682
        %v4713 = vunpack.c.h.b16 %v682
        %v4714 = vunpack.c.l.b16 %v683
        %v4715 = vunpack.c.h.b16 %v683
        %v4716 = vunpack.c.l.b16 %v684
        %v4717 = vunpack.c.h.b16 %v684
        %v4718 = vunpack.c.l.b16 %v685
        %v4719 = vunpack.c.h.b16 %v685
        %v4720 = vunpack.c.l.b16 %v686
        %v4721 = vunpack.c.h.b16 %v686
        %v4722 = vunpack.c.l.b16 %v687
        %v4723 = vunpack.c.h.b16 %v687
        %v4724 = vunpack.c.l.b16 %v688
        %v4725 = vunpack.c.h.b16 %v688
        %v4726 = vunpack.c.l.b16 %v689
        %v4727 = vunpack.c.h.b16 %v689
        %v4728 = vunpack.c.l.b16 %v690
        %v4729 = vunpack.c.h.b16 %v690
        %v4730 = vunpack.c.l.b16 %v691
        %v4731 = vunpack.c.h.b16 %v691
        %v4732 = vunpack.c.l.b16 %v692
        %v4733 = vunpack.c.h.b16 %v692
        %v4734 = vunpack.c.l.b16 %v693
        %v4735 = vunpack.c.h.b16 %v693
        %v4736 = vunpack.c.l.b16 %v694
        %v4737 = vunpack.c.h.b16 %v694
        %v4738 = vunpack.c.l.b16 %v695
        %v4739 = vunpack.c.h.b16 %v695
        %v4740 = vunpack.c.l.b16 %v696
        %v4741 = vunpack.c.h.b16 %v696
        %v4742 = vunpack.c.l.b16 %v697
        %v4743 = vunpack.c.h.b16 %v697
        %v4744 = vunpack.c.l.b16 %v698
        %v4745 = vunpack.c.h.b16 %v698
        %v4746 = vunpack.c.l.b16 %v699
        %v4747 = vunpack.c.h.b16 %v699
        %v4748 = vunpack.c.l.b16 %v700
        %v4749 = vunpack.c.h.b16 %v700
        %v4750 = vunpack.c.l.b16 %v701
        %v4751 = vunpack.c.h.b16 %v701
        %v4752 = vunpack.c.l.b16 %v702
        %v4753 = vunpack.c.h.b16 %v702
        %v4754 = vunpack.c.l.b16 %v703
        %v4755 = vunpack.c.h.b16 %v703
        %v4756 = vunpack.c.l.b16 %v704
        %v4757 = vunpack.c.h.b16 %v704
        %v4758 = vunpack.c.l.b16 %v705
        %v4759 = vunpack.c.h.b16 %v705
        %v4760 = vunpack.c.l.b16 %v706
        %v4761 = vunpack.c.h.b16 %v706
        %v4762 = vunpack.c.l.b16 %v707
        %v4763 = vunpack.c.h.b16 %v707
        %v4764 = vunpack.c.l.b16 %v708
        %v4765 = vunpack.c.h.b16 %v708
        %v4766 = vunpack.c.l.b16 %v709
        %v4767 = vunpack.c.h.b16 %v709
        %v4768 = vunpack.c.l.b16 %v710
        %v4769 = vunpack.c.h.b16 %v710
        %v4770 = vunpack.c.l.b16 %v711
        %v4771 = vunpack.c.h.b16 %v711
        %v4772 = vunpack.c.l.b16 %v712
        %v4773 = vunpack.c.h.b16 %v712
        %v4774 = vunpack.c.l.b16 %v713
        %v4775 = vunpack.c.h.b16 %v713
        %v4776 = vunpack.c.l.b16 %v714
        %v4777 = vunpack.c.h.b16 %v714
        %v4778 = vunpack.c.l.b16 %v715
        %v4779 = vunpack.c.h.b16 %v715
        %v4780 = vunpack.c.l.b16 %v716
        %v4781 = vunpack.c.h.b16 %v716
        %v4782 = vunpack.c.l.b16 %v717
        %v4783 = vunpack.c.h.b16 %v717
        %v4784 = vunpack.c.l.b16 %v718
        %v4785 = vunpack.c.h.b16 %v718
        %v4786 = vunpack.c.l.b16 %v719
        %v4787 = vunpack.c.h.b16 %v719
        %v4788 = vunpack.c.l.b16 %v720
        %v4789 = vunpack.c.h.b16 %v720
        %v4790 = vunpack.c.l.b16 %v721
        %v4791 = vunpack.c.h.b16 %v721
        %v4792 = vunpack.c.l.b16 %v722
        %v4793 = vunpack.c.h.b16 %v722
        %v4794 = vunpack.c.l.b16 %v723
        %v4795 = vunpack.c.h.b16 %v723
        %v4796 = vunpack.c.l.b16 %v724
        %v4797 = vunpack.c.h.b16 %v724
        %v4798 = vunpack.c.l.b16 %v725
        %v4799 = vunpack.c.h.b16 %v725
        %v4800 = vunpack.c.l.b16 %v726
        %v4801 = vunpack.c.h.b16 %v726
        %v4802 = vunpack.c.l.b16 %v727
        %v4803 = vunpack.c.h.b16 %v727
        %v4804 = vunpack.c.l.b16 %v728
        %v4805 = vunpack.c.h.b16 %v728
        %v4806 = vunpack.c.l.b16 %v729
        %v4807 = vunpack.c.h.b16 %v729
        %v4808 = vunpack.c.l.b16 %v730
        %v4809 = vunpack.c.h.b16 %v730
        %v4810 = vunpack.c.l.b16 %v731
        %v4811 = vunpack.c.h.b16 %v731
        %v4812 = vunpack.c.l.b16 %v732
        %v4813 = vunpack.c.h.b16 %v732
        %v4814 = vunpack.c.l.b16 %v733
        %v4815 = vunpack.c.h.b16 %v733
        %v4816 = vunpack.c.l.b16 %v734
        %v4817 = vunpack.c.h.b16 %v734
        %v4818 = vunpack.c.l.b16 %v735
        %v4819 = vunpack.c.h.b16 %v735
        %v4820 = vunpack.c.l.b16 %v736
        %v4821 = vunpack.c.h.b16 %v736
        %v4822 = vunpack.c.l.b16 %v737
        %v4823 = vunpack.c.h.b16 %v737
        %v4824 = vunpack.c.l.b16 %v738
        %v4825 = vunpack.c.h.b16 %v738
        %v4826 = vunpack.c.l.b16 %v739
        %v4827 = vunpack.c.h.b16 %v739
        %v4828 = vunpack.c.l.b16 %v740
        %v4829 = vunpack.c.h.b16 %v740
        %v4830 = vunpack.c.l.b16 %v741
        %v4831 = vunpack.c.h.b16 %v741
        %v4832 = vunpack.c.l.b16 %v742
        %v4833 = vunpack.c.h.b16 %v742
        %v4834 = vunpack.c.l.b16 %v743
        %v4835 = vunpack.c.h.b16 %v743
        %v4836 = vunpack.c.l.b16 %v744
        %v4837 = vunpack.c.h.b16 %v744
        %v4838 = vunpack.c.l.b16 %v745
        %v4839 = vunpack.c.h.b16 %v745
        %v4840 = vunpack.c.l.b16 %v746
        %v4841 = vunpack.c.h.b16 %v746
        %v4842 = vunpack.c.l.b16 %v747
        %v4843 = vunpack.c.h.b16 %v747
        %v4844 = vunpack.c.l.b16 %v748
        %v4845 = vunpack.c.h.b16 %v748
        %v4846 = vunpack.c.l.b16 %v749
        %v4847 = vunpack.c.h.b16 %v749
        %v4848 = vunpack.c.l.b16 %v750
        %v4849 = vunpack.c.h.b16 %v750
        %v4850 = vunpack.c.l.b16 %v751
        %v4851 = vunpack.c.h.b16 %v751
        %v4852 = vunpack.c.l.b16 %v752
        %v4853 = vunpack.c.h.b16 %v752
        %v4854 = vunpack.c.l.b16 %v753
        %v4855 = vunpack.c.h.b16 %v753
        %v4856 = vunpack.c.l.b16 %v754
        %v4857 = vunpack.c.h.b16 %v754
        %v4858 = vunpack.c.l.b16 %v755
        %v4859 = vunpack.c.h.b16 %v755
        %v4860 = vunpack.c.l.b16 %v756
        %v4861 = vunpack.c.h.b16 %v756
        %v4862 = vunpack.c.l.b16 %v757
        %v4863 = vunpack.c.h.b16 %v757
        %v4864 = vunpack.c.l.b16 %v758
        %v4865 = vunpack.c.h.b16 %v758
        %v4866 = vunpack.c.l.b16 %v759
        %v4867 = vunpack.c.h.b16 %v759
        %v4868 = vunpack.c.l.b16 %v760
        %v4869 = vunpack.c.h.b16 %v760
        %v4870 = vunpack.c.l.b16 %v761
        %v4871 = vunpack.c.h.b16 %v761
        %v4872 = vunpack.c.l.b16 %v762
        %v4873 = vunpack.c.h.b16 %v762
        %v4874 = vunpack.c.l.b16 %v763
        %v4875 = vunpack.c.h.b16 %v763
        %v4876 = vunpack.c.l.b16 %v764
        %v4877 = vunpack.c.h.b16 %v764
        %v4878 = vunpack.c.l.b16 %v765
        %v4879 = vunpack.c.h.b16 %v765
        %v4880 = vunpack.c.l.b16 %v766
        %v4881 = vunpack.c.h.b16 %v766
        %v4882 = vunpack.c.l.b16 %v767
        %v4883 = vunpack.c.h.b16 %v767
        %v4884 = vunpack.c.l.b16 %v768
        %v4885 = vunpack.c.h.b16 %v768
        %v4886 = vunpack.c.l.b16 %v769
        %v4887 = vunpack.c.h.b16 %v769
        %v4888 = vunpack.c.l.b16 %v770
        %v4889 = vunpack.c.h.b16 %v770
        %v4890 = vunpack.c.l.b16 %v771
        %v4891 = vunpack.c.h.b16 %v771
        %v4892 = vunpack.c.l.b16 %v772
        %v4893 = vunpack.c.h.b16 %v772
        %v4894 = vunpack.c.l.b16 %v773
        %v4895 = vunpack.c.h.b16 %v773
        %v4896 = vunpack.c.l.b16 %v774
        %v4897 = vunpack.c.h.b16 %v774
        %v4898 = vunpack.c.l.b16 %v775
        %v4899 = vunpack.c.h.b16 %v775
        %v4900 = vunpack.c.l.b16 %v776
        %v4901 = vunpack.c.h.b16 %v776
        %v4902 = vunpack.c.l.b16 %v777
        %v4903 = vunpack.c.h.b16 %v777
        %v4904 = vunpack.c.l.b16 %v778
        %v4905 = vunpack.c.h.b16 %v778
        %v4906 = vunpack.c.l.b16 %v779
        %v4907 = vunpack.c.h.b16 %v779
        %v4908 = vunpack.c.l.b16 %v780
        %v4909 = vunpack.c.h.b16 %v780
        %v4910 = vunpack.c.l.b16 %v781
        %v4911 = vunpack.c.h.b16 %v781
        %v4912 = vunpack.c.l.b16 %v782
        %v4913 = vunpack.c.h.b16 %v782
        %v4914 = vunpack.c.l.b16 %v783
        %v4915 = vunpack.c.h.b16 %v783
        %v4916 = vunpack.c.l.b16 %v784
        %v4917 = vunpack.c.h.b16 %v784
        %v4918 = vunpack.c.l.b16 %v785
        %v4919 = vunpack.c.h.b16 %v785
        %v4920 = vunpack.c.l.b16 %v786
        %v4921 = vunpack.c.h.b16 %v786
        %v4922 = vunpack.c.l.b16 %v787
        %v4923 = vunpack.c.h.b16 %v787
        %v4924 = vunpack.c.l.b16 %v788
        %v4925 = vunpack.c.h.b16 %v788
        %v4926 = vunpack.c.l.b16 %v789
        %v4927 = vunpack.c.h.b16 %v789
        %v4928 = vunpack.c.l.b16 %v790
        %v4929 = vunpack.c.h.b16 %v790
        %v4930 = vunpack.c.l.b16 %v791
        %v4931 = vunpack.c.h.b16 %v791
        %v4932 = vunpack.c.l.b16 %v792
        %v4933 = vunpack.c.h.b16 %v792
        %v4934 = vunpack.c.l.b16 %v793
        %v4935 = vunpack.c.h.b16 %v793
        %v4936 = vunpack.c.l.b16 %v794
        %v4937 = vunpack.c.h.b16 %v794
        %v4938 = vunpack.c.l.b16 %v795
        %v4939 = vunpack.c.h.b16 %v795
        %v4940 = vunpack.c.l.b16 %v796
        %v4941 = vunpack.c.h.b16 %v796
        %v4942 = vunpack.c.l.b16 %v797
        %v4943 = vunpack.c.h.b16 %v797
        %v4944 = vunpack.c.l.b16 %v798
        %v4945 = vunpack.c.h.b16 %v798
        %v4946 = vunpack.c.l.b16 %v799
        %v4947 = vunpack.c.h.b16 %v799
        %v4948 = vunpack.c.l.b16 %v800
        %v4949 = vunpack.c.h.b16 %v800
        %v4950 = vunpack.c.l.b16 %v801
        %v4951 = vunpack.c.h.b16 %v801
        %v4952 = vunpack.c.l.b16 %v802
        %v4953 = vunpack.c.h.b16 %v802
        %v4954 = vunpack.c.l.b16 %v803
        %v4955 = vunpack.c.h.b16 %v803
        %v4956 = vunpack.c.l.b16 %v804
        %v4957 = vunpack.c.h.b16 %v804
        %v4958 = vunpack.c.l.b16 %v805
        %v4959 = vunpack.c.h.b16 %v805
        %v4960 = vunpack.c.l.b16 %v806
        %v4961 = vunpack.c.h.b16 %v806
        %v4962 = vunpack.c.l.b16 %v807
        %v4963 = vunpack.c.h.b16 %v807
        %v4964 = vunpack.c.l.b16 %v808
        %v4965 = vunpack.c.h.b16 %v808
        %v4966 = vunpack.c.l.b16 %v809
        %v4967 = vunpack.c.h.b16 %v809
        %v4968 = vunpack.c.l.b16 %v810
        %v4969 = vunpack.c.h.b16 %v810
        %v4970 = vunpack.c.l.b16 %v811
        %v4971 = vunpack.c.h.b16 %v811
        %v4972 = vunpack.c.l.b16 %v812
        %v4973 = vunpack.c.h.b16 %v812
        %v4974 = vunpack.c.l.b16 %v813
        %v4975 = vunpack.c.h.b16 %v813
        %v4976 = vunpack.c.l.b16 %v814
        %v4977 = vunpack.c.h.b16 %v814
        %v4978 = vunpack.c.l.b16 %v815
        %v4979 = vunpack.c.h.b16 %v815
        %v4980 = vunpack.c.l.b16 %v816
        %v4981 = vunpack.c.h.b16 %v816
        %v4982 = vunpack.c.l.b16 %v817
        %v4983 = vunpack.c.h.b16 %v817
        %v4984 = vunpack.c.l.b16 %v818
        %v4985 = vunpack.c.h.b16 %v818
        %v4986 = vunpack.c.l.b16 %v819
        %v4987 = vunpack.c.h.b16 %v819
        %v4988 = vunpack.c.l.b16 %v820
        %v4989 = vunpack.c.h.b16 %v820
        %v4990 = vunpack.c.l.b16 %v821
        %v4991 = vunpack.c.h.b16 %v821
        %v4992 = vunpack.c.l.b16 %v822
        %v4993 = vunpack.c.h.b16 %v822
        %v4994 = vunpack.c.l.b16 %v823
        %v4995 = vunpack.c.h.b16 %v823
        %v4996 = vunpack.c.l.b16 %v824
        %v4997 = vunpack.c.h.b16 %v824
        %v4998 = vunpack.c.l.b16 %v825
        %v4999 = vunpack.c.h.b16 %v825
        %v5000 = vunpack.c.l.b16 %v826
        %v5001 = vunpack.c.h.b16 %v826
        %v5002 = vunpack.c.l.b16 %v827
        %v5003 = vunpack.c.h.b16 %v827
        %v5004 = vunpack.c.l.b16 %v828
        %v5005 = vunpack.c.h.b16 %v828
        %v5006 = vunpack.c.l.b16 %v829
        %v5007 = vunpack.c.h.b16 %v829
        %v5008 = vunpack.c.l.b16 %v830
        %v5009 = vunpack.c.h.b16 %v830
        %v5010 = vunpack.c.l.b16 %v831
        %v5011 = vunpack.c.h.b16 %v831
        %v5012 = vunpack.c.l.b16 %v832
        %v5013 = vunpack.c.h.b16 %v832
        %v5014 = vunpack.c.l.b16 %v833
        %v5015 = vunpack.c.h.b16 %v833
        %v5016 = vunpack.c.l.b16 %v834
        %v5017 = vunpack.c.h.b16 %v834
        %v5018 = vunpack.c.l.b16 %v835
        %v5019 = vunpack.c.h.b16 %v835
        %v5020 = vunpack.c.l.b16 %v836
        %v5021 = vunpack.c.h.b16 %v836
        %v5022 = vunpack.c.l.b16 %v837
        %v5023 = vunpack.c.h.b16 %v837
        %v5024 = vunpack.c.l.b16 %v838
        %v5025 = vunpack.c.h.b16 %v838
        %v5026 = vunpack.c.l.b16 %v839
        %v5027 = vunpack.c.h.b16 %v839
        %v5028 = vunpack.c.l.b16 %v840
        %v5029 = vunpack.c.h.b16 %v840
        %v5030 = vunpack.c.l.b16 %v841
        %v5031 = vunpack.c.h.b16 %v841
        %v5032 = vunpack.c.l.b16 %v842
        %v5033 = vunpack.c.h.b16 %v842
        %v5034 = vunpack.c.l.b16 %v843
        %v5035 = vunpack.c.h.b16 %v843
        %v5036 = vunpack.c.l.b16 %v844
        %v5037 = vunpack.c.h.b16 %v844
        %v5038 = vunpack.c.l.b16 %v845
        %v5039 = vunpack.c.h.b16 %v845
        %v5040 = vunpack.c.l.b16 %v846
        %v5041 = vunpack.c.h.b16 %v846
        %v5042 = vunpack.c.l.b16 %v847
        %v5043 = vunpack.c.h.b16 %v847
        %v5044 = vunpack.c.l.b16 %v848
        %v5045 = vunpack.c.h.b16 %v848
        %v5046 = vunpack.c.l.b16 %v849
        %v5047 = vunpack.c.h.b16 %v849
        %v5048 = vunpack.c.l.b16 %v850
        %v5049 = vunpack.c.h.b16 %v850
        %v5050 = vunpack.c.l.b16 %v851
        %v5051 = vunpack.c.h.b16 %v851
        %v5052 = vunpack.c.l.b16 %v852
        %v5053 = vunpack.c.h.b16 %v852
        %v5054 = vunpack.c.l.b16 %v853
        %v5055 = vunpack.c.h.b16 %v853
        %v5056 = vunpack.c.l.b16 %v854
        %v5057 = vunpack.c.h.b16 %v854
        %v5058 = vunpack.c.l.b16 %v855
        %v5059 = vunpack.c.h.b16 %v855
        %v5060 = vunpack.c.l.b16 %v856
        %v5061 = vunpack.c.h.b16 %v856
        %v5062 = vunpack.c.l.b16 %v857
        %v5063 = vunpack.c.h.b16 %v857
        %v5064 = vunpack.c.l.b16 %v858
        %v5065 = vunpack.c.h.b16 %v858
        %v5066 = vunpack.c.l.b16 %v859
        %v5067 = vunpack.c.h.b16 %v859
        %v5068 = vunpack.c.l.b16 %v860
        %v5069 = vunpack.c.h.b16 %v860
        %v5070 = vunpack.c.l.b16 %v861
        %v5071 = vunpack.c.h.b16 %v861
        %v5072 = vunpack.c.l.b16 %v862
        %v5073 = vunpack.c.h.b16 %v862
        %v5074 = vunpack.c.l.b16 %v863
        %v5075 = vunpack.c.h.b16 %v863
        %v5076 = vunpack.c.l.b16 %v864
        %v5077 = vunpack.c.h.b16 %v864
        %v5078 = vunpack.c.l.b16 %v865
        %v5079 = vunpack.c.h.b16 %v865
        %v5080 = vunpack.c.l.b16 %v866
        %v5081 = vunpack.c.h.b16 %v866
        %v5082 = vunpack.c.l.b16 %v867
        %v5083 = vunpack.c.h.b16 %v867
        %v5084 = vunpack.c.l.b16 %v868
        %v5085 = vunpack.c.h.b16 %v868
        %v5086 = vunpack.c.l.b16 %v869
        %v5087 = vunpack.c.h.b16 %v869
        %v5088 = vunpack.c.l.b16 %v870
        %v5089 = vunpack.c.h.b16 %v870
        %v5090 = vunpack.c.l.b16 %v871
        %v5091 = vunpack.c.h.b16 %v871
        %v5092 = vunpack.c.l.b16 %v872
        %v5093 = vunpack.c.h.b16 %v872
        %v5094 = vunpack.c.l.b16 %v873
        %v5095 = vunpack.c.h.b16 %v873
        %v5096 = vunpack.c.l.b16 %v874
        %v5097 = vunpack.c.h.b16 %v874
        %v5098 = vunpack.c.l.b16 %v875
        %v5099 = vunpack.c.h.b16 %v875
        %v5100 = vunpack.c.l.b16 %v876
        %v5101 = vunpack.c.h.b16 %v876
        %v5102 = vunpack.c.l.b16 %v877
        %v5103 = vunpack.c.h.b16 %v877
        %v5104 = vunpack.c.l.b16 %v878
        %v5105 = vunpack.c.h.b16 %v878
        %v5106 = vunpack.c.l.b16 %v879
        %v5107 = vunpack.c.h.b16 %v879
        %v5108 = vunpack.c.l.b16 %v880
        %v5109 = vunpack.c.h.b16 %v880
        %v5110 = vunpack.c.l.b16 %v881
        %v5111 = vunpack.c.h.b16 %v881
        %v5112 = vunpack.c.l.b16 %v882
        %v5113 = vunpack.c.h.b16 %v882
        %v5114 = vunpack.c.l.b16 %v883
        %v5115 = vunpack.c.h.b16 %v883
        %v5116 = vunpack.c.l.b16 %v884
        %v5117 = vunpack.c.h.b16 %v884
        %v5118 = vunpack.c.l.b16 %v885
        %v5119 = vunpack.c.h.b16 %v885
        %v5120 = vunpack.c.l.b16 %v886
        %v5121 = vunpack.c.h.b16 %v886
        %v5122 = vunpack.c.l.b16 %v887
        %v5123 = vunpack.c.h.b16 %v887
        %v5124 = vunpack.c.l.b16 %v888
        %v5125 = vunpack.c.h.b16 %v888
        %v5126 = vunpack.c.l.b16 %v889
        %v5127 = vunpack.c.h.b16 %v889
        %v5128 = vunpack.c.l.b16 %v890
        %v5129 = vunpack.c.h.b16 %v890
        %v5130 = vunpack.c.l.b16 %v891
        %v5131 = vunpack.c.h.b16 %v891
        %v5132 = vunpack.c.l.b16 %v892
        %v5133 = vunpack.c.h.b16 %v892
        %v5134 = vunpack.c.l.b16 %v893
        %v5135 = vunpack.c.h.b16 %v893
        %v5136 = vunpack.c.l.b16 %v894
        %v5137 = vunpack.c.h.b16 %v894
        %v5138 = vunpack.c.l.b16 %v895
        %v5139 = vunpack.c.h.b16 %v895
        %v5140 = vunpack.c.l.b16 %v896
        %v5141 = vunpack.c.h.b16 %v896
        %v5142 = vunpack.c.l.b16 %v897
        %v5143 = vunpack.c.h.b16 %v897
        %v5144 = vunpack.c.l.b16 %v898
        %v5145 = vunpack.c.h.b16 %v898
        %v5146 = vunpack.c.l.b16 %v899
        %v5147 = vunpack.c.h.b16 %v899
        %v5148 = vunpack.c.l.b16 %v900
        %v5149 = vunpack.c.h.b16 %v900
        %v5150 = vunpack.c.l.b16 %v901
        %v5151 = vunpack.c.h.b16 %v901
        %v5152 = vunpack.c.l.b16 %v902
        %v5153 = vunpack.c.h.b16 %v902
        %v5154 = vunpack.c.l.b16 %v903
        %v5155 = vunpack.c.h.b16 %v903
        %v5156 = vunpack.c.l.b16 %v904
        %v5157 = vunpack.c.h.b16 %v904
        %v5158 = vunpack.c.l.b16 %v905
        %v5159 = vunpack.c.h.b16 %v905
        %v5160 = vunpack.c.l.b16 %v906
        %v5161 = vunpack.c.h.b16 %v906
        %v5162 = vunpack.c.l.b16 %v907
        %v5163 = vunpack.c.h.b16 %v907
        %v5164 = vunpack.c.l.b16 %v908
        %v5165 = vunpack.c.h.b16 %v908
        %v5166 = vunpack.c.l.b16 %v909
        %v5167 = vunpack.c.h.b16 %v909
        %v5168 = vunpack.c.l.b16 %v910
        %v5169 = vunpack.c.h.b16 %v910
        %v5170 = vunpack.c.l.b16 %v911
        %v5171 = vunpack.c.h.b16 %v911
        %v5172 = vunpack.c.l.b16 %v912
        %v5173 = vunpack.c.h.b16 %v912
        %v5174 = vunpack.c.l.b16 %v913
        %v5175 = vunpack.c.h.b16 %v913
        %v5176 = vunpack.c.l.b16 %v914
        %v5177 = vunpack.c.h.b16 %v914
        %v5178 = vunpack.c.l.b16 %v915
        %v5179 = vunpack.c.h.b16 %v915
        %v5180 = vunpack.c.l.b16 %v916
        %v5181 = vunpack.c.h.b16 %v916
        %v5182 = vunpack.c.l.b16 %v917
        %v5183 = vunpack.c.h.b16 %v917
        %v5184 = vunpack.c.l.b16 %v918
        %v5185 = vunpack.c.h.b16 %v918
        %v5186 = vunpack.c.l.b16 %v919
        %v5187 = vunpack.c.h.b16 %v919
        %v5188 = vunpack.c.l.b16 %v920
        %v5189 = vunpack.c.h.b16 %v920
        %v5190 = vunpack.c.l.b16 %v921
        %v5191 = vunpack.c.h.b16 %v921
        %v5192 = vunpack.c.l.b16 %v922
        %v5193 = vunpack.c.h.b16 %v922
        %v5194 = vunpack.c.l.b16 %v923
        %v5195 = vunpack.c.h.b16 %v923
        %v5196 = vunpack.c.l.b16 %v924
        %v5197 = vunpack.c.h.b16 %v924
        %v5198 = vunpack.c.l.b16 %v925
        %v5199 = vunpack.c.h.b16 %v925
        %v5200 = vunpack.c.l.b16 %v926
        %v5201 = vunpack.c.h.b16 %v926
        %v5202 = vunpack.c.l.b16 %v927
        %v5203 = vunpack.c.h.b16 %v927
        %v5204 = vunpack.c.l.b16 %v928
        %v5205 = vunpack.c.h.b16 %v928
        %v5206 = vunpack.c.l.b16 %v929
        %v5207 = vunpack.c.h.b16 %v929
        %v5208 = vunpack.c.l.b16 %v930
        %v5209 = vunpack.c.h.b16 %v930
        %v5210 = vunpack.c.l.b16 %v931
        %v5211 = vunpack.c.h.b16 %v931
        %v5212 = vunpack.c.l.b16 %v932
        %v5213 = vunpack.c.h.b16 %v932
        %v5214 = vunpack.c.l.b16 %v933
        %v5215 = vunpack.c.h.b16 %v933
        %v5216 = vunpack.c.l.b16 %v934
        %v5217 = vunpack.c.h.b16 %v934
        %v5218 = vunpack.c.l.b16 %v935
        %v5219 = vunpack.c.h.b16 %v935
        %v5220 = vunpack.c.l.b16 %v936
        %v5221 = vunpack.c.h.b16 %v936
        %v5222 = vunpack.c.l.b16 %v937
        %v5223 = vunpack.c.h.b16 %v937
        %v5224 = vunpack.c.l.b16 %v938
        %v5225 = vunpack.c.h.b16 %v938
        %v5226 = vunpack.c.l.b16 %v939
        %v5227 = vunpack.c.h.b16 %v939
        %v5228 = vunpack.c.l.b16 %v940
        %v5229 = vunpack.c.h.b16 %v940
        %v5230 = vunpack.c.l.b16 %v941
        %v5231 = vunpack.c.h.b16 %v941
        %v5232 = vunpack.c.l.b16 %v942
        %v5233 = vunpack.c.h.b16 %v942
        %v5234 = vunpack.c.l.b16 %v943
        %v5235 = vunpack.c.h.b16 %v943
        %v5236 = vunpack.c.l.b16 %v944
        %v5237 = vunpack.c.h.b16 %v944
        %v5238 = vunpack.c.l.b16 %v945
        %v5239 = vunpack.c.h.b16 %v945
        %v5240 = vunpack.c.l.b16 %v946
        %v5241 = vunpack.c.h.b16 %v946
        %v5242 = vunpack.c.l.b16 %v947
        %v5243 = vunpack.c.h.b16 %v947
        %v5244 = vunpack.c.l.b16 %v948
        %v5245 = vunpack.c.h.b16 %v948
        %v5246 = vunpack.c.l.b16 %v949
        %v5247 = vunpack.c.h.b16 %v949
        %v5248 = vunpack.c.l.b16 %v950
        %v5249 = vunpack.c.h.b16 %v950
        %v5250 = vunpack.c.l.b16 %v951
        %v5251 = vunpack.c.h.b16 %v951
        %v5252 = vunpack.c.l.b16 %v952
        %v5253 = vunpack.c.h.b16 %v952
        %v5254 = vunpack.c.l.b16 %v953
        %v5255 = vunpack.c.h.b16 %v953
        %v5256 = vunpack.c.l.b16 %v954
        %v5257 = vunpack.c.h.b16 %v954
        %v5258 = vunpack.c.l.b16 %v955
        %v5259 = vunpack.c.h.b16 %v955
        %v5260 = vunpack.c.l.b16 %v956
        %v5261 = vunpack.c.h.b16 %v956
        %v5262 = vunpack.c.l.b16 %v957
        %v5263 = vunpack.c.h.b16 %v957
        %v5264 = vunpack.c.l.b16 %v958
        %v5265 = vunpack.c.h.b16 %v958
        %v5266 = vunpack.c.l.b16 %v959
        %v5267 = vunpack.c.h.b16 %v959
        %v5268 = vunpack.c.l.b16 %v960
        %v5269 = vunpack.c.h.b16 %v960
        %v5270 = vunpack.c.l.b16 %v961
        %v5271 = vunpack.c.h.b16 %v961
        %v5272 = vunpack.c.l.b16 %v962
        %v5273 = vunpack.c.h.b16 %v962
        %v5274 = vunpack.c.l.b16 %v963
        %v5275 = vunpack.c.h.b16 %v963
        %v5276 = vunpack.c.l.b16 %v964
        %v5277 = vunpack.c.h.b16 %v964
        %v5278 = vunpack.c.l.b16 %v965
        %v5279 = vunpack.c.h.b16 %v965
        %v5280 = vunpack.c.l.b16 %v966
        %v5281 = vunpack.c.h.b16 %v966
        %v5282 = vunpack.c.l.b16 %v967
        %v5283 = vunpack.c.h.b16 %v967
        %v5284 = vunpack.c.l.b16 %v968
        %v5285 = vunpack.c.h.b16 %v968
        %v5286 = vunpack.c.l.b16 %v969
        %v5287 = vunpack.c.h.b16 %v969
        %v5288 = vunpack.c.l.b16 %v970
        %v5289 = vunpack.c.h.b16 %v970
        %v5290 = vunpack.c.l.b16 %v971
        %v5291 = vunpack.c.h.b16 %v971
        %v5292 = vunpack.c.l.b16 %v972
        %v5293 = vunpack.c.h.b16 %v972
        %v5294 = vunpack.c.l.b16 %v973
        %v5295 = vunpack.c.h.b16 %v973
        %v5296 = vunpack.c.l.b16 %v974
        %v5297 = vunpack.c.h.b16 %v974
        %v5298 = vunpack.c.l.b16 %v975
        %v5299 = vunpack.c.h.b16 %v975
        %v5300 = vunpack.c.l.b16 %v976
        %v5301 = vunpack.c.h.b16 %v976
        %v5302 = vunpack.c.l.b16 %v977
        %v5303 = vunpack.c.h.b16 %v977
        %v5304 = vunpack.c.l.b16 %v978
        %v5305 = vunpack.c.h.b16 %v978
        %v5306 = vunpack.c.l.b16 %v979
        %v5307 = vunpack.c.h.b16 %v979
        %v5308 = vunpack.c.l.b16 %v980
        %v5309 = vunpack.c.h.b16 %v980
        %v5310 = vunpack.c.l.b16 %v981
        %v5311 = vunpack.c.h.b16 %v981
        %v5312 = vunpack.c.l.b16 %v982
        %v5313 = vunpack.c.h.b16 %v982
        %v5314 = vunpack.c.l.b16 %v983
        %v5315 = vunpack.c.h.b16 %v983
        %v5316 = vunpack.c.l.b16 %v984
        %v5317 = vunpack.c.h.b16 %v984
        %v5318 = vunpack.c.l.b16 %v985
        %v5319 = vunpack.c.h.b16 %v985
        %v5320 = vunpack.c.l.b16 %v986
        %v5321 = vunpack.c.h.b16 %v986
        %v5322 = vunpack.c.l.b16 %v987
        %v5323 = vunpack.c.h.b16 %v987
        %v5324 = vunpack.c.l.b16 %v988
        %v5325 = vunpack.c.h.b16 %v988
        %v5326 = vunpack.c.l.b16 %v989
        %v5327 = vunpack.c.h.b16 %v989
        %v5328 = vunpack.c.l.b16 %v990
        %v5329 = vunpack.c.h.b16 %v990
        %v5330 = vunpack.c.l.b16 %v991
        %v5331 = vunpack.c.h.b16 %v991
        %v5332 = vunpack.c.l.b16 %v992
        %v5333 = vunpack.c.h.b16 %v992
        %v5334 = vunpack.c.l.b16 %v993
        %v5335 = vunpack.c.h.b16 %v993
        %v5336 = vunpack.c.l.b16 %v994
        %v5337 = vunpack.c.h.b16 %v994
        %v5338 = vunpack.c.l.b16 %v995
        %v5339 = vunpack.c.h.b16 %v995
        %v5340 = vunpack.c.l.b16 %v996
        %v5341 = vunpack.c.h.b16 %v996
        %v5342 = vunpack.c.l.b16 %v997
        %v5343 = vunpack.c.h.b16 %v997
        %v5344 = vunpack.c.l.b16 %v998
        %v5345 = vunpack.c.h.b16 %v998
        %v5346 = vunpack.c.l.b16 %v999
        %v5347 = vunpack.c.h.b16 %v999
        %v5348 = vunpack.c.l.b16 %v1000
        %v5349 = vunpack.c.h.b16 %v1000
        %v5350 = vunpack.c.l.b16 %v1001
        %v5351 = vunpack.c.h.b16 %v1001
        %v5352 = vunpack.c.l.b16 %v1002
        %v5353 = vunpack.c.h.b16 %v1002
        %v5354 = vunpack.c.l.b16 %v1003
        %v5355 = vunpack.c.h.b16 %v1003
        %v5356 = vunpack.c.l.b16 %v1004
        %v5357 = vunpack.c.h.b16 %v1004
        %v5358 = vunpack.c.l.b16 %v1005
        %v5359 = vunpack.c.h.b16 %v1005
        %v5360 = vunpack.c.l.b16 %v1006
        %v5361 = vunpack.c.h.b16 %v1006
        %v5362 = vunpack.c.l.b16 %v1007
        %v5363 = vunpack.c.h.b16 %v1007
        %v5364 = vunpack.c.l.b16 %v1008
        %v5365 = vunpack.c.h.b16 %v1008
        %v5366 = vunpack.c.l.b16 %v1009
        %v5367 = vunpack.c.h.b16 %v1009
        %v5368 = vunpack.c.l.b16 %v1010
        %v5369 = vunpack.c.h.b16 %v1010
        %v5370 = vunpack.c.l.b16 %v1011
        %v5371 = vunpack.c.h.b16 %v1011
        %v5372 = vunpack.c.l.b16 %v1012
        %v5373 = vunpack.c.h.b16 %v1012
        %v5374 = vunpack.c.l.b16 %v1013
        %v5375 = vunpack.c.h.b16 %v1013
        %v5376 = vunpack.c.l.b16 %v1014
        %v5377 = vunpack.c.h.b16 %v1014
        %v5378 = vunpack.c.l.b16 %v1015
        %v5379 = vunpack.c.h.b16 %v1015
        %v5380 = vunpack.c.l.b16 %v1016
        %v5381 = vunpack.c.h.b16 %v1016
        %v5382 = vunpack.c.l.b16 %v1017
        %v5383 = vunpack.c.h.b16 %v1017
        %v5384 = vunpack.c.l.b16 %v1018
        %v5385 = vunpack.c.h.b16 %v1018
        %v5386 = vunpack.c.l.b16 %v1019
        %v5387 = vunpack.c.h.b16 %v1019
        %v5388 = vunpack.c.l.b16 %v1020
        %v5389 = vunpack.c.h.b16 %v1020
        %v5390 = vunpack.c.l.b16 %v1021
        %v5391 = vunpack.c.h.b16 %v1021
        %v5392 = vunpack.c.l.b16 %v1022
        %v5393 = vunpack.c.h.b16 %v1022
        %v5394 = vunpack.c.l.b16 %v1023
        %v5395 = vunpack.c.h.b16 %v1023
        %v5396 = vunpack.c.l.b16 %v1024
        %v5397 = vunpack.c.h.b16 %v1024
        %v5398 = vunpack.c.l.b16 %v1025
        %v5399 = vunpack.c.h.b16 %v1025
        %v5400 = vunpack.c.l.b16 %v1026
        %v5401 = vunpack.c.h.b16 %v1026
        %v5402 = vunpack.c.l.b16 %v1027
        %v5403 = vunpack.c.h.b16 %v1027
        %v5404 = vunpack.c.l.b16 %v1028
        %v5405 = vunpack.c.h.b16 %v1028
        %v5406 = vunpack.c.l.b16 %v1029
        %v5407 = vunpack.c.h.b16 %v1029
        %v5408 = vunpack.c.l.b16 %v1030
        %v5409 = vunpack.c.h.b16 %v1030
        %v5410 = vunpack.c.l.b16 %v1031
        %v5411 = vunpack.c.h.b16 %v1031
        %v5412 = vunpack.c.l.b16 %v1032
        %v5413 = vunpack.c.h.b16 %v1032
        %v5414 = vunpack.c.l.b16 %v1033
        %v5415 = vunpack.c.h.b16 %v1033
        %v5416 = vunpack.c.l.b16 %v1034
        %v5417 = vunpack.c.h.b16 %v1034
        %v5418 = vunpack.c.l.b16 %v1035
        %v5419 = vunpack.c.h.b16 %v1035
        %v5420 = vunpack.c.l.b16 %v1036
        %v5421 = vunpack.c.h.b16 %v1036
        %v5422 = vunpack.c.l.b16 %v1037
        %v5423 = vunpack.c.h.b16 %v1037
        %v5424 = vunpack.c.l.b16 %v1038
        %v5425 = vunpack.c.h.b16 %v1038
        %v5426 = vunpack.c.l.b16 %v1039
        %v5427 = vunpack.c.h.b16 %v1039
        %v5428 = vunpack.c.l.b16 %v1040
        %v5429 = vunpack.c.h.b16 %v1040
        %v5430 = vunpack.c.l.b16 %v1041
        %v5431 = vunpack.c.h.b16 %v1041
        %v5432 = vunpack.c.l.b16 %v1042
        %v5433 = vunpack.c.h.b16 %v1042
        %v5434 = vunpack.c.l.b16 %v1043
        %v5435 = vunpack.c.h.b16 %v1043
        %v5436 = vunpack.c.l.b16 %v1044
        %v5437 = vunpack.c.h.b16 %v1044
        %v5438 = vunpack.c.l.b16 %v1045
        %v5439 = vunpack.c.h.b16 %v1045
        %v5440 = vunpack.c.l.b16 %v1046
        %v5441 = vunpack.c.h.b16 %v1046
        %v5442 = vunpack.c.l.b16 %v1047
        %v5443 = vunpack.c.h.b16 %v1047
        %v5444 = vunpack.c.l.b16 %v1048
        %v5445 = vunpack.c.h.b16 %v1048
        %v5446 = vunpack.c.l.b16 %v1049
        %v5447 = vunpack.c.h.b16 %v1049
        %v5448 = vunpack.c.l.b16 %v1050
        %v5449 = vunpack.c.h.b16 %v1050
        %v5450 = vunpack.c.l.b16 %v1051
        %v5451 = vunpack.c.h.b16 %v1051
        %v5452 = vunpack.c.l.b16 %v1052
        %v5453 = vunpack.c.h.b16 %v1052
        %v5454 = vunpack.c.l.b16 %v1053
        %v5455 = vunpack.c.h.b16 %v1053
        %v5456 = vunpack.c.l.b16 %v1054
        %v5457 = vunpack.c.h.b16 %v1054
        %v5458 = vunpack.c.l.b16 %v1055
        %v5459 = vunpack.c.h.b16 %v1055
        %v5460 = vunpack.c.l.b16 %v1056
        %v5461 = vunpack.c.h.b16 %v1056
        %v5462 = vunpack.c.l.b16 %v1057
        %v5463 = vunpack.c.h.b16 %v1057
        %v5464 = vunpack.c.l.b16 %v1058
        %v5465 = vunpack.c.h.b16 %v1058
        %v5466 = vunpack.c.l.b16 %v1059
        %v5467 = vunpack.c.h.b16 %v1059
        %v5468 = vunpack.c.l.b16 %v1060
        %v5469 = vunpack.c.h.b16 %v1060
        %v5470 = vunpack.c.l.b16 %v1061
        %v5471 = vunpack.c.h.b16 %v1061
        %v5472 = vunpack.c.l.b16 %v1062
        %v5473 = vunpack.c.h.b16 %v1062
        %v5474 = vunpack.c.l.b16 %v1063
        %v5475 = vunpack.c.h.b16 %v1063
        %v5476 = vunpack.c.l.b16 %v1064
        %v5477 = vunpack.c.h.b16 %v1064
        %v5478 = vunpack.c.l.b16 %v1065
        %v5479 = vunpack.c.h.b16 %v1065
        %v5480 = vunpack.c.l.b16 %v1066
        %v5481 = vunpack.c.h.b16 %v1066
        %v5482 = vunpack.c.l.b16 %v1067
        %v5483 = vunpack.c.h.b16 %v1067
        %v5484 = vunpack.c.l.b16 %v1068
        %v5485 = vunpack.c.h.b16 %v1068
        %v5486 = vunpack.c.l.b16 %v1069
        %v5487 = vunpack.c.h.b16 %v1069
        %v5488 = vunpack.c.l.b16 %v1070
        %v5489 = vunpack.c.h.b16 %v1070
        %v5490 = vunpack.c.l.b16 %v1071
        %v5491 = vunpack.c.h.b16 %v1071
        %v5492 = vunpack.c.l.b16 %v1072
        %v5493 = vunpack.c.h.b16 %v1072
        %v5494 = vunpack.c.l.b16 %v1073
        %v5495 = vunpack.c.h.b16 %v1073
        %v5496 = vunpack.c.l.b16 %v1074
        %v5497 = vunpack.c.h.b16 %v1074
        %v5498 = vunpack.c.l.b16 %v1075
        %v5499 = vunpack.c.h.b16 %v1075
        %v5500 = vunpack.c.l.b16 %v1076
        %v5501 = vunpack.c.h.b16 %v1076
        %v5502 = vunpack.c.l.b16 %v1077
        %v5503 = vunpack.c.h.b16 %v1077
        %v5504 = vunpack.c.l.b16 %v1078
        %v5505 = vunpack.c.h.b16 %v1078
        %v5506 = vunpack.c.l.b16 %v1079
        %v5507 = vunpack.c.h.b16 %v1079
        %v5508 = vunpack.c.l.b16 %v1080
        %v5509 = vunpack.c.h.b16 %v1080
        %v5510 = vunpack.c.l.b16 %v1081
        %v5511 = vunpack.c.h.b16 %v1081
        %v5512 = vunpack.c.l.b16 %v1082
        %v5513 = vunpack.c.h.b16 %v1082
        %v5514 = vunpack.c.l.b16 %v1083
        %v5515 = vunpack.c.h.b16 %v1083
        %v5516 = vunpack.c.l.b16 %v1084
        %v5517 = vunpack.c.h.b16 %v1084
        %v5518 = vunpack.c.l.b16 %v1085
        %v5519 = vunpack.c.h.b16 %v1085
        %v5520 = vunpack.c.l.b16 %v1086
        %v5521 = vunpack.c.h.b16 %v1086
        %v5522 = vunpack.c.l.b16 %v1087
        %v5523 = vunpack.c.h.b16 %v1087
        %v5524 = vunpack.c.l.b16 %v1088
        %v5525 = vunpack.c.h.b16 %v1088
        %v5526 = vunpack.c.l.b16 %v1089
        %v5527 = vunpack.c.h.b16 %v1089
        %v5528 = vunpack.c.l.b16 %v1090
        %v5529 = vunpack.c.h.b16 %v1090
        %v5530 = vunpack.c.l.b16 %v1091
        %v5531 = vunpack.c.h.b16 %v1091
        %v5532 = vunpack.c.l.b16 %v1092
        %v5533 = vunpack.c.h.b16 %v1092
        %v5534 = vunpack.c.l.b16 %v1093
        %v5535 = vunpack.c.h.b16 %v1093
        %v5536 = vunpack.c.l.b16 %v1094
        %v5537 = vunpack.c.h.b16 %v1094
        %v5538 = vunpack.c.l.b16 %v1095
        %v5539 = vunpack.c.h.b16 %v1095
        %v5540 = vunpack.c.l.b16 %v1096
        %v5541 = vunpack.c.h.b16 %v1096
        %v5542 = vunpack.c.l.b16 %v1097
        %v5543 = vunpack.c.h.b16 %v1097
        %v5544 = vunpack.c.l.b16 %v1098
        %v5545 = vunpack.c.h.b16 %v1098
        %v5546 = vunpack.c.l.b16 %v1099
        %v5547 = vunpack.c.h.b16 %v1099
        %v5548 = vunpack.c.l.b16 %v1100
        %v5549 = vunpack.c.h.b16 %v1100
        %v5550 = vunpack.c.l.b16 %v1101
        %v5551 = vunpack.c.h.b16 %v1101
        %v5552 = vunpack.c.l.b16 %v1102
        %v5553 = vunpack.c.h.b16 %v1102
        %v5554 = vunpack.c.l.b16 %v1103
        %v5555 = vunpack.c.h.b16 %v1103
        %v5556 = vunpack.c.l.b16 %v1104
        %v5557 = vunpack.c.h.b16 %v1104
        %v5558 = vunpack.c.l.b16 %v1105
        %v5559 = vunpack.c.h.b16 %v1105
        %v5560 = vunpack.c.l.b16 %v1106
        %v5561 = vunpack.c.h.b16 %v1106
        %v5562 = vunpack.c.l.b16 %v1107
        %v5563 = vunpack.c.h.b16 %v1107
        %v5564 = vunpack.c.l.b16 %v1108
        %v5565 = vunpack.c.h.b16 %v1108
        %v5566 = vunpack.c.l.b16 %v1109
        %v5567 = vunpack.c.h.b16 %v1109
        %v5568 = vunpack.c.l.b16 %v1110
        %v5569 = vunpack.c.h.b16 %v1110
        %v5570 = vunpack.c.l.b16 %v1111
        %v5571 = vunpack.c.h.b16 %v1111
        %v5572 = vunpack.c.l.b16 %v1112
        %v5573 = vunpack.c.h.b16 %v1112
        %v5574 = vunpack.c.l.b16 %v1113
        %v5575 = vunpack.c.h.b16 %v1113
        %v5576 = vunpack.c.l.b16 %v1114
        %v5577 = vunpack.c.h.b16 %v1114
        %v5578 = vunpack.c.l.b16 %v1115
        %v5579 = vunpack.c.h.b16 %v1115
        %v5580 = vunpack.c.l.b16 %v1116
        %v5581 = vunpack.c.h.b16 %v1116
        %v5582 = vunpack.c.l.b16 %v1117
        %v5583 = vunpack.c.h.b16 %v1117
        %v5584 = vunpack.c.l.b16 %v1118
        %v5585 = vunpack.c.h.b16 %v1118
        %v5586 = vunpack.c.l.b16 %v1119
        %v5587 = vunpack.c.h.b16 %v1119
        %v5588 = vunpack.c.l.b16 %v1120
        %v5589 = vunpack.c.h.b16 %v1120
        %v5590 = vunpack.c.l.b16 %v1121
        %v5591 = vunpack.c.h.b16 %v1121
        %v5592 = vunpack.c.l.b16 %v1122
        %v5593 = vunpack.c.h.b16 %v1122
        %v5594 = vunpack.c.l.b16 %v1123
        %v5595 = vunpack.c.h.b16 %v1123
        %v5596 = vunpack.c.l.b16 %v1124
        %v5597 = vunpack.c.h.b16 %v1124
        %v5598 = vunpack.c.l.b16 %v1125
        %v5599 = vunpack.c.h.b16 %v1125
        %v5600 = vunpack.c.l.b16 %v1126
        %v5601 = vunpack.c.h.b16 %v1126
        %v5602 = vunpack.c.l.b16 %v1127
        %v5603 = vunpack.c.h.b16 %v1127
        %v5604 = vunpack.c.l.b16 %v1128
        %v5605 = vunpack.c.h.b16 %v1128
        %v5606 = vunpack.c.l.b16 %v1129
        %v5607 = vunpack.c.h.b16 %v1129
        %v5608 = vunpack.c.l.b16 %v1130
        %v5609 = vunpack.c.h.b16 %v1130
        %v5610 = vunpack.c.l.b16 %v1131
        %v5611 = vunpack.c.h.b16 %v1131
        %v5612 = vunpack.c.l.b16 %v1132
        %v5613 = vunpack.c.h.b16 %v1132
        %v5614 = vunpack.c.l.b16 %v1133
        %v5615 = vunpack.c.h.b16 %v1133
        %v5616 = vunpack.c.l.b16 %v1134
        %v5617 = vunpack.c.h.b16 %v1134
        %v5618 = vunpack.c.l.b16 %v1135
        %v5619 = vunpack.c.h.b16 %v1135
        %v5620 = vunpack.c.l.b16 %v1136
        %v5621 = vunpack.c.h.b16 %v1136
        %v5622 = vunpack.c.l.b16 %v1137
        %v5623 = vunpack.c.h.b16 %v1137
        %v5624 = vunpack.c.l.b16 %v1138
        %v5625 = vunpack.c.h.b16 %v1138
        %v5626 = vunpack.c.l.b16 %v1139
        %v5627 = vunpack.c.h.b16 %v1139
        %v5628 = vunpack.c.l.b16 %v1140
        %v5629 = vunpack.c.h.b16 %v1140
        %v5630 = vunpack.c.l.b16 %v1141
        %v5631 = vunpack.c.h.b16 %v1141
        %v5632 = vunpack.c.l.b16 %v1142
        %v5633 = vunpack.c.h.b16 %v1142
        %v5634 = vunpack.c.l.b16 %v1143
        %v5635 = vunpack.c.h.b16 %v1143
        %v5636 = vunpack.c.l.b16 %v1144
        %v5637 = vunpack.c.h.b16 %v1144
        %v5638 = vunpack.c.l.b16 %v1145
        %v5639 = vunpack.c.h.b16 %v1145
        %v5640 = vunpack.c.l.b16 %v1146
        %v5641 = vunpack.c.h.b16 %v1146
        %v5642 = vunpack.c.l.b16 %v1147
        %v5643 = vunpack.c.h.b16 %v1147
        %v5644 = vunpack.c.l.b16 %v1148
        %v5645 = vunpack.c.h.b16 %v1148
        %v5646 = vunpack.c.l.b16 %v1149
        %v5647 = vunpack.c.h.b16 %v1149
        %v5648 = vunpack.c.l.b16 %v1150
        %v5649 = vunpack.c.h.b16 %v1150
        %v5650 = vunpack.c.l.b16 %v1151
        %v5651 = vunpack.c.h.b16 %v1151
        %v5652 = vunpack.c.l.b16 %v1152
        %v5653 = vunpack.c.h.b16 %v1152
        %v5654 = vunpack.c.l.b16 %v1153
        %v5655 = vunpack.c.h.b16 %v1153
        %v5656 = vunpack.c.l.b16 %v1154
        %v5657 = vunpack.c.h.b16 %v1154
        %v5658 = vunpack.c.l.b16 %v1155
        %v5659 = vunpack.c.h.b16 %v1155
        %v5660 = vunpack.c.l.b16 %v1156
        %v5661 = vunpack.c.h.b16 %v1156
        %v5662 = vunpack.c.l.b16 %v1157
        %v5663 = vunpack.c.h.b16 %v1157
        %v5664 = vunpack.c.l.b16 %v1158
        %v5665 = vunpack.c.h.b16 %v1158
        %v5666 = vunpack.c.l.b16 %v1159
        %v5667 = vunpack.c.h.b16 %v1159
        %v5668 = vunpack.c.l.b16 %v1160
        %v5669 = vunpack.c.h.b16 %v1160
        %v5670 = vunpack.c.l.b16 %v1161
        %v5671 = vunpack.c.h.b16 %v1161
        %v5672 = vunpack.c.l.b16 %v1162
        %v5673 = vunpack.c.h.b16 %v1162
        %v5674 = vunpack.c.l.b16 %v1163
        %v5675 = vunpack.c.h.b16 %v1163
        %v5676 = vunpack.c.l.b16 %v1164
        %v5677 = vunpack.c.h.b16 %v1164
        %v5678 = vunpack.c.l.b16 %v1165
        %v5679 = vunpack.c.h.b16 %v1165
        %v5680 = vunpack.c.l.b16 %v1166
        %v5681 = vunpack.c.h.b16 %v1166
        %v5682 = vunpack.c.l.b16 %v1167
        %v5683 = vunpack.c.h.b16 %v1167
        %v5684 = vunpack.c.l.b16 %v1168
        %v5685 = vunpack.c.h.b16 %v1168
        %v5686 = vunpack.c.l.b16 %v1169
        %v5687 = vunpack.c.h.b16 %v1169
        %v5688 = vunpack.c.l.b16 %v1170
        %v5689 = vunpack.c.h.b16 %v1170
        %v5690 = vunpack.c.l.b16 %v1171
        %v5691 = vunpack.c.h.b16 %v1171
        %v5692 = vunpack.c.l.b16 %v1172
        %v5693 = vunpack.c.h.b16 %v1172
        %v5694 = vunpack.c.l.b16 %v1173
        %v5695 = vunpack.c.h.b16 %v1173
        %v5696 = vunpack.c.l.b16 %v1174
        %v5697 = vunpack.c.h.b16 %v1174
        %v5698 = vunpack.c.l.b16 %v1175
        %v5699 = vunpack.c.h.b16 %v1175
        %v5700 = vunpack.c.l.b16 %v1176
        %v5701 = vunpack.c.h.b16 %v1176
        %v5702 = vunpack.c.l.b16 %v1177
        %v5703 = vunpack.c.h.b16 %v1177
        %v5704 = vunpack.c.l.b16 %v1178
        %v5705 = vunpack.c.h.b16 %v1178
        %v5706 = vunpack.c.l.b16 %v1179
        %v5707 = vunpack.c.h.b16 %v1179
        %v5708 = vunpack.c.l.b16 %v1180
        %v5709 = vunpack.c.h.b16 %v1180
        %v5710 = vunpack.c.l.b16 %v1181
        %v5711 = vunpack.c.h.b16 %v1181
        %v5712 = vunpack.c.l.b16 %v1182
        %v5713 = vunpack.c.h.b16 %v1182
        %v5714 = vunpack.c.l.b16 %v1183
        %v5715 = vunpack.c.h.b16 %v1183
        %v5716 = vunpack.c.l.b16 %v1184
        %v5717 = vunpack.c.h.b16 %v1184
        %v5718 = vunpack.c.l.b16 %v1185
        %v5719 = vunpack.c.h.b16 %v1185
        %v5720 = vunpack.c.l.b16 %v1186
        %v5721 = vunpack.c.h.b16 %v1186
        %v5722 = vunpack.c.l.b16 %v1187
        %v5723 = vunpack.c.h.b16 %v1187
        %v5724 = vunpack.c.l.b16 %v1188
        %v5725 = vunpack.c.h.b16 %v1188
        %v5726 = vunpack.c.l.b16 %v1189
        %v5727 = vunpack.c.h.b16 %v1189
        %v5728 = vunpack.c.l.b16 %v1190
        %v5729 = vunpack.c.h.b16 %v1190
        %v5730 = vunpack.c.l.b16 %v1191
        %v5731 = vunpack.c.h.b16 %v1191
        %v5732 = vunpack.c.l.b16 %v1192
        %v5733 = vunpack.c.h.b16 %v1192
        %v5734 = vunpack.c.l.b16 %v1193
        %v5735 = vunpack.c.h.b16 %v1193
        %v5736 = vunpack.c.l.b16 %v1194
        %v5737 = vunpack.c.h.b16 %v1194
        %v5738 = vunpack.c.l.b16 %v1195
        %v5739 = vunpack.c.h.b16 %v1195
        %v5740 = vunpack.c.l.b16 %v1196
        %v5741 = vunpack.c.h.b16 %v1196
        %v5742 = vunpack.c.l.b16 %v1197
        %v5743 = vunpack.c.h.b16 %v1197
        %v5744 = vunpack.c.l.b16 %v1198
        %v5745 = vunpack.c.h.b16 %v1198
        %v5746 = vunpack.c.l.b16 %v1199
        %v5747 = vunpack.c.h.b16 %v1199
        %v5748 = vunpack.c.l.b16 %v1200
        %v5749 = vunpack.c.h.b16 %v1200
        %v5750 = vunpack.c.l.b16 %v1201
        %v5751 = vunpack.c.h.b16 %v1201
        %v5752 = vunpack.c.l.b16 %v1202
        %v5753 = vunpack.c.h.b16 %v1202
        %v5754 = vunpack.c.l.b16 %v1203
        %v5755 = vunpack.c.h.b16 %v1203
        %v5756 = vunpack.c.l.b16 %v1204
        %v5757 = vunpack.c.h.b16 %v1204
        %v5758 = vunpack.c.l.b16 %v1205
        %v5759 = vunpack.c.h.b16 %v1205
        %v5760 = vunpack.c.l.b16 %v1206
        %v5761 = vunpack.c.h.b16 %v1206
        %v5762 = vunpack.c.l.b16 %v1207
        %v5763 = vunpack.c.h.b16 %v1207
        %v5764 = vunpack.c.l.b16 %v1208
        %v5765 = vunpack.c.h.b16 %v1208
        %v5766 = vunpack.c.l.b16 %v1209
        %v5767 = vunpack.c.h.b16 %v1209
        %v5768 = vunpack.c.l.b16 %v1210
        %v5769 = vunpack.c.h.b16 %v1210
        %v5770 = vunpack.c.l.b16 %v1211
        %v5771 = vunpack.c.h.b16 %v1211
        %v5772 = vunpack.c.l.b16 %v1212
        %v5773 = vunpack.c.h.b16 %v1212
        %v5774 = vunpack.c.l.b16 %v1213
        %v5775 = vunpack.c.h.b16 %v1213
        %v5776 = vunpack.c.l.b16 %v1214
        %v5777 = vunpack.c.h.b16 %v1214
        %v5778 = vunpack.c.l.b16 %v1215
        %v5779 = vunpack.c.h.b16 %v1215
        %v5780 = vunpack.c.l.b16 %v1216
        %v5781 = vunpack.c.h.b16 %v1216
        %v5782 = vunpack.c.l.b16 %v1217
        %v5783 = vunpack.c.h.b16 %v1217
        %v5784 = vunpack.c.l.b16 %v1218
        %v5785 = vunpack.c.h.b16 %v1218
        %v5786 = vunpack.c.l.b16 %v1219
        %v5787 = vunpack.c.h.b16 %v1219
        %v5788 = vunpack.c.l.b16 %v1220
        %v5789 = vunpack.c.h.b16 %v1220
        %v5790 = vunpack.c.l.b16 %v1221
        %v5791 = vunpack.c.h.b16 %v1221
        %v5792 = vunpack.c.l.b16 %v1222
        %v5793 = vunpack.c.h.b16 %v1222
        %v5794 = vunpack.c.l.b16 %v1223
        %v5795 = vunpack.c.h.b16 %v1223
        %v5796 = vunpack.c.l.b16 %v1224
        %v5797 = vunpack.c.h.b16 %v1224
        %v5798 = vunpack.c.l.b16 %v1225
        %v5799 = vunpack.c.h.b16 %v1225
        %v5800 = vunpack.c.l.b16 %v1226
        %v5801 = vunpack.c.h.b16 %v1226
        %v5802 = vunpack.c.l.b16 %v1227
        %v5803 = vunpack.c.h.b16 %v1227
        %v5804 = vunpack.c.l.b16 %v1228
        %v5805 = vunpack.c.h.b16 %v1228
        %v5806 = vunpack.c.l.b16 %v1229
        %v5807 = vunpack.c.h.b16 %v1229
        %v5808 = vunpack.c.l.b16 %v1230
        %v5809 = vunpack.c.h.b16 %v1230
        %v5810 = vunpack.c.l.b16 %v1231
        %v5811 = vunpack.c.h.b16 %v1231
        %v5812 = vunpack.c.l.b16 %v1232
        %v5813 = vunpack.c.h.b16 %v1232
        %v5814 = vunpack.c.l.b16 %v1233
        %v5815 = vunpack.c.h.b16 %v1233
        %v5816 = vunpack.c.l.b16 %v1234
        %v5817 = vunpack.c.h.b16 %v1234
        %v5818 = vunpack.c.l.b16 %v1235
        %v5819 = vunpack.c.h.b16 %v1235
        %v5820 = vunpack.c.l.b16 %v1236
        %v5821 = vunpack.c.h.b16 %v1236
        %v5822 = vunpack.c.l.b16 %v1237
        %v5823 = vunpack.c.h.b16 %v1237
        %v5824 = vunpack.c.l.b16 %v1238
        %v5825 = vunpack.c.h.b16 %v1238
        %v5826 = vunpack.c.l.b16 %v1239
        %v5827 = vunpack.c.h.b16 %v1239
        %v5828 = vunpack.c.l.b16 %v1240
        %v5829 = vunpack.c.h.b16 %v1240
        %v5830 = vunpack.c.l.b16 %v1241
        %v5831 = vunpack.c.h.b16 %v1241
        %v5832 = vunpack.c.l.b16 %v1242
        %v5833 = vunpack.c.h.b16 %v1242
        %v5834 = vunpack.c.l.b16 %v1243
        %v5835 = vunpack.c.h.b16 %v1243
        %v5836 = vunpack.c.l.b16 %v1244
        %v5837 = vunpack.c.h.b16 %v1244
        %v5838 = vunpack.c.l.b16 %v1245
        %v5839 = vunpack.c.h.b16 %v1245
        %v5840 = vunpack.c.l.b16 %v1246
        %v5841 = vunpack.c.h.b16 %v1246
        %v5842 = vunpack.c.l.b16 %v1247
        %v5843 = vunpack.c.h.b16 %v1247
        %v5844 = vunpack.c.l.b16 %v1248
        %v5845 = vunpack.c.h.b16 %v1248
        %v5846 = vunpack.c.l.b16 %v1249
        %v5847 = vunpack.c.h.b16 %v1249
        %v5848 = vunpack.c.l.b16 %v1250
        %v5849 = vunpack.c.h.b16 %v1250
        %v5850 = vunpack.c.l.b16 %v1251
        %v5851 = vunpack.c.h.b16 %v1251
        %v5852 = vunpack.c.l.b16 %v1252
        %v5853 = vunpack.c.h.b16 %v1252
        %v5854 = vunpack.c.l.b16 %v1253
        %v5855 = vunpack.c.h.b16 %v1253
        %v5856 = vunpack.c.l.b16 %v1254
        %v5857 = vunpack.c.h.b16 %v1254
        %v5858 = vunpack.c.l.b16 %v1255
        %v5859 = vunpack.c.h.b16 %v1255
        %v5860 = vunpack.c.l.b16 %v1256
        %v5861 = vunpack.c.h.b16 %v1256
        %v5862 = vunpack.c.l.b16 %v1257
        %v5863 = vunpack.c.h.b16 %v1257
        %v5864 = vunpack.c.l.b16 %v1258
        %v5865 = vunpack.c.h.b16 %v1258
        %v5866 = vunpack.c.l.b16 %v1259
        %v5867 = vunpack.c.h.b16 %v1259
        %v5868 = vunpack.c.l.b16 %v1260
        %v5869 = vunpack.c.h.b16 %v1260
        %v5870 = vunpack.c.l.b16 %v1261
        %v5871 = vunpack.c.h.b16 %v1261
        %v5872 = vunpack.c.l.b16 %v1262
        %v5873 = vunpack.c.h.b16 %v1262
        %v5874 = vunpack.c.l.b16 %v1263
        %v5875 = vunpack.c.h.b16 %v1263
        %v5876 = vunpack.c.l.b16 %v1264
        %v5877 = vunpack.c.h.b16 %v1264
        %v5878 = vunpack.c.l.b16 %v1265
        %v5879 = vunpack.c.h.b16 %v1265
        %v5880 = vunpack.c.l.b16 %v1266
        %v5881 = vunpack.c.h.b16 %v1266
        %v5882 = vunpack.c.l.b16 %v1267
        %v5883 = vunpack.c.h.b16 %v1267
        %v5884 = vunpack.c.l.b16 %v1268
        %v5885 = vunpack.c.h.b16 %v1268
        %v5886 = vunpack.c.l.b16 %v1269
        %v5887 = vunpack.c.h.b16 %v1269
        %v5888 = vunpack.c.l.b16 %v1270
        %v5889 = vunpack.c.h.b16 %v1270
        %v5890 = vunpack.c.l.b16 %v1271
        %v5891 = vunpack.c.h.b16 %v1271
        %v5892 = vunpack.c.l.b16 %v1272
        %v5893 = vunpack.c.h.b16 %v1272
        %v5894 = vunpack.c.l.b16 %v1273
        %v5895 = vunpack.c.h.b16 %v1273
        %v5896 = vunpack.c.l.b16 %v1274
        %v5897 = vunpack.c.h.b16 %v1274
        %v5898 = vunpack.c.l.b16 %v1275
        %v5899 = vunpack.c.h.b16 %v1275
        %v5900 = vunpack.c.l.b16 %v1276
        %v5901 = vunpack.c.h.b16 %v1276
        %v5902 = vunpack.c.l.b16 %v1277
        %v5903 = vunpack.c.h.b16 %v1277
        %v5904 = vunpack.c.l.b16 %v1278
        %v5905 = vunpack.c.h.b16 %v1278
        %v5906 = vunpack.c.l.b16 %v1279
        %v5907 = vunpack.c.h.b16 %v1279
        %v5908 = vunpack.c.l.b16 %v1280
        %v5909 = vunpack.c.h.b16 %v1280
        %v5910 = vunpack.c.l.b16 %v1281
        %v5911 = vunpack.c.h.b16 %v1281
        %v5912 = vunpack.c.l.b16 %v1282
        %v5913 = vunpack.c.h.b16 %v1282
        %v5914 = vunpack.c.l.b16 %v1283
        %v5915 = vunpack.c.h.b16 %v1283
        %v5916 = vunpack.c.l.b16 %v1284
        %v5917 = vunpack.c.h.b16 %v1284
        %v5918 = vunpack.c.l.b16 %v1285
        %v5919 = vunpack.c.h.b16 %v1285
        %v5920 = vunpack.c.l.b16 %v1286
        %v5921 = vunpack.c.h.b16 %v1286
        %v5922 = vunpack.c.l.b16 %v1287
        %v5923 = vunpack.c.h.b16 %v1287
        %v5924 = vunpack.c.l.b16 %v1288
        %v5925 = vunpack.c.h.b16 %v1288
        %v5926 = vunpack.c.l.b16 %v1289
        %v5927 = vunpack.c.h.b16 %v1289
        %v5928 = vunpack.c.l.b16 %v1290
        %v5929 = vunpack.c.h.b16 %v1290
        %v5930 = vunpack.c.l.b16 %v1291
        %v5931 = vunpack.c.h.b16 %v1291
        %v5932 = vunpack.c.l.b16 %v1292
        %v5933 = vunpack.c.h.b16 %v1292
        %v5934 = vunpack.c.l.b16 %v1293
        %v5935 = vunpack.c.h.b16 %v1293
        %v5936 = vunpack.c.l.b16 %v1294
        %v5937 = vunpack.c.h.b16 %v1294
        %v5938 = vunpack.c.l.b16 %v1295
        %v5939 = vunpack.c.h.b16 %v1295
        %v5940 = vunpack.c.l.b16 %v1296
        %v5941 = vunpack.c.h.b16 %v1296
        %v5942 = vunpack.c.l.b16 %v1297
        %v5943 = vunpack.c.h.b16 %v1297
        %v5944 = vunpack.c.l.b16 %v1298
        %v5945 = vunpack.c.h.b16 %v1298
        %v5946 = vunpack.c.l.b16 %v1299
        %v5947 = vunpack.c.h.b16 %v1299
        %v5948 = vunpack.c.l.b16 %v1300
        %v5949 = vunpack.c.h.b16 %v1300
        %v5950 = vunpack.c.l.b16 %v1301
        %v5951 = vunpack.c.h.b16 %v1301
        %v5952 = vunpack.c.l.b16 %v1302
        %v5953 = vunpack.c.h.b16 %v1302
        %v5954 = vunpack.c.l.b16 %v1303
        %v5955 = vunpack.c.h.b16 %v1303
        %v5956 = vunpack.c.l.b16 %v1304
        %v5957 = vunpack.c.h.b16 %v1304
        %v5958 = vunpack.c.l.b16 %v1305
        %v5959 = vunpack.c.h.b16 %v1305
        %v5960 = vunpack.c.l.b16 %v1306
        %v5961 = vunpack.c.h.b16 %v1306
        %v5962 = vunpack.c.l.b16 %v1307
        %v5963 = vunpack.c.h.b16 %v1307
        %v5964 = vunpack.c.l.b16 %v1308
        %v5965 = vunpack.c.h.b16 %v1308
        %v5966 = vunpack.c.l.b16 %v1309
        %v5967 = vunpack.c.h.b16 %v1309
        %v5968 = vunpack.c.l.b16 %v1310
        %v5969 = vunpack.c.h.b16 %v1310
        %v5970 = vunpack.c.l.b16 %v1311
        %v5971 = vunpack.c.h.b16 %v1311
        %v5972 = vunpack.c.l.b16 %v1312
        %v5973 = vunpack.c.h.b16 %v1312
        %v5974 = vunpack.c.l.b16 %v1313
        %v5975 = vunpack.c.h.b16 %v1313
        %v5976 = vunpack.c.l.b16 %v1314
        %v5977 = vunpack.c.h.b16 %v1314
        %v5978 = vunpack.c.l.b16 %v1315
        %v5979 = vunpack.c.h.b16 %v1315
        %v5980 = vunpack.c.l.b16 %v1316
        %v5981 = vunpack.c.h.b16 %v1316
        %v5982 = vunpack.c.l.b16 %v1317
        %v5983 = vunpack.c.h.b16 %v1317
        %v5984 = vunpack.c.l.b16 %v1318
        %v5985 = vunpack.c.h.b16 %v1318
        %v5986 = vunpack.c.l.b16 %v1319
        %v5987 = vunpack.c.h.b16 %v1319
        %v5988 = vunpack.c.l.b16 %v1320
        %v5989 = vunpack.c.h.b16 %v1320
        %v5990 = vunpack.c.l.b16 %v1321
        %v5991 = vunpack.c.h.b16 %v1321
        %v5992 = vunpack.c.l.b16 %v1322
        %v5993 = vunpack.c.h.b16 %v1322
        %v5994 = vunpack.c.l.b16 %v1323
        %v5995 = vunpack.c.h.b16 %v1323
        %v5996 = vunpack.c.l.b16 %v1324
        %v5997 = vunpack.c.h.b16 %v1324
        %v5998 = vunpack.c.l.b16 %v1325
        %v5999 = vunpack.c.h.b16 %v1325
        %v6000 = vunpack.c.l.b16 %v1326
        %v6001 = vunpack.c.h.b16 %v1326
        %v6002 = vunpack.c.l.b16 %v1327
        %v6003 = vunpack.c.h.b16 %v1327
        %v6004 = vunpack.c.l.b16 %v1328
        %v6005 = vunpack.c.h.b16 %v1328
        %v6006 = vunpack.c.l.b16 %v1329
        %v6007 = vunpack.c.h.b16 %v1329
        %v6008 = vunpack.c.l.b16 %v1330
        %v6009 = vunpack.c.h.b16 %v1330
        %v6010 = vunpack.c.l.b16 %v1331
        %v6011 = vunpack.c.h.b16 %v1331
        %v6012 = vunpack.c.l.b16 %v1332
        %v6013 = vunpack.c.h.b16 %v1332
        %v6014 = vunpack.c.l.b16 %v1333
        %v6015 = vunpack.c.h.b16 %v1333
        %v6016 = vunpack.c.l.b16 %v1334
        %v6017 = vunpack.c.h.b16 %v1334
        %v6018 = vunpack.c.l.b16 %v1335
        %v6019 = vunpack.c.h.b16 %v1335
        %v6020 = vunpack.c.l.b16 %v1336
        %v6021 = vunpack.c.h.b16 %v1336
        %v6022 = vunpack.c.l.b16 %v1337
        %v6023 = vunpack.c.h.b16 %v1337
        %v6024 = vunpack.c.l.b16 %v1338
        %v6025 = vunpack.c.h.b16 %v1338
        %v6026 = vunpack.c.l.b16 %v1339
        %v6027 = vunpack.c.h.b16 %v1339
        %v6028 = vunpack.c.l.b16 %v1340
        %v6029 = vunpack.c.h.b16 %v1340
        %v6030 = vunpack.c.l.b16 %v1341
        %v6031 = vunpack.c.h.b16 %v1341
        %v6032 = vunpack.c.l.b16 %v1342
        %v6033 = vunpack.c.h.b16 %v1342
        %v6034 = vunpack.c.l.b16 %v1343
        %v6035 = vunpack.c.h.b16 %v1343
        %v6036 = vunpack.c.l.b16 %v1344
        %v6037 = vunpack.c.h.b16 %v1344
        %v6038 = vunpack.c.l.b16 %v1345
        %v6039 = vunpack.c.h.b16 %v1345
        %v6040 = vunpack.c.l.b16 %v1346
        %v6041 = vunpack.c.h.b16 %v1346
        %v6042 = vunpack.c.l.b16 %v1347
        %v6043 = vunpack.c.h.b16 %v1347
        %v6044 = vunpack.c.l.b16 %v1348
        %v6045 = vunpack.c.h.b16 %v1348
        %v6046 = vunpack.c.l.b16 %v1349
        %v6047 = vunpack.c.h.b16 %v1349
        %v6048 = vunpack.c.l.b16 %v1350
        %v6049 = vunpack.c.h.b16 %v1350
        %v6050 = vunpack.c.l.b16 %v1351
        %v6051 = vunpack.c.h.b16 %v1351
        %v6052 = vunpack.c.l.b16 %v1352
        %v6053 = vunpack.c.h.b16 %v1352
        %v6054 = vunpack.c.l.b16 %v1353
        %v6055 = vunpack.c.h.b16 %v1353
        %v6056 = vunpack.c.l.b16 %v1354
        %v6057 = vunpack.c.h.b16 %v1354
        %v6058 = vunpack.c.l.b16 %v1355
        %v6059 = vunpack.c.h.b16 %v1355
        %v6060 = vunpack.c.l.b16 %v1356
        %v6061 = vunpack.c.h.b16 %v1356
        %v6062 = vunpack.c.l.b16 %v1357
        %v6063 = vunpack.c.h.b16 %v1357
        %v6064 = vunpack.c.l.b16 %v1358
        %v6065 = vunpack.c.h.b16 %v1358
        %v6066 = vunpack.c.l.b16 %v1359
        %v6067 = vunpack.c.h.b16 %v1359
        %v6068 = vunpack.c.l.b16 %v1360
        %v6069 = vunpack.c.h.b16 %v1360
        %v6070 = vunpack.c.l.b16 %v1361
        %v6071 = vunpack.c.h.b16 %v1361
        %v6072 = vunpack.c.l.b16 %v1362
        %v6073 = vunpack.c.h.b16 %v1362
        %v6074 = vunpack.c.l.b16 %v1363
        %v6075 = vunpack.c.h.b16 %v1363
        %v6076 = vunpack.c.l.b16 %v1364
        %v6077 = vunpack.c.h.b16 %v1364
        %v6078 = vunpack.c.l.b16 %v1365
        %v6079 = vunpack.c.h.b16 %v1365
        %v6080 = vunpack.c.l.b16 %v1366
        %v6081 = vunpack.c.h.b16 %v1366
        %v6082 = vunpack.c.l.b16 %v1367
        %v6083 = vunpack.c.h.b16 %v1367
        %v6084 = vunpack.c.l.b16 %v1368
        %v6085 = vunpack.c.h.b16 %v1368
        %v6086 = vunpack.c.l.b16 %v1369
        %v6087 = vunpack.c.h.b16 %v1369
        %v6088 = vunpack.c.l.b16 %v1370
        %v6089 = vunpack.c.h.b16 %v1370
        %v6090 = vunpack.c.l.b16 %v1371
        %v6091 = vunpack.c.h.b16 %v1371
        %v6092 = vunpack.c.l.b16 %v1372
        %v6093 = vunpack.c.h.b16 %v1372
        %v6094 = vunpack.c.l.b16 %v1373
        %v6095 = vunpack.c.h.b16 %v1373
        %v6096 = vunpack.c.l.b16 %v1374
        %v6097 = vunpack.c.h.b16 %v1374
        %v6098 = vunpack.c.l.b16 %v1375
        %v6099 = vunpack.c.h.b16 %v1375
        %v6100 = vunpack.c.l.b16 %v1376
        %v6101 = vunpack.c.h.b16 %v1376
        %v6102 = vunpack.c.l.b16 %v1377
        %v6103 = vunpack.c.h.b16 %v1377
        %v6104 = vunpack.c.l.b16 %v1378
        %v6105 = vunpack.c.h.b16 %v1378
        %v6106 = vunpack.c.l.b16 %v1379
        %v6107 = vunpack.c.h.b16 %v1379
        %v6108 = vunpack.c.l.b16 %v1380
        %v6109 = vunpack.c.h.b16 %v1380
        %v6110 = vunpack.c.l.b16 %v1381
        %v6111 = vunpack.c.h.b16 %v1381
        %v6112 = vunpack.c.l.b16 %v1382
        %v6113 = vunpack.c.h.b16 %v1382
        %v6114 = vunpack.c.l.b16 %v1383
        %v6115 = vunpack.c.h.b16 %v1383
        %v6116 = vunpack.c.l.b16 %v1384
        %v6117 = vunpack.c.h.b16 %v1384
        %v6118 = vunpack.c.l.b16 %v1385
        %v6119 = vunpack.c.h.b16 %v1385
        %v6120 = vunpack.c.l.b16 %v1386
        %v6121 = vunpack.c.h.b16 %v1386
        %v6122 = vunpack.c.l.b16 %v1387
        %v6123 = vunpack.c.h.b16 %v1387
        %v6124 = vunpack.c.l.b16 %v1388
        %v6125 = vunpack.c.h.b16 %v1388
        %v6126 = vunpack.c.l.b16 %v1389
        %v6127 = vunpack.c.h.b16 %v1389
        %v6128 = vunpack.c.l.b16 %v1390
        %v6129 = vunpack.c.h.b16 %v1390
        %v6130 = vunpack.c.l.b16 %v1391
        %v6131 = vunpack.c.h.b16 %v1391
        %v6132 = vunpack.c.l.b16 %v1392
        %v6133 = vunpack.c.h.b16 %v1392
        %v6134 = vunpack.c.l.b16 %v1393
        %v6135 = vunpack.c.h.b16 %v1393
        %v6136 = vunpack.c.l.b16 %v1394
        %v6137 = vunpack.c.h.b16 %v1394
        %v6138 = vunpack.c.l.b16 %v1395
        %v6139 = vunpack.c.h.b16 %v1395
        %v6140 = vunpack.c.l.b16 %v1396
        %v6141 = vunpack.c.h.b16 %v1396
        %v6142 = vunpack.c.l.b16 %v1397
        %v6143 = vunpack.c.h.b16 %v1397
        %v6144 = vunpack.c.l.b16 %v1398
        %v6145 = vunpack.c.h.b16 %v1398
        %v6146 = vunpack.c.l.b16 %v1399
        %v6147 = vunpack.c.h.b16 %v1399
        %v6148 = vunpack.c.l.b16 %v1400
        %v6149 = vunpack.c.h.b16 %v1400
        %v6150 = vunpack.c.l.b16 %v1401
        %v6151 = vunpack.c.h.b16 %v1401
        %v6152 = vunpack.c.l.b16 %v1402
        %v6153 = vunpack.c.h.b16 %v1402
        %v6154 = vunpack.c.l.b16 %v1403
        %v6155 = vunpack.c.h.b16 %v1403
        %v6156 = vunpack.c.l.b16 %v1404
        %v6157 = vunpack.c.h.b16 %v1404
        %v6158 = vunpack.c.l.b16 %v1405
        %v6159 = vunpack.c.h.b16 %v1405
        %v6160 = vunpack.c.l.b16 %v1406
        %v6161 = vunpack.c.h.b16 %v1406
        %v6162 = vunpack.c.l.b16 %v1407
        %v6163 = vunpack.c.h.b16 %v1407
        %v6164 = vunpack.c.l.b16 %v1408
        %v6165 = vunpack.c.h.b16 %v1408
        %v6166 = vunpack.c.l.b16 %v1409
        %v6167 = vunpack.c.h.b16 %v1409
        %v6168 = vunpack.c.l.b16 %v1410
        %v6169 = vunpack.c.h.b16 %v1410
        %v6170 = vunpack.c.l.b16 %v1411
        %v6171 = vunpack.c.h.b16 %v1411
        %v6172 = vunpack.c.l.b16 %v1412
        %v6173 = vunpack.c.h.b16 %v1412
        %v6174 = vunpack.c.l.b16 %v1413
        %v6175 = vunpack.c.h.b16 %v1413
        %v6176 = vunpack.c.l.b16 %v1414
        %v6177 = vunpack.c.h.b16 %v1414
        %v6178 = vunpack.c.l.b16 %v1415
        %v6179 = vunpack.c.h.b16 %v1415
        %v6180 = vunpack.c.l.b16 %v1416
        %v6181 = vunpack.c.h.b16 %v1416
        %v6182 = vunpack.c.l.b16 %v1417
        %v6183 = vunpack.c.h.b16 %v1417
        %v6184 = vunpack.c.l.b16 %v1418
        %v6185 = vunpack.c.h.b16 %v1418
        %v6186 = vunpack.c.l.b16 %v1419
        %v6187 = vunpack.c.h.b16 %v1419
        %v6188 = vunpack.c.l.b16 %v1420
        %v6189 = vunpack.c.h.b16 %v1420
        %v6190 = vunpack.c.l.b16 %v1421
        %v6191 = vunpack.c.h.b16 %v1421
        %v6192 = vunpack.c.l.b16 %v1422
        %v6193 = vunpack.c.h.b16 %v1422
        %v6194 = vunpack.c.l.b16 %v1423
        %v6195 = vunpack.c.h.b16 %v1423
        %v6196 = vunpack.c.l.b16 %v1424
        %v6197 = vunpack.c.h.b16 %v1424
        %v6198 = vunpack.c.l.b16 %v1425
        %v6199 = vunpack.c.h.b16 %v1425
        %v6200 = vunpack.c.l.b16 %v1426
        %v6201 = vunpack.c.h.b16 %v1426
        %v6202 = vunpack.c.l.b16 %v1427
        %v6203 = vunpack.c.h.b16 %v1427
        %v6204 = vunpack.c.l.b16 %v1428
        %v6205 = vunpack.c.h.b16 %v1428
        %v6206 = vunpack.c.l.b16 %v1429
        %v6207 = vunpack.c.h.b16 %v1429
        %v6208 = vunpack.c.l.b16 %v1430
        %v6209 = vunpack.c.h.b16 %v1430
        %v6210 = vunpack.c.l.b16 %v1431
        %v6211 = vunpack.c.h.b16 %v1431
        %v6212 = vunpack.c.l.b16 %v1432
        %v6213 = vunpack.c.h.b16 %v1432
        %v6214 = vunpack.c.l.b16 %v1433
        %v6215 = vunpack.c.h.b16 %v1433
        %v6216 = vunpack.c.l.b16 %v1434
        %v6217 = vunpack.c.h.b16 %v1434
        %v6218 = vunpack.c.l.b16 %v1435
        %v6219 = vunpack.c.h.b16 %v1435
        %v6220 = vunpack.c.l.b16 %v1436
        %v6221 = vunpack.c.h.b16 %v1436
        %v6222 = vunpack.c.l.b16 %v1437
        %v6223 = vunpack.c.h.b16 %v1437
        %v6224 = vunpack.c.l.b16 %v1438
        %v6225 = vunpack.c.h.b16 %v1438
        %v6226 = vunpack.c.l.b16 %v1439
        %v6227 = vunpack.c.h.b16 %v1439
        %v6228 = vunpack.c.l.b16 %v1440
        %v6229 = vunpack.c.h.b16 %v1440
        %v6230 = vunpack.c.l.b16 %v1441
        %v6231 = vunpack.c.h.b16 %v1441
        %v6232 = vunpack.c.l.b16 %v1442
        %v6233 = vunpack.c.h.b16 %v1442
        %v6234 = vunpack.c.l.b16 %v1443
        %v6235 = vunpack.c.h.b16 %v1443
        %v6236 = vunpack.c.l.b16 %v1444
        %v6237 = vunpack.c.h.b16 %v1444
        %v6238 = vunpack.c.l.b16 %v1445
        %v6239 = vunpack.c.h.b16 %v1445
        %v6240 = vunpack.c.l.b16 %v1446
        %v6241 = vunpack.c.h.b16 %v1446
        %v6242 = vunpack.c.l.b16 %v1447
        %v6243 = vunpack.c.h.b16 %v1447
        %v6244 = vunpack.c.l.b16 %v1448
        %v6245 = vunpack.c.h.b16 %v1448
        %v6246 = vunpack.c.l.b16 %v1449
        %v6247 = vunpack.c.h.b16 %v1449
        %v6248 = vunpack.c.l.b16 %v1450
        %v6249 = vunpack.c.h.b16 %v1450
        %v6250 = vunpack.c.l.b16 %v1451
        %v6251 = vunpack.c.h.b16 %v1451
        %v6252 = vunpack.c.l.b16 %v1452
        %v6253 = vunpack.c.h.b16 %v1452
        %v6254 = vunpack.c.l.b16 %v1453
        %v6255 = vunpack.c.h.b16 %v1453
        %v6256 = vunpack.c.l.b16 %v1454
        %v6257 = vunpack.c.h.b16 %v1454
        %v6258 = vunpack.c.l.b16 %v1455
        %v6259 = vunpack.c.h.b16 %v1455
        %v6260 = vunpack.c.l.b16 %v1456
        %v6261 = vunpack.c.h.b16 %v1456
        %v6262 = vunpack.c.l.b16 %v1457
        %v6263 = vunpack.c.h.b16 %v1457
        %v6264 = vunpack.c.l.b16 %v1458
        %v6265 = vunpack.c.h.b16 %v1458
        %v6266 = vunpack.c.l.b16 %v1459
        %v6267 = vunpack.c.h.b16 %v1459
        %v6268 = vunpack.c.l.b16 %v1460
        %v6269 = vunpack.c.h.b16 %v1460
        %v6270 = vunpack.c.l.b16 %v1461
        %v6271 = vunpack.c.h.b16 %v1461
        %v6272 = vunpack.c.l.b16 %v1462
        %v6273 = vunpack.c.h.b16 %v1462
        %v6274 = vunpack.c.l.b16 %v1463
        %v6275 = vunpack.c.h.b16 %v1463
        %v6276 = vunpack.c.l.b16 %v1464
        %v6277 = vunpack.c.h.b16 %v1464
        %v6278 = vunpack.c.l.b16 %v1465
        %v6279 = vunpack.c.h.b16 %v1465
        %v6280 = vunpack.c.l.b16 %v1466
        %v6281 = vunpack.c.h.b16 %v1466
        %v6282 = vunpack.c.l.b16 %v1467
        %v6283 = vunpack.c.h.b16 %v1467
        %v6284 = vunpack.c.l.b16 %v1468
        %v6285 = vunpack.c.h.b16 %v1468
        %v6286 = vunpack.c.l.b16 %v1469
        %v6287 = vunpack.c.h.b16 %v1469
        %v6288 = vunpack.c.l.b16 %v1470
        %v6289 = vunpack.c.h.b16 %v1470
        %v6290 = vunpack.c.l.b16 %v1471
        %v6291 = vunpack.c.h.b16 %v1471
        %v6292 = vunpack.c.l.b16 %v1472
        %v6293 = vunpack.c.h.b16 %v1472
        %v6294 = vunpack.c.l.b16 %v1473
        %v6295 = vunpack.c.h.b16 %v1473
        %v6296 = vunpack.c.l.b16 %v1474
        %v6297 = vunpack.c.h.b16 %v1474
        %v6298 = vunpack.c.l.b16 %v1475
        %v6299 = vunpack.c.h.b16 %v1475
        %v6300 = vunpack.c.l.b16 %v1476
        %v6301 = vunpack.c.h.b16 %v1476
        %v6302 = vunpack.c.l.b16 %v1477
        %v6303 = vunpack.c.h.b16 %v1477
        %v6304 = vunpack.c.l.b16 %v1478
        %v6305 = vunpack.c.h.b16 %v1478
        %v6306 = vunpack.c.l.b16 %v1479
        %v6307 = vunpack.c.h.b16 %v1479
        %v6308 = vunpack.c.l.b16 %v1480
        %v6309 = vunpack.c.h.b16 %v1480
        %v6310 = vunpack.c.l.b16 %v1481
        %v6311 = vunpack.c.h.b16 %v1481
        %v6312 = vunpack.c.l.b16 %v1482
        %v6313 = vunpack.c.h.b16 %v1482
        %v6314 = vunpack.c.l.b16 %v1483
        %v6315 = vunpack.c.h.b16 %v1483
        %v6316 = vunpack.c.l.b16 %v1484
        %v6317 = vunpack.c.h.b16 %v1484
        %v6318 = vunpack.c.l.b16 %v1485
        %v6319 = vunpack.c.h.b16 %v1485
        %v6320 = vunpack.c.l.b16 %v1486
        %v6321 = vunpack.c.h.b16 %v1486
        %v6322 = vunpack.c.l.b16 %v1487
        %v6323 = vunpack.c.h.b16 %v1487
        %v6324 = vunpack.c.l.b16 %v1488
        %v6325 = vunpack.c.h.b16 %v1488
        %v6326 = vunpack.c.l.b16 %v1489
        %v6327 = vunpack.c.h.b16 %v1489
        %v6328 = vunpack.c.l.b16 %v1490
        %v6329 = vunpack.c.h.b16 %v1490
        %v6330 = vunpack.c.l.b16 %v1491
        %v6331 = vunpack.c.h.b16 %v1491
        %v6332 = vunpack.c.l.b16 %v1492
        %v6333 = vunpack.c.h.b16 %v1492
        %v6334 = vunpack.c.l.b16 %v1493
        %v6335 = vunpack.c.h.b16 %v1493
        %v6336 = vunpack.c.l.b16 %v1494
        %v6337 = vunpack.c.h.b16 %v1494
        %v6338 = vunpack.c.l.b16 %v1495
        %v6339 = vunpack.c.h.b16 %v1495
        %v6340 = vunpack.c.l.b16 %v1496
        %v6341 = vunpack.c.h.b16 %v1496
        %v6342 = vunpack.c.l.b16 %v1497
        %v6343 = vunpack.c.h.b16 %v1497
        %v6344 = vunpack.c.l.b16 %v1498
        %v6345 = vunpack.c.h.b16 %v1498
        %v6346 = vunpack.c.l.b16 %v1499
        %v6347 = vunpack.c.h.b16 %v1499
        %v6348 = vunpack.c.l.b16 %v1500
        %v6349 = vunpack.c.h.b16 %v1500
        %v6350 = vunpack.c.l.b16 %v1501
        %v6351 = vunpack.c.h.b16 %v1501
        %v6352 = vunpack.c.l.b16 %v1502
        %v6353 = vunpack.c.h.b16 %v1502
        %v6354 = vunpack.c.l.b16 %v1503
        %v6355 = vunpack.c.h.b16 %v1503
        %v6356 = vunpack.c.l.b16 %v1504
        %v6357 = vunpack.c.h.b16 %v1504
        %v6358 = vunpack.c.l.b16 %v1505
        %v6359 = vunpack.c.h.b16 %v1505
        %v6360 = vunpack.c.l.b16 %v1506
        %v6361 = vunpack.c.h.b16 %v1506
        %v6362 = vunpack.c.l.b16 %v1507
        %v6363 = vunpack.c.h.b16 %v1507
        %v6364 = vunpack.c.l.b16 %v1508
        %v6365 = vunpack.c.h.b16 %v1508
        %v6366 = vunpack.c.l.b16 %v1509
        %v6367 = vunpack.c.h.b16 %v1509
        %v6368 = vunpack.c.l.b16 %v1510
        %v6369 = vunpack.c.h.b16 %v1510
        %v6370 = vunpack.c.l.b16 %v1511
        %v6371 = vunpack.c.h.b16 %v1511
        %v6372 = vunpack.c.l.b16 %v1512
        %v6373 = vunpack.c.h.b16 %v1512
        %v6374 = vunpack.c.l.b16 %v1513
        %v6375 = vunpack.c.h.b16 %v1513
        %v6376 = vunpack.c.l.b16 %v1514
        %v6377 = vunpack.c.h.b16 %v1514
        %v6378 = vunpack.c.l.b16 %v1515
        %v6379 = vunpack.c.h.b16 %v1515
        %v6380 = vunpack.c.l.b16 %v1516
        %v6381 = vunpack.c.h.b16 %v1516
        %v6382 = vunpack.c.l.b16 %v1517
        %v6383 = vunpack.c.h.b16 %v1517
        %v6384 = vunpack.c.l.b16 %v1518
        %v6385 = vunpack.c.h.b16 %v1518
        %v6386 = vunpack.c.l.b16 %v1519
        %v6387 = vunpack.c.h.b16 %v1519
        %v6388 = vunpack.c.l.b16 %v1520
        %v6389 = vunpack.c.h.b16 %v1520
        %v6390 = vunpack.c.l.b16 %v1521
        %v6391 = vunpack.c.h.b16 %v1521
        %v6392 = vunpack.c.l.b16 %v1522
        %v6393 = vunpack.c.h.b16 %v1522
        %v6394 = vunpack.c.l.b16 %v1523
        %v6395 = vunpack.c.h.b16 %v1523
        %v6396 = vunpack.c.l.b16 %v1524
        %v6397 = vunpack.c.h.b16 %v1524
        %v6398 = vunpack.c.l.b16 %v1525
        %v6399 = vunpack.c.h.b16 %v1525
        %v6400 = vunpack.c.l.b16 %v1526
        %v6401 = vunpack.c.h.b16 %v1526
        %v6402 = vunpack.c.l.b16 %v1527
        %v6403 = vunpack.c.h.b16 %v1527
        %v6404 = vunpack.c.l.b16 %v1528
        %v6405 = vunpack.c.h.b16 %v1528
        %v6406 = vunpack.c.l.b16 %v1529
        %v6407 = vunpack.c.h.b16 %v1529
        %v6408 = vunpack.c.l.b16 %v1530
        %v6409 = vunpack.c.h.b16 %v1530
        %v6410 = vunpack.c.l.b16 %v1531
        %v6411 = vunpack.c.h.b16 %v1531
        %v6412 = vunpack.c.l.b16 %v1532
        %v6413 = vunpack.c.h.b16 %v1532
        %v6414 = vunpack.c.l.b16 %v1533
        %v6415 = vunpack.c.h.b16 %v1533
        %v6416 = vunpack.c.l.b16 %v1534
        %v6417 = vunpack.c.h.b16 %v1534
        %v6418 = vunpack.c.l.b16 %v1535
        %v6419 = vunpack.c.h.b16 %v1535
        %v6420 = vunpack.c.l.b16 %v1536
        %v6421 = vunpack.c.h.b16 %v1536
        %v6422 = vunpack.c.l.b16 %v1537
        %v6423 = vunpack.c.h.b16 %v1537
        %v6424 = vunpack.c.l.b16 %v1538
        %v6425 = vunpack.c.h.b16 %v1538
        %v6426 = vunpack.c.l.b16 %v1539
        %v6427 = vunpack.c.h.b16 %v1539
        %v6428 = vunpack.c.l.b16 %v1540
        %v6429 = vunpack.c.h.b16 %v1540
        %v6430 = vunpack.c.l.b16 %v1541
        %v6431 = vunpack.c.h.b16 %v1541
        %v6432 = vunpack.c.l.b16 %v1542
        %v6433 = vunpack.c.h.b16 %v1542
        %v6434 = vunpack.c.l.b16 %v1543
        %v6435 = vunpack.c.h.b16 %v1543
        %v6436 = vunpack.c.l.b16 %v1544
        %v6437 = vunpack.c.h.b16 %v1544
        %v6438 = vunpack.c.l.b16 %v1545
        %v6439 = vunpack.c.h.b16 %v1545
        %v6440 = vunpack.c.l.b16 %v1546
        %v6441 = vunpack.c.h.b16 %v1546
        %v6442 = vunpack.c.l.b16 %v1547
        %v6443 = vunpack.c.h.b16 %v1547
        %v6444 = vunpack.c.l.b16 %v1548
        %v6445 = vunpack.c.h.b16 %v1548
        %v6446 = vunpack.c.l.b16 %v1549
        %v6447 = vunpack.c.h.b16 %v1549
        %v6448 = vunpack.c.l.b16 %v1550
        %v6449 = vunpack.c.h.b16 %v1550
        %v6450 = vunpack.c.l.b16 %v1551
        %v6451 = vunpack.c.h.b16 %v1551
        %v6452 = vunpack.c.l.b16 %v1552
        %v6453 = vunpack.c.h.b16 %v1552
        %v6454 = vunpack.c.l.b16 %v1553
        %v6455 = vunpack.c.h.b16 %v1553
        %v6456 = vunpack.c.l.b16 %v1554
        %v6457 = vunpack.c.h.b16 %v1554
        %v6458 = vunpack.c.l.b16 %v1555
        %v6459 = vunpack.c.h.b16 %v1555
        %v6460 = vunpack.c.l.b16 %v1556
        %v6461 = vunpack.c.h.b16 %v1556
        %v6462 = vunpack.c.l.b16 %v1557
        %v6463 = vunpack.c.h.b16 %v1557
        %v6464 = vunpack.c.l.b16 %v1558
        %v6465 = vunpack.c.h.b16 %v1558
        %v6466 = vunpack.c.l.b16 %v1559
        %v6467 = vunpack.c.h.b16 %v1559
        %v6468 = vunpack.c.l.b16 %v1560
        %v6469 = vunpack.c.h.b16 %v1560
        %v6470 = vunpack.c.l.b16 %v1561
        %v6471 = vunpack.c.h.b16 %v1561
        %v6472 = vunpack.c.l.b16 %v1562
        %v6473 = vunpack.c.h.b16 %v1562
        %v6474 = vunpack.c.l.b16 %v1563
        %v6475 = vunpack.c.h.b16 %v1563
        %v6476 = vunpack.c.l.b16 %v1564
        %v6477 = vunpack.c.h.b16 %v1564
        %v6478 = vunpack.c.l.b16 %v1565
        %v6479 = vunpack.c.h.b16 %v1565
        %v6480 = vunpack.c.l.b16 %v1566
        %v6481 = vunpack.c.h.b16 %v1566
        %v6482 = vunpack.c.l.b16 %v1567
        %v6483 = vunpack.c.h.b16 %v1567
        %v6484 = vunpack.c.l.b16 %v1568
        %v6485 = vunpack.c.h.b16 %v1568
        %v6486 = vunpack.c.l.b16 %v1569
        %v6487 = vunpack.c.h.b16 %v1569
        %v6488 = vunpack.c.l.b16 %v1570
        %v6489 = vunpack.c.h.b16 %v1570
        %v6490 = vunpack.c.l.b16 %v1571
        %v6491 = vunpack.c.h.b16 %v1571
        %v6492 = vunpack.c.l.b16 %v1572
        %v6493 = vunpack.c.h.b16 %v1572
        %v6494 = vunpack.c.l.b16 %v1573
        %v6495 = vunpack.c.h.b16 %v1573
        %v6496 = vunpack.c.l.b16 %v1574
        %v6497 = vunpack.c.h.b16 %v1574
        %v6498 = vunpack.c.l.b16 %v1575
        %v6499 = vunpack.c.h.b16 %v1575
        %v6500 = vunpack.c.l.b16 %v1576
        %v6501 = vunpack.c.h.b16 %v1576
        %v6502 = vunpack.c.l.b16 %v1577
        %v6503 = vunpack.c.h.b16 %v1577
        %v6504 = vunpack.c.l.b16 %v1578
        %v6505 = vunpack.c.h.b16 %v1578
        %v6506 = vunpack.c.l.b16 %v1579
        %v6507 = vunpack.c.h.b16 %v1579
        %v6508 = vunpack.c.l.b16 %v1580
        %v6509 = vunpack.c.h.b16 %v1580
        %v6510 = vunpack.c.l.b16 %v1581
        %v6511 = vunpack.c.h.b16 %v1581
        %v6512 = vunpack.c.l.b16 %v1582
        %v6513 = vunpack.c.h.b16 %v1582
        %v6514 = vunpack.c.l.b16 %v1583
        %v6515 = vunpack.c.h.b16 %v1583
        %v6516 = vunpack.c.l.b16 %v1584
        %v6517 = vunpack.c.h.b16 %v1584
        %v6518 = vunpack.c.l.b16 %v1585
        %v6519 = vunpack.c.h.b16 %v1585
        %v6520 = vunpack.c.l.b16 %v1586
        %v6521 = vunpack.c.h.b16 %v1586
        %v6522 = vunpack.c.l.b16 %v1587
        %v6523 = vunpack.c.h.b16 %v1587
        %v6524 = vunpack.c.l.b16 %v1588
        %v6525 = vunpack.c.h.b16 %v1588
        %v6526 = vunpack.c.l.b16 %v1589
        %v6527 = vunpack.c.h.b16 %v1589
        %v6528 = vunpack.c.l.b16 %v1590
        %v6529 = vunpack.c.h.b16 %v1590
        %v6530 = vunpack.c.l.b16 %v1591
        %v6531 = vunpack.c.h.b16 %v1591
        %v6532 = vunpack.c.l.b16 %v1592
        %v6533 = vunpack.c.h.b16 %v1592
        %v6534 = vunpack.c.l.b16 %v1593
        %v6535 = vunpack.c.h.b16 %v1593
        %v6536 = vunpack.c.l.b16 %v1594
        %v6537 = vunpack.c.h.b16 %v1594
        %v6538 = vunpack.c.l.b16 %v1595
        %v6539 = vunpack.c.h.b16 %v1595
        %v6540 = vunpack.c.l.b16 %v1596
        %v6541 = vunpack.c.h.b16 %v1596
        %v6542 = vunpack.c.l.b16 %v1597
        %v6543 = vunpack.c.h.b16 %v1597
        %v6544 = vunpack.c.l.b16 %v1598
        %v6545 = vunpack.c.h.b16 %v1598
        %v6546 = vunpack.c.l.b16 %v1599
        %v6547 = vunpack.c.h.b16 %v1599
        %v6548 = vunpack.c.l.b16 %v1600
        %v6549 = vunpack.c.h.b16 %v1600
        %v6550 = vunpack.c.l.b16 %v1601
        %v6551 = vunpack.c.h.b16 %v1601
        %v6552 = vunpack.c.l.b16 %v1602
        %v6553 = vunpack.c.h.b16 %v1602
        %v6554 = vunpack.c.l.b16 %v1603
        %v6555 = vunpack.c.h.b16 %v1603
        %v6556 = vunpack.c.l.b16 %v1604
        %v6557 = vunpack.c.h.b16 %v1604
        %v6558 = vunpack.c.l.b16 %v1605
        %v6559 = vunpack.c.h.b16 %v1605
        %v6560 = vunpack.c.l.b16 %v1606
        %v6561 = vunpack.c.h.b16 %v1606
        %v6562 = vunpack.c.l.b16 %v1607
        %v6563 = vunpack.c.h.b16 %v1607
        %v6564 = vunpack.c.l.b16 %v1608
        %v6565 = vunpack.c.h.b16 %v1608
        %v6566 = vunpack.c.l.b16 %v1609
        %v6567 = vunpack.c.h.b16 %v1609
        %v6568 = vunpack.c.l.b16 %v1610
        %v6569 = vunpack.c.h.b16 %v1610
        %v6570 = vunpack.c.l.b16 %v1611
        %v6571 = vunpack.c.h.b16 %v1611
        %v6572 = vunpack.c.l.b16 %v1612
        %v6573 = vunpack.c.h.b16 %v1612
        %v6574 = vunpack.c.l.b16 %v1613
        %v6575 = vunpack.c.h.b16 %v1613
        %v6576 = vunpack.c.l.b16 %v1614
        %v6577 = vunpack.c.h.b16 %v1614
        %v6578 = vunpack.c.l.b16 %v1615
        %v6579 = vunpack.c.h.b16 %v1615
        %v6580 = vunpack.c.l.b16 %v1616
        %v6581 = vunpack.c.h.b16 %v1616
        %v6582 = vunpack.c.l.b16 %v1617
        %v6583 = vunpack.c.h.b16 %v1617
        %v6584 = vunpack.c.l.b16 %v1618
        %v6585 = vunpack.c.h.b16 %v1618
        %v6586 = vunpack.c.l.b16 %v1619
        %v6587 = vunpack.c.h.b16 %v1619
        %v6588 = vunpack.c.l.b16 %v1620
        %v6589 = vunpack.c.h.b16 %v1620
        %v6590 = vunpack.c.l.b16 %v1621
        %v6591 = vunpack.c.h.b16 %v1621
        %v6592 = vunpack.c.l.b16 %v1622
        %v6593 = vunpack.c.h.b16 %v1622
        %v6594 = vunpack.c.l.b16 %v1623
        %v6595 = vunpack.c.h.b16 %v1623
        %v6596 = vunpack.c.l.b16 %v1624
        %v6597 = vunpack.c.h.b16 %v1624
        %v6598 = vunpack.c.l.b16 %v1625
        %v6599 = vunpack.c.h.b16 %v1625
        %v6600 = vunpack.c.l.b16 %v1626
        %v6601 = vunpack.c.h.b16 %v1626
        %v6602 = vunpack.c.l.b16 %v1627
        %v6603 = vunpack.c.h.b16 %v1627
        %v6604 = vunpack.c.l.b16 %v1628
        %v6605 = vunpack.c.h.b16 %v1628
        %v6606 = vunpack.c.l.b16 %v1629
        %v6607 = vunpack.c.h.b16 %v1629
        %v6608 = vunpack.c.l.b16 %v1630
        %v6609 = vunpack.c.h.b16 %v1630
        %v6610 = vunpack.c.l.b16 %v1631
        %v6611 = vunpack.c.h.b16 %v1631
        %v6612 = vunpack.c.l.b16 %v1632
        %v6613 = vunpack.c.h.b16 %v1632
        %v6614 = vunpack.c.l.b16 %v1633
        %v6615 = vunpack.c.h.b16 %v1633
        %v6616 = vunpack.c.l.b16 %v1634
        %v6617 = vunpack.c.h.b16 %v1634
        %v6618 = vunpack.c.l.b16 %v1635
        %v6619 = vunpack.c.h.b16 %v1635
        %v6620 = vunpack.c.l.b16 %v1636
        %v6621 = vunpack.c.h.b16 %v1636
        %v6622 = vunpack.c.l.b16 %v1637
        %v6623 = vunpack.c.h.b16 %v1637
        %v6624 = vunpack.c.l.b16 %v1638
        %v6625 = vunpack.c.h.b16 %v1638
        %v6626 = vunpack.c.l.b16 %v1639
        %v6627 = vunpack.c.h.b16 %v1639
        %v6628 = vunpack.c.l.b16 %v1640
        %v6629 = vunpack.c.h.b16 %v1640
        %v6630 = vunpack.c.l.b16 %v1641
        %v6631 = vunpack.c.h.b16 %v1641
        %v6632 = vunpack.c.l.b16 %v1642
        %v6633 = vunpack.c.h.b16 %v1642
        %v6634 = vunpack.c.l.b16 %v1643
        %v6635 = vunpack.c.h.b16 %v1643
        %v6636 = vunpack.c.l.b16 %v1644
        %v6637 = vunpack.c.h.b16 %v1644
        %v6638 = vunpack.c.l.b16 %v1645
        %v6639 = vunpack.c.h.b16 %v1645
        %v6640 = vunpack.c.l.b16 %v1646
        %v6641 = vunpack.c.h.b16 %v1646
        %v6642 = vunpack.c.l.b16 %v1647
        %v6643 = vunpack.c.h.b16 %v1647
        %v6644 = vunpack.c.l.b16 %v1648
        %v6645 = vunpack.c.h.b16 %v1648
        %v6646 = vunpack.c.l.b16 %v1649
        %v6647 = vunpack.c.h.b16 %v1649
        %v6648 = vunpack.c.l.b16 %v1650
        %v6649 = vunpack.c.h.b16 %v1650
        %v6650 = vunpack.c.l.b16 %v1651
        %v6651 = vunpack.c.h.b16 %v1651
        %v6652 = vunpack.c.l.b16 %v1652
        %v6653 = vunpack.c.h.b16 %v1652
        %v6654 = vunpack.c.l.b16 %v1653
        %v6655 = vunpack.c.h.b16 %v1653
        %v6656 = vunpack.c.l.b16 %v1654
        %v6657 = vunpack.c.h.b16 %v1654
        %v6658 = vunpack.c.l.b16 %v1655
        %v6659 = vunpack.c.h.b16 %v1655
        %v6660 = vunpack.c.l.b16 %v1656
        %v6661 = vunpack.c.h.b16 %v1656
        %v6662 = vunpack.c.l.b16 %v1657
        %v6663 = vunpack.c.h.b16 %v1657
        %v6664 = vunpack.c.l.b16 %v1658
        %v6665 = vunpack.c.h.b16 %v1658
        %v6666 = vunpack.c.l.b16 %v1659
        %v6667 = vunpack.c.h.b16 %v1659
        %v6668 = vunpack.c.l.b16 %v1660
        %v6669 = vunpack.c.h.b16 %v1660
        %v6670 = vunpack.c.l.b16 %v1661
        %v6671 = vunpack.c.h.b16 %v1661
        %v6672 = vunpack.c.l.b16 %v1662
        %v6673 = vunpack.c.h.b16 %v1662
        %v6674 = vunpack.c.l.b16 %v1663
        %v6675 = vunpack.c.h.b16 %v1663
        %v6676 = vunpack.c.l.b16 %v1664
        %v6677 = vunpack.c.h.b16 %v1664
        %v6678 = vunpack.c.l.b16 %v1665
        %v6679 = vunpack.c.h.b16 %v1665
        %v6680 = vunpack.c.l.b16 %v1666
        %v6681 = vunpack.c.h.b16 %v1666
        %v6682 = vunpack.c.l.b16 %v1667
        %v6683 = vunpack.c.h.b16 %v1667
        %v6684 = vunpack.c.l.b16 %v1668
        %v6685 = vunpack.c.h.b16 %v1668
        %v6686 = vunpack.c.l.b16 %v1669
        %v6687 = vunpack.c.h.b16 %v1669
        %v6688 = vunpack.c.l.b16 %v1670
        %v6689 = vunpack.c.h.b16 %v1670
        %v6690 = vunpack.c.l.b16 %v1671
        %v6691 = vunpack.c.h.b16 %v1671
        %v6692 = vunpack.c.l.b16 %v1672
        %v6693 = vunpack.c.h.b16 %v1672
        %v6694 = vunpack.c.l.b16 %v1673
        %v6695 = vunpack.c.h.b16 %v1673
        %v6696 = vunpack.c.l.b16 %v1674
        %v6697 = vunpack.c.h.b16 %v1674
        %v6698 = vunpack.c.l.b16 %v1675
        %v6699 = vunpack.c.h.b16 %v1675
        %v6700 = vunpack.c.l.b16 %v1676
        %v6701 = vunpack.c.h.b16 %v1676
        %v6702 = vunpack.c.l.b16 %v1677
        %v6703 = vunpack.c.h.b16 %v1677
        %v6704 = vunpack.c.l.b16 %v1678
        %v6705 = vunpack.c.h.b16 %v1678
        %v6706 = vunpack.c.l.b16 %v1679
        %v6707 = vunpack.c.h.b16 %v1679
        %v6708 = vunpack.c.l.b16 %v1680
        %v6709 = vunpack.c.h.b16 %v1680
        %v6710 = vunpack.c.l.b16 %v1681
        %v6711 = vunpack.c.h.b16 %v1681
        %v6712 = vunpack.c.l.b16 %v1682
        %v6713 = vunpack.c.h.b16 %v1682
        %v6714 = vunpack.c.l.b16 %v1683
        %v6715 = vunpack.c.h.b16 %v1683
        %v6716 = vunpack.c.l.b16 %v1684
        %v6717 = vunpack.c.h.b16 %v1684
        %v6718 = vunpack.c.l.b16 %v1685
        %v6719 = vunpack.c.h.b16 %v1685
        %v6720 = vunpack.c.l.b16 %v1686
        %v6721 = vunpack.c.h.b16 %v1686
        %v6722 = vunpack.c.l.b16 %v1687
        %v6723 = vunpack.c.h.b16 %v1687
        %v6724 = vunpack.c.l.b16 %v1688
        %v6725 = vunpack.c.h.b16 %v1688
        %v6726 = vunpack.c.l.b16 %v1689
        %v6727 = vunpack.c.h.b16 %v1689
        %v6728 = vunpack.c.l.b16 %v1690
        %v6729 = vunpack.c.h.b16 %v1690
        %v6730 = vunpack.c.l.b16 %v1691
        %v6731 = vunpack.c.h.b16 %v1691
        %v6732 = vunpack.c.l.b16 %v1692
        %v6733 = vunpack.c.h.b16 %v1692
        %v6734 = vunpack.c.l.b16 %v1693
        %v6735 = vunpack.c.h.b16 %v1693
        %v6736 = vunpack.c.l.b16 %v1694
        %v6737 = vunpack.c.h.b16 %v1694
        %v6738 = vunpack.c.l.b16 %v1695
        %v6739 = vunpack.c.h.b16 %v1695
        %v6740 = vunpack.c.l.b16 %v1696
        %v6741 = vunpack.c.h.b16 %v1696
        %v6742 = vunpack.c.l.b16 %v1697
        %v6743 = vunpack.c.h.b16 %v1697
        %v6744 = vunpack.c.l.b16 %v1698
        %v6745 = vunpack.c.h.b16 %v1698
        %v6746 = vunpack.c.l.b16 %v1699
        %v6747 = vunpack.c.h.b16 %v1699
        %v6748 = vunpack.c.l.b16 %v1700
        %v6749 = vunpack.c.h.b16 %v1700
        %v6750 = vunpack.c.l.b16 %v1701
        %v6751 = vunpack.c.h.b16 %v1701
        %v6752 = vunpack.c.l.b16 %v1702
        %v6753 = vunpack.c.h.b16 %v1702
        %v6754 = vunpack.c.l.b16 %v1703
        %v6755 = vunpack.c.h.b16 %v1703
        %v6756 = vunpack.c.l.b16 %v1704
        %v6757 = vunpack.c.h.b16 %v1704
        %v6758 = vunpack.c.l.b16 %v1705
        %v6759 = vunpack.c.h.b16 %v1705
        %v6760 = vunpack.c.l.b16 %v1706
        %v6761 = vunpack.c.h.b16 %v1706
        %v6762 = vunpack.c.l.b16 %v1707
        %v6763 = vunpack.c.h.b16 %v1707
        %v6764 = vunpack.c.l.b16 %v1708
        %v6765 = vunpack.c.h.b16 %v1708
        %v6766 = vunpack.c.l.b16 %v1709
        %v6767 = vunpack.c.h.b16 %v1709
        %v6768 = vunpack.c.l.b16 %v1710
        %v6769 = vunpack.c.h.b16 %v1710
        %v6770 = vunpack.c.l.b16 %v1711
        %v6771 = vunpack.c.h.b16 %v1711
        %v6772 = vunpack.c.l.b16 %v1712
        %v6773 = vunpack.c.h.b16 %v1712
        %v6774 = vunpack.c.l.b16 %v1713
        %v6775 = vunpack.c.h.b16 %v1713
        %v6776 = vunpack.c.l.b16 %v1714
        %v6777 = vunpack.c.h.b16 %v1714
        %v6778 = vunpack.c.l.b16 %v1715
        %v6779 = vunpack.c.h.b16 %v1715
        %v6780 = vunpack.c.l.b16 %v1716
        %v6781 = vunpack.c.h.b16 %v1716
        %v6782 = vunpack.c.l.b16 %v1717
        %v6783 = vunpack.c.h.b16 %v1717
        %v6784 = vunpack.c.l.b16 %v1718
        %v6785 = vunpack.c.h.b16 %v1718
        %v6786 = vunpack.c.l.b16 %v1719
        %v6787 = vunpack.c.h.b16 %v1719
        %v6788 = vunpack.c.l.b16 %v1720
        %v6789 = vunpack.c.h.b16 %v1720
        %v6790 = vunpack.c.l.b16 %v1721
        %v6791 = vunpack.c.h.b16 %v1721
        %v6792 = vunpack.c.l.b16 %v1722
        %v6793 = vunpack.c.h.b16 %v1722
        %v6794 = vunpack.c.l.b16 %v1723
        %v6795 = vunpack.c.h.b16 %v1723
        %v6796 = vunpack.c.l.b16 %v1724
        %v6797 = vunpack.c.h.b16 %v1724
        %v6798 = vunpack.c.l.b16 %v1725
        %v6799 = vunpack.c.h.b16 %v1725
        %v6800 = vunpack.c.l.b16 %v1726
        %v6801 = vunpack.c.h.b16 %v1726
        %v6802 = vunpack.c.l.b16 %v1727
        %v6803 = vunpack.c.h.b16 %v1727
        %v6804 = vunpack.c.l.b16 %v1728
        %v6805 = vunpack.c.h.b16 %v1728
        %v6806 = vunpack.c.l.b16 %v1729
        %v6807 = vunpack.c.h.b16 %v1729
        %v6808 = vunpack.c.l.b16 %v1730
        %v6809 = vunpack.c.h.b16 %v1730
        %v6810 = vunpack.c.l.b16 %v1731
        %v6811 = vunpack.c.h.b16 %v1731
        %v6812 = vunpack.c.l.b16 %v1732
        %v6813 = vunpack.c.h.b16 %v1732
        %v6814 = vunpack.c.l.b16 %v1733
        %v6815 = vunpack.c.h.b16 %v1733
        %v6816 = vunpack.c.l.b16 %v1734
        %v6817 = vunpack.c.h.b16 %v1734
        %v6818 = vunpack.c.l.b16 %v1735
        %v6819 = vunpack.c.h.b16 %v1735
        %v6820 = vunpack.c.l.b16 %v1736
        %v6821 = vunpack.c.h.b16 %v1736
        %v6822 = vunpack.c.l.b16 %v1737
        %v6823 = vunpack.c.h.b16 %v1737
        %v6824 = vunpack.c.l.b16 %v1738
        %v6825 = vunpack.c.h.b16 %v1738
        %v6826 = vunpack.c.l.b16 %v1739
        %v6827 = vunpack.c.h.b16 %v1739
        %v6828 = vunpack.c.l.b16 %v1740
        %v6829 = vunpack.c.h.b16 %v1740
        %v6830 = vunpack.c.l.b16 %v1741
        %v6831 = vunpack.c.h.b16 %v1741
        %v6832 = vunpack.c.l.b16 %v1742
        %v6833 = vunpack.c.h.b16 %v1742
        %v6834 = vunpack.c.l.b16 %v1743
        %v6835 = vunpack.c.h.b16 %v1743
        %v6836 = vunpack.c.l.b16 %v1744
        %v6837 = vunpack.c.h.b16 %v1744
        %v6838 = vunpack.c.l.b16 %v1745
        %v6839 = vunpack.c.h.b16 %v1745
        %v6840 = vunpack.c.l.b16 %v1746
        %v6841 = vunpack.c.h.b16 %v1746
        %v6842 = vunpack.c.l.b16 %v1747
        %v6843 = vunpack.c.h.b16 %v1747
        %v6844 = vunpack.c.l.b16 %v1748
        %v6845 = vunpack.c.h.b16 %v1748
        %v6846 = vunpack.c.l.b16 %v1749
        %v6847 = vunpack.c.h.b16 %v1749
        %v6848 = vunpack.c.l.b16 %v1750
        %v6849 = vunpack.c.h.b16 %v1750
        %v6850 = vunpack.c.l.b16 %v1751
        %v6851 = vunpack.c.h.b16 %v1751
        %v6852 = vunpack.c.l.b16 %v1752
        %v6853 = vunpack.c.h.b16 %v1752
        %v6854 = vunpack.c.l.b16 %v1753
        %v6855 = vunpack.c.h.b16 %v1753
        %v6856 = vunpack.c.l.b16 %v1754
        %v6857 = vunpack.c.h.b16 %v1754
        %v6858 = vunpack.c.l.b16 %v1755
        %v6859 = vunpack.c.h.b16 %v1755
        %v6860 = vunpack.c.l.b16 %v1756
        %v6861 = vunpack.c.h.b16 %v1756
        %v6862 = vunpack.c.l.b16 %v1757
        %v6863 = vunpack.c.h.b16 %v1757
        %v6864 = vunpack.c.l.b16 %v1758
        %v6865 = vunpack.c.h.b16 %v1758
        %v6866 = vunpack.c.l.b16 %v1759
        %v6867 = vunpack.c.h.b16 %v1759
        %v6868 = vunpack.c.l.b16 %v1760
        %v6869 = vunpack.c.h.b16 %v1760
        %v6870 = vunpack.c.l.b16 %v1761
        %v6871 = vunpack.c.h.b16 %v1761
        %v6872 = vunpack.c.l.b16 %v1762
        %v6873 = vunpack.c.h.b16 %v1762
        %v6874 = vunpack.c.l.b16 %v1763
        %v6875 = vunpack.c.h.b16 %v1763
        %v6876 = vunpack.c.l.b16 %v1764
        %v6877 = vunpack.c.h.b16 %v1764
        %v6878 = vunpack.c.l.b16 %v1765
        %v6879 = vunpack.c.h.b16 %v1765
        %v6880 = vunpack.c.l.b16 %v1766
        %v6881 = vunpack.c.h.b16 %v1766
        %v6882 = vunpack.c.l.b16 %v1767
        %v6883 = vunpack.c.h.b16 %v1767
        %v6884 = vunpack.c.l.b16 %v1768
        %v6885 = vunpack.c.h.b16 %v1768
        %v6886 = vunpack.c.l.b16 %v1769
        %v6887 = vunpack.c.h.b16 %v1769
        %v6888 = vunpack.c.l.b16 %v1770
        %v6889 = vunpack.c.h.b16 %v1770
        %v6890 = vunpack.c.l.b16 %v1771
        %v6891 = vunpack.c.h.b16 %v1771
        %v6892 = vunpack.c.l.b16 %v1772
        %v6893 = vunpack.c.h.b16 %v1772
        %v6894 = vunpack.c.l.b16 %v1773
        %v6895 = vunpack.c.h.b16 %v1773
        %v6896 = vunpack.c.l.b16 %v1774
        %v6897 = vunpack.c.h.b16 %v1774
        %v6898 = vunpack.c.l.b16 %v1775
        %v6899 = vunpack.c.h.b16 %v1775
        %v6900 = vunpack.c.l.b16 %v1776
        %v6901 = vunpack.c.h.b16 %v1776
        %v6902 = vunpack.c.l.b16 %v1777
        %v6903 = vunpack.c.h.b16 %v1777
        %v6904 = vunpack.c.l.b16 %v1778
        %v6905 = vunpack.c.h.b16 %v1778
        %v6906 = vunpack.c.l.b16 %v1779
        %v6907 = vunpack.c.h.b16 %v1779
        %v6908 = vunpack.c.l.b16 %v1780
        %v6909 = vunpack.c.h.b16 %v1780
        %v6910 = vunpack.c.l.b16 %v1781
        %v6911 = vunpack.c.h.b16 %v1781
        %v6912 = vunpack.c.l.b16 %v1782
        %v6913 = vunpack.c.h.b16 %v1782
        %v6914 = vunpack.c.l.b16 %v1783
        %v6915 = vunpack.c.h.b16 %v1783
        %v6916 = vunpack.c.l.b16 %v1784
        %v6917 = vunpack.c.h.b16 %v1784
        %v6918 = vunpack.c.l.b16 %v1785
        %v6919 = vunpack.c.h.b16 %v1785
        %v6920 = vunpack.c.l.b16 %v1786
        %v6921 = vunpack.c.h.b16 %v1786
        %v6922 = vunpack.c.l.b16 %v1787
        %v6923 = vunpack.c.h.b16 %v1787
        %v6924 = vunpack.c.l.b16 %v1788
        %v6925 = vunpack.c.h.b16 %v1788
        %v6926 = vunpack.c.l.b16 %v1789
        %v6927 = vunpack.c.h.b16 %v1789
        %v6928 = vunpack.c.l.b16 %v1790
        %v6929 = vunpack.c.h.b16 %v1790
        %v6930 = vunpack.c.l.b16 %v1791
        %v6931 = vunpack.c.h.b16 %v1791
        %v6932 = vunpack.c.l.b16 %v1792
        %v6933 = vunpack.c.h.b16 %v1792
        %v6934 = vunpack.c.l.b16 %v1793
        %v6935 = vunpack.c.h.b16 %v1793
        %v6936 = vunpack.c.l.b16 %v1794
        %v6937 = vunpack.c.h.b16 %v1794
        %v6938 = vunpack.c.l.b16 %v1795
        %v6939 = vunpack.c.h.b16 %v1795
        %v6940 = vunpack.c.l.b16 %v1796
        %v6941 = vunpack.c.h.b16 %v1796
        %v6942 = vunpack.c.l.b16 %v1797
        %v6943 = vunpack.c.h.b16 %v1797
        %v6944 = vunpack.c.l.b16 %v1798
        %v6945 = vunpack.c.h.b16 %v1798
        %v6946 = vunpack.c.l.b16 %v1799
        %v6947 = vunpack.c.h.b16 %v1799
        %v6948 = vunpack.c.l.b16 %v1800
        %v6949 = vunpack.c.h.b16 %v1800
        %v6950 = vunpack.c.l.b16 %v1801
        %v6951 = vunpack.c.h.b16 %v1801
        %v6952 = vunpack.c.l.b16 %v1802
        %v6953 = vunpack.c.h.b16 %v1802
        %v6954 = vunpack.c.l.b16 %v1803
        %v6955 = vunpack.c.h.b16 %v1803
        %v6956 = vunpack.c.l.b16 %v1804
        %v6957 = vunpack.c.h.b16 %v1804
        %v6958 = vunpack.c.l.b16 %v1805
        %v6959 = vunpack.c.h.b16 %v1805
        %v6960 = vunpack.c.l.b16 %v1806
        %v6961 = vunpack.c.h.b16 %v1806
        %v6962 = vunpack.c.l.b16 %v1807
        %v6963 = vunpack.c.h.b16 %v1807
        %v6964 = vunpack.c.l.b16 %v1808
        %v6965 = vunpack.c.h.b16 %v1808
        %v6966 = vunpack.c.l.b16 %v1809
        %v6967 = vunpack.c.h.b16 %v1809
        %v6968 = vunpack.c.l.b16 %v1810
        %v6969 = vunpack.c.h.b16 %v1810
        %v6970 = vunpack.c.l.b16 %v1811
        %v6971 = vunpack.c.h.b16 %v1811
        %v6972 = vunpack.c.l.b16 %v1812
        %v6973 = vunpack.c.h.b16 %v1812
        %v6974 = vunpack.c.l.b16 %v1813
        %v6975 = vunpack.c.h.b16 %v1813
        %v6976 = vunpack.c.l.b16 %v1814
        %v6977 = vunpack.c.h.b16 %v1814
        %v6978 = vunpack.c.l.b16 %v1815
        %v6979 = vunpack.c.h.b16 %v1815
        %v6980 = vunpack.c.l.b16 %v1816
        %v6981 = vunpack.c.h.b16 %v1816
        %v6982 = vunpack.c.l.b16 %v1817
        %v6983 = vunpack.c.h.b16 %v1817
        %v6984 = vunpack.c.l.b16 %v1818
        %v6985 = vunpack.c.h.b16 %v1818
        %v6986 = vunpack.c.l.b16 %v1819
        %v6987 = vunpack.c.h.b16 %v1819
        %v6988 = vunpack.c.l.b16 %v1820
        %v6989 = vunpack.c.h.b16 %v1820
        %v6990 = vunpack.c.l.b16 %v1821
        %v6991 = vunpack.c.h.b16 %v1821
        %v6992 = vunpack.c.l.b16 %v1822
        %v6993 = vunpack.c.h.b16 %v1822
        %v6994 = vunpack.c.l.b16 %v1823
        %v6995 = vunpack.c.h.b16 %v1823
        %v6996 = vunpack.c.l.b16 %v1824
        %v6997 = vunpack.c.h.b16 %v1824
        %v6998 = vunpack.c.l.b16 %v1825
        %v6999 = vunpack.c.h.b16 %v1825
        %v7000 = vunpack.c.l.b16 %v1826
        %v7001 = vunpack.c.h.b16 %v1826
        %v7002 = vunpack.c.l.b16 %v1827
        %v7003 = vunpack.c.h.b16 %v1827
        %v7004 = vunpack.c.l.b16 %v1828
        %v7005 = vunpack.c.h.b16 %v1828
        %v7006 = vunpack.c.l.b16 %v1829
        %v7007 = vunpack.c.h.b16 %v1829
        %v7008 = vunpack.c.l.b16 %v1830
        %v7009 = vunpack.c.h.b16 %v1830
        %v7010 = vunpack.c.l.b16 %v1831
        %v7011 = vunpack.c.h.b16 %v1831
        %v7012 = vunpack.c.l.b16 %v1832
        %v7013 = vunpack.c.h.b16 %v1832
        %v7014 = vunpack.c.l.b16 %v1833
        %v7015 = vunpack.c.h.b16 %v1833
        %v7016 = vunpack.c.l.b16 %v1834
        %v7017 = vunpack.c.h.b16 %v1834
        %v7018 = vunpack.c.l.b16 %v1835
        %v7019 = vunpack.c.h.b16 %v1835
        %v7020 = vunpack.c.l.b16 %v1836
        %v7021 = vunpack.c.h.b16 %v1836
        %v7022 = vunpack.c.l.b16 %v1837
        %v7023 = vunpack.c.h.b16 %v1837
        %v7024 = vunpack.c.l.b16 %v1838
        %v7025 = vunpack.c.h.b16 %v1838
        %v7026 = vunpack.c.l.b16 %v1839
        %v7027 = vunpack.c.h.b16 %v1839
        %v7028 = vunpack.c.l.b16 %v1840
        %v7029 = vunpack.c.h.b16 %v1840
        %v7030 = vunpack.c.l.b16 %v1841
        %v7031 = vunpack.c.h.b16 %v1841
        %v7032 = vunpack.c.l.b16 %v1842
        %v7033 = vunpack.c.h.b16 %v1842
        %v7034 = vunpack.c.l.b16 %v1843
        %v7035 = vunpack.c.h.b16 %v1843
        %v7036 = vunpack.c.l.b16 %v1844
        %v7037 = vunpack.c.h.b16 %v1844
        %v7038 = vunpack.c.l.b16 %v1845
        %v7039 = vunpack.c.h.b16 %v1845
        %v7040 = vunpack.c.l.b16 %v1846
        %v7041 = vunpack.c.h.b16 %v1846
        %v7042 = vunpack.c.l.b16 %v1847
        %v7043 = vunpack.c.h.b16 %v1847
        %v7044 = vunpack.c.l.b16 %v1848
        %v7045 = vunpack.c.h.b16 %v1848
        %v7046 = vunpack.c.l.b16 %v1849
        %v7047 = vunpack.c.h.b16 %v1849
        %v7048 = vunpack.c.l.b16 %v1850
        %v7049 = vunpack.c.h.b16 %v1850
        %v7050 = vunpack.c.l.b16 %v1851
        %v7051 = vunpack.c.h.b16 %v1851
        %v7052 = vunpack.c.l.b16 %v1852
        %v7053 = vunpack.c.h.b16 %v1852
        %v7054 = vunpack.c.l.b16 %v1853
        %v7055 = vunpack.c.h.b16 %v1853
        %v7056 = vunpack.c.l.b16 %v1854
        %v7057 = vunpack.c.h.b16 %v1854
        %v7058 = vunpack.c.l.b16 %v1855
        %v7059 = vunpack.c.h.b16 %v1855
        %v7060 = vunpack.c.l.b16 %v1856
        %v7061 = vunpack.c.h.b16 %v1856
        %v7062 = vunpack.c.l.b16 %v1857
        %v7063 = vunpack.c.h.b16 %v1857
        %v7064 = vunpack.c.l.b16 %v1858
        %v7065 = vunpack.c.h.b16 %v1858
        %v7066 = vunpack.c.l.b16 %v1859
        %v7067 = vunpack.c.h.b16 %v1859
        %v7068 = vunpack.c.l.b16 %v1860
        %v7069 = vunpack.c.h.b16 %v1860
        %v7070 = vunpack.c.l.b16 %v1861
        %v7071 = vunpack.c.h.b16 %v1861
        %v7072 = vunpack.c.l.b16 %v1862
        %v7073 = vunpack.c.h.b16 %v1862
        %v7074 = vunpack.c.l.b16 %v1863
        %v7075 = vunpack.c.h.b16 %v1863
        %v7076 = vunpack.c.l.b16 %v1864
        %v7077 = vunpack.c.h.b16 %v1864
        %v7078 = vunpack.c.l.b16 %v1865
        %v7079 = vunpack.c.h.b16 %v1865
        %v7080 = vunpack.c.l.b16 %v1866
        %v7081 = vunpack.c.h.b16 %v1866
        %v7082 = vunpack.c.l.b16 %v1867
        %v7083 = vunpack.c.h.b16 %v1867
        %v7084 = vunpack.c.l.b16 %v1868
        %v7085 = vunpack.c.h.b16 %v1868
        %v7086 = vunpack.c.l.b16 %v1869
        %v7087 = vunpack.c.h.b16 %v1869
        %v7088 = vunpack.c.l.b16 %v1870
        %v7089 = vunpack.c.h.b16 %v1870
        %v7090 = vunpack.c.l.b16 %v1871
        %v7091 = vunpack.c.h.b16 %v1871
        %v7092 = vunpack.c.l.b16 %v1872
        %v7093 = vunpack.c.h.b16 %v1872
        %v7094 = vunpack.c.l.b16 %v1873
        %v7095 = vunpack.c.h.b16 %v1873
        %v7096 = vunpack.c.l.b16 %v1874
        %v7097 = vunpack.c.h.b16 %v1874
        %v7098 = vunpack.c.l.b16 %v1875
        %v7099 = vunpack.c.h.b16 %v1875
        %v7100 = vunpack.c.l.b16 %v1876
        %v7101 = vunpack.c.h.b16 %v1876
        %v7102 = vunpack.c.l.b16 %v1877
        %v7103 = vunpack.c.h.b16 %v1877
        %v7104 = vunpack.c.l.b16 %v1878
        %v7105 = vunpack.c.h.b16 %v1878
        %v7106 = vunpack.c.l.b16 %v1879
        %v7107 = vunpack.c.h.b16 %v1879
        %v7108 = vunpack.c.l.b16 %v1880
        %v7109 = vunpack.c.h.b16 %v1880
        %v7110 = vunpack.c.l.b16 %v1881
        %v7111 = vunpack.c.h.b16 %v1881
        %v7112 = vunpack.c.l.b16 %v1882
        %v7113 = vunpack.c.h.b16 %v1882
        %v7114 = vunpack.c.l.b16 %v1883
        %v7115 = vunpack.c.h.b16 %v1883
        %v7116 = vunpack.c.l.b16 %v1884
        %v7117 = vunpack.c.h.b16 %v1884
        %v7118 = vunpack.c.l.b16 %v1885
        %v7119 = vunpack.c.h.b16 %v1885
        %v7120 = vunpack.c.l.b16 %v1886
        %v7121 = vunpack.c.h.b16 %v1886
        %v7122 = vunpack.c.l.b16 %v1887
        %v7123 = vunpack.c.h.b16 %v1887
        %v7124 = vunpack.c.l.b16 %v1888
        %v7125 = vunpack.c.h.b16 %v1888
        %v7126 = vunpack.c.l.b16 %v1889
        %v7127 = vunpack.c.h.b16 %v1889
        %v7128 = vunpack.c.l.b16 %v1890
        %v7129 = vunpack.c.h.b16 %v1890
        %v7130 = vunpack.c.l.b16 %v1891
        %v7131 = vunpack.c.h.b16 %v1891
        %v7132 = vunpack.c.l.b16 %v1892
        %v7133 = vunpack.c.h.b16 %v1892
        %v7134 = vunpack.c.l.b16 %v1893
        %v7135 = vunpack.c.h.b16 %v1893
        %v7136 = vunpack.c.l.b16 %v1894
        %v7137 = vunpack.c.h.b16 %v1894
        %v7138 = vunpack.c.l.b16 %v1895
        %v7139 = vunpack.c.h.b16 %v1895
        %v7140 = vunpack.c.l.b16 %v1896
        %v7141 = vunpack.c.h.b16 %v1896
        %v7142 = vunpack.c.l.b16 %v1897
        %v7143 = vunpack.c.h.b16 %v1897
        %v7144 = vunpack.c.l.b16 %v1898
        %v7145 = vunpack.c.h.b16 %v1898
        %v7146 = vunpack.c.l.b16 %v1899
        %v7147 = vunpack.c.h.b16 %v1899
        %v7148 = vunpack.c.l.b16 %v1900
        %v7149 = vunpack.c.h.b16 %v1900
        %v7150 = vunpack.c.l.b16 %v1901
        %v7151 = vunpack.c.h.b16 %v1901
        %v7152 = vunpack.c.l.b16 %v1902
        %v7153 = vunpack.c.h.b16 %v1902
        %v7154 = vunpack.c.l.b16 %v1903
        %v7155 = vunpack.c.h.b16 %v1903
        %v7156 = vunpack.c.l.b16 %v1904
        %v7157 = vunpack.c.h.b16 %v1904
        %v7158 = vunpack.c.l.b16 %v1905
        %v7159 = vunpack.c.h.b16 %v1905
        %v7160 = vunpack.c.l.b16 %v1906
        %v7161 = vunpack.c.h.b16 %v1906
        %v7162 = vunpack.c.l.b16 %v1907
        %v7163 = vunpack.c.h.b16 %v1907
        %v7164 = vunpack.c.l.b16 %v1908
        %v7165 = vunpack.c.h.b16 %v1908
        %v7166 = vunpack.c.l.b16 %v1909
        %v7167 = vunpack.c.h.b16 %v1909
        %v7168 = vunpack.c.l.b16 %v1910
        %v7169 = vunpack.c.h.b16 %v1910
        %v7170 = vunpack.c.l.b16 %v1911
        %v7171 = vunpack.c.h.b16 %v1911
        %v7172 = vunpack.c.l.b16 %v1912
        %v7173 = vunpack.c.h.b16 %v1912
        %v7174 = vunpack.c.l.b16 %v1913
        %v7175 = vunpack.c.h.b16 %v1913
        %v7176 = vunpack.c.l.b16 %v1914
        %v7177 = vunpack.c.h.b16 %v1914
        %v7178 = vunpack.c.l.b16 %v1915
        %v7179 = vunpack.c.h.b16 %v1915
        %v7180 = vunpack.c.l.b16 %v1916
        %v7181 = vunpack.c.h.b16 %v1916
        %v7182 = vunpack.c.l.b16 %v1917
        %v7183 = vunpack.c.h.b16 %v1917
        %v7184 = vunpack.c.l.b16 %v1918
        %v7185 = vunpack.c.h.b16 %v1918
        %v7186 = vunpack.c.l.b16 %v1919
        %v7187 = vunpack.c.h.b16 %v1919
        %v7188 = vunpack.c.l.b16 %v1920
        %v7189 = vunpack.c.h.b16 %v1920
        %v7190 = vunpack.c.l.b16 %v1921
        %v7191 = vunpack.c.h.b16 %v1921
        %v7192 = vunpack.c.l.b16 %v1922
        %v7193 = vunpack.c.h.b16 %v1922
        %v7194 = vunpack.c.l.b16 %v1923
        %v7195 = vunpack.c.h.b16 %v1923
        %v7196 = vunpack.c.l.b16 %v1924
        %v7197 = vunpack.c.h.b16 %v1924
        %v7198 = vunpack.c.l.b16 %v1925
        %v7199 = vunpack.c.h.b16 %v1925
        %v7200 = vunpack.c.l.b16 %v1926
        %v7201 = vunpack.c.h.b16 %v1926
        %v7202 = vunpack.c.l.b16 %v1927
        %v7203 = vunpack.c.h.b16 %v1927
        %v7204 = vunpack.c.l.b16 %v1928
        %v7205 = vunpack.c.h.b16 %v1928
        %v7206 = vunpack.c.l.b16 %v1929
        %v7207 = vunpack.c.h.b16 %v1929
        %v7208 = vunpack.c.l.b16 %v1930
        %v7209 = vunpack.c.h.b16 %v1930
        %v7210 = vunpack.c.l.b16 %v1931
        %v7211 = vunpack.c.h.b16 %v1931
        %v7212 = vunpack.c.l.b16 %v1932
        %v7213 = vunpack.c.h.b16 %v1932
        %v7214 = vunpack.c.l.b16 %v1933
        %v7215 = vunpack.c.h.b16 %v1933
        %v7216 = vunpack.c.l.b16 %v1934
        %v7217 = vunpack.c.h.b16 %v1934
        %v7218 = vunpack.c.l.b16 %v1935
        %v7219 = vunpack.c.h.b16 %v1935
        %v7220 = vunpack.c.l.b16 %v1936
        %v7221 = vunpack.c.h.b16 %v1936
        %v7222 = vunpack.c.l.b16 %v1937
        %v7223 = vunpack.c.h.b16 %v1937
        %v7224 = vunpack.c.l.b16 %v1938
        %v7225 = vunpack.c.h.b16 %v1938
        %v7226 = vunpack.c.l.b16 %v1939
        %v7227 = vunpack.c.h.b16 %v1939
        %v7228 = vunpack.c.l.b16 %v1940
        %v7229 = vunpack.c.h.b16 %v1940
        %v7230 = vunpack.c.l.b16 %v1941
        %v7231 = vunpack.c.h.b16 %v1941
        %v7232 = vunpack.c.l.b16 %v1942
        %v7233 = vunpack.c.h.b16 %v1942
        %v7234 = vunpack.c.l.b16 %v1943
        %v7235 = vunpack.c.h.b16 %v1943
        %v7236 = vunpack.c.l.b16 %v1944
        %v7237 = vunpack.c.h.b16 %v1944
        %v7238 = vunpack.c.l.b16 %v1945
        %v7239 = vunpack.c.h.b16 %v1945
        %v7240 = vunpack.c.l.b16 %v1946
        %v7241 = vunpack.c.h.b16 %v1946
        %v7242 = vunpack.c.l.b16 %v1947
        %v7243 = vunpack.c.h.b16 %v1947
        %v7244 = vunpack.c.l.b16 %v1948
        %v7245 = vunpack.c.h.b16 %v1948
        %v7246 = vunpack.c.l.b16 %v1949
        %v7247 = vunpack.c.h.b16 %v1949
        %v7248 = vunpack.c.l.b16 %v1950
        %v7249 = vunpack.c.h.b16 %v1950
        %v7250 = vunpack.c.l.b16 %v1951
        %v7251 = vunpack.c.h.b16 %v1951
        %v7252 = vunpack.c.l.b16 %v1952
        %v7253 = vunpack.c.h.b16 %v1952
        %v7254 = vunpack.c.l.b16 %v1953
        %v7255 = vunpack.c.h.b16 %v1953
        %v7256 = vunpack.c.l.b16 %v1954
        %v7257 = vunpack.c.h.b16 %v1954
        %v7258 = vunpack.c.l.b16 %v1955
        %v7259 = vunpack.c.h.b16 %v1955
        %v7260 = vunpack.c.l.b16 %v1956
        %v7261 = vunpack.c.h.b16 %v1956
        %v7262 = vunpack.c.l.b16 %v1957
        %v7263 = vunpack.c.h.b16 %v1957
        %v7264 = vunpack.c.l.b16 %v1958
        %v7265 = vunpack.c.h.b16 %v1958
        %v7266 = vunpack.c.l.b16 %v1959
        %v7267 = vunpack.c.h.b16 %v1959
        %v7268 = vunpack.c.l.b16 %v1960
        %v7269 = vunpack.c.h.b16 %v1960
        %v7270 = vunpack.c.l.b16 %v1961
        %v7271 = vunpack.c.h.b16 %v1961
        %v7272 = vunpack.c.l.b16 %v1962
        %v7273 = vunpack.c.h.b16 %v1962
        %v7274 = vunpack.c.l.b16 %v1963
        %v7275 = vunpack.c.h.b16 %v1963
        %v7276 = vunpack.c.l.b16 %v1964
        %v7277 = vunpack.c.h.b16 %v1964
        %v7278 = vunpack.c.l.b16 %v1965
        %v7279 = vunpack.c.h.b16 %v1965
        %v7280 = vunpack.c.l.b16 %v1966
        %v7281 = vunpack.c.h.b16 %v1966
        %v7282 = vunpack.c.l.b16 %v1967
        %v7283 = vunpack.c.h.b16 %v1967
        %v7284 = vunpack.c.l.b16 %v1968
        %v7285 = vunpack.c.h.b16 %v1968
        %v7286 = vunpack.c.l.b16 %v1969
        %v7287 = vunpack.c.h.b16 %v1969
        %v7288 = vunpack.c.l.b16 %v1970
        %v7289 = vunpack.c.h.b16 %v1970
        %v7290 = vunpack.c.l.b16 %v1971
        %v7291 = vunpack.c.h.b16 %v1971
        %v7292 = vunpack.c.l.b16 %v1972
        %v7293 = vunpack.c.h.b16 %v1972
        %v7294 = vunpack.c.l.b16 %v1973
        %v7295 = vunpack.c.h.b16 %v1973
        %v7296 = vunpack.c.l.b16 %v1974
        %v7297 = vunpack.c.h.b16 %v1974
        %v7298 = vunpack.c.l.b16 %v1975
        %v7299 = vunpack.c.h.b16 %v1975
        %v7300 = vunpack.c.l.b16 %v1976
        %v7301 = vunpack.c.h.b16 %v1976
        %v7302 = vunpack.c.l.b16 %v1977
        %v7303 = vunpack.c.h.b16 %v1977
        %v7304 = vunpack.c.l.b16 %v1978
        %v7305 = vunpack.c.h.b16 %v1978
        %v7306 = vunpack.c.l.b16 %v1979
        %v7307 = vunpack.c.h.b16 %v1979
        %v7308 = vunpack.c.l.b16 %v1980
        %v7309 = vunpack.c.h.b16 %v1980
        %v7310 = vunpack.c.l.b16 %v1981
        %v7311 = vunpack.c.h.b16 %v1981
        %v7312 = vunpack.c.l.b16 %v1982
        %v7313 = vunpack.c.h.b16 %v1982
        %v7314 = vunpack.c.l.b16 %v1983
        %v7315 = vunpack.c.h.b16 %v1983
        %v7316 = vunpack.c.l.b16 %v1984
        %v7317 = vunpack.c.h.b16 %v1984
        %v7318 = vunpack.c.l.b16 %v1985
        %v7319 = vunpack.c.h.b16 %v1985
        %v7320 = vunpack.c.l.b16 %v1986
        %v7321 = vunpack.c.h.b16 %v1986
        %v7322 = vunpack.c.l.b16 %v1987
        %v7323 = vunpack.c.h.b16 %v1987
        %v7324 = vunpack.c.l.b16 %v1988
        %v7325 = vunpack.c.h.b16 %v1988
        %v7326 = vunpack.c.l.b16 %v1989
        %v7327 = vunpack.c.h.b16 %v1989
        %v7328 = vunpack.c.l.b16 %v1990
        %v7329 = vunpack.c.h.b16 %v1990
        %v7330 = vunpack.c.l.b16 %v1991
        %v7331 = vunpack.c.h.b16 %v1991
        %v7332 = vunpack.c.l.b16 %v1992
        %v7333 = vunpack.c.h.b16 %v1992
        %v7334 = vunpack.c.l.b16 %v1993
        %v7335 = vunpack.c.h.b16 %v1993
        %v7336 = vunpack.c.l.b16 %v1994
        %v7337 = vunpack.c.h.b16 %v1994
        %v7338 = vunpack.c.l.b16 %v1995
        %v7339 = vunpack.c.h.b16 %v1995
        %v7340 = vunpack.c.l.b16 %v1996
        %v7341 = vunpack.c.h.b16 %v1996
        %v7342 = vunpack.c.l.b16 %v1997
        %v7343 = vunpack.c.h.b16 %v1997
        %v7344 = vunpack.c.l.b16 %v1998
        %v7345 = vunpack.c.h.b16 %v1998
        %v7346 = vunpack.c.l.b16 %v1999
        %v7347 = vunpack.c.h.b16 %v1999
        %v7348 = vunpack.c.l.b16 %v2000
        %v7349 = vunpack.c.h.b16 %v2000
        %v7350 = vunpack.c.l.b16 %v2001
        %v7351 = vunpack.c.h.b16 %v2001
        %v7352 = vunpack.c.l.b16 %v2002
        %v7353 = vunpack.c.h.b16 %v2002
        %v7354 = vunpack.c.l.b16 %v2003
        %v7355 = vunpack.c.h.b16 %v2003
        %v7356 = vunpack.c.l.b16 %v2004
        %v7357 = vunpack.c.h.b16 %v2004
        %v7358 = vunpack.c.l.b16 %v2005
        %v7359 = vunpack.c.h.b16 %v2005
        %v7360 = vunpack.c.l.b16 %v2006
        %v7361 = vunpack.c.h.b16 %v2006
        %v7362 = vunpack.c.l.b16 %v2007
        %v7363 = vunpack.c.h.b16 %v2007
        %v7364 = vunpack.c.l.b16 %v2008
        %v7365 = vunpack.c.h.b16 %v2008
        %v7366 = vunpack.c.l.b16 %v2009
        %v7367 = vunpack.c.h.b16 %v2009
        %v7368 = vunpack.c.l.b16 %v2010
        %v7369 = vunpack.c.h.b16 %v2010
        %v7370 = vunpack.c.l.b16 %v2011
        %v7371 = vunpack.c.h.b16 %v2011
        %v7372 = vunpack.c.l.b16 %v2012
        %v7373 = vunpack.c.h.b16 %v2012
        %v7374 = vunpack.c.l.b16 %v2013
        %v7375 = vunpack.c.h.b16 %v2013
        %v7376 = vunpack.c.l.b16 %v2014
        %v7377 = vunpack.c.h.b16 %v2014
        %v7378 = vunpack.c.l.b16 %v2015
        %v7379 = vunpack.c.h.b16 %v2015
        %v7380 = vunpack.c.l.b16 %v2016
        %v7381 = vunpack.c.h.b16 %v2016
        %v7382 = vunpack.c.l.b16 %v2017
        %v7383 = vunpack.c.h.b16 %v2017
        %v7384 = vunpack.c.l.b16 %v2018
        %v7385 = vunpack.c.h.b16 %v2018
        %v7386 = vunpack.c.l.b16 %v2019
        %v7387 = vunpack.c.h.b16 %v2019
        %v7388 = vunpack.c.l.b16 %v2020
        %v7389 = vunpack.c.h.b16 %v2020
        %v7390 = vunpack.c.l.b16 %v2021
        %v7391 = vunpack.c.h.b16 %v2021
        %v7392 = vunpack.c.l.b16 %v2022
        %v7393 = vunpack.c.h.b16 %v2022
        %v7394 = vunpack.c.l.b16 %v2023
        %v7395 = vunpack.c.h.b16 %v2023
        %v7396 = vunpack.c.l.b16 %v2024
        %v7397 = vunpack.c.h.b16 %v2024
        %v7398 = vunpack.c.l.b16 %v2025
        %v7399 = vunpack.c.h.b16 %v2025
        %v7400 = vunpack.c.l.b16 %v2026
        %v7401 = vunpack.c.h.b16 %v2026
        %v7402 = vunpack.c.l.b16 %v2027
        %v7403 = vunpack.c.h.b16 %v2027
        %v7404 = vunpack.c.l.b16 %v2028
        %v7405 = vunpack.c.h.b16 %v2028
        %v7406 = vunpack.c.l.b16 %v2029
        %v7407 = vunpack.c.h.b16 %v2029
        %v7408 = vunpack.c.l.b16 %v2030
        %v7409 = vunpack.c.h.b16 %v2030
        %v7410 = vunpack.c.l.b16 %v2031
        %v7411 = vunpack.c.h.b16 %v2031
        %v7412 = vunpack.c.l.b16 %v2032
        %v7413 = vunpack.c.h.b16 %v2032
        %v7414 = vunpack.c.l.b16 %v2033
        %v7415 = vunpack.c.h.b16 %v2033
        %v7416 = vunpack.c.l.b16 %v2034
        %v7417 = vunpack.c.h.b16 %v2034
        %v7418 = vunpack.c.l.b16 %v2035
        %v7419 = vunpack.c.h.b16 %v2035
        %v7420 = vunpack.c.l.b16 %v2036
        %v7421 = vunpack.c.h.b16 %v2036
        %v7422 = vunpack.c.l.b16 %v2037
        %v7423 = vunpack.c.h.b16 %v2037
        %v7424 = vunpack.c.l.b16 %v2038
        %v7425 = vunpack.c.h.b16 %v2038
        %v7426 = vunpack.c.l.b16 %v2039
        %v7427 = vunpack.c.h.b16 %v2039
        %v7428 = vunpack.c.l.b16 %v2040
        %v7429 = vunpack.c.h.b16 %v2040
        %v7430 = vunpack.c.l.b16 %v2041
        %v7431 = vunpack.c.h.b16 %v2041
        %v7432 = vunpack.c.l.b16 %v2042
        %v7433 = vunpack.c.h.b16 %v2042
        %v7434 = vunpack.c.l.b16 %v2043
        %v7435 = vunpack.c.h.b16 %v2043
        %v7436 = vunpack.c.l.b16 %v2044
        %v7437 = vunpack.c.h.b16 %v2044
        %v7438 = vunpack.c.l.b16 %v2045
        %v7439 = vunpack.c.h.b16 %v2045
        %v7440 = vunpack.c.l.b16 %v2046
        %v7441 = vunpack.c.h.b16 %v2046
        %v7442 = vunpack.c.l.b16 %v2047
        %v7443 = vunpack.c.h.b16 %v2047
        %v7444 = vunpack.c.l.b16 %v2048
        %v7445 = vunpack.c.h.b16 %v2048
        %v7446 = vunpack.c.l.b16 %v2049
        %v7447 = vunpack.c.h.b16 %v2049
        %v7448 = vunpack.c.l.b16 %v2050
        %v7449 = vunpack.c.h.b16 %v2050
        %v7450 = vunpack.c.l.b16 %v2051
        %v7451 = vunpack.c.h.b16 %v2051
        %v7452 = vunpack.c.l.b16 %v2052
        %v7453 = vunpack.c.h.b16 %v2052
        %v7454 = vunpack.c.l.b16 %v2053
        %v7455 = vunpack.c.h.b16 %v2053
        %v7456 = vunpack.c.l.b16 %v2054
        %v7457 = vunpack.c.h.b16 %v2054
        %v7458 = vunpack.c.l.b16 %v2055
        %v7459 = vunpack.c.h.b16 %v2055
        %v7460 = vunpack.c.l.b16 %v2056
        %v7461 = vunpack.c.h.b16 %v2056
        %v7462 = vunpack.c.l.b16 %v2057
        %v7463 = vunpack.c.h.b16 %v2057
        %v7464 = vunpack.c.l.b16 %v2058
        %v7465 = vunpack.c.h.b16 %v2058
        %v7466 = vunpack.c.l.b16 %v2059
        %v7467 = vunpack.c.h.b16 %v2059
        %v7468 = vunpack.c.l.b16 %v2060
        %v7469 = vunpack.c.h.b16 %v2060
        %v7470 = vunpack.c.l.b16 %v2061
        %v7471 = vunpack.c.h.b16 %v2061
        %v7472 = vunpack.c.l.b16 %v2062
        %v7473 = vunpack.c.h.b16 %v2062
        %v7474 = vunpack.c.l.b16 %v2063
        %v7475 = vunpack.c.h.b16 %v2063
        %v7476 = vunpack.c.l.b16 %v2064
        %v7477 = vunpack.c.h.b16 %v2064
        %v7478 = vunpack.c.l.b16 %v2065
        %v7479 = vunpack.c.h.b16 %v2065
        %v7480 = vunpack.c.l.b16 %v2066
        %v7481 = vunpack.c.h.b16 %v2066
        %v7482 = vunpack.c.l.b16 %v2067
        %v7483 = vunpack.c.h.b16 %v2067
        %v7484 = vunpack.c.l.b16 %v2068
        %v7485 = vunpack.c.h.b16 %v2068
        %v7486 = vunpack.c.l.b16 %v2069
        %v7487 = vunpack.c.h.b16 %v2069
        %v7488 = vunpack.c.l.b16 %v2070
        %v7489 = vunpack.c.h.b16 %v2070
        %v7490 = vunpack.c.l.b16 %v2071
        %v7491 = vunpack.c.h.b16 %v2071
        %v7492 = vunpack.c.l.b16 %v2072
        %v7493 = vunpack.c.h.b16 %v2072
        %v7494 = vunpack.c.l.b16 %v2073
        %v7495 = vunpack.c.h.b16 %v2073
        %v7496 = vunpack.c.l.b16 %v2074
        %v7497 = vunpack.c.h.b16 %v2074
        %v7498 = vunpack.c.l.b16 %v2075
        %v7499 = vunpack.c.h.b16 %v2075
        %v7500 = vunpack.c.l.b16 %v2076
        %v7501 = vunpack.c.h.b16 %v2076
        %v7502 = vunpack.c.l.b16 %v2077
        %v7503 = vunpack.c.h.b16 %v2077
        %v7504 = vunpack.c.l.b16 %v2078
        %v7505 = vunpack.c.h.b16 %v2078
        %v7506 = vunpack.c.l.b16 %v2079
        %v7507 = vunpack.c.h.b16 %v2079
        %v7508 = vunpack.c.l.b16 %v2080
        %v7509 = vunpack.c.h.b16 %v2080
        %v7510 = vunpack.c.l.b16 %v2081
        %v7511 = vunpack.c.h.b16 %v2081
        %v7512 = vunpack.c.l.b16 %v2082
        %v7513 = vunpack.c.h.b16 %v2082
        %v7514 = vunpack.c.l.b16 %v2083
        %v7515 = vunpack.c.h.b16 %v2083
        %v7516 = vunpack.c.l.b16 %v2084
        %v7517 = vunpack.c.h.b16 %v2084
        %v7518 = vunpack.c.l.b16 %v2085
        %v7519 = vunpack.c.h.b16 %v2085
        %v7520 = vunpack.c.l.b16 %v2086
        %v7521 = vunpack.c.h.b16 %v2086
        %v7522 = vunpack.c.l.b16 %v2087
        %v7523 = vunpack.c.h.b16 %v2087
        %v7524 = vunpack.c.l.b16 %v2088
        %v7525 = vunpack.c.h.b16 %v2088
        %v7526 = vunpack.c.l.b16 %v2089
        %v7527 = vunpack.c.h.b16 %v2089
        %v7528 = vunpack.c.l.b16 %v2090
        %v7529 = vunpack.c.h.b16 %v2090
        %v7530 = vunpack.c.l.b16 %v2091
        %v7531 = vunpack.c.h.b16 %v2091
        %v7532 = vpack.c.b16 %v3956, %v3948
        %v7533 = vpack.c.b16 %v3957, %v3949
        %v7534 = vpack.c.b16 %v3958, %v3950
        %v7535 = vpack.c.b16 %v3959, %v3951
        %v7536 = vpack.c.b16 %v3960, %v3952
        %v7537 = vpack.c.b16 %v3961, %v3953
        %v7538 = vpack.c.b16 %v3962, %v3954
        %v7539 = vpack.c.b16 %v3963, %v3955
        %v7540 = vpack.c.b16 %v3972, %v3964
        %v7541 = vpack.c.b16 %v3973, %v3965
        %v7542 = vpack.c.b16 %v3974, %v3966
        %v7543 = vpack.c.b16 %v3975, %v3967
        %v7544 = vpack.c.b16 %v3976, %v3968
        %v7545 = vpack.c.b16 %v3977, %v3969
        %v7546 = vpack.c.b16 %v3978, %v3970
        %v7547 = vpack.c.b16 %v3979, %v3971
        %v7548 = vpack.c.b16 %v3988, %v3980
        %v7549 = vpack.c.b16 %v3989, %v3981
        %v7550 = vpack.c.b16 %v3990, %v3982
        %v7551 = vpack.c.b16 %v3991, %v3983
        %v7552 = vpack.c.b16 %v3992, %v3984
        %v7553 = vpack.c.b16 %v3993, %v3985
        %v7554 = vpack.c.b16 %v3994, %v3986
        %v7555 = vpack.c.b16 %v3995, %v3987
        %v7556 = vpack.c.b16 %v4004, %v3996
        %v7557 = vpack.c.b16 %v4005, %v3997
        %v7558 = vpack.c.b16 %v4006, %v3998
        %v7559 = vpack.c.b16 %v4007, %v3999
        %v7560 = vpack.c.b16 %v4008, %v4000
        %v7561 = vpack.c.b16 %v4009, %v4001
        %v7562 = vpack.c.b16 %v4010, %v4002
        %v7563 = vpack.c.b16 %v4011, %v4003
        %v7564 = vpack.c.b16 %v4020, %v4012
        %v7565 = vpack.c.b16 %v4021, %v4013
        %v7566 = vpack.c.b16 %v4022, %v4014
        %v7567 = vpack.c.b16 %v4023, %v4015
        %v7568 = vpack.c.b16 %v4024, %v4016
        %v7569 = vpack.c.b16 %v4025, %v4017
        %v7570 = vpack.c.b16 %v4026, %v4018
        %v7571 = vpack.c.b16 %v4027, %v4019
        %v7572 = vpack.c.b16 %v4036, %v4028
        %v7573 = vpack.c.b16 %v4037, %v4029
        %v7574 = vpack.c.b16 %v4038, %v4030
        %v7575 = vpack.c.b16 %v4039, %v4031
        %v7576 = vpack.c.b16 %v4040, %v4032
        %v7577 = vpack.c.b16 %v4041, %v4033
        %v7578 = vpack.c.b16 %v4042, %v4034
        %v7579 = vpack.c.b16 %v4043, %v4035
        %v7580 = vpack.c.b16 %v4052, %v4044
        %v7581 = vpack.c.b16 %v4053, %v4045
        %v7582 = vpack.c.b16 %v4054, %v4046
        %v7583 = vpack.c.b16 %v4055, %v4047
        %v7584 = vpack.c.b16 %v4056, %v4048
        %v7585 = vpack.c.b16 %v4057, %v4049
        %v7586 = vpack.c.b16 %v4058, %v4050
        %v7587 = vpack.c.b16 %v4059, %v4051
        %v7588 = vpack.c.b16 %v4068, %v4060
        %v7589 = vpack.c.b16 %v4069, %v4061
        %v7590 = vpack.c.b16 %v4070, %v4062
        %v7591 = vpack.c.b16 %v4071, %v4063
        %v7592 = vpack.c.b16 %v4072, %v4064
        %v7593 = vpack.c.b16 %v4073, %v4065
        %v7594 = vpack.c.b16 %v4074, %v4066
        %v7595 = vpack.c.b16 %v4075, %v4067
        %v7596 = vpack.c.b16 %v4084, %v4076
        %v7597 = vpack.c.b16 %v4085, %v4077
        %v7598 = vpack.c.b16 %v4086, %v4078
        %v7599 = vpack.c.b16 %v4087, %v4079
        %v7600 = vpack.c.b16 %v4088, %v4080
        %v7601 = vpack.c.b16 %v4089, %v4081
        %v7602 = vpack.c.b16 %v4090, %v4082
        %v7603 = vpack.c.b16 %v4091, %v4083
        %v7604 = vpack.c.b16 %v4100, %v4092
        %v7605 = vpack.c.b16 %v4101, %v4093
        %v7606 = vpack.c.b16 %v4102, %v4094
        %v7607 = vpack.c.b16 %v4103, %v4095
        %v7608 = vpack.c.b16 %v4104, %v4096
        %v7609 = vpack.c.b16 %v4105, %v4097
        %v7610 = vpack.c.b16 %v4106, %v4098
        %v7611 = vpack.c.b16 %v4107, %v4099
        %v7612 = vpack.c.b16 %v4116, %v4108
        %v7613 = vpack.c.b16 %v4117, %v4109
        %v7614 = vpack.c.b16 %v4118, %v4110
        %v7615 = vpack.c.b16 %v4119, %v4111
        %v7616 = vpack.c.b16 %v4120, %v4112
        %v7617 = vpack.c.b16 %v4121, %v4113
        %v7618 = vpack.c.b16 %v4122, %v4114
        %v7619 = vpack.c.b16 %v4123, %v4115
        %v7620 = vpack.c.b16 %v4132, %v4124
        %v7621 = vpack.c.b16 %v4133, %v4125
        %v7622 = vpack.c.b16 %v4134, %v4126
        %v7623 = vpack.c.b16 %v4135, %v4127
        %v7624 = vpack.c.b16 %v4136, %v4128
        %v7625 = vpack.c.b16 %v4137, %v4129
        %v7626 = vpack.c.b16 %v4138, %v4130
        %v7627 = vpack.c.b16 %v4139, %v4131
        %v7628 = vpack.c.b16 %v4148, %v4140
        %v7629 = vpack.c.b16 %v4149, %v4141
        %v7630 = vpack.c.b16 %v4150, %v4142
        %v7631 = vpack.c.b16 %v4151, %v4143
        %v7632 = vpack.c.b16 %v4152, %v4144
        %v7633 = vpack.c.b16 %v4153, %v4145
        %v7634 = vpack.c.b16 %v4154, %v4146
        %v7635 = vpack.c.b16 %v4155, %v4147
        %v7636 = vpack.c.b16 %v4164, %v4156
        %v7637 = vpack.c.b16 %v4165, %v4157
        %v7638 = vpack.c.b16 %v4166, %v4158
        %v7639 = vpack.c.b16 %v4167, %v4159
        %v7640 = vpack.c.b16 %v4168, %v4160
        %v7641 = vpack.c.b16 %v4169, %v4161
        %v7642 = vpack.c.b16 %v4170, %v4162
        %v7643 = vpack.c.b16 %v4171, %v4163
        %v7644 = vpack.c.b16 %v4180, %v4172
        %v7645 = vpack.c.b16 %v4181, %v4173
        %v7646 = vpack.c.b16 %v4182, %v4174
        %v7647 = vpack.c.b16 %v4183, %v4175
        %v7648 = vpack.c.b16 %v4184, %v4176
        %v7649 = vpack.c.b16 %v4185, %v4177
        %v7650 = vpack.c.b16 %v4186, %v4178
        %v7651 = vpack.c.b16 %v4187, %v4179
        %v7652 = vpack.c.b16 %v4196, %v4188
        %v7653 = vpack.c.b16 %v4197, %v4189
        %v7654 = vpack.c.b16 %v4198, %v4190
        %v7655 = vpack.c.b16 %v4199, %v4191
        %v7656 = vpack.c.b16 %v4200, %v4192
        %v7657 = vpack.c.b16 %v4201, %v4193
        %v7658 = vpack.c.b16 %v4202, %v4194
        %v7659 = vpack.c.b16 %v4203, %v4195
        %v7660 = vpack.c.b16 %v4212, %v4204
        %v7661 = vpack.c.b16 %v4213, %v4205
        %v7662 = vpack.c.b16 %v4214, %v4206
        %v7663 = vpack.c.b16 %v4215, %v4207
        %v7664 = vpack.c.b16 %v4216, %v4208
        %v7665 = vpack.c.b16 %v4217, %v4209
        %v7666 = vpack.c.b16 %v4218, %v4210
        %v7667 = vpack.c.b16 %v4219, %v4211
        %v7668 = vpack.c.b16 %v4228, %v4220
        %v7669 = vpack.c.b16 %v4229, %v4221
        %v7670 = vpack.c.b16 %v4230, %v4222
        %v7671 = vpack.c.b16 %v4231, %v4223
        %v7672 = vpack.c.b16 %v4232, %v4224
        %v7673 = vpack.c.b16 %v4233, %v4225
        %v7674 = vpack.c.b16 %v4234, %v4226
        %v7675 = vpack.c.b16 %v4235, %v4227
        %v7676 = vpack.c.b16 %v4244, %v4236
        %v7677 = vpack.c.b16 %v4245, %v4237
        %v7678 = vpack.c.b16 %v4246, %v4238
        %v7679 = vpack.c.b16 %v4247, %v4239
        %v7680 = vpack.c.b16 %v4248, %v4240
        %v7681 = vpack.c.b16 %v4249, %v4241
        %v7682 = vpack.c.b16 %v4250, %v4242
        %v7683 = vpack.c.b16 %v4251, %v4243
        %v7684 = vpack.c.b16 %v4260, %v4252
        %v7685 = vpack.c.b16 %v4261, %v4253
        %v7686 = vpack.c.b16 %v4262, %v4254
        %v7687 = vpack.c.b16 %v4263, %v4255
        %v7688 = vpack.c.b16 %v4264, %v4256
        %v7689 = vpack.c.b16 %v4265, %v4257
        %v7690 = vpack.c.b16 %v4266, %v4258
        %v7691 = vpack.c.b16 %v4267, %v4259
        %v7692 = vpack.c.b16 %v4276, %v4268
        %v7693 = vpack.c.b16 %v4277, %v4269
        %v7694 = vpack.c.b16 %v4278, %v4270
        %v7695 = vpack.c.b16 %v4279, %v4271
        %v7696 = vpack.c.b16 %v4280, %v4272
        %v7697 = vpack.c.b16 %v4281, %v4273
        %v7698 = vpack.c.b16 %v4282, %v4274
        %v7699 = vpack.c.b16 %v4283, %v4275
        %v7700 = vpack.c.b16 %v4292, %v4284
        %v7701 = vpack.c.b16 %v4293, %v4285
        %v7702 = vpack.c.b16 %v4294, %v4286
        %v7703 = vpack.c.b16 %v4295, %v4287
        %v7704 = vpack.c.b16 %v4296, %v4288
        %v7705 = vpack.c.b16 %v4297, %v4289
        %v7706 = vpack.c.b16 %v4298, %v4290
        %v7707 = vpack.c.b16 %v4299, %v4291
        %v7708 = vpack.c.b16 %v4308, %v4300
        %v7709 = vpack.c.b16 %v4309, %v4301
        %v7710 = vpack.c.b16 %v4310, %v4302
        %v7711 = vpack.c.b16 %v4311, %v4303
        %v7712 = vpack.c.b16 %v4312, %v4304
        %v7713 = vpack.c.b16 %v4313, %v4305
        %v7714 = vpack.c.b16 %v4314, %v4306
        %v7715 = vpack.c.b16 %v4315, %v4307
        %v7716 = vpack.c.b16 %v4324, %v4316
        %v7717 = vpack.c.b16 %v4325, %v4317
        %v7718 = vpack.c.b16 %v4326, %v4318
        %v7719 = vpack.c.b16 %v4327, %v4319
        %v7720 = vpack.c.b16 %v4328, %v4320
        %v7721 = vpack.c.b16 %v4329, %v4321
        %v7722 = vpack.c.b16 %v4330, %v4322
        %v7723 = vpack.c.b16 %v4331, %v4323
        %v7724 = vpack.c.b16 %v4340, %v4332
        %v7725 = vpack.c.b16 %v4341, %v4333
        %v7726 = vpack.c.b16 %v4342, %v4334
        %v7727 = vpack.c.b16 %v4343, %v4335
        %v7728 = vpack.c.b16 %v4344, %v4336
        %v7729 = vpack.c.b16 %v4345, %v4337
        %v7730 = vpack.c.b16 %v4346, %v4338
        %v7731 = vpack.c.b16 %v4347, %v4339
        %v7732 = vpack.c.b16 %v4356, %v4348
        %v7733 = vpack.c.b16 %v4357, %v4349
        %v7734 = vpack.c.b16 %v4358, %v4350
        %v7735 = vpack.c.b16 %v4359, %v4351
        %v7736 = vpack.c.b16 %v4360, %v4352
        %v7737 = vpack.c.b16 %v4361, %v4353
        %v7738 = vpack.c.b16 %v4362, %v4354
        %v7739 = vpack.c.b16 %v4363, %v4355
        %v7740 = vpack.c.b16 %v4372, %v4364
        %v7741 = vpack.c.b16 %v4373, %v4365
        %v7742 = vpack.c.b16 %v4374, %v4366
        %v7743 = vpack.c.b16 %v4375, %v4367
        %v7744 = vpack.c.b16 %v4376, %v4368
        %v7745 = vpack.c.b16 %v4377, %v4369
        %v7746 = vpack.c.b16 %v4378, %v4370
        %v7747 = vpack.c.b16 %v4379, %v4371
        %v7748 = vpack.c.b16 %v4388, %v4380
        %v7749 = vpack.c.b16 %v4389, %v4381
        %v7750 = vpack.c.b16 %v4390, %v4382
        %v7751 = vpack.c.b16 %v4391, %v4383
        %v7752 = vpack.c.b16 %v4392, %v4384
        %v7753 = vpack.c.b16 %v4393, %v4385
        %v7754 = vpack.c.b16 %v4394, %v4386
        %v7755 = vpack.c.b16 %v4395, %v4387
        %v7756 = vpack.c.b16 %v4404, %v4396
        %v7757 = vpack.c.b16 %v4405, %v4397
        %v7758 = vpack.c.b16 %v4406, %v4398
        %v7759 = vpack.c.b16 %v4407, %v4399
        %v7760 = vpack.c.b16 %v4408, %v4400
        %v7761 = vpack.c.b16 %v4409, %v4401
        %v7762 = vpack.c.b16 %v4410, %v4402
        %v7763 = vpack.c.b16 %v4411, %v4403
        %v7764 = vpack.c.b16 %v4420, %v4412
        %v7765 = vpack.c.b16 %v4421, %v4413
        %v7766 = vpack.c.b16 %v4422, %v4414
        %v7767 = vpack.c.b16 %v4423, %v4415
        %v7768 = vpack.c.b16 %v4424, %v4416
        %v7769 = vpack.c.b16 %v4425, %v4417
        %v7770 = vpack.c.b16 %v4426, %v4418
        %v7771 = vpack.c.b16 %v4427, %v4419
        %v7772 = vpack.c.b16 %v4436, %v4428
        %v7773 = vpack.c.b16 %v4437, %v4429
        %v7774 = vpack.c.b16 %v4438, %v4430
        %v7775 = vpack.c.b16 %v4439, %v4431
        %v7776 = vpack.c.b16 %v4440, %v4432
        %v7777 = vpack.c.b16 %v4441, %v4433
        %v7778 = vpack.c.b16 %v4442, %v4434
        %v7779 = vpack.c.b16 %v4443, %v4435
        %v7780 = vpack.c.b16 %v4452, %v4444
        %v7781 = vpack.c.b16 %v4453, %v4445
        %v7782 = vpack.c.b16 %v4454, %v4446
        %v7783 = vpack.c.b16 %v4455, %v4447
        %v7784 = vpack.c.b16 %v4456, %v4448
        %v7785 = vpack.c.b16 %v4457, %v4449
        %v7786 = vpack.c.b16 %v4458, %v4450
        %v7787 = vpack.c.b16 %v4459, %v4451
        %v7788 = vpack.c.b16 %v4468, %v4460
        %v7789 = vpack.c.b16 %v4469, %v4461
        %v7790 = vpack.c.b16 %v4470, %v4462
        %v7791 = vpack.c.b16 %v4471, %v4463
        %v7792 = vpack.c.b16 %v4472, %v4464
        %v7793 = vpack.c.b16 %v4473, %v4465
        %v7794 = vpack.c.b16 %v4474, %v4466
        %v7795 = vpack.c.b16 %v4475, %v4467
        %v7796 = vpack.c.b16 %v4484, %v4476
        %v7797 = vpack.c.b16 %v4485, %v4477
        %v7798 = vpack.c.b16 %v4486, %v4478
        %v7799 = vpack.c.b16 %v4487, %v4479
        %v7800 = vpack.c.b16 %v4488, %v4480
        %v7801 = vpack.c.b16 %v4489, %v4481
        %v7802 = vpack.c.b16 %v4490, %v4482
        %v7803 = vpack.c.b16 %v4491, %v4483
        %v7804 = vpack.c.b16 %v4500, %v4492
        %v7805 = vpack.c.b16 %v4501, %v4493
        %v7806 = vpack.c.b16 %v4502, %v4494
        %v7807 = vpack.c.b16 %v4503, %v4495
        %v7808 = vpack.c.b16 %v4504, %v4496
        %v7809 = vpack.c.b16 %v4505, %v4497
        %v7810 = vpack.c.b16 %v4506, %v4498
        %v7811 = vpack.c.b16 %v4507, %v4499
        %v7812 = vpack.c.b16 %v4516, %v4508
        %v7813 = vpack.c.b16 %v4517, %v4509
        %v7814 = vpack.c.b16 %v4518, %v4510
        %v7815 = vpack.c.b16 %v4519, %v4511
        %v7816 = vpack.c.b16 %v4520, %v4512
        %v7817 = vpack.c.b16 %v4521, %v4513
        %v7818 = vpack.c.b16 %v4522, %v4514
        %v7819 = vpack.c.b16 %v4523, %v4515
        %v7820 = vpack.c.b16 %v4532, %v4524
        %v7821 = vpack.c.b16 %v4533, %v4525
        %v7822 = vpack.c.b16 %v4534, %v4526
        %v7823 = vpack.c.b16 %v4535, %v4527
        %v7824 = vpack.c.b16 %v4536, %v4528
        %v7825 = vpack.c.b16 %v4537, %v4529
        %v7826 = vpack.c.b16 %v4538, %v4530
        %v7827 = vpack.c.b16 %v4539, %v4531
        %v7828 = vpack.c.b16 %v4548, %v4540
        %v7829 = vpack.c.b16 %v4549, %v4541
        %v7830 = vpack.c.b16 %v4550, %v4542
        %v7831 = vpack.c.b16 %v4551, %v4543
        %v7832 = vpack.c.b16 %v4552, %v4544
        %v7833 = vpack.c.b16 %v4553, %v4545
        %v7834 = vpack.c.b16 %v4554, %v4546
        %v7835 = vpack.c.b16 %v4555, %v4547
        %v7836 = vpack.c.b16 %v4564, %v4556
        %v7837 = vpack.c.b16 %v4565, %v4557
        %v7838 = vpack.c.b16 %v4566, %v4558
        %v7839 = vpack.c.b16 %v4567, %v4559
        %v7840 = vpack.c.b16 %v4568, %v4560
        %v7841 = vpack.c.b16 %v4569, %v4561
        %v7842 = vpack.c.b16 %v4570, %v4562
        %v7843 = vpack.c.b16 %v4571, %v4563
        %v7844 = vpack.c.b16 %v4580, %v4572
        %v7845 = vpack.c.b16 %v4581, %v4573
        %v7846 = vpack.c.b16 %v4582, %v4574
        %v7847 = vpack.c.b16 %v4583, %v4575
        %v7848 = vpack.c.b16 %v4584, %v4576
        %v7849 = vpack.c.b16 %v4585, %v4577
        %v7850 = vpack.c.b16 %v4586, %v4578
        %v7851 = vpack.c.b16 %v4587, %v4579
        %v7852 = vpack.c.b16 %v4596, %v4588
        %v7853 = vpack.c.b16 %v4597, %v4589
        %v7854 = vpack.c.b16 %v4598, %v4590
        %v7855 = vpack.c.b16 %v4599, %v4591
        %v7856 = vpack.c.b16 %v4600, %v4592
        %v7857 = vpack.c.b16 %v4601, %v4593
        %v7858 = vpack.c.b16 %v4602, %v4594
        %v7859 = vpack.c.b16 %v4603, %v4595
        %v7860 = vpack.c.b16 %v4612, %v4604
        %v7861 = vpack.c.b16 %v4613, %v4605
        %v7862 = vpack.c.b16 %v4614, %v4606
        %v7863 = vpack.c.b16 %v4615, %v4607
        %v7864 = vpack.c.b16 %v4616, %v4608
        %v7865 = vpack.c.b16 %v4617, %v4609
        %v7866 = vpack.c.b16 %v4618, %v4610
        %v7867 = vpack.c.b16 %v4619, %v4611
        %v7868 = vpack.c.b16 %v4628, %v4620
        %v7869 = vpack.c.b16 %v4629, %v4621
        %v7870 = vpack.c.b16 %v4630, %v4622
        %v7871 = vpack.c.b16 %v4631, %v4623
        %v7872 = vpack.c.b16 %v4632, %v4624
        %v7873 = vpack.c.b16 %v4633, %v4625
        %v7874 = vpack.c.b16 %v4634, %v4626
        %v7875 = vpack.c.b16 %v4635, %v4627
        %v7876 = vpack.c.b16 %v4644, %v4636
        %v7877 = vpack.c.b16 %v4645, %v4637
        %v7878 = vpack.c.b16 %v4646, %v4638
        %v7879 = vpack.c.b16 %v4647, %v4639
        %v7880 = vpack.c.b16 %v4648, %v4640
        %v7881 = vpack.c.b16 %v4649, %v4641
        %v7882 = vpack.c.b16 %v4650, %v4642
        %v7883 = vpack.c.b16 %v4651, %v4643
        %v7884 = vpack.c.b16 %v4660, %v4652
        %v7885 = vpack.c.b16 %v4661, %v4653
        %v7886 = vpack.c.b16 %v4662, %v4654
        %v7887 = vpack.c.b16 %v4663, %v4655
        %v7888 = vpack.c.b16 %v4664, %v4656
        %v7889 = vpack.c.b16 %v4665, %v4657
        %v7890 = vpack.c.b16 %v4666, %v4658
        %v7891 = vpack.c.b16 %v4667, %v4659
        %v7892 = vpack.c.b16 %v4676, %v4668
        %v7893 = vpack.c.b16 %v4677, %v4669
        %v7894 = vpack.c.b16 %v4678, %v4670
        %v7895 = vpack.c.b16 %v4679, %v4671
        %v7896 = vpack.c.b16 %v4680, %v4672
        %v7897 = vpack.c.b16 %v4681, %v4673
        %v7898 = vpack.c.b16 %v4682, %v4674
        %v7899 = vpack.c.b16 %v4683, %v4675
        %v7900 = vpack.c.b16 %v4692, %v4684
        %v7901 = vpack.c.b16 %v4693, %v4685
        %v7902 = vpack.c.b16 %v4694, %v4686
        %v7903 = vpack.c.b16 %v4695, %v4687
        %v7904 = vpack.c.b16 %v4696, %v4688
        %v7905 = vpack.c.b16 %v4697, %v4689
        %v7906 = vpack.c.b16 %v4698, %v4690
        %v7907 = vpack.c.b16 %v4699, %v4691
        %v7908 = vpack.c.b16 %v4708, %v4700
        %v7909 = vpack.c.b16 %v4709, %v4701
        %v7910 = vpack.c.b16 %v4710, %v4702
        %v7911 = vpack.c.b16 %v4711, %v4703
        %v7912 = vpack.c.b16 %v4712, %v4704
        %v7913 = vpack.c.b16 %v4713, %v4705
        %v7914 = vpack.c.b16 %v4714, %v4706
        %v7915 = vpack.c.b16 %v4715, %v4707
        %v7916 = vpack.c.b16 %v4724, %v4716
        %v7917 = vpack.c.b16 %v4725, %v4717
        %v7918 = vpack.c.b16 %v4726, %v4718
        %v7919 = vpack.c.b16 %v4727, %v4719
        %v7920 = vpack.c.b16 %v4728, %v4720
        %v7921 = vpack.c.b16 %v4729, %v4721
        %v7922 = vpack.c.b16 %v4730, %v4722
        %v7923 = vpack.c.b16 %v4731, %v4723
        %v7924 = vpack.c.b16 %v4740, %v4732
        %v7925 = vpack.c.b16 %v4741, %v4733
        %v7926 = vpack.c.b16 %v4742, %v4734
        %v7927 = vpack.c.b16 %v4743, %v4735
        %v7928 = vpack.c.b16 %v4744, %v4736
        %v7929 = vpack.c.b16 %v4745, %v4737
        %v7930 = vpack.c.b16 %v4746, %v4738
        %v7931 = vpack.c.b16 %v4747, %v4739
        %v7932 = vpack.c.b16 %v4756, %v4748
        %v7933 = vpack.c.b16 %v4757, %v4749
        %v7934 = vpack.c.b16 %v4758, %v4750
        %v7935 = vpack.c.b16 %v4759, %v4751
        %v7936 = vpack.c.b16 %v4760, %v4752
        %v7937 = vpack.c.b16 %v4761, %v4753
        %v7938 = vpack.c.b16 %v4762, %v4754
        %v7939 = vpack.c.b16 %v4763, %v4755
        %v7940 = vpack.c.b16 %v4772, %v4764
        %v7941 = vpack.c.b16 %v4773, %v4765
        %v7942 = vpack.c.b16 %v4774, %v4766
        %v7943 = vpack.c.b16 %v4775, %v4767
        %v7944 = vpack.c.b16 %v4776, %v4768
        %v7945 = vpack.c.b16 %v4777, %v4769
        %v7946 = vpack.c.b16 %v4778, %v4770
        %v7947 = vpack.c.b16 %v4779, %v4771
        %v7948 = vpack.c.b16 %v4788, %v4780
        %v7949 = vpack.c.b16 %v4789, %v4781
        %v7950 = vpack.c.b16 %v4790, %v4782
        %v7951 = vpack.c.b16 %v4791, %v4783
        %v7952 = vpack.c.b16 %v4792, %v4784
        %v7953 = vpack.c.b16 %v4793, %v4785
        %v7954 = vpack.c.b16 %v4794, %v4786
        %v7955 = vpack.c.b16 %v4795, %v4787
        %v7956 = vpack.c.b16 %v4804, %v4796
        %v7957 = vpack.c.b16 %v4805, %v4797
        %v7958 = vpack.c.b16 %v4806, %v4798
        %v7959 = vpack.c.b16 %v4807, %v4799
        %v7960 = vpack.c.b16 %v4808, %v4800
        %v7961 = vpack.c.b16 %v4809, %v4801
        %v7962 = vpack.c.b16 %v4810, %v4802
        %v7963 = vpack.c.b16 %v4811, %v4803
        %v7964 = vpack.c.b16 %v4820, %v4812
        %v7965 = vpack.c.b16 %v4821, %v4813
        %v7966 = vpack.c.b16 %v4822, %v4814
        %v7967 = vpack.c.b16 %v4823, %v4815
        %v7968 = vpack.c.b16 %v4824, %v4816
        %v7969 = vpack.c.b16 %v4825, %v4817
        %v7970 = vpack.c.b16 %v4826, %v4818
        %v7971 = vpack.c.b16 %v4827, %v4819
        %v7972 = vpack.c.b16 %v4836, %v4828
        %v7973 = vpack.c.b16 %v4837, %v4829
        %v7974 = vpack.c.b16 %v4838, %v4830
        %v7975 = vpack.c.b16 %v4839, %v4831
        %v7976 = vpack.c.b16 %v4840, %v4832
        %v7977 = vpack.c.b16 %v4841, %v4833
        %v7978 = vpack.c.b16 %v4842, %v4834
        %v7979 = vpack.c.b16 %v4843, %v4835
        %v7980 = vpack.c.b16 %v4852, %v4844
        %v7981 = vpack.c.b16 %v4853, %v4845
        %v7982 = vpack.c.b16 %v4854, %v4846
        %v7983 = vpack.c.b16 %v4855, %v4847
        %v7984 = vpack.c.b16 %v4856, %v4848
        %v7985 = vpack.c.b16 %v4857, %v4849
        %v7986 = vpack.c.b16 %v4858, %v4850
        %v7987 = vpack.c.b16 %v4859, %v4851
        %v7988 = vpack.c.b16 %v4868, %v4860
        %v7989 = vpack.c.b16 %v4869, %v4861
        %v7990 = vpack.c.b16 %v4870, %v4862
        %v7991 = vpack.c.b16 %v4871, %v4863
        %v7992 = vpack.c.b16 %v4872, %v4864
        %v7993 = vpack.c.b16 %v4873, %v4865
        %v7994 = vpack.c.b16 %v4874, %v4866
        %v7995 = vpack.c.b16 %v4875, %v4867
        %v7996 = vpack.c.b16 %v4884, %v4876
        %v7997 = vpack.c.b16 %v4885, %v4877
        %v7998 = vpack.c.b16 %v4886, %v4878
        %v7999 = vpack.c.b16 %v4887, %v4879
        %v8000 = vpack.c.b16 %v4888, %v4880
        %v8001 = vpack.c.b16 %v4889, %v4881
        %v8002 = vpack.c.b16 %v4890, %v4882
        %v8003 = vpack.c.b16 %v4891, %v4883
        %v8004 = vpack.c.b16 %v4900, %v4892
        %v8005 = vpack.c.b16 %v4901, %v4893
        %v8006 = vpack.c.b16 %v4902, %v4894
        %v8007 = vpack.c.b16 %v4903, %v4895
        %v8008 = vpack.c.b16 %v4904, %v4896
        %v8009 = vpack.c.b16 %v4905, %v4897
        %v8010 = vpack.c.b16 %v4906, %v4898
        %v8011 = vpack.c.b16 %v4907, %v4899
        %v8012 = vpack.c.b16 %v4916, %v4908
        %v8013 = vpack.c.b16 %v4917, %v4909
        %v8014 = vpack.c.b16 %v4918, %v4910
        %v8015 = vpack.c.b16 %v4919, %v4911
        %v8016 = vpack.c.b16 %v4920, %v4912
        %v8017 = vpack.c.b16 %v4921, %v4913
        %v8018 = vpack.c.b16 %v4922, %v4914
        %v8019 = vpack.c.b16 %v4923, %v4915
        %v8020 = vpack.c.b16 %v4932, %v4924
        %v8021 = vpack.c.b16 %v4933, %v4925
        %v8022 = vpack.c.b16 %v4934, %v4926
        %v8023 = vpack.c.b16 %v4935, %v4927
        %v8024 = vpack.c.b16 %v4936, %v4928
        %v8025 = vpack.c.b16 %v4937, %v4929
        %v8026 = vpack.c.b16 %v4938, %v4930
        %v8027 = vpack.c.b16 %v4939, %v4931
        %v8028 = vpack.c.b16 %v4948, %v4940
        %v8029 = vpack.c.b16 %v4949, %v4941
        %v8030 = vpack.c.b16 %v4950, %v4942
        %v8031 = vpack.c.b16 %v4951, %v4943
        %v8032 = vpack.c.b16 %v4952, %v4944
        %v8033 = vpack.c.b16 %v4953, %v4945
        %v8034 = vpack.c.b16 %v4954, %v4946
        %v8035 = vpack.c.b16 %v4955, %v4947
        %v8036 = vpack.c.b16 %v4964, %v4956
        %v8037 = vpack.c.b16 %v4965, %v4957
        %v8038 = vpack.c.b16 %v4966, %v4958
        %v8039 = vpack.c.b16 %v4967, %v4959
        %v8040 = vpack.c.b16 %v4968, %v4960
        %v8041 = vpack.c.b16 %v4969, %v4961
        %v8042 = vpack.c.b16 %v4970, %v4962
        %v8043 = vpack.c.b16 %v4971, %v4963
        %v8044 = vpack.c.b16 %v4980, %v4972
        %v8045 = vpack.c.b16 %v4981, %v4973
        %v8046 = vpack.c.b16 %v4982, %v4974
        %v8047 = vpack.c.b16 %v4983, %v4975
        %v8048 = vpack.c.b16 %v4984, %v4976
        %v8049 = vpack.c.b16 %v4985, %v4977
        %v8050 = vpack.c.b16 %v4986, %v4978
        %v8051 = vpack.c.b16 %v4987, %v4979
        %v8052 = vpack.c.b16 %v4996, %v4988
        %v8053 = vpack.c.b16 %v4997, %v4989
        %v8054 = vpack.c.b16 %v4998, %v4990
        %v8055 = vpack.c.b16 %v4999, %v4991
        %v8056 = vpack.c.b16 %v5000, %v4992
        %v8057 = vpack.c.b16 %v5001, %v4993
        %v8058 = vpack.c.b16 %v5002, %v4994
        %v8059 = vpack.c.b16 %v5003, %v4995
        %v8060 = vpack.c.b16 %v5012, %v5004
        %v8061 = vpack.c.b16 %v5013, %v5005
        %v8062 = vpack.c.b16 %v5014, %v5006
        %v8063 = vpack.c.b16 %v5015, %v5007
        %v8064 = vpack.c.b16 %v5016, %v5008
        %v8065 = vpack.c.b16 %v5017, %v5009
        %v8066 = vpack.c.b16 %v5018, %v5010
        %v8067 = vpack.c.b16 %v5019, %v5011
        %v8068 = vpack.c.b16 %v5028, %v5020
        %v8069 = vpack.c.b16 %v5029, %v5021
        %v8070 = vpack.c.b16 %v5030, %v5022
        %v8071 = vpack.c.b16 %v5031, %v5023
        %v8072 = vpack.c.b16 %v5032, %v5024
        %v8073 = vpack.c.b16 %v5033, %v5025
        %v8074 = vpack.c.b16 %v5034, %v5026
        %v8075 = vpack.c.b16 %v5035, %v5027
        %v8076 = vpack.c.b16 %v5044, %v5036
        %v8077 = vpack.c.b16 %v5045, %v5037
        %v8078 = vpack.c.b16 %v5046, %v5038
        %v8079 = vpack.c.b16 %v5047, %v5039
        %v8080 = vpack.c.b16 %v5048, %v5040
        %v8081 = vpack.c.b16 %v5049, %v5041
        %v8082 = vpack.c.b16 %v5050, %v5042
        %v8083 = vpack.c.b16 %v5051, %v5043
        %v8084 = vpack.c.b16 %v5060, %v5052
        %v8085 = vpack.c.b16 %v5061, %v5053
        %v8086 = vpack.c.b16 %v5062, %v5054
        %v8087 = vpack.c.b16 %v5063, %v5055
        %v8088 = vpack.c.b16 %v5064, %v5056
        %v8089 = vpack.c.b16 %v5065, %v5057
        %v8090 = vpack.c.b16 %v5066, %v5058
        %v8091 = vpack.c.b16 %v5067, %v5059
        %v8092 = vpack.c.b16 %v5076, %v5068
        %v8093 = vpack.c.b16 %v5077, %v5069
        %v8094 = vpack.c.b16 %v5078, %v5070
        %v8095 = vpack.c.b16 %v5079, %v5071
        %v8096 = vpack.c.b16 %v5080, %v5072
        %v8097 = vpack.c.b16 %v5081, %v5073
        %v8098 = vpack.c.b16 %v5082, %v5074
        %v8099 = vpack.c.b16 %v5083, %v5075
        %v8100 = vpack.c.b16 %v5092, %v5084
        %v8101 = vpack.c.b16 %v5093, %v5085
        %v8102 = vpack.c.b16 %v5094, %v5086
        %v8103 = vpack.c.b16 %v5095, %v5087
        %v8104 = vpack.c.b16 %v5096, %v5088
        %v8105 = vpack.c.b16 %v5097, %v5089
        %v8106 = vpack.c.b16 %v5098, %v5090
        %v8107 = vpack.c.b16 %v5099, %v5091
        %v8108 = vpack.c.b16 %v5108, %v5100
        %v8109 = vpack.c.b16 %v5109, %v5101
        %v8110 = vpack.c.b16 %v5110, %v5102
        %v8111 = vpack.c.b16 %v5111, %v5103
        %v8112 = vpack.c.b16 %v5112, %v5104
        %v8113 = vpack.c.b16 %v5113, %v5105
        %v8114 = vpack.c.b16 %v5114, %v5106
        %v8115 = vpack.c.b16 %v5115, %v5107
        %v8116 = vpack.c.b16 %v5124, %v5116
        %v8117 = vpack.c.b16 %v5125, %v5117
        %v8118 = vpack.c.b16 %v5126, %v5118
        %v8119 = vpack.c.b16 %v5127, %v5119
        %v8120 = vpack.c.b16 %v5128, %v5120
        %v8121 = vpack.c.b16 %v5129, %v5121
        %v8122 = vpack.c.b16 %v5130, %v5122
        %v8123 = vpack.c.b16 %v5131, %v5123
        %v8124 = vpack.c.b16 %v5140, %v5132
        %v8125 = vpack.c.b16 %v5141, %v5133
        %v8126 = vpack.c.b16 %v5142, %v5134
        %v8127 = vpack.c.b16 %v5143, %v5135
        %v8128 = vpack.c.b16 %v5144, %v5136
        %v8129 = vpack.c.b16 %v5145, %v5137
        %v8130 = vpack.c.b16 %v5146, %v5138
        %v8131 = vpack.c.b16 %v5147, %v5139
        %v8132 = vpack.c.b16 %v5156, %v5148
        %v8133 = vpack.c.b16 %v5157, %v5149
        %v8134 = vpack.c.b16 %v5158, %v5150
        %v8135 = vpack.c.b16 %v5159, %v5151
        %v8136 = vpack.c.b16 %v5160, %v5152
        %v8137 = vpack.c.b16 %v5161, %v5153
        %v8138 = vpack.c.b16 %v5162, %v5154
        %v8139 = vpack.c.b16 %v5163, %v5155
        %v8140 = vpack.c.b16 %v5172, %v5164
        %v8141 = vpack.c.b16 %v5173, %v5165
        %v8142 = vpack.c.b16 %v5174, %v5166
        %v8143 = vpack.c.b16 %v5175, %v5167
        %v8144 = vpack.c.b16 %v5176, %v5168
        %v8145 = vpack.c.b16 %v5177, %v5169
        %v8146 = vpack.c.b16 %v5178, %v5170
        %v8147 = vpack.c.b16 %v5179, %v5171
        %v8148 = vpack.c.b16 %v5188, %v5180
        %v8149 = vpack.c.b16 %v5189, %v5181
        %v8150 = vpack.c.b16 %v5190, %v5182
        %v8151 = vpack.c.b16 %v5191, %v5183
        %v8152 = vpack.c.b16 %v5192, %v5184
        %v8153 = vpack.c.b16 %v5193, %v5185
        %v8154 = vpack.c.b16 %v5194, %v5186
        %v8155 = vpack.c.b16 %v5195, %v5187
        %v8156 = vpack.c.b16 %v5204, %v5196
        %v8157 = vpack.c.b16 %v5205, %v5197
        %v8158 = vpack.c.b16 %v5206, %v5198
        %v8159 = vpack.c.b16 %v5207, %v5199
        %v8160 = vpack.c.b16 %v5208, %v5200
        %v8161 = vpack.c.b16 %v5209, %v5201
        %v8162 = vpack.c.b16 %v5210, %v5202
        %v8163 = vpack.c.b16 %v5211, %v5203
        %v8164 = vpack.c.b16 %v5220, %v5212
        %v8165 = vpack.c.b16 %v5221, %v5213
        %v8166 = vpack.c.b16 %v5222, %v5214
        %v8167 = vpack.c.b16 %v5223, %v5215
        %v8168 = vpack.c.b16 %v5224, %v5216
        %v8169 = vpack.c.b16 %v5225, %v5217
        %v8170 = vpack.c.b16 %v5226, %v5218
        %v8171 = vpack.c.b16 %v5227, %v5219
        %v8172 = vpack.c.b16 %v5236, %v5228
        %v8173 = vpack.c.b16 %v5237, %v5229
        %v8174 = vpack.c.b16 %v5238, %v5230
        %v8175 = vpack.c.b16 %v5239, %v5231
        %v8176 = vpack.c.b16 %v5240, %v5232
        %v8177 = vpack.c.b16 %v5241, %v5233
        %v8178 = vpack.c.b16 %v5242, %v5234
        %v8179 = vpack.c.b16 %v5243, %v5235
        %v8180 = vpack.c.b16 %v5252, %v5244
        %v8181 = vpack.c.b16 %v5253, %v5245
        %v8182 = vpack.c.b16 %v5254, %v5246
        %v8183 = vpack.c.b16 %v5255, %v5247
        %v8184 = vpack.c.b16 %v5256, %v5248
        %v8185 = vpack.c.b16 %v5257, %v5249
        %v8186 = vpack.c.b16 %v5258, %v5250
        %v8187 = vpack.c.b16 %v5259, %v5251
        %v8188 = vpack.c.b16 %v5268, %v5260
        %v8189 = vpack.c.b16 %v5269, %v5261
        %v8190 = vpack.c.b16 %v5270, %v5262
        %v8191 = vpack.c.b16 %v5271, %v5263
        %v8192 = vpack.c.b16 %v5272, %v5264
        %v8193 = vpack.c.b16 %v5273, %v5265
        %v8194 = vpack.c.b16 %v5274, %v5266
        %v8195 = vpack.c.b16 %v5275, %v5267
        %v8196 = vpack.c.b16 %v5284, %v5276
        %v8197 = vpack.c.b16 %v5285, %v5277
        %v8198 = vpack.c.b16 %v5286, %v5278
        %v8199 = vpack.c.b16 %v5287, %v5279
        %v8200 = vpack.c.b16 %v5288, %v5280
        %v8201 = vpack.c.b16 %v5289, %v5281
        %v8202 = vpack.c.b16 %v5290, %v5282
        %v8203 = vpack.c.b16 %v5291, %v5283
        %v8204 = vpack.c.b16 %v5300, %v5292
        %v8205 = vpack.c.b16 %v5301, %v5293
        %v8206 = vpack.c.b16 %v5302, %v5294
        %v8207 = vpack.c.b16 %v5303, %v5295
        %v8208 = vpack.c.b16 %v5304, %v5296
        %v8209 = vpack.c.b16 %v5305, %v5297
        %v8210 = vpack.c.b16 %v5306, %v5298
        %v8211 = vpack.c.b16 %v5307, %v5299
        %v8212 = vpack.c.b16 %v5316, %v5308
        %v8213 = vpack.c.b16 %v5317, %v5309
        %v8214 = vpack.c.b16 %v5318, %v5310
        %v8215 = vpack.c.b16 %v5319, %v5311
        %v8216 = vpack.c.b16 %v5320, %v5312
        %v8217 = vpack.c.b16 %v5321, %v5313
        %v8218 = vpack.c.b16 %v5322, %v5314
        %v8219 = vpack.c.b16 %v5323, %v5315
        %v8220 = vpack.c.b16 %v5332, %v5324
        %v8221 = vpack.c.b16 %v5333, %v5325
        %v8222 = vpack.c.b16 %v5334, %v5326
        %v8223 = vpack.c.b16 %v5335, %v5327
        %v8224 = vpack.c.b16 %v5336, %v5328
        %v8225 = vpack.c.b16 %v5337, %v5329
        %v8226 = vpack.c.b16 %v5338, %v5330
        %v8227 = vpack.c.b16 %v5339, %v5331
        %v8228 = vpack.c.b16 %v5348, %v5340
        %v8229 = vpack.c.b16 %v5349, %v5341
        %v8230 = vpack.c.b16 %v5350, %v5342
        %v8231 = vpack.c.b16 %v5351, %v5343
        %v8232 = vpack.c.b16 %v5352, %v5344
        %v8233 = vpack.c.b16 %v5353, %v5345
        %v8234 = vpack.c.b16 %v5354, %v5346
        %v8235 = vpack.c.b16 %v5355, %v5347
        %v8236 = vpack.c.b16 %v5364, %v5356
        %v8237 = vpack.c.b16 %v5365, %v5357
        %v8238 = vpack.c.b16 %v5366, %v5358
        %v8239 = vpack.c.b16 %v5367, %v5359
        %v8240 = vpack.c.b16 %v5368, %v5360
        %v8241 = vpack.c.b16 %v5369, %v5361
        %v8242 = vpack.c.b16 %v5370, %v5362
        %v8243 = vpack.c.b16 %v5371, %v5363
        %v8244 = vpack.c.b16 %v5380, %v5372
        %v8245 = vpack.c.b16 %v5381, %v5373
        %v8246 = vpack.c.b16 %v5382, %v5374
        %v8247 = vpack.c.b16 %v5383, %v5375
        %v8248 = vpack.c.b16 %v5384, %v5376
        %v8249 = vpack.c.b16 %v5385, %v5377
        %v8250 = vpack.c.b16 %v5386, %v5378
        %v8251 = vpack.c.b16 %v5387, %v5379
        %v8252 = vpack.c.b16 %v5396, %v5388
        %v8253 = vpack.c.b16 %v5397, %v5389
        %v8254 = vpack.c.b16 %v5398, %v5390
        %v8255 = vpack.c.b16 %v5399, %v5391
        %v8256 = vpack.c.b16 %v5400, %v5392
        %v8257 = vpack.c.b16 %v5401, %v5393
        %v8258 = vpack.c.b16 %v5402, %v5394
        %v8259 = vpack.c.b16 %v5403, %v5395
        %v8260 = vpack.c.b16 %v5412, %v5404
        %v8261 = vpack.c.b16 %v5413, %v5405
        %v8262 = vpack.c.b16 %v5414, %v5406
        %v8263 = vpack.c.b16 %v5415, %v5407
        %v8264 = vpack.c.b16 %v5416, %v5408
        %v8265 = vpack.c.b16 %v5417, %v5409
        %v8266 = vpack.c.b16 %v5418, %v5410
        %v8267 = vpack.c.b16 %v5419, %v5411
        %v8268 = vpack.c.b16 %v5428, %v5420
        %v8269 = vpack.c.b16 %v5429, %v5421
        %v8270 = vpack.c.b16 %v5430, %v5422
        %v8271 = vpack.c.b16 %v5431, %v5423
        %v8272 = vpack.c.b16 %v5432, %v5424
        %v8273 = vpack.c.b16 %v5433, %v5425
        %v8274 = vpack.c.b16 %v5434, %v5426
        %v8275 = vpack.c.b16 %v5435, %v5427
        %v8276 = vpack.c.b16 %v5444, %v5436
        %v8277 = vpack.c.b16 %v5445, %v5437
        %v8278 = vpack.c.b16 %v5446, %v5438
        %v8279 = vpack.c.b16 %v5447, %v5439
        %v8280 = vpack.c.b16 %v5448, %v5440
        %v8281 = vpack.c.b16 %v5449, %v5441
        %v8282 = vpack.c.b16 %v5450, %v5442
        %v8283 = vpack.c.b16 %v5451, %v5443
        %v8284 = vpack.c.b16 %v5460, %v5452
        %v8285 = vpack.c.b16 %v5461, %v5453
        %v8286 = vpack.c.b16 %v5462, %v5454
        %v8287 = vpack.c.b16 %v5463, %v5455
        %v8288 = vpack.c.b16 %v5464, %v5456
        %v8289 = vpack.c.b16 %v5465, %v5457
        %v8290 = vpack.c.b16 %v5466, %v5458
        %v8291 = vpack.c.b16 %v5467, %v5459
        %v8292 = vpack.c.b16 %v5476, %v5468
        %v8293 = vpack.c.b16 %v5477, %v5469
        %v8294 = vpack.c.b16 %v5478, %v5470
        %v8295 = vpack.c.b16 %v5479, %v5471
        %v8296 = vpack.c.b16 %v5480, %v5472
        %v8297 = vpack.c.b16 %v5481, %v5473
        %v8298 = vpack.c.b16 %v5482, %v5474
        %v8299 = vpack.c.b16 %v5483, %v5475
        %v8300 = vpack.c.b16 %v5492, %v5484
        %v8301 = vpack.c.b16 %v5493, %v5485
        %v8302 = vpack.c.b16 %v5494, %v5486
        %v8303 = vpack.c.b16 %v5495, %v5487
        %v8304 = vpack.c.b16 %v5496, %v5488
        %v8305 = vpack.c.b16 %v5497, %v5489
        %v8306 = vpack.c.b16 %v5498, %v5490
        %v8307 = vpack.c.b16 %v5499, %v5491
        %v8308 = vpack.c.b16 %v5508, %v5500
        %v8309 = vpack.c.b16 %v5509, %v5501
        %v8310 = vpack.c.b16 %v5510, %v5502
        %v8311 = vpack.c.b16 %v5511, %v5503
        %v8312 = vpack.c.b16 %v5512, %v5504
        %v8313 = vpack.c.b16 %v5513, %v5505
        %v8314 = vpack.c.b16 %v5514, %v5506
        %v8315 = vpack.c.b16 %v5515, %v5507
        %v8316 = vpack.c.b16 %v5524, %v5516
        %v8317 = vpack.c.b16 %v5525, %v5517
        %v8318 = vpack.c.b16 %v5526, %v5518
        %v8319 = vpack.c.b16 %v5527, %v5519
        %v8320 = vpack.c.b16 %v5528, %v5520
        %v8321 = vpack.c.b16 %v5529, %v5521
        %v8322 = vpack.c.b16 %v5530, %v5522
        %v8323 = vpack.c.b16 %v5531, %v5523
        %v8324 = vpack.c.b16 %v5540, %v5532
        %v8325 = vpack.c.b16 %v5541, %v5533
        %v8326 = vpack.c.b16 %v5542, %v5534
        %v8327 = vpack.c.b16 %v5543, %v5535
        %v8328 = vpack.c.b16 %v5544, %v5536
        %v8329 = vpack.c.b16 %v5545, %v5537
        %v8330 = vpack.c.b16 %v5546, %v5538
        %v8331 = vpack.c.b16 %v5547, %v5539
        %v8332 = vpack.c.b16 %v5556, %v5548
        %v8333 = vpack.c.b16 %v5557, %v5549
        %v8334 = vpack.c.b16 %v5558, %v5550
        %v8335 = vpack.c.b16 %v5559, %v5551
        %v8336 = vpack.c.b16 %v5560, %v5552
        %v8337 = vpack.c.b16 %v5561, %v5553
        %v8338 = vpack.c.b16 %v5562, %v5554
        %v8339 = vpack.c.b16 %v5563, %v5555
        %v8340 = vpack.c.b16 %v5572, %v5564
        %v8341 = vpack.c.b16 %v5573, %v5565
        %v8342 = vpack.c.b16 %v5574, %v5566
        %v8343 = vpack.c.b16 %v5575, %v5567
        %v8344 = vpack.c.b16 %v5576, %v5568
        %v8345 = vpack.c.b16 %v5577, %v5569
        %v8346 = vpack.c.b16 %v5578, %v5570
        %v8347 = vpack.c.b16 %v5579, %v5571
        %v8348 = vpack.c.b16 %v5588, %v5580
        %v8349 = vpack.c.b16 %v5589, %v5581
        %v8350 = vpack.c.b16 %v5590, %v5582
        %v8351 = vpack.c.b16 %v5591, %v5583
        %v8352 = vpack.c.b16 %v5592, %v5584
        %v8353 = vpack.c.b16 %v5593, %v5585
        %v8354 = vpack.c.b16 %v5594, %v5586
        %v8355 = vpack.c.b16 %v5595, %v5587
        %v8356 = vpack.c.b16 %v5604, %v5596
        %v8357 = vpack.c.b16 %v5605, %v5597
        %v8358 = vpack.c.b16 %v5606, %v5598
        %v8359 = vpack.c.b16 %v5607, %v5599
        %v8360 = vpack.c.b16 %v5608, %v5600
        %v8361 = vpack.c.b16 %v5609, %v5601
        %v8362 = vpack.c.b16 %v5610, %v5602
        %v8363 = vpack.c.b16 %v5611, %v5603
        %v8364 = vpack.c.b16 %v5620, %v5612
        %v8365 = vpack.c.b16 %v5621, %v5613
        %v8366 = vpack.c.b16 %v5622, %v5614
        %v8367 = vpack.c.b16 %v5623, %v5615
        %v8368 = vpack.c.b16 %v5624, %v5616
        %v8369 = vpack.c.b16 %v5625, %v5617
        %v8370 = vpack.c.b16 %v5626, %v5618
        %v8371 = vpack.c.b16 %v5627, %v5619
        %v8372 = vpack.c.b16 %v5636, %v5628
        %v8373 = vpack.c.b16 %v5637, %v5629
        %v8374 = vpack.c.b16 %v5638, %v5630
        %v8375 = vpack.c.b16 %v5639, %v5631
        %v8376 = vpack.c.b16 %v5640, %v5632
        %v8377 = vpack.c.b16 %v5641, %v5633
        %v8378 = vpack.c.b16 %v5642, %v5634
        %v8379 = vpack.c.b16 %v5643, %v5635
        %v8380 = vpack.c.b16 %v5652, %v5644
        %v8381 = vpack.c.b16 %v5653, %v5645
        %v8382 = vpack.c.b16 %v5654, %v5646
        %v8383 = vpack.c.b16 %v5655, %v5647
        %v8384 = vpack.c.b16 %v5656, %v5648
        %v8385 = vpack.c.b16 %v5657, %v5649
        %v8386 = vpack.c.b16 %v5658, %v5650
        %v8387 = vpack.c.b16 %v5659, %v5651
        %v8388 = vpack.c.b16 %v5668, %v5660
        %v8389 = vpack.c.b16 %v5669, %v5661
        %v8390 = vpack.c.b16 %v5670, %v5662
        %v8391 = vpack.c.b16 %v5671, %v5663
        %v8392 = vpack.c.b16 %v5672, %v5664
        %v8393 = vpack.c.b16 %v5673, %v5665
        %v8394 = vpack.c.b16 %v5674, %v5666
        %v8395 = vpack.c.b16 %v5675, %v5667
        %v8396 = vpack.c.b16 %v5684, %v5676
        %v8397 = vpack.c.b16 %v5685, %v5677
        %v8398 = vpack.c.b16 %v5686, %v5678
        %v8399 = vpack.c.b16 %v5687, %v5679
        %v8400 = vpack.c.b16 %v5688, %v5680
        %v8401 = vpack.c.b16 %v5689, %v5681
        %v8402 = vpack.c.b16 %v5690, %v5682
        %v8403 = vpack.c.b16 %v5691, %v5683
        %v8404 = vpack.c.b16 %v5700, %v5692
        %v8405 = vpack.c.b16 %v5701, %v5693
        %v8406 = vpack.c.b16 %v5702, %v5694
        %v8407 = vpack.c.b16 %v5703, %v5695
        %v8408 = vpack.c.b16 %v5704, %v5696
        %v8409 = vpack.c.b16 %v5705, %v5697
        %v8410 = vpack.c.b16 %v5706, %v5698
        %v8411 = vpack.c.b16 %v5707, %v5699
        %v8412 = vpack.c.b16 %v5716, %v5708
        %v8413 = vpack.c.b16 %v5717, %v5709
        %v8414 = vpack.c.b16 %v5718, %v5710
        %v8415 = vpack.c.b16 %v5719, %v5711
        %v8416 = vpack.c.b16 %v5720, %v5712
        %v8417 = vpack.c.b16 %v5721, %v5713
        %v8418 = vpack.c.b16 %v5722, %v5714
        %v8419 = vpack.c.b16 %v5723, %v5715
        %v8420 = vpack.c.b16 %v5732, %v5724
        %v8421 = vpack.c.b16 %v5733, %v5725
        %v8422 = vpack.c.b16 %v5734, %v5726
        %v8423 = vpack.c.b16 %v5735, %v5727
        %v8424 = vpack.c.b16 %v5736, %v5728
        %v8425 = vpack.c.b16 %v5737, %v5729
        %v8426 = vpack.c.b16 %v5738, %v5730
        %v8427 = vpack.c.b16 %v5739, %v5731
        %v8428 = vpack.c.b16 %v5748, %v5740
        %v8429 = vpack.c.b16 %v5749, %v5741
        %v8430 = vpack.c.b16 %v5750, %v5742
        %v8431 = vpack.c.b16 %v5751, %v5743
        %v8432 = vpack.c.b16 %v5752, %v5744
        %v8433 = vpack.c.b16 %v5753, %v5745
        %v8434 = vpack.c.b16 %v5754, %v5746
        %v8435 = vpack.c.b16 %v5755, %v5747
        %v8436 = vpack.c.b16 %v5764, %v5756
        %v8437 = vpack.c.b16 %v5765, %v5757
        %v8438 = vpack.c.b16 %v5766, %v5758
        %v8439 = vpack.c.b16 %v5767, %v5759
        %v8440 = vpack.c.b16 %v5768, %v5760
        %v8441 = vpack.c.b16 %v5769, %v5761
        %v8442 = vpack.c.b16 %v5770, %v5762
        %v8443 = vpack.c.b16 %v5771, %v5763
        %v8444 = vpack.c.b16 %v5780, %v5772
        %v8445 = vpack.c.b16 %v5781, %v5773
        %v8446 = vpack.c.b16 %v5782, %v5774
        %v8447 = vpack.c.b16 %v5783, %v5775
        %v8448 = vpack.c.b16 %v5784, %v5776
        %v8449 = vpack.c.b16 %v5785, %v5777
        %v8450 = vpack.c.b16 %v5786, %v5778
        %v8451 = vpack.c.b16 %v5787, %v5779
        %v8452 = vpack.c.b16 %v5796, %v5788
        %v8453 = vpack.c.b16 %v5797, %v5789
        %v8454 = vpack.c.b16 %v5798, %v5790
        %v8455 = vpack.c.b16 %v5799, %v5791
        %v8456 = vpack.c.b16 %v5800, %v5792
        %v8457 = vpack.c.b16 %v5801, %v5793
        %v8458 = vpack.c.b16 %v5802, %v5794
        %v8459 = vpack.c.b16 %v5803, %v5795
        %v8460 = vpack.c.b16 %v5812, %v5804
        %v8461 = vpack.c.b16 %v5813, %v5805
        %v8462 = vpack.c.b16 %v5814, %v5806
        %v8463 = vpack.c.b16 %v5815, %v5807
        %v8464 = vpack.c.b16 %v5816, %v5808
        %v8465 = vpack.c.b16 %v5817, %v5809
        %v8466 = vpack.c.b16 %v5818, %v5810
        %v8467 = vpack.c.b16 %v5819, %v5811
        %v8468 = vpack.c.b16 %v5828, %v5820
        %v8469 = vpack.c.b16 %v5829, %v5821
        %v8470 = vpack.c.b16 %v5830, %v5822
        %v8471 = vpack.c.b16 %v5831, %v5823
        %v8472 = vpack.c.b16 %v5832, %v5824
        %v8473 = vpack.c.b16 %v5833, %v5825
        %v8474 = vpack.c.b16 %v5834, %v5826
        %v8475 = vpack.c.b16 %v5835, %v5827
        %v8476 = vpack.c.b16 %v5844, %v5836
        %v8477 = vpack.c.b16 %v5845, %v5837
        %v8478 = vpack.c.b16 %v5846, %v5838
        %v8479 = vpack.c.b16 %v5847, %v5839
        %v8480 = vpack.c.b16 %v5848, %v5840
        %v8481 = vpack.c.b16 %v5849, %v5841
        %v8482 = vpack.c.b16 %v5850, %v5842
        %v8483 = vpack.c.b16 %v5851, %v5843
        %v8484 = vpack.c.b16 %v5860, %v5852
        %v8485 = vpack.c.b16 %v5861, %v5853
        %v8486 = vpack.c.b16 %v5862, %v5854
        %v8487 = vpack.c.b16 %v5863, %v5855
        %v8488 = vpack.c.b16 %v5864, %v5856
        %v8489 = vpack.c.b16 %v5865, %v5857
        %v8490 = vpack.c.b16 %v5866, %v5858
        %v8491 = vpack.c.b16 %v5867, %v5859
        %v8492 = vpack.c.b16 %v5876, %v5868
        %v8493 = vpack.c.b16 %v5877, %v5869
        %v8494 = vpack.c.b16 %v5878, %v5870
        %v8495 = vpack.c.b16 %v5879, %v5871
        %v8496 = vpack.c.b16 %v5880, %v5872
        %v8497 = vpack.c.b16 %v5881, %v5873
        %v8498 = vpack.c.b16 %v5882, %v5874
        %v8499 = vpack.c.b16 %v5883, %v5875
        %v8500 = vpack.c.b16 %v5892, %v5884
        %v8501 = vpack.c.b16 %v5893, %v5885
        %v8502 = vpack.c.b16 %v5894, %v5886
        %v8503 = vpack.c.b16 %v5895, %v5887
        %v8504 = vpack.c.b16 %v5896, %v5888
        %v8505 = vpack.c.b16 %v5897, %v5889
        %v8506 = vpack.c.b16 %v5898, %v5890
        %v8507 = vpack.c.b16 %v5899, %v5891
        %v8508 = vpack.c.b16 %v5908, %v5900
        %v8509 = vpack.c.b16 %v5909, %v5901
        %v8510 = vpack.c.b16 %v5910, %v5902
        %v8511 = vpack.c.b16 %v5911, %v5903
        %v8512 = vpack.c.b16 %v5912, %v5904
        %v8513 = vpack.c.b16 %v5913, %v5905
        %v8514 = vpack.c.b16 %v5914, %v5906
        %v8515 = vpack.c.b16 %v5915, %v5907
        %v8516 = vpack.c.b16 %v5924, %v5916
        %v8517 = vpack.c.b16 %v5925, %v5917
        %v8518 = vpack.c.b16 %v5926, %v5918
        %v8519 = vpack.c.b16 %v5927, %v5919
        %v8520 = vpack.c.b16 %v5928, %v5920
        %v8521 = vpack.c.b16 %v5929, %v5921
        %v8522 = vpack.c.b16 %v5930, %v5922
        %v8523 = vpack.c.b16 %v5931, %v5923
        %v8524 = vpack.c.b16 %v5940, %v5932
        %v8525 = vpack.c.b16 %v5941, %v5933
        %v8526 = vpack.c.b16 %v5942, %v5934
        %v8527 = vpack.c.b16 %v5943, %v5935
        %v8528 = vpack.c.b16 %v5944, %v5936
        %v8529 = vpack.c.b16 %v5945, %v5937
        %v8530 = vpack.c.b16 %v5946, %v5938
        %v8531 = vpack.c.b16 %v5947, %v5939
        %v8532 = vpack.c.b16 %v5956, %v5948
        %v8533 = vpack.c.b16 %v5957, %v5949
        %v8534 = vpack.c.b16 %v5958, %v5950
        %v8535 = vpack.c.b16 %v5959, %v5951
        %v8536 = vpack.c.b16 %v5960, %v5952
        %v8537 = vpack.c.b16 %v5961, %v5953
        %v8538 = vpack.c.b16 %v5962, %v5954
        %v8539 = vpack.c.b16 %v5963, %v5955
        %v8540 = vpack.c.b16 %v5972, %v5964
        %v8541 = vpack.c.b16 %v5973, %v5965
        %v8542 = vpack.c.b16 %v5974, %v5966
        %v8543 = vpack.c.b16 %v5975, %v5967
        %v8544 = vpack.c.b16 %v5976, %v5968
        %v8545 = vpack.c.b16 %v5977, %v5969
        %v8546 = vpack.c.b16 %v5978, %v5970
        %v8547 = vpack.c.b16 %v5979, %v5971
        %v8548 = vpack.c.b16 %v5988, %v5980
        %v8549 = vpack.c.b16 %v5989, %v5981
        %v8550 = vpack.c.b16 %v5990, %v5982
        %v8551 = vpack.c.b16 %v5991, %v5983
        %v8552 = vpack.c.b16 %v5992, %v5984
        %v8553 = vpack.c.b16 %v5993, %v5985
        %v8554 = vpack.c.b16 %v5994, %v5986
        %v8555 = vpack.c.b16 %v5995, %v5987
        %v8556 = vpack.c.b16 %v6004, %v5996
        %v8557 = vpack.c.b16 %v6005, %v5997
        %v8558 = vpack.c.b16 %v6006, %v5998
        %v8559 = vpack.c.b16 %v6007, %v5999
        %v8560 = vpack.c.b16 %v6008, %v6000
        %v8561 = vpack.c.b16 %v6009, %v6001
        %v8562 = vpack.c.b16 %v6010, %v6002
        %v8563 = vpack.c.b16 %v6011, %v6003
        %v8564 = vpack.c.b16 %v6020, %v6012
        %v8565 = vpack.c.b16 %v6021, %v6013
        %v8566 = vpack.c.b16 %v6022, %v6014
        %v8567 = vpack.c.b16 %v6023, %v6015
        %v8568 = vpack.c.b16 %v6024, %v6016
        %v8569 = vpack.c.b16 %v6025, %v6017
        %v8570 = vpack.c.b16 %v6026, %v6018
        %v8571 = vpack.c.b16 %v6027, %v6019
        %v8572 = vpack.c.b16 %v6036, %v6028
        %v8573 = vpack.c.b16 %v6037, %v6029
        %v8574 = vpack.c.b16 %v6038, %v6030
        %v8575 = vpack.c.b16 %v6039, %v6031
        %v8576 = vpack.c.b16 %v6040, %v6032
        %v8577 = vpack.c.b16 %v6041, %v6033
        %v8578 = vpack.c.b16 %v6042, %v6034
        %v8579 = vpack.c.b16 %v6043, %v6035
        %v8580 = vpack.c.b16 %v6052, %v6044
        %v8581 = vpack.c.b16 %v6053, %v6045
        %v8582 = vpack.c.b16 %v6054, %v6046
        %v8583 = vpack.c.b16 %v6055, %v6047
        %v8584 = vpack.c.b16 %v6056, %v6048
        %v8585 = vpack.c.b16 %v6057, %v6049
        %v8586 = vpack.c.b16 %v6058, %v6050
        %v8587 = vpack.c.b16 %v6059, %v6051
        %v8588 = vpack.c.b16 %v6068, %v6060
        %v8589 = vpack.c.b16 %v6069, %v6061
        %v8590 = vpack.c.b16 %v6070, %v6062
        %v8591 = vpack.c.b16 %v6071, %v6063
        %v8592 = vpack.c.b16 %v6072, %v6064
        %v8593 = vpack.c.b16 %v6073, %v6065
        %v8594 = vpack.c.b16 %v6074, %v6066
        %v8595 = vpack.c.b16 %v6075, %v6067
        %v8596 = vpack.c.b16 %v6084, %v6076
        %v8597 = vpack.c.b16 %v6085, %v6077
        %v8598 = vpack.c.b16 %v6086, %v6078
        %v8599 = vpack.c.b16 %v6087, %v6079
        %v8600 = vpack.c.b16 %v6088, %v6080
        %v8601 = vpack.c.b16 %v6089, %v6081
        %v8602 = vpack.c.b16 %v6090, %v6082
        %v8603 = vpack.c.b16 %v6091, %v6083
        %v8604 = vpack.c.b16 %v6100, %v6092
        %v8605 = vpack.c.b16 %v6101, %v6093
        %v8606 = vpack.c.b16 %v6102, %v6094
        %v8607 = vpack.c.b16 %v6103, %v6095
        %v8608 = vpack.c.b16 %v6104, %v6096
        %v8609 = vpack.c.b16 %v6105, %v6097
        %v8610 = vpack.c.b16 %v6106, %v6098
        %v8611 = vpack.c.b16 %v6107, %v6099
        %v8612 = vpack.c.b16 %v6116, %v6108
        %v8613 = vpack.c.b16 %v6117, %v6109
        %v8614 = vpack.c.b16 %v6118, %v6110
        %v8615 = vpack.c.b16 %v6119, %v6111
        %v8616 = vpack.c.b16 %v6120, %v6112
        %v8617 = vpack.c.b16 %v6121, %v6113
        %v8618 = vpack.c.b16 %v6122, %v6114
        %v8619 = vpack.c.b16 %v6123, %v6115
        %v8620 = vpack.c.b16 %v6132, %v6124
        %v8621 = vpack.c.b16 %v6133, %v6125
        %v8622 = vpack.c.b16 %v6134, %v6126
        %v8623 = vpack.c.b16 %v6135, %v6127
        %v8624 = vpack.c.b16 %v6136, %v6128
        %v8625 = vpack.c.b16 %v6137, %v6129
        %v8626 = vpack.c.b16 %v6138, %v6130
        %v8627 = vpack.c.b16 %v6139, %v6131
        %v8628 = vpack.c.b16 %v6148, %v6140
        %v8629 = vpack.c.b16 %v6149, %v6141
        %v8630 = vpack.c.b16 %v6150, %v6142
        %v8631 = vpack.c.b16 %v6151, %v6143
        %v8632 = vpack.c.b16 %v6152, %v6144
        %v8633 = vpack.c.b16 %v6153, %v6145
        %v8634 = vpack.c.b16 %v6154, %v6146
        %v8635 = vpack.c.b16 %v6155, %v6147
        %v8636 = vpack.c.b16 %v6164, %v6156
        %v8637 = vpack.c.b16 %v6165, %v6157
        %v8638 = vpack.c.b16 %v6166, %v6158
        %v8639 = vpack.c.b16 %v6167, %v6159
        %v8640 = vpack.c.b16 %v6168, %v6160
        %v8641 = vpack.c.b16 %v6169, %v6161
        %v8642 = vpack.c.b16 %v6170, %v6162
        %v8643 = vpack.c.b16 %v6171, %v6163
        %v8644 = vpack.c.b16 %v6180, %v6172
        %v8645 = vpack.c.b16 %v6181, %v6173
        %v8646 = vpack.c.b16 %v6182, %v6174
        %v8647 = vpack.c.b16 %v6183, %v6175
        %v8648 = vpack.c.b16 %v6184, %v6176
        %v8649 = vpack.c.b16 %v6185, %v6177
        %v8650 = vpack.c.b16 %v6186, %v6178
        %v8651 = vpack.c.b16 %v6187, %v6179
        %v8652 = vpack.c.b16 %v6196, %v6188
        %v8653 = vpack.c.b16 %v6197, %v6189
        %v8654 = vpack.c.b16 %v6198, %v6190
        %v8655 = vpack.c.b16 %v6199, %v6191
        %v8656 = vpack.c.b16 %v6200, %v6192
        %v8657 = vpack.c.b16 %v6201, %v6193
        %v8658 = vpack.c.b16 %v6202, %v6194
        %v8659 = vpack.c.b16 %v6203, %v6195
        %v8660 = vpack.c.b16 %v6212, %v6204
        %v8661 = vpack.c.b16 %v6213, %v6205
        %v8662 = vpack.c.b16 %v6214, %v6206
        %v8663 = vpack.c.b16 %v6215, %v6207
        %v8664 = vpack.c.b16 %v6216, %v6208
        %v8665 = vpack.c.b16 %v6217, %v6209
        %v8666 = vpack.c.b16 %v6218, %v6210
        %v8667 = vpack.c.b16 %v6219, %v6211
        %v8668 = vpack.c.b16 %v6228, %v6220
        %v8669 = vpack.c.b16 %v6229, %v6221
        %v8670 = vpack.c.b16 %v6230, %v6222
        %v8671 = vpack.c.b16 %v6231, %v6223
        %v8672 = vpack.c.b16 %v6232, %v6224
        %v8673 = vpack.c.b16 %v6233, %v6225
        %v8674 = vpack.c.b16 %v6234, %v6226
        %v8675 = vpack.c.b16 %v6235, %v6227
        %v8676 = vpack.c.b16 %v6244, %v6236
        %v8677 = vpack.c.b16 %v6245, %v6237
        %v8678 = vpack.c.b16 %v6246, %v6238
        %v8679 = vpack.c.b16 %v6247, %v6239
        %v8680 = vpack.c.b16 %v6248, %v6240
        %v8681 = vpack.c.b16 %v6249, %v6241
        %v8682 = vpack.c.b16 %v6250, %v6242
        %v8683 = vpack.c.b16 %v6251, %v6243
        %v8684 = vpack.c.b16 %v6260, %v6252
        %v8685 = vpack.c.b16 %v6261, %v6253
        %v8686 = vpack.c.b16 %v6262, %v6254
        %v8687 = vpack.c.b16 %v6263, %v6255
        %v8688 = vpack.c.b16 %v6264, %v6256
        %v8689 = vpack.c.b16 %v6265, %v6257
        %v8690 = vpack.c.b16 %v6266, %v6258
        %v8691 = vpack.c.b16 %v6267, %v6259
        %v8692 = vpack.c.b16 %v6276, %v6268
        %v8693 = vpack.c.b16 %v6277, %v6269
        %v8694 = vpack.c.b16 %v6278, %v6270
        %v8695 = vpack.c.b16 %v6279, %v6271
        %v8696 = vpack.c.b16 %v6280, %v6272
        %v8697 = vpack.c.b16 %v6281, %v6273
        %v8698 = vpack.c.b16 %v6282, %v6274
        %v8699 = vpack.c.b16 %v6283, %v6275
        %v8700 = vpack.c.b16 %v6292, %v6284
        %v8701 = vpack.c.b16 %v6293, %v6285
        %v8702 = vpack.c.b16 %v6294, %v6286
        %v8703 = vpack.c.b16 %v6295, %v6287
        %v8704 = vpack.c.b16 %v6296, %v6288
        %v8705 = vpack.c.b16 %v6297, %v6289
        %v8706 = vpack.c.b16 %v6298, %v6290
        %v8707 = vpack.c.b16 %v6299, %v6291
        %v8708 = vpack.c.b16 %v6308, %v6300
        %v8709 = vpack.c.b16 %v6309, %v6301
        %v8710 = vpack.c.b16 %v6310, %v6302
        %v8711 = vpack.c.b16 %v6311, %v6303
        %v8712 = vpack.c.b16 %v6312, %v6304
        %v8713 = vpack.c.b16 %v6313, %v6305
        %v8714 = vpack.c.b16 %v6314, %v6306
        %v8715 = vpack.c.b16 %v6315, %v6307
        %v8716 = vpack.c.b16 %v6324, %v6316
        %v8717 = vpack.c.b16 %v6325, %v6317
        %v8718 = vpack.c.b16 %v6326, %v6318
        %v8719 = vpack.c.b16 %v6327, %v6319
        %v8720 = vpack.c.b16 %v6328, %v6320
        %v8721 = vpack.c.b16 %v6329, %v6321
        %v8722 = vpack.c.b16 %v6330, %v6322
        %v8723 = vpack.c.b16 %v6331, %v6323
        %v8724 = vpack.c.b16 %v6340, %v6332
        %v8725 = vpack.c.b16 %v6341, %v6333
        %v8726 = vpack.c.b16 %v6342, %v6334
        %v8727 = vpack.c.b16 %v6343, %v6335
        %v8728 = vpack.c.b16 %v6344, %v6336
        %v8729 = vpack.c.b16 %v6345, %v6337
        %v8730 = vpack.c.b16 %v6346, %v6338
        %v8731 = vpack.c.b16 %v6347, %v6339
        %v8732 = vpack.c.b16 %v6356, %v6348
        %v8733 = vpack.c.b16 %v6357, %v6349
        %v8734 = vpack.c.b16 %v6358, %v6350
        %v8735 = vpack.c.b16 %v6359, %v6351
        %v8736 = vpack.c.b16 %v6360, %v6352
        %v8737 = vpack.c.b16 %v6361, %v6353
        %v8738 = vpack.c.b16 %v6362, %v6354
        %v8739 = vpack.c.b16 %v6363, %v6355
        %v8740 = vpack.c.b16 %v6372, %v6364
        %v8741 = vpack.c.b16 %v6373, %v6365
        %v8742 = vpack.c.b16 %v6374, %v6366
        %v8743 = vpack.c.b16 %v6375, %v6367
        %v8744 = vpack.c.b16 %v6376, %v6368
        %v8745 = vpack.c.b16 %v6377, %v6369
        %v8746 = vpack.c.b16 %v6378, %v6370
        %v8747 = vpack.c.b16 %v6379, %v6371
        %v8748 = vpack.c.b16 %v6388, %v6380
        %v8749 = vpack.c.b16 %v6389, %v6381
        %v8750 = vpack.c.b16 %v6390, %v6382
        %v8751 = vpack.c.b16 %v6391, %v6383
        %v8752 = vpack.c.b16 %v6392, %v6384
        %v8753 = vpack.c.b16 %v6393, %v6385
        %v8754 = vpack.c.b16 %v6394, %v6386
        %v8755 = vpack.c.b16 %v6395, %v6387
        %v8756 = vpack.c.b16 %v6404, %v6396
        %v8757 = vpack.c.b16 %v6405, %v6397
        %v8758 = vpack.c.b16 %v6406, %v6398
        %v8759 = vpack.c.b16 %v6407, %v6399
        %v8760 = vpack.c.b16 %v6408, %v6400
        %v8761 = vpack.c.b16 %v6409, %v6401
        %v8762 = vpack.c.b16 %v6410, %v6402
        %v8763 = vpack.c.b16 %v6411, %v6403
        %v8764 = vpack.c.b16 %v6420, %v6412
        %v8765 = vpack.c.b16 %v6421, %v6413
        %v8766 = vpack.c.b16 %v6422, %v6414
        %v8767 = vpack.c.b16 %v6423, %v6415
        %v8768 = vpack.c.b16 %v6424, %v6416
        %v8769 = vpack.c.b16 %v6425, %v6417
        %v8770 = vpack.c.b16 %v6426, %v6418
        %v8771 = vpack.c.b16 %v6427, %v6419
        %v8772 = vpack.c.b16 %v6436, %v6428
        %v8773 = vpack.c.b16 %v6437, %v6429
        %v8774 = vpack.c.b16 %v6438, %v6430
        %v8775 = vpack.c.b16 %v6439, %v6431
        %v8776 = vpack.c.b16 %v6440, %v6432
        %v8777 = vpack.c.b16 %v6441, %v6433
        %v8778 = vpack.c.b16 %v6442, %v6434
        %v8779 = vpack.c.b16 %v6443, %v6435
        %v8780 = vpack.c.b16 %v6452, %v6444
        %v8781 = vpack.c.b16 %v6453, %v6445
        %v8782 = vpack.c.b16 %v6454, %v6446
        %v8783 = vpack.c.b16 %v6455, %v6447
        %v8784 = vpack.c.b16 %v6456, %v6448
        %v8785 = vpack.c.b16 %v6457, %v6449
        %v8786 = vpack.c.b16 %v6458, %v6450
        %v8787 = vpack.c.b16 %v6459, %v6451
        %v8788 = vpack.c.b16 %v6468, %v6460
        %v8789 = vpack.c.b16 %v6469, %v6461
        %v8790 = vpack.c.b16 %v6470, %v6462
        %v8791 = vpack.c.b16 %v6471, %v6463
        %v8792 = vpack.c.b16 %v6472, %v6464
        %v8793 = vpack.c.b16 %v6473, %v6465
        %v8794 = vpack.c.b16 %v6474, %v6466
        %v8795 = vpack.c.b16 %v6475, %v6467
        %v8796 = vpack.c.b16 %v6484, %v6476
        %v8797 = vpack.c.b16 %v6485, %v6477
        %v8798 = vpack.c.b16 %v6486, %v6478
        %v8799 = vpack.c.b16 %v6487, %v6479
        %v8800 = vpack.c.b16 %v6488, %v6480
        %v8801 = vpack.c.b16 %v6489, %v6481
        %v8802 = vpack.c.b16 %v6490, %v6482
        %v8803 = vpack.c.b16 %v6491, %v6483
        %v8804 = vpack.c.b16 %v6500, %v6492
        %v8805 = vpack.c.b16 %v6501, %v6493
        %v8806 = vpack.c.b16 %v6502, %v6494
        %v8807 = vpack.c.b16 %v6503, %v6495
        %v8808 = vpack.c.b16 %v6504, %v6496
        %v8809 = vpack.c.b16 %v6505, %v6497
        %v8810 = vpack.c.b16 %v6506, %v6498
        %v8811 = vpack.c.b16 %v6507, %v6499
        %v8812 = vpack.c.b16 %v6516, %v6508
        %v8813 = vpack.c.b16 %v6517, %v6509
        %v8814 = vpack.c.b16 %v6518, %v6510
        %v8815 = vpack.c.b16 %v6519, %v6511
        %v8816 = vpack.c.b16 %v6520, %v6512
        %v8817 = vpack.c.b16 %v6521, %v6513
        %v8818 = vpack.c.b16 %v6522, %v6514
        %v8819 = vpack.c.b16 %v6523, %v6515
        %v8820 = vpack.c.b16 %v6532, %v6524
        %v8821 = vpack.c.b16 %v6533, %v6525
        %v8822 = vpack.c.b16 %v6534, %v6526
        %v8823 = vpack.c.b16 %v6535, %v6527
        %v8824 = vpack.c.b16 %v6536, %v6528
        %v8825 = vpack.c.b16 %v6537, %v6529
        %v8826 = vpack.c.b16 %v6538, %v6530
        %v8827 = vpack.c.b16 %v6539, %v6531
        %v8828 = vpack.c.b16 %v6548, %v6540
        %v8829 = vpack.c.b16 %v6549, %v6541
        %v8830 = vpack.c.b16 %v6550, %v6542
        %v8831 = vpack.c.b16 %v6551, %v6543
        %v8832 = vpack.c.b16 %v6552, %v6544
        %v8833 = vpack.c.b16 %v6553, %v6545
        %v8834 = vpack.c.b16 %v6554, %v6546
        %v8835 = vpack.c.b16 %v6555, %v6547
        %v8836 = vpack.c.b16 %v6564, %v6556
        %v8837 = vpack.c.b16 %v6565, %v6557
        %v8838 = vpack.c.b16 %v6566, %v6558
        %v8839 = vpack.c.b16 %v6567, %v6559
        %v8840 = vpack.c.b16 %v6568, %v6560
        %v8841 = vpack.c.b16 %v6569, %v6561
        %v8842 = vpack.c.b16 %v6570, %v6562
        %v8843 = vpack.c.b16 %v6571, %v6563
        %v8844 = vpack.c.b16 %v6580, %v6572
        %v8845 = vpack.c.b16 %v6581, %v6573
        %v8846 = vpack.c.b16 %v6582, %v6574
        %v8847 = vpack.c.b16 %v6583, %v6575
        %v8848 = vpack.c.b16 %v6584, %v6576
        %v8849 = vpack.c.b16 %v6585, %v6577
        %v8850 = vpack.c.b16 %v6586, %v6578
        %v8851 = vpack.c.b16 %v6587, %v6579
        %v8852 = vpack.c.b16 %v6596, %v6588
        %v8853 = vpack.c.b16 %v6597, %v6589
        %v8854 = vpack.c.b16 %v6598, %v6590
        %v8855 = vpack.c.b16 %v6599, %v6591
        %v8856 = vpack.c.b16 %v6600, %v6592
        %v8857 = vpack.c.b16 %v6601, %v6593
        %v8858 = vpack.c.b16 %v6602, %v6594
        %v8859 = vpack.c.b16 %v6603, %v6595
        %v8860 = vpack.c.b16 %v6612, %v6604
        %v8861 = vpack.c.b16 %v6613, %v6605
        %v8862 = vpack.c.b16 %v6614, %v6606
        %v8863 = vpack.c.b16 %v6615, %v6607
        %v8864 = vpack.c.b16 %v6616, %v6608
        %v8865 = vpack.c.b16 %v6617, %v6609
        %v8866 = vpack.c.b16 %v6618, %v6610
        %v8867 = vpack.c.b16 %v6619, %v6611
        %v8868 = vpack.c.b16 %v6628, %v6620
        %v8869 = vpack.c.b16 %v6629, %v6621
        %v8870 = vpack.c.b16 %v6630, %v6622
        %v8871 = vpack.c.b16 %v6631, %v6623
        %v8872 = vpack.c.b16 %v6632, %v6624
        %v8873 = vpack.c.b16 %v6633, %v6625
        %v8874 = vpack.c.b16 %v6634, %v6626
        %v8875 = vpack.c.b16 %v6635, %v6627
        %v8876 = vpack.c.b16 %v6644, %v6636
        %v8877 = vpack.c.b16 %v6645, %v6637
        %v8878 = vpack.c.b16 %v6646, %v6638
        %v8879 = vpack.c.b16 %v6647, %v6639
        %v8880 = vpack.c.b16 %v6648, %v6640
        %v8881 = vpack.c.b16 %v6649, %v6641
        %v8882 = vpack.c.b16 %v6650, %v6642
        %v8883 = vpack.c.b16 %v6651, %v6643
        %v8884 = vpack.c.b16 %v6660, %v6652
        %v8885 = vpack.c.b16 %v6661, %v6653
        %v8886 = vpack.c.b16 %v6662, %v6654
        %v8887 = vpack.c.b16 %v6663, %v6655
        %v8888 = vpack.c.b16 %v6664, %v6656
        %v8889 = vpack.c.b16 %v6665, %v6657
        %v8890 = vpack.c.b16 %v6666, %v6658
        %v8891 = vpack.c.b16 %v6667, %v6659
        %v8892 = vpack.c.b16 %v6676, %v6668
        %v8893 = vpack.c.b16 %v6677, %v6669
        %v8894 = vpack.c.b16 %v6678, %v6670
        %v8895 = vpack.c.b16 %v6679, %v6671
        %v8896 = vpack.c.b16 %v6680, %v6672
        %v8897 = vpack.c.b16 %v6681, %v6673
        %v8898 = vpack.c.b16 %v6682, %v6674
        %v8899 = vpack.c.b16 %v6683, %v6675
        %v8900 = vpack.c.b16 %v6692, %v6684
        %v8901 = vpack.c.b16 %v6693, %v6685
        %v8902 = vpack.c.b16 %v6694, %v6686
        %v8903 = vpack.c.b16 %v6695, %v6687
        %v8904 = vpack.c.b16 %v6696, %v6688
        %v8905 = vpack.c.b16 %v6697, %v6689
        %v8906 = vpack.c.b16 %v6698, %v6690
        %v8907 = vpack.c.b16 %v6699, %v6691
        %v8908 = vpack.c.b16 %v6708, %v6700
        %v8909 = vpack.c.b16 %v6709, %v6701
        %v8910 = vpack.c.b16 %v6710, %v6702
        %v8911 = vpack.c.b16 %v6711, %v6703
        %v8912 = vpack.c.b16 %v6712, %v6704
        %v8913 = vpack.c.b16 %v6713, %v6705
        %v8914 = vpack.c.b16 %v6714, %v6706
        %v8915 = vpack.c.b16 %v6715, %v6707
        %v8916 = vpack.c.b16 %v6724, %v6716
        %v8917 = vpack.c.b16 %v6725, %v6717
        %v8918 = vpack.c.b16 %v6726, %v6718
        %v8919 = vpack.c.b16 %v6727, %v6719
        %v8920 = vpack.c.b16 %v6728, %v6720
        %v8921 = vpack.c.b16 %v6729, %v6721
        %v8922 = vpack.c.b16 %v6730, %v6722
        %v8923 = vpack.c.b16 %v6731, %v6723
        %v8924 = vpack.c.b16 %v6740, %v6732
        %v8925 = vpack.c.b16 %v6741, %v6733
        %v8926 = vpack.c.b16 %v6742, %v6734
        %v8927 = vpack.c.b16 %v6743, %v6735
        %v8928 = vpack.c.b16 %v6744, %v6736
        %v8929 = vpack.c.b16 %v6745, %v6737
        %v8930 = vpack.c.b16 %v6746, %v6738
        %v8931 = vpack.c.b16 %v6747, %v6739
        %v8932 = vpack.c.b16 %v6756, %v6748
        %v8933 = vpack.c.b16 %v6757, %v6749
        %v8934 = vpack.c.b16 %v6758, %v6750
        %v8935 = vpack.c.b16 %v6759, %v6751
        %v8936 = vpack.c.b16 %v6760, %v6752
        %v8937 = vpack.c.b16 %v6761, %v6753
        %v8938 = vpack.c.b16 %v6762, %v6754
        %v8939 = vpack.c.b16 %v6763, %v6755
        %v8940 = vpack.c.b16 %v6772, %v6764
        %v8941 = vpack.c.b16 %v6773, %v6765
        %v8942 = vpack.c.b16 %v6774, %v6766
        %v8943 = vpack.c.b16 %v6775, %v6767
        %v8944 = vpack.c.b16 %v6776, %v6768
        %v8945 = vpack.c.b16 %v6777, %v6769
        %v8946 = vpack.c.b16 %v6778, %v6770
        %v8947 = vpack.c.b16 %v6779, %v6771
        %v8948 = vpack.c.b16 %v6788, %v6780
        %v8949 = vpack.c.b16 %v6789, %v6781
        %v8950 = vpack.c.b16 %v6790, %v6782
        %v8951 = vpack.c.b16 %v6791, %v6783
        %v8952 = vpack.c.b16 %v6792, %v6784
        %v8953 = vpack.c.b16 %v6793, %v6785
        %v8954 = vpack.c.b16 %v6794, %v6786
        %v8955 = vpack.c.b16 %v6795, %v6787
        %v8956 = vpack.c.b16 %v6804, %v6796
        %v8957 = vpack.c.b16 %v6805, %v6797
        %v8958 = vpack.c.b16 %v6806, %v6798
        %v8959 = vpack.c.b16 %v6807, %v6799
        %v8960 = vpack.c.b16 %v6808, %v6800
        %v8961 = vpack.c.b16 %v6809, %v6801
        %v8962 = vpack.c.b16 %v6810, %v6802
        %v8963 = vpack.c.b16 %v6811, %v6803
        %v8964 = vpack.c.b16 %v6820, %v6812
        %v8965 = vpack.c.b16 %v6821, %v6813
        %v8966 = vpack.c.b16 %v6822, %v6814
        %v8967 = vpack.c.b16 %v6823, %v6815
        %v8968 = vpack.c.b16 %v6824, %v6816
        %v8969 = vpack.c.b16 %v6825, %v6817
        %v8970 = vpack.c.b16 %v6826, %v6818
        %v8971 = vpack.c.b16 %v6827, %v6819
        %v8972 = vpack.c.b16 %v6836, %v6828
        %v8973 = vpack.c.b16 %v6837, %v6829
        %v8974 = vpack.c.b16 %v6838, %v6830
        %v8975 = vpack.c.b16 %v6839, %v6831
        %v8976 = vpack.c.b16 %v6840, %v6832
        %v8977 = vpack.c.b16 %v6841, %v6833
        %v8978 = vpack.c.b16 %v6842, %v6834
        %v8979 = vpack.c.b16 %v6843, %v6835
        %v8980 = vpack.c.b16 %v6852, %v6844
        %v8981 = vpack.c.b16 %v6853, %v6845
        %v8982 = vpack.c.b16 %v6854, %v6846
        %v8983 = vpack.c.b16 %v6855, %v6847
        %v8984 = vpack.c.b16 %v6856, %v6848
        %v8985 = vpack.c.b16 %v6857, %v6849
        %v8986 = vpack.c.b16 %v6858, %v6850
        %v8987 = vpack.c.b16 %v6859, %v6851
        %v8988 = vpack.c.b16 %v6868, %v6860
        %v8989 = vpack.c.b16 %v6869, %v6861
        %v8990 = vpack.c.b16 %v6870, %v6862
        %v8991 = vpack.c.b16 %v6871, %v6863
        %v8992 = vpack.c.b16 %v6872, %v6864
        %v8993 = vpack.c.b16 %v6873, %v6865
        %v8994 = vpack.c.b16 %v6874, %v6866
        %v8995 = vpack.c.b16 %v6875, %v6867
        %v8996 = vpack.c.b16 %v6884, %v6876
        %v8997 = vpack.c.b16 %v6885, %v6877
        %v8998 = vpack.c.b16 %v6886, %v6878
        %v8999 = vpack.c.b16 %v6887, %v6879
        %v9000 = vpack.c.b16 %v6888, %v6880
        %v9001 = vpack.c.b16 %v6889, %v6881
        %v9002 = vpack.c.b16 %v6890, %v6882
        %v9003 = vpack.c.b16 %v6891, %v6883
        %v9004 = vpack.c.b16 %v6900, %v6892
        %v9005 = vpack.c.b16 %v6901, %v6893
        %v9006 = vpack.c.b16 %v6902, %v6894
        %v9007 = vpack.c.b16 %v6903, %v6895
        %v9008 = vpack.c.b16 %v6904, %v6896
        %v9009 = vpack.c.b16 %v6905, %v6897
        %v9010 = vpack.c.b16 %v6906, %v6898
        %v9011 = vpack.c.b16 %v6907, %v6899
        %v9012 = vpack.c.b16 %v6916, %v6908
        %v9013 = vpack.c.b16 %v6917, %v6909
        %v9014 = vpack.c.b16 %v6918, %v6910
        %v9015 = vpack.c.b16 %v6919, %v6911
        %v9016 = vpack.c.b16 %v6920, %v6912
        %v9017 = vpack.c.b16 %v6921, %v6913
        %v9018 = vpack.c.b16 %v6922, %v6914
        %v9019 = vpack.c.b16 %v6923, %v6915
        %v9020 = vpack.c.b16 %v6932, %v6924
        %v9021 = vpack.c.b16 %v6933, %v6925
        %v9022 = vpack.c.b16 %v6934, %v6926
        %v9023 = vpack.c.b16 %v6935, %v6927
        %v9024 = vpack.c.b16 %v6936, %v6928
        %v9025 = vpack.c.b16 %v6937, %v6929
        %v9026 = vpack.c.b16 %v6938, %v6930
        %v9027 = vpack.c.b16 %v6939, %v6931
        %v9028 = vpack.c.b16 %v6948, %v6940
        %v9029 = vpack.c.b16 %v6949, %v6941
        %v9030 = vpack.c.b16 %v6950, %v6942
        %v9031 = vpack.c.b16 %v6951, %v6943
        %v9032 = vpack.c.b16 %v6952, %v6944
        %v9033 = vpack.c.b16 %v6953, %v6945
        %v9034 = vpack.c.b16 %v6954, %v6946
        %v9035 = vpack.c.b16 %v6955, %v6947
        %v9036 = vpack.c.b16 %v6964, %v6956
        %v9037 = vpack.c.b16 %v6965, %v6957
        %v9038 = vpack.c.b16 %v6966, %v6958
        %v9039 = vpack.c.b16 %v6967, %v6959
        %v9040 = vpack.c.b16 %v6968, %v6960
        %v9041 = vpack.c.b16 %v6969, %v6961
        %v9042 = vpack.c.b16 %v6970, %v6962
        %v9043 = vpack.c.b16 %v6971, %v6963
        %v9044 = vpack.c.b16 %v6980, %v6972
        %v9045 = vpack.c.b16 %v6981, %v6973
        %v9046 = vpack.c.b16 %v6982, %v6974
        %v9047 = vpack.c.b16 %v6983, %v6975
        %v9048 = vpack.c.b16 %v6984, %v6976
        %v9049 = vpack.c.b16 %v6985, %v6977
        %v9050 = vpack.c.b16 %v6986, %v6978
        %v9051 = vpack.c.b16 %v6987, %v6979
        %v9052 = vpack.c.b16 %v6996, %v6988
        %v9053 = vpack.c.b16 %v6997, %v6989
        %v9054 = vpack.c.b16 %v6998, %v6990
        %v9055 = vpack.c.b16 %v6999, %v6991
        %v9056 = vpack.c.b16 %v7000, %v6992
        %v9057 = vpack.c.b16 %v7001, %v6993
        %v9058 = vpack.c.b16 %v7002, %v6994
        %v9059 = vpack.c.b16 %v7003, %v6995
        %v9060 = vpack.c.b16 %v7012, %v7004
        %v9061 = vpack.c.b16 %v7013, %v7005
        %v9062 = vpack.c.b16 %v7014, %v7006
        %v9063 = vpack.c.b16 %v7015, %v7007
        %v9064 = vpack.c.b16 %v7016, %v7008
        %v9065 = vpack.c.b16 %v7017, %v7009
        %v9066 = vpack.c.b16 %v7018, %v7010
        %v9067 = vpack.c.b16 %v7019, %v7011
        %v9068 = vpack.c.b16 %v7028, %v7020
        %v9069 = vpack.c.b16 %v7029, %v7021
        %v9070 = vpack.c.b16 %v7030, %v7022
        %v9071 = vpack.c.b16 %v7031, %v7023
        %v9072 = vpack.c.b16 %v7032, %v7024
        %v9073 = vpack.c.b16 %v7033, %v7025
        %v9074 = vpack.c.b16 %v7034, %v7026
        %v9075 = vpack.c.b16 %v7035, %v7027
        %v9076 = vpack.c.b16 %v7044, %v7036
        %v9077 = vpack.c.b16 %v7045, %v7037
        %v9078 = vpack.c.b16 %v7046, %v7038
        %v9079 = vpack.c.b16 %v7047, %v7039
        %v9080 = vpack.c.b16 %v7048, %v7040
        %v9081 = vpack.c.b16 %v7049, %v7041
        %v9082 = vpack.c.b16 %v7050, %v7042
        %v9083 = vpack.c.b16 %v7051, %v7043
        %v9084 = vpack.c.b16 %v7060, %v7052
        %v9085 = vpack.c.b16 %v7061, %v7053
        %v9086 = vpack.c.b16 %v7062, %v7054
        %v9087 = vpack.c.b16 %v7063, %v7055
        %v9088 = vpack.c.b16 %v7064, %v7056
        %v9089 = vpack.c.b16 %v7065, %v7057
        %v9090 = vpack.c.b16 %v7066, %v7058
        %v9091 = vpack.c.b16 %v7067, %v7059
        %v9092 = vpack.c.b16 %v7076, %v7068
        %v9093 = vpack.c.b16 %v7077, %v7069
        %v9094 = vpack.c.b16 %v7078, %v7070
        %v9095 = vpack.c.b16 %v7079, %v7071
        %v9096 = vpack.c.b16 %v7080, %v7072
        %v9097 = vpack.c.b16 %v7081, %v7073
        %v9098 = vpack.c.b16 %v7082, %v7074
        %v9099 = vpack.c.b16 %v7083, %v7075
        %v9100 = vpack.c.b16 %v7092, %v7084
        %v9101 = vpack.c.b16 %v7093, %v7085
        %v9102 = vpack.c.b16 %v7094, %v7086
        %v9103 = vpack.c.b16 %v7095, %v7087
        %v9104 = vpack.c.b16 %v7096, %v7088
        %v9105 = vpack.c.b16 %v7097, %v7089
        %v9106 = vpack.c.b16 %v7098, %v7090
        %v9107 = vpack.c.b16 %v7099, %v7091
        %v9108 = vpack.c.b16 %v7108, %v7100
        %v9109 = vpack.c.b16 %v7109, %v7101
        %v9110 = vpack.c.b16 %v7110, %v7102
        %v9111 = vpack.c.b16 %v7111, %v7103
        %v9112 = vpack.c.b16 %v7112, %v7104
        %v9113 = vpack.c.b16 %v7113, %v7105
        %v9114 = vpack.c.b16 %v7114, %v7106
        %v9115 = vpack.c.b16 %v7115, %v7107
        %v9116 = vpack.c.b16 %v7124, %v7116
        %v9117 = vpack.c.b16 %v7125, %v7117
        %v9118 = vpack.c.b16 %v7126, %v7118
        %v9119 = vpack.c.b16 %v7127, %v7119
        %v9120 = vpack.c.b16 %v7128, %v7120
        %v9121 = vpack.c.b16 %v7129, %v7121
        %v9122 = vpack.c.b16 %v7130, %v7122
        %v9123 = vpack.c.b16 %v7131, %v7123
        %v9124 = vpack.c.b16 %v7140, %v7132
        %v9125 = vpack.c.b16 %v7141, %v7133
        %v9126 = vpack.c.b16 %v7142, %v7134
        %v9127 = vpack.c.b16 %v7143, %v7135
        %v9128 = vpack.c.b16 %v7144, %v7136
        %v9129 = vpack.c.b16 %v7145, %v7137
        %v9130 = vpack.c.b16 %v7146, %v7138
        %v9131 = vpack.c.b16 %v7147, %v7139
        %v9132 = vpack.c.b16 %v7156, %v7148
        %v9133 = vpack.c.b16 %v7157, %v7149
        %v9134 = vpack.c.b16 %v7158, %v7150
        %v9135 = vpack.c.b16 %v7159, %v7151
        %v9136 = vpack.c.b16 %v7160, %v7152
        %v9137 = vpack.c.b16 %v7161, %v7153
        %v9138 = vpack.c.b16 %v7162, %v7154
        %v9139 = vpack.c.b16 %v7163, %v7155
        %v9140 = vpack.c.b16 %v7172, %v7164
        %v9141 = vpack.c.b16 %v7173, %v7165
        %v9142 = vpack.c.b16 %v7174, %v7166
        %v9143 = vpack.c.b16 %v7175, %v7167
        %v9144 = vpack.c.b16 %v7176, %v7168
        %v9145 = vpack.c.b16 %v7177, %v7169
        %v9146 = vpack.c.b16 %v7178, %v7170
        %v9147 = vpack.c.b16 %v7179, %v7171
        %v9148 = vpack.c.b16 %v7188, %v7180
        %v9149 = vpack.c.b16 %v7189, %v7181
        %v9150 = vpack.c.b16 %v7190, %v7182
        %v9151 = vpack.c.b16 %v7191, %v7183
        %v9152 = vpack.c.b16 %v7192, %v7184
        %v9153 = vpack.c.b16 %v7193, %v7185
        %v9154 = vpack.c.b16 %v7194, %v7186
        %v9155 = vpack.c.b16 %v7195, %v7187
        %v9156 = vpack.c.b16 %v7204, %v7196
        %v9157 = vpack.c.b16 %v7205, %v7197
        %v9158 = vpack.c.b16 %v7206, %v7198
        %v9159 = vpack.c.b16 %v7207, %v7199
        %v9160 = vpack.c.b16 %v7208, %v7200
        %v9161 = vpack.c.b16 %v7209, %v7201
        %v9162 = vpack.c.b16 %v7210, %v7202
        %v9163 = vpack.c.b16 %v7211, %v7203
        %v9164 = vpack.c.b16 %v7220, %v7212
        %v9165 = vpack.c.b16 %v7221, %v7213
        %v9166 = vpack.c.b16 %v7222, %v7214
        %v9167 = vpack.c.b16 %v7223, %v7215
        %v9168 = vpack.c.b16 %v7224, %v7216
        %v9169 = vpack.c.b16 %v7225, %v7217
        %v9170 = vpack.c.b16 %v7226, %v7218
        %v9171 = vpack.c.b16 %v7227, %v7219
        %v9172 = vpack.c.b16 %v7236, %v7228
        %v9173 = vpack.c.b16 %v7237, %v7229
        %v9174 = vpack.c.b16 %v7238, %v7230
        %v9175 = vpack.c.b16 %v7239, %v7231
        %v9176 = vpack.c.b16 %v7240, %v7232
        %v9177 = vpack.c.b16 %v7241, %v7233
        %v9178 = vpack.c.b16 %v7242, %v7234
        %v9179 = vpack.c.b16 %v7243, %v7235
        %v9180 = vpack.c.b16 %v7252, %v7244
        %v9181 = vpack.c.b16 %v7253, %v7245
        %v9182 = vpack.c.b16 %v7254, %v7246
        %v9183 = vpack.c.b16 %v7255, %v7247
        %v9184 = vpack.c.b16 %v7256, %v7248
        %v9185 = vpack.c.b16 %v7257, %v7249
        %v9186 = vpack.c.b16 %v7258, %v7250
        %v9187 = vpack.c.b16 %v7259, %v7251
        %v9188 = vpack.c.b16 %v7268, %v7260
        %v9189 = vpack.c.b16 %v7269, %v7261
        %v9190 = vpack.c.b16 %v7270, %v7262
        %v9191 = vpack.c.b16 %v7271, %v7263
        %v9192 = vpack.c.b16 %v7272, %v7264
        %v9193 = vpack.c.b16 %v7273, %v7265
        %v9194 = vpack.c.b16 %v7274, %v7266
        %v9195 = vpack.c.b16 %v7275, %v7267
        %v9196 = vpack.c.b16 %v7284, %v7276
        %v9197 = vpack.c.b16 %v7285, %v7277
        %v9198 = vpack.c.b16 %v7286, %v7278
        %v9199 = vpack.c.b16 %v7287, %v7279
        %v9200 = vpack.c.b16 %v7288, %v7280
        %v9201 = vpack.c.b16 %v7289, %v7281
        %v9202 = vpack.c.b16 %v7290, %v7282
        %v9203 = vpack.c.b16 %v7291, %v7283
        %v9204 = vpack.c.b16 %v7300, %v7292
        %v9205 = vpack.c.b16 %v7301, %v7293
        %v9206 = vpack.c.b16 %v7302, %v7294
        %v9207 = vpack.c.b16 %v7303, %v7295
        %v9208 = vpack.c.b16 %v7304, %v7296
        %v9209 = vpack.c.b16 %v7305, %v7297
        %v9210 = vpack.c.b16 %v7306, %v7298
        %v9211 = vpack.c.b16 %v7307, %v7299
        %v9212 = vpack.c.b16 %v7316, %v7308
        %v9213 = vpack.c.b16 %v7317, %v7309
        %v9214 = vpack.c.b16 %v7318, %v7310
        %v9215 = vpack.c.b16 %v7319, %v7311
        %v9216 = vpack.c.b16 %v7320, %v7312
        %v9217 = vpack.c.b16 %v7321, %v7313
        %v9218 = vpack.c.b16 %v7322, %v7314
        %v9219 = vpack.c.b16 %v7323, %v7315
        %v9220 = vpack.c.b16 %v7332, %v7324
        %v9221 = vpack.c.b16 %v7333, %v7325
        %v9222 = vpack.c.b16 %v7334, %v7326
        %v9223 = vpack.c.b16 %v7335, %v7327
        %v9224 = vpack.c.b16 %v7336, %v7328
        %v9225 = vpack.c.b16 %v7337, %v7329
        %v9226 = vpack.c.b16 %v7338, %v7330
        %v9227 = vpack.c.b16 %v7339, %v7331
        %v9228 = vpack.c.b16 %v7348, %v7340
        %v9229 = vpack.c.b16 %v7349, %v7341
        %v9230 = vpack.c.b16 %v7350, %v7342
        %v9231 = vpack.c.b16 %v7351, %v7343
        %v9232 = vpack.c.b16 %v7352, %v7344
        %v9233 = vpack.c.b16 %v7353, %v7345
        %v9234 = vpack.c.b16 %v7354, %v7346
        %v9235 = vpack.c.b16 %v7355, %v7347
        %v9236 = vpack.c.b16 %v7364, %v7356
        %v9237 = vpack.c.b16 %v7365, %v7357
        %v9238 = vpack.c.b16 %v7366, %v7358
        %v9239 = vpack.c.b16 %v7367, %v7359
        %v9240 = vpack.c.b16 %v7368, %v7360
        %v9241 = vpack.c.b16 %v7369, %v7361
        %v9242 = vpack.c.b16 %v7370, %v7362
        %v9243 = vpack.c.b16 %v7371, %v7363
        %v9244 = vpack.c.b16 %v7380, %v7372
        %v9245 = vpack.c.b16 %v7381, %v7373
        %v9246 = vpack.c.b16 %v7382, %v7374
        %v9247 = vpack.c.b16 %v7383, %v7375
        %v9248 = vpack.c.b16 %v7384, %v7376
        %v9249 = vpack.c.b16 %v7385, %v7377
        %v9250 = vpack.c.b16 %v7386, %v7378
        %v9251 = vpack.c.b16 %v7387, %v7379
        %v9252 = vpack.c.b16 %v7396, %v7388
        %v9253 = vpack.c.b16 %v7397, %v7389
        %v9254 = vpack.c.b16 %v7398, %v7390
        %v9255 = vpack.c.b16 %v7399, %v7391
        %v9256 = vpack.c.b16 %v7400, %v7392
        %v9257 = vpack.c.b16 %v7401, %v7393
        %v9258 = vpack.c.b16 %v7402, %v7394
        %v9259 = vpack.c.b16 %v7403, %v7395
        %v9260 = vpack.c.b16 %v7412, %v7404
        %v9261 = vpack.c.b16 %v7413, %v7405
        %v9262 = vpack.c.b16 %v7414, %v7406
        %v9263 = vpack.c.b16 %v7415, %v7407
        %v9264 = vpack.c.b16 %v7416, %v7408
        %v9265 = vpack.c.b16 %v7417, %v7409
        %v9266 = vpack.c.b16 %v7418, %v7410
        %v9267 = vpack.c.b16 %v7419, %v7411
        %v9268 = vpack.c.b16 %v7428, %v7420
        %v9269 = vpack.c.b16 %v7429, %v7421
        %v9270 = vpack.c.b16 %v7430, %v7422
        %v9271 = vpack.c.b16 %v7431, %v7423
        %v9272 = vpack.c.b16 %v7432, %v7424
        %v9273 = vpack.c.b16 %v7433, %v7425
        %v9274 = vpack.c.b16 %v7434, %v7426
        %v9275 = vpack.c.b16 %v7435, %v7427
        %v9276 = vpack.c.b16 %v7444, %v7436
        %v9277 = vpack.c.b16 %v7445, %v7437
        %v9278 = vpack.c.b16 %v7446, %v7438
        %v9279 = vpack.c.b16 %v7447, %v7439
        %v9280 = vpack.c.b16 %v7448, %v7440
        %v9281 = vpack.c.b16 %v7449, %v7441
        %v9282 = vpack.c.b16 %v7450, %v7442
        %v9283 = vpack.c.b16 %v7451, %v7443
        %v9284 = vpack.c.b16 %v7460, %v7452
        %v9285 = vpack.c.b16 %v7461, %v7453
        %v9286 = vpack.c.b16 %v7462, %v7454
        %v9287 = vpack.c.b16 %v7463, %v7455
        %v9288 = vpack.c.b16 %v7464, %v7456
        %v9289 = vpack.c.b16 %v7465, %v7457
        %v9290 = vpack.c.b16 %v7466, %v7458
        %v9291 = vpack.c.b16 %v7467, %v7459
        %v9292 = vpack.c.b16 %v7476, %v7468
        %v9293 = vpack.c.b16 %v7477, %v7469
        %v9294 = vpack.c.b16 %v7478, %v7470
        %v9295 = vpack.c.b16 %v7479, %v7471
        %v9296 = vpack.c.b16 %v7480, %v7472
        %v9297 = vpack.c.b16 %v7481, %v7473
        %v9298 = vpack.c.b16 %v7482, %v7474
        %v9299 = vpack.c.b16 %v7483, %v7475
        %v9300 = vpack.c.b16 %v7492, %v7484
        %v9301 = vpack.c.b16 %v7493, %v7485
        %v9302 = vpack.c.b16 %v7494, %v7486
        %v9303 = vpack.c.b16 %v7495, %v7487
        %v9304 = vpack.c.b16 %v7496, %v7488
        %v9305 = vpack.c.b16 %v7497, %v7489
        %v9306 = vpack.c.b16 %v7498, %v7490
        %v9307 = vpack.c.b16 %v7499, %v7491
        %v9308 = vpack.c.b16 %v7508, %v7500
        %v9309 = vpack.c.b16 %v7509, %v7501
        %v9310 = vpack.c.b16 %v7510, %v7502
        %v9311 = vpack.c.b16 %v7511, %v7503
        %v9312 = vpack.c.b16 %v7512, %v7504
        %v9313 = vpack.c.b16 %v7513, %v7505
        %v9314 = vpack.c.b16 %v7514, %v7506
        %v9315 = vpack.c.b16 %v7515, %v7507
        %v9316 = vpack.c.b16 %v7524, %v7516
        %v9317 = vpack.c.b16 %v7525, %v7517
        %v9318 = vpack.c.b16 %v7526, %v7518
        %v9319 = vpack.c.b16 %v7527, %v7519
        %v9320 = vpack.c.b16 %v7528, %v7520
        %v9321 = vpack.c.b16 %v7529, %v7521
        %v9322 = vpack.c.b16 %v7530, %v7522
        %v9323 = vpack.c.b16 %v7531, %v7523
        %11116 = vmatpush.bf16.msra.mxu0 %v7588
        %11117 = vmatpush.bf16.msra.mxu0 %v7580
        %11118 = vmatpush.bf16.msra.mxu0 %v7572
        %11119 = vmatpush.bf16.msra.mxu0 %v7564
        %11120 = vmatpush.bf16.msra.mxu0 %v7556
        %11121 = vmatpush.bf16.msra.mxu0 %v7548
        %11122 = vmatpush.bf16.msra.mxu0 %v7540
        %11123 = vmatpush.bf16.msra.mxu0 %v7532
        %11124 = vmatmul.bf16.gmra.mxu0 %v2094
        %v11125 = vpop.f32.mrf.mxu0
        %v11126 = vadd.f32 0.0, %v11125
        %v11127 = vpop.f32.mrf.mxu0
        %11128 = vdwg.mxu0
        %11129 = vmatpush.bf16.msra.mxu0 %v7652
        %11130 = vmatpush.bf16.msra.mxu0 %v7644
        %11131 = vmatpush.bf16.msra.mxu0 %v7636
        %11132 = vmatpush.bf16.msra.mxu0 %v7628
        %11133 = vmatpush.bf16.msra.mxu0 %v7620
        %11134 = vmatpush.bf16.msra.mxu0 %v7612
        %11135 = vmatpush.bf16.msra.mxu0 %v7604
        %11136 = vmatpush.bf16.msra.mxu0 %v7596
        %11137 = vmatmul.bf16.gmra.mxu0 %v2095
        %v11138 = vpop.f32.mrf.mxu0
        %v11139 = vadd.f32 %v11126, %v11138
        %v11140 = vpop.f32.mrf.mxu0
        %11141 = vdwg.mxu0
        %11142 = vmatpush.bf16.msra.mxu0 %v7716
        %11143 = vmatpush.bf16.msra.mxu0 %v7708
        %11144 = vmatpush.bf16.msra.mxu0 %v7700
        %11145 = vmatpush.bf16.msra.mxu0 %v7692
        %11146 = vmatpush.bf16.msra.mxu0 %v7684
        %11147 = vmatpush.bf16.msra.mxu0 %v7676
        %11148 = vmatpush.bf16.msra.mxu0 %v7668
        %11149 = vmatpush.bf16.msra.mxu0 %v7660
        %11150 = vmatmul.bf16.gmra.mxu0 %v2096
        %v11151 = vpop.f32.mrf.mxu0
        %v11152 = vadd.f32 %v11139, %v11151
        %v11153 = vpop.f32.mrf.mxu0
        %11154 = vdwg.mxu0
        %11155 = vmatpush.bf16.msra.mxu0 %v7780
        %11156 = vmatpush.bf16.msra.mxu0 %v7772
        %11157 = vmatpush.bf16.msra.mxu0 %v7764
        %11158 = vmatpush.bf16.msra.mxu0 %v7756
        %11159 = vmatpush.bf16.msra.mxu0 %v7748
        %11160 = vmatpush.bf16.msra.mxu0 %v7740
        %11161 = vmatpush.bf16.msra.mxu0 %v7732
        %11162 = vmatpush.bf16.msra.mxu0 %v7724
        %11163 = vmatmul.bf16.gmra.mxu0 %v2097
        %v11164 = vpop.f32.mrf.mxu0
        %v11165 = vadd.f32 %v11152, %v11164
        %v11166 = vpop.f32.mrf.mxu0
        %11167 = vdwg.mxu0
        %11168 = vmatpush.bf16.msra.mxu0 %v7844
        %11169 = vmatpush.bf16.msra.mxu0 %v7836
        %11170 = vmatpush.bf16.msra.mxu0 %v7828
        %11171 = vmatpush.bf16.msra.mxu0 %v7820
        %11172 = vmatpush.bf16.msra.mxu0 %v7812
        %11173 = vmatpush.bf16.msra.mxu0 %v7804
        %11174 = vmatpush.bf16.msra.mxu0 %v7796
        %11175 = vmatpush.bf16.msra.mxu0 %v7788
        %11176 = vmatmul.bf16.gmra.mxu0 %v2098
        %v11177 = vpop.f32.mrf.mxu0
        %v11178 = vadd.f32 %v11165, %v11177
        %v11179 = vpop.f32.mrf.mxu0
        %11180 = vdwg.mxu0
        %11181 = vmatpush.bf16.msra.mxu0 %v7908
        %11182 = vmatpush.bf16.msra.mxu0 %v7900
        %11183 = vmatpush.bf16.msra.mxu0 %v7892
        %11184 = vmatpush.bf16.msra.mxu0 %v7884
        %11185 = vmatpush.bf16.msra.mxu0 %v7876
        %11186 = vmatpush.bf16.msra.mxu0 %v7868
        %11187 = vmatpush.bf16.msra.mxu0 %v7860
        %11188 = vmatpush.bf16.msra.mxu0 %v7852
        %11189 = vmatmul.bf16.gmra.mxu0 %v2099
        %v11190 = vpop.f32.mrf.mxu0
        %v11191 = vadd.f32 %v11178, %v11190
        %v11192 = vpop.f32.mrf.mxu0
        %11193 = vdwg.mxu0
        %11194 = vmatpush.bf16.msra.mxu0 %v7972
        %11195 = vmatpush.bf16.msra.mxu0 %v7964
        %11196 = vmatpush.bf16.msra.mxu0 %v7956
        %11197 = vmatpush.bf16.msra.mxu0 %v7948
        %11198 = vmatpush.bf16.msra.mxu0 %v7940
        %11199 = vmatpush.bf16.msra.mxu0 %v7932
        %11200 = vmatpush.bf16.msra.mxu0 %v7924
        %11201 = vmatpush.bf16.msra.mxu0 %v7916
        %11202 = vmatmul.bf16.gmra.mxu0 %v2100
        %v11203 = vpop.f32.mrf.mxu0
        %v11204 = vadd.f32 %v11191, %v11203
        %v11205 = vpop.f32.mrf.mxu0
        %11206 = vdwg.mxu0
        %11207 = vmatpush.bf16.msra.mxu0 %v8036
        %11208 = vmatpush.bf16.msra.mxu0 %v8028
        %11209 = vmatpush.bf16.msra.mxu0 %v8020
        %11210 = vmatpush.bf16.msra.mxu0 %v8012
        %11211 = vmatpush.bf16.msra.mxu0 %v8004
        %11212 = vmatpush.bf16.msra.mxu0 %v7996
        %11213 = vmatpush.bf16.msra.mxu0 %v7988
        %11214 = vmatpush.bf16.msra.mxu0 %v7980
        %11215 = vmatmul.bf16.gmra.mxu0 %v2101
        %v11216 = vpop.f32.mrf.mxu0
        %v11217 = vadd.f32 %v11204, %v11216
        %v11218 = vpop.f32.mrf.mxu0
        %11219 = vdwg.mxu0
        %11220 = vmatpush.bf16.msra.mxu0 %v8100
        %11221 = vmatpush.bf16.msra.mxu0 %v8092
        %11222 = vmatpush.bf16.msra.mxu0 %v8084
        %11223 = vmatpush.bf16.msra.mxu0 %v8076
        %11224 = vmatpush.bf16.msra.mxu0 %v8068
        %11225 = vmatpush.bf16.msra.mxu0 %v8060
        %11226 = vmatpush.bf16.msra.mxu0 %v8052
        %11227 = vmatpush.bf16.msra.mxu0 %v8044
        %11228 = vmatmul.bf16.gmra.mxu0 %v2104
        %v11229 = vpop.f32.mrf.mxu0
        %v11230 = vadd.f32 %v11217, %v11229
        %v11231 = vpop.f32.mrf.mxu0
        %11232 = vdwg.mxu0
        %11233 = vmatpush.bf16.msra.mxu0 %v8164
        %11234 = vmatpush.bf16.msra.mxu0 %v8156
        %11235 = vmatpush.bf16.msra.mxu0 %v8148
        %11236 = vmatpush.bf16.msra.mxu0 %v8140
        %11237 = vmatpush.bf16.msra.mxu0 %v8132
        %11238 = vmatpush.bf16.msra.mxu0 %v8124
        %11239 = vmatpush.bf16.msra.mxu0 %v8116
        %11240 = vmatpush.bf16.msra.mxu0 %v8108
        %11241 = vmatmul.bf16.gmra.mxu0 %v2105
        %v11242 = vpop.f32.mrf.mxu0
        %v11243 = vadd.f32 %v11230, %v11242
        %v11244 = vpop.f32.mrf.mxu0
        %11245 = vdwg.mxu0
        %11246 = vmatpush.bf16.msra.mxu0 %v8228
        %11247 = vmatpush.bf16.msra.mxu0 %v8220
        %11248 = vmatpush.bf16.msra.mxu0 %v8212
        %11249 = vmatpush.bf16.msra.mxu0 %v8204
        %11250 = vmatpush.bf16.msra.mxu0 %v8196
        %11251 = vmatpush.bf16.msra.mxu0 %v8188
        %11252 = vmatpush.bf16.msra.mxu0 %v8180
        %11253 = vmatpush.bf16.msra.mxu0 %v8172
        %11254 = vmatmul.bf16.gmra.mxu0 %v2106
        %v11255 = vpop.f32.mrf.mxu0
        %v11256 = vadd.f32 %v11243, %v11255
        %v11257 = vpop.f32.mrf.mxu0
        %11258 = vdwg.mxu0
        %11259 = vmatpush.bf16.msra.mxu0 %v8292
        %11260 = vmatpush.bf16.msra.mxu0 %v8284
        %11261 = vmatpush.bf16.msra.mxu0 %v8276
        %11262 = vmatpush.bf16.msra.mxu0 %v8268
        %11263 = vmatpush.bf16.msra.mxu0 %v8260
        %11264 = vmatpush.bf16.msra.mxu0 %v8252
        %11265 = vmatpush.bf16.msra.mxu0 %v8244
        %11266 = vmatpush.bf16.msra.mxu0 %v8236
        %11267 = vmatmul.bf16.gmra.mxu0 %v2107
        %v11268 = vpop.f32.mrf.mxu0
        %v11269 = vadd.f32 %v11256, %v11268
        %v11270 = vpop.f32.mrf.mxu0
        %11271 = vdwg.mxu0
        %11272 = vmatpush.bf16.msra.mxu0 %v8356
        %11273 = vmatpush.bf16.msra.mxu0 %v8348
        %11274 = vmatpush.bf16.msra.mxu0 %v8340
        %11275 = vmatpush.bf16.msra.mxu0 %v8332
        %11276 = vmatpush.bf16.msra.mxu0 %v8324
        %11277 = vmatpush.bf16.msra.mxu0 %v8316
        %11278 = vmatpush.bf16.msra.mxu0 %v8308
        %11279 = vmatpush.bf16.msra.mxu0 %v8300
        %11280 = vmatmul.bf16.gmra.mxu0 %v2108
        %v11281 = vpop.f32.mrf.mxu0
        %v11282 = vadd.f32 %v11269, %v11281
        %v11283 = vpop.f32.mrf.mxu0
        %11284 = vdwg.mxu0
        %11285 = vmatpush.bf16.msra.mxu0 %v8420
        %11286 = vmatpush.bf16.msra.mxu0 %v8412
        %11287 = vmatpush.bf16.msra.mxu0 %v8404
        %11288 = vmatpush.bf16.msra.mxu0 %v8396
        %11289 = vmatpush.bf16.msra.mxu0 %v8388
        %11290 = vmatpush.bf16.msra.mxu0 %v8380
        %11291 = vmatpush.bf16.msra.mxu0 %v8372
        %11292 = vmatpush.bf16.msra.mxu0 %v8364
        %11293 = vmatmul.bf16.gmra.mxu0 %v2109
        %v11294 = vpop.f32.mrf.mxu0
        %v11295 = vadd.f32 %v11282, %v11294
        %v11296 = vpop.f32.mrf.mxu0
        %11297 = vdwg.mxu0
        %11298 = vmatpush.bf16.msra.mxu0 %v8484
        %11299 = vmatpush.bf16.msra.mxu0 %v8476
        %11300 = vmatpush.bf16.msra.mxu0 %v8468
        %11301 = vmatpush.bf16.msra.mxu0 %v8460
        %11302 = vmatpush.bf16.msra.mxu0 %v8452
        %11303 = vmatpush.bf16.msra.mxu0 %v8444
        %11304 = vmatpush.bf16.msra.mxu0 %v8436
        %11305 = vmatpush.bf16.msra.mxu0 %v8428
        %11306 = vmatmul.bf16.gmra.mxu0 %v2110
        %v11307 = vpop.f32.mrf.mxu0
        %v11308 = vadd.f32 %v11295, %v11307
        %v11309 = vpop.f32.mrf.mxu0
        %11310 = vdwg.mxu0
        %11311 = vmatpush.bf16.msra.mxu0 %v8548
        %11312 = vmatpush.bf16.msra.mxu0 %v8540
        %11313 = vmatpush.bf16.msra.mxu0 %v8532
        %11314 = vmatpush.bf16.msra.mxu0 %v8524
        %11315 = vmatpush.bf16.msra.mxu0 %v8516
        %11316 = vmatpush.bf16.msra.mxu0 %v8508
        %11317 = vmatpush.bf16.msra.mxu0 %v8500
        %11318 = vmatpush.bf16.msra.mxu0 %v8492
        %11319 = vmatmul.bf16.gmra.mxu0 %v2111
        %v11320 = vpop.f32.mrf.mxu0
        %v11321 = vadd.f32 %v11308, %v11320
        %v11322 = vpop.f32.mrf.mxu0
        %11323 = vdwg.mxu0
        %11324 = vmatpush.bf16.msra.mxu0 %v8612
        %11325 = vmatpush.bf16.msra.mxu0 %v8604
        %11326 = vmatpush.bf16.msra.mxu0 %v8596
        %11327 = vmatpush.bf16.msra.mxu0 %v8588
        %11328 = vmatpush.bf16.msra.mxu0 %v8580
        %11329 = vmatpush.bf16.msra.mxu0 %v8572
        %11330 = vmatpush.bf16.msra.mxu0 %v8564
        %11331 = vmatpush.bf16.msra.mxu0 %v8556
        %11332 = vmatmul.bf16.gmra.mxu0 %v2114
        %v11333 = vpop.f32.mrf.mxu0
        %v11334 = vadd.f32 %v11321, %v11333
        %v11335 = vpop.f32.mrf.mxu0
        %11336 = vdwg.mxu0
        %11337 = vmatpush.bf16.msra.mxu0 %v8676
        %11338 = vmatpush.bf16.msra.mxu0 %v8668
        %11339 = vmatpush.bf16.msra.mxu0 %v8660
        %11340 = vmatpush.bf16.msra.mxu0 %v8652
        %11341 = vmatpush.bf16.msra.mxu0 %v8644
        %11342 = vmatpush.bf16.msra.mxu0 %v8636
        %11343 = vmatpush.bf16.msra.mxu0 %v8628
        %11344 = vmatpush.bf16.msra.mxu0 %v8620
        %11345 = vmatmul.bf16.gmra.mxu0 %v2115
        %v11346 = vpop.f32.mrf.mxu0
        %v11347 = vadd.f32 %v11334, %v11346
        %v11348 = vpop.f32.mrf.mxu0
        %11349 = vdwg.mxu0
        %11350 = vmatpush.bf16.msra.mxu0 %v8740
        %11351 = vmatpush.bf16.msra.mxu0 %v8732
        %11352 = vmatpush.bf16.msra.mxu0 %v8724
        %11353 = vmatpush.bf16.msra.mxu0 %v8716
        %11354 = vmatpush.bf16.msra.mxu0 %v8708
        %11355 = vmatpush.bf16.msra.mxu0 %v8700
        %11356 = vmatpush.bf16.msra.mxu0 %v8692
        %11357 = vmatpush.bf16.msra.mxu0 %v8684
        %11358 = vmatmul.bf16.gmra.mxu0 %v2116
        %v11359 = vpop.f32.mrf.mxu0
        %v11360 = vadd.f32 %v11347, %v11359
        %v11361 = vpop.f32.mrf.mxu0
        %11362 = vdwg.mxu0
        %11363 = vmatpush.bf16.msra.mxu0 %v8804
        %11364 = vmatpush.bf16.msra.mxu0 %v8796
        %11365 = vmatpush.bf16.msra.mxu0 %v8788
        %11366 = vmatpush.bf16.msra.mxu0 %v8780
        %11367 = vmatpush.bf16.msra.mxu0 %v8772
        %11368 = vmatpush.bf16.msra.mxu0 %v8764
        %11369 = vmatpush.bf16.msra.mxu0 %v8756
        %11370 = vmatpush.bf16.msra.mxu0 %v8748
        %11371 = vmatmul.bf16.gmra.mxu0 %v2117
        %v11372 = vpop.f32.mrf.mxu0
        %v11373 = vadd.f32 %v11360, %v11372
        %v11374 = vpop.f32.mrf.mxu0
        %11375 = vdwg.mxu0
        %11376 = vmatpush.bf16.msra.mxu0 %v8868
        %11377 = vmatpush.bf16.msra.mxu0 %v8860
        %11378 = vmatpush.bf16.msra.mxu0 %v8852
        %11379 = vmatpush.bf16.msra.mxu0 %v8844
        %11380 = vmatpush.bf16.msra.mxu0 %v8836
        %11381 = vmatpush.bf16.msra.mxu0 %v8828
        %11382 = vmatpush.bf16.msra.mxu0 %v8820
        %11383 = vmatpush.bf16.msra.mxu0 %v8812
        %11384 = vmatmul.bf16.gmra.mxu0 %v2118
        %v11385 = vpop.f32.mrf.mxu0
        %v11386 = vadd.f32 %v11373, %v11385
        %v11387 = vpop.f32.mrf.mxu0
        %11388 = vdwg.mxu0
        %11389 = vmatpush.bf16.msra.mxu0 %v8932
        %11390 = vmatpush.bf16.msra.mxu0 %v8924
        %11391 = vmatpush.bf16.msra.mxu0 %v8916
        %11392 = vmatpush.bf16.msra.mxu0 %v8908
        %11393 = vmatpush.bf16.msra.mxu0 %v8900
        %11394 = vmatpush.bf16.msra.mxu0 %v8892
        %11395 = vmatpush.bf16.msra.mxu0 %v8884
        %11396 = vmatpush.bf16.msra.mxu0 %v8876
        %11397 = vmatmul.bf16.gmra.mxu0 %v2119
        %v11398 = vpop.f32.mrf.mxu0
        %v11399 = vadd.f32 %v11386, %v11398
        %v11400 = vpop.f32.mrf.mxu0
        %11401 = vdwg.mxu0
        %11402 = vmatpush.bf16.msra.mxu0 %v8996
        %11403 = vmatpush.bf16.msra.mxu0 %v8988
        %11404 = vmatpush.bf16.msra.mxu0 %v8980
        %11405 = vmatpush.bf16.msra.mxu0 %v8972
        %11406 = vmatpush.bf16.msra.mxu0 %v8964
        %11407 = vmatpush.bf16.msra.mxu0 %v8956
        %11408 = vmatpush.bf16.msra.mxu0 %v8948
        %11409 = vmatpush.bf16.msra.mxu0 %v8940
        %11410 = vmatmul.bf16.gmra.mxu0 %v2120
        %v11411 = vpop.f32.mrf.mxu0
        %v11412 = vadd.f32 %v11399, %v11411
        %v11413 = vpop.f32.mrf.mxu0
        %11414 = vdwg.mxu0
        %11415 = vmatpush.bf16.msra.mxu0 %v9060
        %11416 = vmatpush.bf16.msra.mxu0 %v9052
        %11417 = vmatpush.bf16.msra.mxu0 %v9044
        %11418 = vmatpush.bf16.msra.mxu0 %v9036
        %11419 = vmatpush.bf16.msra.mxu0 %v9028
        %11420 = vmatpush.bf16.msra.mxu0 %v9020
        %11421 = vmatpush.bf16.msra.mxu0 %v9012
        %11422 = vmatpush.bf16.msra.mxu0 %v9004
        %11423 = vmatmul.bf16.gmra.mxu0 %v2121
        %v11424 = vpop.f32.mrf.mxu0
        %v11425 = vadd.f32 %v11412, %v11424
        %v11426 = vpop.f32.mrf.mxu0
        %11427 = vdwg.mxu0
        %11428 = vmatpush.bf16.msra.mxu0 %v9124
        %11429 = vmatpush.bf16.msra.mxu0 %v9116
        %11430 = vmatpush.bf16.msra.mxu0 %v9108
        %11431 = vmatpush.bf16.msra.mxu0 %v9100
        %11432 = vmatpush.bf16.msra.mxu0 %v9092
        %11433 = vmatpush.bf16.msra.mxu0 %v9084
        %11434 = vmatpush.bf16.msra.mxu0 %v9076
        %11435 = vmatpush.bf16.msra.mxu0 %v9068
        %11436 = vmatmul.bf16.gmra.mxu0 %v2124
        %v11437 = vpop.f32.mrf.mxu0
        %v11438 = vadd.f32 %v11425, %v11437
        %v11439 = vpop.f32.mrf.mxu0
        %11440 = vdwg.mxu0
        %11441 = vmatpush.bf16.msra.mxu0 %v9188
        %11442 = vmatpush.bf16.msra.mxu0 %v9180
        %11443 = vmatpush.bf16.msra.mxu0 %v9172
        %11444 = vmatpush.bf16.msra.mxu0 %v9164
        %11445 = vmatpush.bf16.msra.mxu0 %v9156
        %11446 = vmatpush.bf16.msra.mxu0 %v9148
        %11447 = vmatpush.bf16.msra.mxu0 %v9140
        %11448 = vmatpush.bf16.msra.mxu0 %v9132
        %11449 = vmatmul.bf16.gmra.mxu0 %v2125
        %v11450 = vpop.f32.mrf.mxu0
        %v11451 = vadd.f32 %v11438, %v11450
        %v11452 = vpop.f32.mrf.mxu0
        %11453 = vdwg.mxu0
        %11454 = vmatpush.bf16.msra.mxu0 %v9252
        %11455 = vmatpush.bf16.msra.mxu0 %v9244
        %11456 = vmatpush.bf16.msra.mxu0 %v9236
        %11457 = vmatpush.bf16.msra.mxu0 %v9228
        %11458 = vmatpush.bf16.msra.mxu0 %v9220
        %11459 = vmatpush.bf16.msra.mxu0 %v9212
        %11460 = vmatpush.bf16.msra.mxu0 %v9204
        %11461 = vmatpush.bf16.msra.mxu0 %v9196
        %11462 = vmatmul.bf16.gmra.mxu0 %v2126
        %v11463 = vpop.f32.mrf.mxu0
        %v11464 = vadd.f32 %v11451, %v11463
        %v11465 = vpop.f32.mrf.mxu0
        %11466 = vdwg.mxu0
        %11467 = vmatpush.bf16.msra.mxu0 %v9316
        %11468 = vmatpush.bf16.msra.mxu0 %v9308
        %11469 = vmatpush.bf16.msra.mxu0 %v9300
        %11470 = vmatpush.bf16.msra.mxu0 %v9292
        %11471 = vmatpush.bf16.msra.mxu0 %v9284
        %11472 = vmatpush.bf16.msra.mxu0 %v9276
        %11473 = vmatpush.bf16.msra.mxu0 %v9268
        %11474 = vmatpush.bf16.msra.mxu0 %v9260
        %11475 = vmatmul.bf16.gmra.mxu0 %v2127
        %v11476 = vpop.f32.mrf.mxu0
        %v11477 = vadd.f32 %v11464, %v11476
        %v11478 = vpop.f32.mrf.mxu0
        %11479 = vdwg.mxu0
        %11480 = vmatpush.bf16.msra.mxu0 %v7589
        %11481 = vmatpush.bf16.msra.mxu0 %v7581
        %11482 = vmatpush.bf16.msra.mxu0 %v7573
        %11483 = vmatpush.bf16.msra.mxu0 %v7565
        %11484 = vmatpush.bf16.msra.mxu0 %v7557
        %11485 = vmatpush.bf16.msra.mxu0 %v7549
        %11486 = vmatpush.bf16.msra.mxu0 %v7541
        %11487 = vmatpush.bf16.msra.mxu0 %v7533
        %11488 = vmatmul.bf16.gmra.mxu0 %v2094
        %v11489 = vpop.f32.mrf.mxu0
        %v11490 = vadd.f32 0.0, %v11489
        %v11491 = vpop.f32.mrf.mxu0
        %11492 = vdwg.mxu0
        %11493 = vmatpush.bf16.msra.mxu0 %v7653
        %11494 = vmatpush.bf16.msra.mxu0 %v7645
        %11495 = vmatpush.bf16.msra.mxu0 %v7637
        %11496 = vmatpush.bf16.msra.mxu0 %v7629
        %11497 = vmatpush.bf16.msra.mxu0 %v7621
        %11498 = vmatpush.bf16.msra.mxu0 %v7613
        %11499 = vmatpush.bf16.msra.mxu0 %v7605
        %11500 = vmatpush.bf16.msra.mxu0 %v7597
        %11501 = vmatmul.bf16.gmra.mxu0 %v2095
        %v11502 = vpop.f32.mrf.mxu0
        %v11503 = vadd.f32 %v11490, %v11502
        %v11504 = vpop.f32.mrf.mxu0
        %11505 = vdwg.mxu0
        %11506 = vmatpush.bf16.msra.mxu0 %v7717
        %11507 = vmatpush.bf16.msra.mxu0 %v7709
        %11508 = vmatpush.bf16.msra.mxu0 %v7701
        %11509 = vmatpush.bf16.msra.mxu0 %v7693
        %11510 = vmatpush.bf16.msra.mxu0 %v7685
        %11511 = vmatpush.bf16.msra.mxu0 %v7677
        %11512 = vmatpush.bf16.msra.mxu0 %v7669
        %11513 = vmatpush.bf16.msra.mxu0 %v7661
        %11514 = vmatmul.bf16.gmra.mxu0 %v2096
        %v11515 = vpop.f32.mrf.mxu0
        %v11516 = vadd.f32 %v11503, %v11515
        %v11517 = vpop.f32.mrf.mxu0
        %11518 = vdwg.mxu0
        %11519 = vmatpush.bf16.msra.mxu0 %v7781
        %11520 = vmatpush.bf16.msra.mxu0 %v7773
        %11521 = vmatpush.bf16.msra.mxu0 %v7765
        %11522 = vmatpush.bf16.msra.mxu0 %v7757
        %11523 = vmatpush.bf16.msra.mxu0 %v7749
        %11524 = vmatpush.bf16.msra.mxu0 %v7741
        %11525 = vmatpush.bf16.msra.mxu0 %v7733
        %11526 = vmatpush.bf16.msra.mxu0 %v7725
        %11527 = vmatmul.bf16.gmra.mxu0 %v2097
        %v11528 = vpop.f32.mrf.mxu0
        %v11529 = vadd.f32 %v11516, %v11528
        %v11530 = vpop.f32.mrf.mxu0
        %11531 = vdwg.mxu0
        %11532 = vmatpush.bf16.msra.mxu0 %v7845
        %11533 = vmatpush.bf16.msra.mxu0 %v7837
        %11534 = vmatpush.bf16.msra.mxu0 %v7829
        %11535 = vmatpush.bf16.msra.mxu0 %v7821
        %11536 = vmatpush.bf16.msra.mxu0 %v7813
        %11537 = vmatpush.bf16.msra.mxu0 %v7805
        %11538 = vmatpush.bf16.msra.mxu0 %v7797
        %11539 = vmatpush.bf16.msra.mxu0 %v7789
        %11540 = vmatmul.bf16.gmra.mxu0 %v2098
        %v11541 = vpop.f32.mrf.mxu0
        %v11542 = vadd.f32 %v11529, %v11541
        %v11543 = vpop.f32.mrf.mxu0
        %11544 = vdwg.mxu0
        %11545 = vmatpush.bf16.msra.mxu0 %v7909
        %11546 = vmatpush.bf16.msra.mxu0 %v7901
        %11547 = vmatpush.bf16.msra.mxu0 %v7893
        %11548 = vmatpush.bf16.msra.mxu0 %v7885
        %11549 = vmatpush.bf16.msra.mxu0 %v7877
        %11550 = vmatpush.bf16.msra.mxu0 %v7869
        %11551 = vmatpush.bf16.msra.mxu0 %v7861
        %11552 = vmatpush.bf16.msra.mxu0 %v7853
        %11553 = vmatmul.bf16.gmra.mxu0 %v2099
        %v11554 = vpop.f32.mrf.mxu0
        %v11555 = vadd.f32 %v11542, %v11554
        %v11556 = vpop.f32.mrf.mxu0
        %11557 = vdwg.mxu0
        %11558 = vmatpush.bf16.msra.mxu0 %v7973
        %11559 = vmatpush.bf16.msra.mxu0 %v7965
        %11560 = vmatpush.bf16.msra.mxu0 %v7957
        %11561 = vmatpush.bf16.msra.mxu0 %v7949
        %11562 = vmatpush.bf16.msra.mxu0 %v7941
        %11563 = vmatpush.bf16.msra.mxu0 %v7933
        %11564 = vmatpush.bf16.msra.mxu0 %v7925
        %11565 = vmatpush.bf16.msra.mxu0 %v7917
        %11566 = vmatmul.bf16.gmra.mxu0 %v2100
        %v11567 = vpop.f32.mrf.mxu0
        %v11568 = vadd.f32 %v11555, %v11567
        %v11569 = vpop.f32.mrf.mxu0
        %11570 = vdwg.mxu0
        %11571 = vmatpush.bf16.msra.mxu0 %v8037
        %11572 = vmatpush.bf16.msra.mxu0 %v8029
        %11573 = vmatpush.bf16.msra.mxu0 %v8021
        %11574 = vmatpush.bf16.msra.mxu0 %v8013
        %11575 = vmatpush.bf16.msra.mxu0 %v8005
        %11576 = vmatpush.bf16.msra.mxu0 %v7997
        %11577 = vmatpush.bf16.msra.mxu0 %v7989
        %11578 = vmatpush.bf16.msra.mxu0 %v7981
        %11579 = vmatmul.bf16.gmra.mxu0 %v2101
        %v11580 = vpop.f32.mrf.mxu0
        %v11581 = vadd.f32 %v11568, %v11580
        %v11582 = vpop.f32.mrf.mxu0
        %11583 = vdwg.mxu0
        %11584 = vmatpush.bf16.msra.mxu0 %v8101
        %11585 = vmatpush.bf16.msra.mxu0 %v8093
        %11586 = vmatpush.bf16.msra.mxu0 %v8085
        %11587 = vmatpush.bf16.msra.mxu0 %v8077
        %11588 = vmatpush.bf16.msra.mxu0 %v8069
        %11589 = vmatpush.bf16.msra.mxu0 %v8061
        %11590 = vmatpush.bf16.msra.mxu0 %v8053
        %11591 = vmatpush.bf16.msra.mxu0 %v8045
        %11592 = vmatmul.bf16.gmra.mxu0 %v2104
        %v11593 = vpop.f32.mrf.mxu0
        %v11594 = vadd.f32 %v11581, %v11593
        %v11595 = vpop.f32.mrf.mxu0
        %11596 = vdwg.mxu0
        %11597 = vmatpush.bf16.msra.mxu0 %v8165
        %11598 = vmatpush.bf16.msra.mxu0 %v8157
        %11599 = vmatpush.bf16.msra.mxu0 %v8149
        %11600 = vmatpush.bf16.msra.mxu0 %v8141
        %11601 = vmatpush.bf16.msra.mxu0 %v8133
        %11602 = vmatpush.bf16.msra.mxu0 %v8125
        %11603 = vmatpush.bf16.msra.mxu0 %v8117
        %11604 = vmatpush.bf16.msra.mxu0 %v8109
        %11605 = vmatmul.bf16.gmra.mxu0 %v2105
        %v11606 = vpop.f32.mrf.mxu0
        %v11607 = vadd.f32 %v11594, %v11606
        %v11608 = vpop.f32.mrf.mxu0
        %11609 = vdwg.mxu0
        %11610 = vmatpush.bf16.msra.mxu0 %v8229
        %11611 = vmatpush.bf16.msra.mxu0 %v8221
        %11612 = vmatpush.bf16.msra.mxu0 %v8213
        %11613 = vmatpush.bf16.msra.mxu0 %v8205
        %11614 = vmatpush.bf16.msra.mxu0 %v8197
        %11615 = vmatpush.bf16.msra.mxu0 %v8189
        %11616 = vmatpush.bf16.msra.mxu0 %v8181
        %11617 = vmatpush.bf16.msra.mxu0 %v8173
        %11618 = vmatmul.bf16.gmra.mxu0 %v2106
        %v11619 = vpop.f32.mrf.mxu0
        %v11620 = vadd.f32 %v11607, %v11619
        %v11621 = vpop.f32.mrf.mxu0
        %11622 = vdwg.mxu0
        %11623 = vmatpush.bf16.msra.mxu0 %v8293
        %11624 = vmatpush.bf16.msra.mxu0 %v8285
        %11625 = vmatpush.bf16.msra.mxu0 %v8277
        %11626 = vmatpush.bf16.msra.mxu0 %v8269
        %11627 = vmatpush.bf16.msra.mxu0 %v8261
        %11628 = vmatpush.bf16.msra.mxu0 %v8253
        %11629 = vmatpush.bf16.msra.mxu0 %v8245
        %11630 = vmatpush.bf16.msra.mxu0 %v8237
        %11631 = vmatmul.bf16.gmra.mxu0 %v2107
        %v11632 = vpop.f32.mrf.mxu0
        %v11633 = vadd.f32 %v11620, %v11632
        %v11634 = vpop.f32.mrf.mxu0
        %11635 = vdwg.mxu0
        %11636 = vmatpush.bf16.msra.mxu0 %v8357
        %11637 = vmatpush.bf16.msra.mxu0 %v8349
        %11638 = vmatpush.bf16.msra.mxu0 %v8341
        %11639 = vmatpush.bf16.msra.mxu0 %v8333
        %11640 = vmatpush.bf16.msra.mxu0 %v8325
        %11641 = vmatpush.bf16.msra.mxu0 %v8317
        %11642 = vmatpush.bf16.msra.mxu0 %v8309
        %11643 = vmatpush.bf16.msra.mxu0 %v8301
        %11644 = vmatmul.bf16.gmra.mxu0 %v2108
        %v11645 = vpop.f32.mrf.mxu0
        %v11646 = vadd.f32 %v11633, %v11645
        %v11647 = vpop.f32.mrf.mxu0
        %11648 = vdwg.mxu0
        %11649 = vmatpush.bf16.msra.mxu0 %v8421
        %11650 = vmatpush.bf16.msra.mxu0 %v8413
        %11651 = vmatpush.bf16.msra.mxu0 %v8405
        %11652 = vmatpush.bf16.msra.mxu0 %v8397
        %11653 = vmatpush.bf16.msra.mxu0 %v8389
        %11654 = vmatpush.bf16.msra.mxu0 %v8381
        %11655 = vmatpush.bf16.msra.mxu0 %v8373
        %11656 = vmatpush.bf16.msra.mxu0 %v8365
        %11657 = vmatmul.bf16.gmra.mxu0 %v2109
        %v11658 = vpop.f32.mrf.mxu0
        %v11659 = vadd.f32 %v11646, %v11658
        %v11660 = vpop.f32.mrf.mxu0
        %11661 = vdwg.mxu0
        %11662 = vmatpush.bf16.msra.mxu0 %v8485
        %11663 = vmatpush.bf16.msra.mxu0 %v8477
        %11664 = vmatpush.bf16.msra.mxu0 %v8469
        %11665 = vmatpush.bf16.msra.mxu0 %v8461
        %11666 = vmatpush.bf16.msra.mxu0 %v8453
        %11667 = vmatpush.bf16.msra.mxu0 %v8445
        %11668 = vmatpush.bf16.msra.mxu0 %v8437
        %11669 = vmatpush.bf16.msra.mxu0 %v8429
        %11670 = vmatmul.bf16.gmra.mxu0 %v2110
        %v11671 = vpop.f32.mrf.mxu0
        %v11672 = vadd.f32 %v11659, %v11671
        %v11673 = vpop.f32.mrf.mxu0
        %11674 = vdwg.mxu0
        %11675 = vmatpush.bf16.msra.mxu0 %v8549
        %11676 = vmatpush.bf16.msra.mxu0 %v8541
        %11677 = vmatpush.bf16.msra.mxu0 %v8533
        %11678 = vmatpush.bf16.msra.mxu0 %v8525
        %11679 = vmatpush.bf16.msra.mxu0 %v8517
        %11680 = vmatpush.bf16.msra.mxu0 %v8509
        %11681 = vmatpush.bf16.msra.mxu0 %v8501
        %11682 = vmatpush.bf16.msra.mxu0 %v8493
        %11683 = vmatmul.bf16.gmra.mxu0 %v2111
        %v11684 = vpop.f32.mrf.mxu0
        %v11685 = vadd.f32 %v11672, %v11684
        %v11686 = vpop.f32.mrf.mxu0
        %11687 = vdwg.mxu0
        %11688 = vmatpush.bf16.msra.mxu0 %v8613
        %11689 = vmatpush.bf16.msra.mxu0 %v8605
        %11690 = vmatpush.bf16.msra.mxu0 %v8597
        %11691 = vmatpush.bf16.msra.mxu0 %v8589
        %11692 = vmatpush.bf16.msra.mxu0 %v8581
        %11693 = vmatpush.bf16.msra.mxu0 %v8573
        %11694 = vmatpush.bf16.msra.mxu0 %v8565
        %11695 = vmatpush.bf16.msra.mxu0 %v8557
        %11696 = vmatmul.bf16.gmra.mxu0 %v2114
        %v11697 = vpop.f32.mrf.mxu0
        %v11698 = vadd.f32 %v11685, %v11697
        %v11699 = vpop.f32.mrf.mxu0
        %11700 = vdwg.mxu0
        %11701 = vmatpush.bf16.msra.mxu0 %v8677
        %11702 = vmatpush.bf16.msra.mxu0 %v8669
        %11703 = vmatpush.bf16.msra.mxu0 %v8661
        %11704 = vmatpush.bf16.msra.mxu0 %v8653
        %11705 = vmatpush.bf16.msra.mxu0 %v8645
        %11706 = vmatpush.bf16.msra.mxu0 %v8637
        %11707 = vmatpush.bf16.msra.mxu0 %v8629
        %11708 = vmatpush.bf16.msra.mxu0 %v8621
        %11709 = vmatmul.bf16.gmra.mxu0 %v2115
        %v11710 = vpop.f32.mrf.mxu0
        %v11711 = vadd.f32 %v11698, %v11710
        %v11712 = vpop.f32.mrf.mxu0
        %11713 = vdwg.mxu0
        %11714 = vmatpush.bf16.msra.mxu0 %v8741
        %11715 = vmatpush.bf16.msra.mxu0 %v8733
        %11716 = vmatpush.bf16.msra.mxu0 %v8725
        %11717 = vmatpush.bf16.msra.mxu0 %v8717
        %11718 = vmatpush.bf16.msra.mxu0 %v8709
        %11719 = vmatpush.bf16.msra.mxu0 %v8701
        %11720 = vmatpush.bf16.msra.mxu0 %v8693
        %11721 = vmatpush.bf16.msra.mxu0 %v8685
        %11722 = vmatmul.bf16.gmra.mxu0 %v2116
        %v11723 = vpop.f32.mrf.mxu0
        %v11724 = vadd.f32 %v11711, %v11723
        %v11725 = vpop.f32.mrf.mxu0
        %11726 = vdwg.mxu0
        %11727 = vmatpush.bf16.msra.mxu0 %v8805
        %11728 = vmatpush.bf16.msra.mxu0 %v8797
        %11729 = vmatpush.bf16.msra.mxu0 %v8789
        %11730 = vmatpush.bf16.msra.mxu0 %v8781
        %11731 = vmatpush.bf16.msra.mxu0 %v8773
        %11732 = vmatpush.bf16.msra.mxu0 %v8765
        %11733 = vmatpush.bf16.msra.mxu0 %v8757
        %11734 = vmatpush.bf16.msra.mxu0 %v8749
        %11735 = vmatmul.bf16.gmra.mxu0 %v2117
        %v11736 = vpop.f32.mrf.mxu0
        %v11737 = vadd.f32 %v11724, %v11736
        %v11738 = vpop.f32.mrf.mxu0
        %11739 = vdwg.mxu0
        %11740 = vmatpush.bf16.msra.mxu0 %v8869
        %11741 = vmatpush.bf16.msra.mxu0 %v8861
        %11742 = vmatpush.bf16.msra.mxu0 %v8853
        %11743 = vmatpush.bf16.msra.mxu0 %v8845
        %11744 = vmatpush.bf16.msra.mxu0 %v8837
        %11745 = vmatpush.bf16.msra.mxu0 %v8829
        %11746 = vmatpush.bf16.msra.mxu0 %v8821
        %11747 = vmatpush.bf16.msra.mxu0 %v8813
        %11748 = vmatmul.bf16.gmra.mxu0 %v2118
        %v11749 = vpop.f32.mrf.mxu0
        %v11750 = vadd.f32 %v11737, %v11749
        %v11751 = vpop.f32.mrf.mxu0
        %11752 = vdwg.mxu0
        %11753 = vmatpush.bf16.msra.mxu0 %v8933
        %11754 = vmatpush.bf16.msra.mxu0 %v8925
        %11755 = vmatpush.bf16.msra.mxu0 %v8917
        %11756 = vmatpush.bf16.msra.mxu0 %v8909
        %11757 = vmatpush.bf16.msra.mxu0 %v8901
        %11758 = vmatpush.bf16.msra.mxu0 %v8893
        %11759 = vmatpush.bf16.msra.mxu0 %v8885
        %11760 = vmatpush.bf16.msra.mxu0 %v8877
        %11761 = vmatmul.bf16.gmra.mxu0 %v2119
        %v11762 = vpop.f32.mrf.mxu0
        %v11763 = vadd.f32 %v11750, %v11762
        %v11764 = vpop.f32.mrf.mxu0
        %11765 = vdwg.mxu0
        %11766 = vmatpush.bf16.msra.mxu0 %v8997
        %11767 = vmatpush.bf16.msra.mxu0 %v8989
        %11768 = vmatpush.bf16.msra.mxu0 %v8981
        %11769 = vmatpush.bf16.msra.mxu0 %v8973
        %11770 = vmatpush.bf16.msra.mxu0 %v8965
        %11771 = vmatpush.bf16.msra.mxu0 %v8957
        %11772 = vmatpush.bf16.msra.mxu0 %v8949
        %11773 = vmatpush.bf16.msra.mxu0 %v8941
        %11774 = vmatmul.bf16.gmra.mxu0 %v2120
        %v11775 = vpop.f32.mrf.mxu0
        %v11776 = vadd.f32 %v11763, %v11775
        %v11777 = vpop.f32.mrf.mxu0
        %11778 = vdwg.mxu0
        %11779 = vmatpush.bf16.msra.mxu0 %v9061
        %11780 = vmatpush.bf16.msra.mxu0 %v9053
        %11781 = vmatpush.bf16.msra.mxu0 %v9045
        %11782 = vmatpush.bf16.msra.mxu0 %v9037
        %11783 = vmatpush.bf16.msra.mxu0 %v9029
        %11784 = vmatpush.bf16.msra.mxu0 %v9021
        %11785 = vmatpush.bf16.msra.mxu0 %v9013
        %11786 = vmatpush.bf16.msra.mxu0 %v9005
        %11787 = vmatmul.bf16.gmra.mxu0 %v2121
        %v11788 = vpop.f32.mrf.mxu0
        %v11789 = vadd.f32 %v11776, %v11788
        %v11790 = vpop.f32.mrf.mxu0
        %11791 = vdwg.mxu0
        %11792 = vmatpush.bf16.msra.mxu0 %v9125
        %11793 = vmatpush.bf16.msra.mxu0 %v9117
        %11794 = vmatpush.bf16.msra.mxu0 %v9109
        %11795 = vmatpush.bf16.msra.mxu0 %v9101
        %11796 = vmatpush.bf16.msra.mxu0 %v9093
        %11797 = vmatpush.bf16.msra.mxu0 %v9085
        %11798 = vmatpush.bf16.msra.mxu0 %v9077
        %11799 = vmatpush.bf16.msra.mxu0 %v9069
        %11800 = vmatmul.bf16.gmra.mxu0 %v2124
        %v11801 = vpop.f32.mrf.mxu0
        %v11802 = vadd.f32 %v11789, %v11801
        %v11803 = vpop.f32.mrf.mxu0
        %11804 = vdwg.mxu0
        %11805 = vmatpush.bf16.msra.mxu0 %v9189
        %11806 = vmatpush.bf16.msra.mxu0 %v9181
        %11807 = vmatpush.bf16.msra.mxu0 %v9173
        %11808 = vmatpush.bf16.msra.mxu0 %v9165
        %11809 = vmatpush.bf16.msra.mxu0 %v9157
        %11810 = vmatpush.bf16.msra.mxu0 %v9149
        %11811 = vmatpush.bf16.msra.mxu0 %v9141
        %11812 = vmatpush.bf16.msra.mxu0 %v9133
        %11813 = vmatmul.bf16.gmra.mxu0 %v2125
        %v11814 = vpop.f32.mrf.mxu0
        %v11815 = vadd.f32 %v11802, %v11814
        %v11816 = vpop.f32.mrf.mxu0
        %11817 = vdwg.mxu0
        %11818 = vmatpush.bf16.msra.mxu0 %v9253
        %11819 = vmatpush.bf16.msra.mxu0 %v9245
        %11820 = vmatpush.bf16.msra.mxu0 %v9237
        %11821 = vmatpush.bf16.msra.mxu0 %v9229
        %11822 = vmatpush.bf16.msra.mxu0 %v9221
        %11823 = vmatpush.bf16.msra.mxu0 %v9213
        %11824 = vmatpush.bf16.msra.mxu0 %v9205
        %11825 = vmatpush.bf16.msra.mxu0 %v9197
        %11826 = vmatmul.bf16.gmra.mxu0 %v2126
        %v11827 = vpop.f32.mrf.mxu0
        %v11828 = vadd.f32 %v11815, %v11827
        %v11829 = vpop.f32.mrf.mxu0
        %11830 = vdwg.mxu0
        %11831 = vmatpush.bf16.msra.mxu0 %v9317
        %11832 = vmatpush.bf16.msra.mxu0 %v9309
        %11833 = vmatpush.bf16.msra.mxu0 %v9301
        %11834 = vmatpush.bf16.msra.mxu0 %v9293
        %11835 = vmatpush.bf16.msra.mxu0 %v9285
        %11836 = vmatpush.bf16.msra.mxu0 %v9277
        %11837 = vmatpush.bf16.msra.mxu0 %v9269
        %11838 = vmatpush.bf16.msra.mxu0 %v9261
        %11839 = vmatmul.bf16.gmra.mxu0 %v2127
        %v11840 = vpop.f32.mrf.mxu0
        %v11841 = vadd.f32 %v11828, %v11840
        %v11842 = vpop.f32.mrf.mxu0
        %11843 = vdwg.mxu0
        %11844 = vmatpush.bf16.msra.mxu0 %v7590
        %11845 = vmatpush.bf16.msra.mxu0 %v7582
        %11846 = vmatpush.bf16.msra.mxu0 %v7574
        %11847 = vmatpush.bf16.msra.mxu0 %v7566
        %11848 = vmatpush.bf16.msra.mxu0 %v7558
        %11849 = vmatpush.bf16.msra.mxu0 %v7550
        %11850 = vmatpush.bf16.msra.mxu0 %v7542
        %11851 = vmatpush.bf16.msra.mxu0 %v7534
        %11852 = vmatmul.bf16.gmra.mxu0 %v2094
        %v11853 = vpop.f32.mrf.mxu0
        %v11854 = vadd.f32 0.0, %v11853
        %v11855 = vpop.f32.mrf.mxu0
        %11856 = vdwg.mxu0
        %11857 = vmatpush.bf16.msra.mxu0 %v7654
        %11858 = vmatpush.bf16.msra.mxu0 %v7646
        %11859 = vmatpush.bf16.msra.mxu0 %v7638
        %11860 = vmatpush.bf16.msra.mxu0 %v7630
        %11861 = vmatpush.bf16.msra.mxu0 %v7622
        %11862 = vmatpush.bf16.msra.mxu0 %v7614
        %11863 = vmatpush.bf16.msra.mxu0 %v7606
        %11864 = vmatpush.bf16.msra.mxu0 %v7598
        %11865 = vmatmul.bf16.gmra.mxu0 %v2095
        %v11866 = vpop.f32.mrf.mxu0
        %v11867 = vadd.f32 %v11854, %v11866
        %v11868 = vpop.f32.mrf.mxu0
        %11869 = vdwg.mxu0
        %11870 = vmatpush.bf16.msra.mxu0 %v7718
        %11871 = vmatpush.bf16.msra.mxu0 %v7710
        %11872 = vmatpush.bf16.msra.mxu0 %v7702
        %11873 = vmatpush.bf16.msra.mxu0 %v7694
        %11874 = vmatpush.bf16.msra.mxu0 %v7686
        %11875 = vmatpush.bf16.msra.mxu0 %v7678
        %11876 = vmatpush.bf16.msra.mxu0 %v7670
        %11877 = vmatpush.bf16.msra.mxu0 %v7662
        %11878 = vmatmul.bf16.gmra.mxu0 %v2096
        %v11879 = vpop.f32.mrf.mxu0
        %v11880 = vadd.f32 %v11867, %v11879
        %v11881 = vpop.f32.mrf.mxu0
        %11882 = vdwg.mxu0
        %11883 = vmatpush.bf16.msra.mxu0 %v7782
        %11884 = vmatpush.bf16.msra.mxu0 %v7774
        %11885 = vmatpush.bf16.msra.mxu0 %v7766
        %11886 = vmatpush.bf16.msra.mxu0 %v7758
        %11887 = vmatpush.bf16.msra.mxu0 %v7750
        %11888 = vmatpush.bf16.msra.mxu0 %v7742
        %11889 = vmatpush.bf16.msra.mxu0 %v7734
        %11890 = vmatpush.bf16.msra.mxu0 %v7726
        %11891 = vmatmul.bf16.gmra.mxu0 %v2097
        %v11892 = vpop.f32.mrf.mxu0
        %v11893 = vadd.f32 %v11880, %v11892
        %v11894 = vpop.f32.mrf.mxu0
        %11895 = vdwg.mxu0
        %11896 = vmatpush.bf16.msra.mxu0 %v7846
        %11897 = vmatpush.bf16.msra.mxu0 %v7838
        %11898 = vmatpush.bf16.msra.mxu0 %v7830
        %11899 = vmatpush.bf16.msra.mxu0 %v7822
        %11900 = vmatpush.bf16.msra.mxu0 %v7814
        %11901 = vmatpush.bf16.msra.mxu0 %v7806
        %11902 = vmatpush.bf16.msra.mxu0 %v7798
        %11903 = vmatpush.bf16.msra.mxu0 %v7790
        %11904 = vmatmul.bf16.gmra.mxu0 %v2098
        %v11905 = vpop.f32.mrf.mxu0
        %v11906 = vadd.f32 %v11893, %v11905
        %v11907 = vpop.f32.mrf.mxu0
        %11908 = vdwg.mxu0
        %11909 = vmatpush.bf16.msra.mxu0 %v7910
        %11910 = vmatpush.bf16.msra.mxu0 %v7902
        %11911 = vmatpush.bf16.msra.mxu0 %v7894
        %11912 = vmatpush.bf16.msra.mxu0 %v7886
        %11913 = vmatpush.bf16.msra.mxu0 %v7878
        %11914 = vmatpush.bf16.msra.mxu0 %v7870
        %11915 = vmatpush.bf16.msra.mxu0 %v7862
        %11916 = vmatpush.bf16.msra.mxu0 %v7854
        %11917 = vmatmul.bf16.gmra.mxu0 %v2099
        %v11918 = vpop.f32.mrf.mxu0
        %v11919 = vadd.f32 %v11906, %v11918
        %v11920 = vpop.f32.mrf.mxu0
        %11921 = vdwg.mxu0
        %11922 = vmatpush.bf16.msra.mxu0 %v7974
        %11923 = vmatpush.bf16.msra.mxu0 %v7966
        %11924 = vmatpush.bf16.msra.mxu0 %v7958
        %11925 = vmatpush.bf16.msra.mxu0 %v7950
        %11926 = vmatpush.bf16.msra.mxu0 %v7942
        %11927 = vmatpush.bf16.msra.mxu0 %v7934
        %11928 = vmatpush.bf16.msra.mxu0 %v7926
        %11929 = vmatpush.bf16.msra.mxu0 %v7918
        %11930 = vmatmul.bf16.gmra.mxu0 %v2100
        %v11931 = vpop.f32.mrf.mxu0
        %v11932 = vadd.f32 %v11919, %v11931
        %v11933 = vpop.f32.mrf.mxu0
        %11934 = vdwg.mxu0
        %11935 = vmatpush.bf16.msra.mxu0 %v8038
        %11936 = vmatpush.bf16.msra.mxu0 %v8030
        %11937 = vmatpush.bf16.msra.mxu0 %v8022
        %11938 = vmatpush.bf16.msra.mxu0 %v8014
        %11939 = vmatpush.bf16.msra.mxu0 %v8006
        %11940 = vmatpush.bf16.msra.mxu0 %v7998
        %11941 = vmatpush.bf16.msra.mxu0 %v7990
        %11942 = vmatpush.bf16.msra.mxu0 %v7982
        %11943 = vmatmul.bf16.gmra.mxu0 %v2101
        %v11944 = vpop.f32.mrf.mxu0
        %v11945 = vadd.f32 %v11932, %v11944
        %v11946 = vpop.f32.mrf.mxu0
        %11947 = vdwg.mxu0
        %11948 = vmatpush.bf16.msra.mxu0 %v8102
        %11949 = vmatpush.bf16.msra.mxu0 %v8094
        %11950 = vmatpush.bf16.msra.mxu0 %v8086
        %11951 = vmatpush.bf16.msra.mxu0 %v8078
        %11952 = vmatpush.bf16.msra.mxu0 %v8070
        %11953 = vmatpush.bf16.msra.mxu0 %v8062
        %11954 = vmatpush.bf16.msra.mxu0 %v8054
        %11955 = vmatpush.bf16.msra.mxu0 %v8046
        %11956 = vmatmul.bf16.gmra.mxu0 %v2104
        %v11957 = vpop.f32.mrf.mxu0
        %v11958 = vadd.f32 %v11945, %v11957
        %v11959 = vpop.f32.mrf.mxu0
        %11960 = vdwg.mxu0
        %11961 = vmatpush.bf16.msra.mxu0 %v8166
        %11962 = vmatpush.bf16.msra.mxu0 %v8158
        %11963 = vmatpush.bf16.msra.mxu0 %v8150
        %11964 = vmatpush.bf16.msra.mxu0 %v8142
        %11965 = vmatpush.bf16.msra.mxu0 %v8134
        %11966 = vmatpush.bf16.msra.mxu0 %v8126
        %11967 = vmatpush.bf16.msra.mxu0 %v8118
        %11968 = vmatpush.bf16.msra.mxu0 %v8110
        %11969 = vmatmul.bf16.gmra.mxu0 %v2105
        %v11970 = vpop.f32.mrf.mxu0
        %v11971 = vadd.f32 %v11958, %v11970
        %v11972 = vpop.f32.mrf.mxu0
        %11973 = vdwg.mxu0
        %11974 = vmatpush.bf16.msra.mxu0 %v8230
        %11975 = vmatpush.bf16.msra.mxu0 %v8222
        %11976 = vmatpush.bf16.msra.mxu0 %v8214
        %11977 = vmatpush.bf16.msra.mxu0 %v8206
        %11978 = vmatpush.bf16.msra.mxu0 %v8198
        %11979 = vmatpush.bf16.msra.mxu0 %v8190
        %11980 = vmatpush.bf16.msra.mxu0 %v8182
        %11981 = vmatpush.bf16.msra.mxu0 %v8174
        %11982 = vmatmul.bf16.gmra.mxu0 %v2106
        %v11983 = vpop.f32.mrf.mxu0
        %v11984 = vadd.f32 %v11971, %v11983
        %v11985 = vpop.f32.mrf.mxu0
        %11986 = vdwg.mxu0
        %11987 = vmatpush.bf16.msra.mxu0 %v8294
        %11988 = vmatpush.bf16.msra.mxu0 %v8286
        %11989 = vmatpush.bf16.msra.mxu0 %v8278
        %11990 = vmatpush.bf16.msra.mxu0 %v8270
        %11991 = vmatpush.bf16.msra.mxu0 %v8262
        %11992 = vmatpush.bf16.msra.mxu0 %v8254
        %11993 = vmatpush.bf16.msra.mxu0 %v8246
        %11994 = vmatpush.bf16.msra.mxu0 %v8238
        %11995 = vmatmul.bf16.gmra.mxu0 %v2107
        %v11996 = vpop.f32.mrf.mxu0
        %v11997 = vadd.f32 %v11984, %v11996
        %v11998 = vpop.f32.mrf.mxu0
        %11999 = vdwg.mxu0
        %12000 = vmatpush.bf16.msra.mxu0 %v8358
        %12001 = vmatpush.bf16.msra.mxu0 %v8350
        %12002 = vmatpush.bf16.msra.mxu0 %v8342
        %12003 = vmatpush.bf16.msra.mxu0 %v8334
        %12004 = vmatpush.bf16.msra.mxu0 %v8326
        %12005 = vmatpush.bf16.msra.mxu0 %v8318
        %12006 = vmatpush.bf16.msra.mxu0 %v8310
        %12007 = vmatpush.bf16.msra.mxu0 %v8302
        %12008 = vmatmul.bf16.gmra.mxu0 %v2108
        %v12009 = vpop.f32.mrf.mxu0
        %v12010 = vadd.f32 %v11997, %v12009
        %v12011 = vpop.f32.mrf.mxu0
        %12012 = vdwg.mxu0
        %12013 = vmatpush.bf16.msra.mxu0 %v8422
        %12014 = vmatpush.bf16.msra.mxu0 %v8414
        %12015 = vmatpush.bf16.msra.mxu0 %v8406
        %12016 = vmatpush.bf16.msra.mxu0 %v8398
        %12017 = vmatpush.bf16.msra.mxu0 %v8390
        %12018 = vmatpush.bf16.msra.mxu0 %v8382
        %12019 = vmatpush.bf16.msra.mxu0 %v8374
        %12020 = vmatpush.bf16.msra.mxu0 %v8366
        %12021 = vmatmul.bf16.gmra.mxu0 %v2109
        %v12022 = vpop.f32.mrf.mxu0
        %v12023 = vadd.f32 %v12010, %v12022
        %v12024 = vpop.f32.mrf.mxu0
        %12025 = vdwg.mxu0
        %12026 = vmatpush.bf16.msra.mxu0 %v8486
        %12027 = vmatpush.bf16.msra.mxu0 %v8478
        %12028 = vmatpush.bf16.msra.mxu0 %v8470
        %12029 = vmatpush.bf16.msra.mxu0 %v8462
        %12030 = vmatpush.bf16.msra.mxu0 %v8454
        %12031 = vmatpush.bf16.msra.mxu0 %v8446
        %12032 = vmatpush.bf16.msra.mxu0 %v8438
        %12033 = vmatpush.bf16.msra.mxu0 %v8430
        %12034 = vmatmul.bf16.gmra.mxu0 %v2110
        %v12035 = vpop.f32.mrf.mxu0
        %v12036 = vadd.f32 %v12023, %v12035
        %v12037 = vpop.f32.mrf.mxu0
        %12038 = vdwg.mxu0
        %12039 = vmatpush.bf16.msra.mxu0 %v8550
        %12040 = vmatpush.bf16.msra.mxu0 %v8542
        %12041 = vmatpush.bf16.msra.mxu0 %v8534
        %12042 = vmatpush.bf16.msra.mxu0 %v8526
        %12043 = vmatpush.bf16.msra.mxu0 %v8518
        %12044 = vmatpush.bf16.msra.mxu0 %v8510
        %12045 = vmatpush.bf16.msra.mxu0 %v8502
        %12046 = vmatpush.bf16.msra.mxu0 %v8494
        %12047 = vmatmul.bf16.gmra.mxu0 %v2111
        %v12048 = vpop.f32.mrf.mxu0
        %v12049 = vadd.f32 %v12036, %v12048
        %v12050 = vpop.f32.mrf.mxu0
        %12051 = vdwg.mxu0
        %12052 = vmatpush.bf16.msra.mxu0 %v8614
        %12053 = vmatpush.bf16.msra.mxu0 %v8606
        %12054 = vmatpush.bf16.msra.mxu0 %v8598
        %12055 = vmatpush.bf16.msra.mxu0 %v8590
        %12056 = vmatpush.bf16.msra.mxu0 %v8582
        %12057 = vmatpush.bf16.msra.mxu0 %v8574
        %12058 = vmatpush.bf16.msra.mxu0 %v8566
        %12059 = vmatpush.bf16.msra.mxu0 %v8558
        %12060 = vmatmul.bf16.gmra.mxu0 %v2114
        %v12061 = vpop.f32.mrf.mxu0
        %v12062 = vadd.f32 %v12049, %v12061
        %v12063 = vpop.f32.mrf.mxu0
        %12064 = vdwg.mxu0
        %12065 = vmatpush.bf16.msra.mxu0 %v8678
        %12066 = vmatpush.bf16.msra.mxu0 %v8670
        %12067 = vmatpush.bf16.msra.mxu0 %v8662
        %12068 = vmatpush.bf16.msra.mxu0 %v8654
        %12069 = vmatpush.bf16.msra.mxu0 %v8646
        %12070 = vmatpush.bf16.msra.mxu0 %v8638
        %12071 = vmatpush.bf16.msra.mxu0 %v8630
        %12072 = vmatpush.bf16.msra.mxu0 %v8622
        %12073 = vmatmul.bf16.gmra.mxu0 %v2115
        %v12074 = vpop.f32.mrf.mxu0
        %v12075 = vadd.f32 %v12062, %v12074
        %v12076 = vpop.f32.mrf.mxu0
        %12077 = vdwg.mxu0
        %12078 = vmatpush.bf16.msra.mxu0 %v8742
        %12079 = vmatpush.bf16.msra.mxu0 %v8734
        %12080 = vmatpush.bf16.msra.mxu0 %v8726
        %12081 = vmatpush.bf16.msra.mxu0 %v8718
        %12082 = vmatpush.bf16.msra.mxu0 %v8710
        %12083 = vmatpush.bf16.msra.mxu0 %v8702
        %12084 = vmatpush.bf16.msra.mxu0 %v8694
        %12085 = vmatpush.bf16.msra.mxu0 %v8686
        %12086 = vmatmul.bf16.gmra.mxu0 %v2116
        %v12087 = vpop.f32.mrf.mxu0
        %v12088 = vadd.f32 %v12075, %v12087
        %v12089 = vpop.f32.mrf.mxu0
        %12090 = vdwg.mxu0
        %12091 = vmatpush.bf16.msra.mxu0 %v8806
        %12092 = vmatpush.bf16.msra.mxu0 %v8798
        %12093 = vmatpush.bf16.msra.mxu0 %v8790
        %12094 = vmatpush.bf16.msra.mxu0 %v8782
        %12095 = vmatpush.bf16.msra.mxu0 %v8774
        %12096 = vmatpush.bf16.msra.mxu0 %v8766
        %12097 = vmatpush.bf16.msra.mxu0 %v8758
        %12098 = vmatpush.bf16.msra.mxu0 %v8750
        %12099 = vmatmul.bf16.gmra.mxu0 %v2117
        %v12100 = vpop.f32.mrf.mxu0
        %v12101 = vadd.f32 %v12088, %v12100
        %v12102 = vpop.f32.mrf.mxu0
        %12103 = vdwg.mxu0
        %12104 = vmatpush.bf16.msra.mxu0 %v8870
        %12105 = vmatpush.bf16.msra.mxu0 %v8862
        %12106 = vmatpush.bf16.msra.mxu0 %v8854
        %12107 = vmatpush.bf16.msra.mxu0 %v8846
        %12108 = vmatpush.bf16.msra.mxu0 %v8838
        %12109 = vmatpush.bf16.msra.mxu0 %v8830
        %12110 = vmatpush.bf16.msra.mxu0 %v8822
        %12111 = vmatpush.bf16.msra.mxu0 %v8814
        %12112 = vmatmul.bf16.gmra.mxu0 %v2118
        %v12113 = vpop.f32.mrf.mxu0
        %v12114 = vadd.f32 %v12101, %v12113
        %v12115 = vpop.f32.mrf.mxu0
        %12116 = vdwg.mxu0
        %12117 = vmatpush.bf16.msra.mxu0 %v8934
        %12118 = vmatpush.bf16.msra.mxu0 %v8926
        %12119 = vmatpush.bf16.msra.mxu0 %v8918
        %12120 = vmatpush.bf16.msra.mxu0 %v8910
        %12121 = vmatpush.bf16.msra.mxu0 %v8902
        %12122 = vmatpush.bf16.msra.mxu0 %v8894
        %12123 = vmatpush.bf16.msra.mxu0 %v8886
        %12124 = vmatpush.bf16.msra.mxu0 %v8878
        %12125 = vmatmul.bf16.gmra.mxu0 %v2119
        %v12126 = vpop.f32.mrf.mxu0
        %v12127 = vadd.f32 %v12114, %v12126
        %v12128 = vpop.f32.mrf.mxu0
        %12129 = vdwg.mxu0
        %12130 = vmatpush.bf16.msra.mxu0 %v8998
        %12131 = vmatpush.bf16.msra.mxu0 %v8990
        %12132 = vmatpush.bf16.msra.mxu0 %v8982
        %12133 = vmatpush.bf16.msra.mxu0 %v8974
        %12134 = vmatpush.bf16.msra.mxu0 %v8966
        %12135 = vmatpush.bf16.msra.mxu0 %v8958
        %12136 = vmatpush.bf16.msra.mxu0 %v8950
        %12137 = vmatpush.bf16.msra.mxu0 %v8942
        %12138 = vmatmul.bf16.gmra.mxu0 %v2120
        %v12139 = vpop.f32.mrf.mxu0
        %v12140 = vadd.f32 %v12127, %v12139
        %v12141 = vpop.f32.mrf.mxu0
        %12142 = vdwg.mxu0
        %12143 = vmatpush.bf16.msra.mxu0 %v9062
        %12144 = vmatpush.bf16.msra.mxu0 %v9054
        %12145 = vmatpush.bf16.msra.mxu0 %v9046
        %12146 = vmatpush.bf16.msra.mxu0 %v9038
        %12147 = vmatpush.bf16.msra.mxu0 %v9030
        %12148 = vmatpush.bf16.msra.mxu0 %v9022
        %12149 = vmatpush.bf16.msra.mxu0 %v9014
        %12150 = vmatpush.bf16.msra.mxu0 %v9006
        %12151 = vmatmul.bf16.gmra.mxu0 %v2121
        %v12152 = vpop.f32.mrf.mxu0
        %v12153 = vadd.f32 %v12140, %v12152
        %v12154 = vpop.f32.mrf.mxu0
        %12155 = vdwg.mxu0
        %12156 = vmatpush.bf16.msra.mxu0 %v9126
        %12157 = vmatpush.bf16.msra.mxu0 %v9118
        %12158 = vmatpush.bf16.msra.mxu0 %v9110
        %12159 = vmatpush.bf16.msra.mxu0 %v9102
        %12160 = vmatpush.bf16.msra.mxu0 %v9094
        %12161 = vmatpush.bf16.msra.mxu0 %v9086
        %12162 = vmatpush.bf16.msra.mxu0 %v9078
        %12163 = vmatpush.bf16.msra.mxu0 %v9070
        %12164 = vmatmul.bf16.gmra.mxu0 %v2124
        %v12165 = vpop.f32.mrf.mxu0
        %v12166 = vadd.f32 %v12153, %v12165
        %v12167 = vpop.f32.mrf.mxu0
        %12168 = vdwg.mxu0
        %12169 = vmatpush.bf16.msra.mxu0 %v9190
        %12170 = vmatpush.bf16.msra.mxu0 %v9182
        %12171 = vmatpush.bf16.msra.mxu0 %v9174
        %12172 = vmatpush.bf16.msra.mxu0 %v9166
        %12173 = vmatpush.bf16.msra.mxu0 %v9158
        %12174 = vmatpush.bf16.msra.mxu0 %v9150
        %12175 = vmatpush.bf16.msra.mxu0 %v9142
        %12176 = vmatpush.bf16.msra.mxu0 %v9134
        %12177 = vmatmul.bf16.gmra.mxu0 %v2125
        %v12178 = vpop.f32.mrf.mxu0
        %v12179 = vadd.f32 %v12166, %v12178
        %v12180 = vpop.f32.mrf.mxu0
        %12181 = vdwg.mxu0
        %12182 = vmatpush.bf16.msra.mxu0 %v9254
        %12183 = vmatpush.bf16.msra.mxu0 %v9246
        %12184 = vmatpush.bf16.msra.mxu0 %v9238
        %12185 = vmatpush.bf16.msra.mxu0 %v9230
        %12186 = vmatpush.bf16.msra.mxu0 %v9222
        %12187 = vmatpush.bf16.msra.mxu0 %v9214
        %12188 = vmatpush.bf16.msra.mxu0 %v9206
        %12189 = vmatpush.bf16.msra.mxu0 %v9198
        %12190 = vmatmul.bf16.gmra.mxu0 %v2126
        %v12191 = vpop.f32.mrf.mxu0
        %v12192 = vadd.f32 %v12179, %v12191
        %v12193 = vpop.f32.mrf.mxu0
        %12194 = vdwg.mxu0
        %12195 = vmatpush.bf16.msra.mxu0 %v9318
        %12196 = vmatpush.bf16.msra.mxu0 %v9310
        %12197 = vmatpush.bf16.msra.mxu0 %v9302
        %12198 = vmatpush.bf16.msra.mxu0 %v9294
        %12199 = vmatpush.bf16.msra.mxu0 %v9286
        %12200 = vmatpush.bf16.msra.mxu0 %v9278
        %12201 = vmatpush.bf16.msra.mxu0 %v9270
        %12202 = vmatpush.bf16.msra.mxu0 %v9262
        %12203 = vmatmul.bf16.gmra.mxu0 %v2127
        %v12204 = vpop.f32.mrf.mxu0
        %v12205 = vadd.f32 %v12192, %v12204
        %v12206 = vpop.f32.mrf.mxu0
        %12207 = vdwg.mxu0
        %12208 = vmatpush.bf16.msra.mxu0 %v7591
        %12209 = vmatpush.bf16.msra.mxu0 %v7583
        %12210 = vmatpush.bf16.msra.mxu0 %v7575
        %12211 = vmatpush.bf16.msra.mxu0 %v7567
        %12212 = vmatpush.bf16.msra.mxu0 %v7559
        %12213 = vmatpush.bf16.msra.mxu0 %v7551
        %12214 = vmatpush.bf16.msra.mxu0 %v7543
        %12215 = vmatpush.bf16.msra.mxu0 %v7535
        %12216 = vmatmul.bf16.gmra.mxu0 %v2094
        %v12217 = vpop.f32.mrf.mxu0
        %v12218 = vadd.f32 0.0, %v12217
        %v12219 = vpop.f32.mrf.mxu0
        %12220 = vdwg.mxu0
        %12221 = vmatpush.bf16.msra.mxu0 %v7655
        %12222 = vmatpush.bf16.msra.mxu0 %v7647
        %12223 = vmatpush.bf16.msra.mxu0 %v7639
        %12224 = vmatpush.bf16.msra.mxu0 %v7631
        %12225 = vmatpush.bf16.msra.mxu0 %v7623
        %12226 = vmatpush.bf16.msra.mxu0 %v7615
        %12227 = vmatpush.bf16.msra.mxu0 %v7607
        %12228 = vmatpush.bf16.msra.mxu0 %v7599
        %12229 = vmatmul.bf16.gmra.mxu0 %v2095
        %v12230 = vpop.f32.mrf.mxu0
        %v12231 = vadd.f32 %v12218, %v12230
        %v12232 = vpop.f32.mrf.mxu0
        %12233 = vdwg.mxu0
        %12234 = vmatpush.bf16.msra.mxu0 %v7719
        %12235 = vmatpush.bf16.msra.mxu0 %v7711
        %12236 = vmatpush.bf16.msra.mxu0 %v7703
        %12237 = vmatpush.bf16.msra.mxu0 %v7695
        %12238 = vmatpush.bf16.msra.mxu0 %v7687
        %12239 = vmatpush.bf16.msra.mxu0 %v7679
        %12240 = vmatpush.bf16.msra.mxu0 %v7671
        %12241 = vmatpush.bf16.msra.mxu0 %v7663
        %12242 = vmatmul.bf16.gmra.mxu0 %v2096
        %v12243 = vpop.f32.mrf.mxu0
        %v12244 = vadd.f32 %v12231, %v12243
        %v12245 = vpop.f32.mrf.mxu0
        %12246 = vdwg.mxu0
        %12247 = vmatpush.bf16.msra.mxu0 %v7783
        %12248 = vmatpush.bf16.msra.mxu0 %v7775
        %12249 = vmatpush.bf16.msra.mxu0 %v7767
        %12250 = vmatpush.bf16.msra.mxu0 %v7759
        %12251 = vmatpush.bf16.msra.mxu0 %v7751
        %12252 = vmatpush.bf16.msra.mxu0 %v7743
        %12253 = vmatpush.bf16.msra.mxu0 %v7735
        %12254 = vmatpush.bf16.msra.mxu0 %v7727
        %12255 = vmatmul.bf16.gmra.mxu0 %v2097
        %v12256 = vpop.f32.mrf.mxu0
        %v12257 = vadd.f32 %v12244, %v12256
        %v12258 = vpop.f32.mrf.mxu0
        %12259 = vdwg.mxu0
        %12260 = vmatpush.bf16.msra.mxu0 %v7847
        %12261 = vmatpush.bf16.msra.mxu0 %v7839
        %12262 = vmatpush.bf16.msra.mxu0 %v7831
        %12263 = vmatpush.bf16.msra.mxu0 %v7823
        %12264 = vmatpush.bf16.msra.mxu0 %v7815
        %12265 = vmatpush.bf16.msra.mxu0 %v7807
        %12266 = vmatpush.bf16.msra.mxu0 %v7799
        %12267 = vmatpush.bf16.msra.mxu0 %v7791
        %12268 = vmatmul.bf16.gmra.mxu0 %v2098
        %v12269 = vpop.f32.mrf.mxu0
        %v12270 = vadd.f32 %v12257, %v12269
        %v12271 = vpop.f32.mrf.mxu0
        %12272 = vdwg.mxu0
        %12273 = vmatpush.bf16.msra.mxu0 %v7911
        %12274 = vmatpush.bf16.msra.mxu0 %v7903
        %12275 = vmatpush.bf16.msra.mxu0 %v7895
        %12276 = vmatpush.bf16.msra.mxu0 %v7887
        %12277 = vmatpush.bf16.msra.mxu0 %v7879
        %12278 = vmatpush.bf16.msra.mxu0 %v7871
        %12279 = vmatpush.bf16.msra.mxu0 %v7863
        %12280 = vmatpush.bf16.msra.mxu0 %v7855
        %12281 = vmatmul.bf16.gmra.mxu0 %v2099
        %v12282 = vpop.f32.mrf.mxu0
        %v12283 = vadd.f32 %v12270, %v12282
        %v12284 = vpop.f32.mrf.mxu0
        %12285 = vdwg.mxu0
        %12286 = vmatpush.bf16.msra.mxu0 %v7975
        %12287 = vmatpush.bf16.msra.mxu0 %v7967
        %12288 = vmatpush.bf16.msra.mxu0 %v7959
        %12289 = vmatpush.bf16.msra.mxu0 %v7951
        %12290 = vmatpush.bf16.msra.mxu0 %v7943
        %12291 = vmatpush.bf16.msra.mxu0 %v7935
        %12292 = vmatpush.bf16.msra.mxu0 %v7927
        %12293 = vmatpush.bf16.msra.mxu0 %v7919
        %12294 = vmatmul.bf16.gmra.mxu0 %v2100
        %v12295 = vpop.f32.mrf.mxu0
        %v12296 = vadd.f32 %v12283, %v12295
        %v12297 = vpop.f32.mrf.mxu0
        %12298 = vdwg.mxu0
        %12299 = vmatpush.bf16.msra.mxu0 %v8039
        %12300 = vmatpush.bf16.msra.mxu0 %v8031
        %12301 = vmatpush.bf16.msra.mxu0 %v8023
        %12302 = vmatpush.bf16.msra.mxu0 %v8015
        %12303 = vmatpush.bf16.msra.mxu0 %v8007
        %12304 = vmatpush.bf16.msra.mxu0 %v7999
        %12305 = vmatpush.bf16.msra.mxu0 %v7991
        %12306 = vmatpush.bf16.msra.mxu0 %v7983
        %12307 = vmatmul.bf16.gmra.mxu0 %v2101
        %v12308 = vpop.f32.mrf.mxu0
        %v12309 = vadd.f32 %v12296, %v12308
        %v12310 = vpop.f32.mrf.mxu0
        %12311 = vdwg.mxu0
        %12312 = vmatpush.bf16.msra.mxu0 %v8103
        %12313 = vmatpush.bf16.msra.mxu0 %v8095
        %12314 = vmatpush.bf16.msra.mxu0 %v8087
        %12315 = vmatpush.bf16.msra.mxu0 %v8079
        %12316 = vmatpush.bf16.msra.mxu0 %v8071
        %12317 = vmatpush.bf16.msra.mxu0 %v8063
        %12318 = vmatpush.bf16.msra.mxu0 %v8055
        %12319 = vmatpush.bf16.msra.mxu0 %v8047
        %12320 = vmatmul.bf16.gmra.mxu0 %v2104
        %v12321 = vpop.f32.mrf.mxu0
        %v12322 = vadd.f32 %v12309, %v12321
        %v12323 = vpop.f32.mrf.mxu0
        %12324 = vdwg.mxu0
        %12325 = vmatpush.bf16.msra.mxu0 %v8167
        %12326 = vmatpush.bf16.msra.mxu0 %v8159
        %12327 = vmatpush.bf16.msra.mxu0 %v8151
        %12328 = vmatpush.bf16.msra.mxu0 %v8143
        %12329 = vmatpush.bf16.msra.mxu0 %v8135
        %12330 = vmatpush.bf16.msra.mxu0 %v8127
        %12331 = vmatpush.bf16.msra.mxu0 %v8119
        %12332 = vmatpush.bf16.msra.mxu0 %v8111
        %12333 = vmatmul.bf16.gmra.mxu0 %v2105
        %v12334 = vpop.f32.mrf.mxu0
        %v12335 = vadd.f32 %v12322, %v12334
        %v12336 = vpop.f32.mrf.mxu0
        %12337 = vdwg.mxu0
        %12338 = vmatpush.bf16.msra.mxu0 %v8231
        %12339 = vmatpush.bf16.msra.mxu0 %v8223
        %12340 = vmatpush.bf16.msra.mxu0 %v8215
        %12341 = vmatpush.bf16.msra.mxu0 %v8207
        %12342 = vmatpush.bf16.msra.mxu0 %v8199
        %12343 = vmatpush.bf16.msra.mxu0 %v8191
        %12344 = vmatpush.bf16.msra.mxu0 %v8183
        %12345 = vmatpush.bf16.msra.mxu0 %v8175
        %12346 = vmatmul.bf16.gmra.mxu0 %v2106
        %v12347 = vpop.f32.mrf.mxu0
        %v12348 = vadd.f32 %v12335, %v12347
        %v12349 = vpop.f32.mrf.mxu0
        %12350 = vdwg.mxu0
        %12351 = vmatpush.bf16.msra.mxu0 %v8295
        %12352 = vmatpush.bf16.msra.mxu0 %v8287
        %12353 = vmatpush.bf16.msra.mxu0 %v8279
        %12354 = vmatpush.bf16.msra.mxu0 %v8271
        %12355 = vmatpush.bf16.msra.mxu0 %v8263
        %12356 = vmatpush.bf16.msra.mxu0 %v8255
        %12357 = vmatpush.bf16.msra.mxu0 %v8247
        %12358 = vmatpush.bf16.msra.mxu0 %v8239
        %12359 = vmatmul.bf16.gmra.mxu0 %v2107
        %v12360 = vpop.f32.mrf.mxu0
        %v12361 = vadd.f32 %v12348, %v12360
        %v12362 = vpop.f32.mrf.mxu0
        %12363 = vdwg.mxu0
        %12364 = vmatpush.bf16.msra.mxu0 %v8359
        %12365 = vmatpush.bf16.msra.mxu0 %v8351
        %12366 = vmatpush.bf16.msra.mxu0 %v8343
        %12367 = vmatpush.bf16.msra.mxu0 %v8335
        %12368 = vmatpush.bf16.msra.mxu0 %v8327
        %12369 = vmatpush.bf16.msra.mxu0 %v8319
        %12370 = vmatpush.bf16.msra.mxu0 %v8311
        %12371 = vmatpush.bf16.msra.mxu0 %v8303
        %12372 = vmatmul.bf16.gmra.mxu0 %v2108
        %v12373 = vpop.f32.mrf.mxu0
        %v12374 = vadd.f32 %v12361, %v12373
        %v12375 = vpop.f32.mrf.mxu0
        %12376 = vdwg.mxu0
        %12377 = vmatpush.bf16.msra.mxu0 %v8423
        %12378 = vmatpush.bf16.msra.mxu0 %v8415
        %12379 = vmatpush.bf16.msra.mxu0 %v8407
        %12380 = vmatpush.bf16.msra.mxu0 %v8399
        %12381 = vmatpush.bf16.msra.mxu0 %v8391
        %12382 = vmatpush.bf16.msra.mxu0 %v8383
        %12383 = vmatpush.bf16.msra.mxu0 %v8375
        %12384 = vmatpush.bf16.msra.mxu0 %v8367
        %12385 = vmatmul.bf16.gmra.mxu0 %v2109
        %v12386 = vpop.f32.mrf.mxu0
        %v12387 = vadd.f32 %v12374, %v12386
        %v12388 = vpop.f32.mrf.mxu0
        %12389 = vdwg.mxu0
        %12390 = vmatpush.bf16.msra.mxu0 %v8487
        %12391 = vmatpush.bf16.msra.mxu0 %v8479
        %12392 = vmatpush.bf16.msra.mxu0 %v8471
        %12393 = vmatpush.bf16.msra.mxu0 %v8463
        %12394 = vmatpush.bf16.msra.mxu0 %v8455
        %12395 = vmatpush.bf16.msra.mxu0 %v8447
        %12396 = vmatpush.bf16.msra.mxu0 %v8439
        %12397 = vmatpush.bf16.msra.mxu0 %v8431
        %12398 = vmatmul.bf16.gmra.mxu0 %v2110
        %v12399 = vpop.f32.mrf.mxu0
        %v12400 = vadd.f32 %v12387, %v12399
        %v12401 = vpop.f32.mrf.mxu0
        %12402 = vdwg.mxu0
        %12403 = vmatpush.bf16.msra.mxu0 %v8551
        %12404 = vmatpush.bf16.msra.mxu0 %v8543
        %12405 = vmatpush.bf16.msra.mxu0 %v8535
        %12406 = vmatpush.bf16.msra.mxu0 %v8527
        %12407 = vmatpush.bf16.msra.mxu0 %v8519
        %12408 = vmatpush.bf16.msra.mxu0 %v8511
        %12409 = vmatpush.bf16.msra.mxu0 %v8503
        %12410 = vmatpush.bf16.msra.mxu0 %v8495
        %12411 = vmatmul.bf16.gmra.mxu0 %v2111
        %v12412 = vpop.f32.mrf.mxu0
        %v12413 = vadd.f32 %v12400, %v12412
        %v12414 = vpop.f32.mrf.mxu0
        %12415 = vdwg.mxu0
        %12416 = vmatpush.bf16.msra.mxu0 %v8615
        %12417 = vmatpush.bf16.msra.mxu0 %v8607
        %12418 = vmatpush.bf16.msra.mxu0 %v8599
        %12419 = vmatpush.bf16.msra.mxu0 %v8591
        %12420 = vmatpush.bf16.msra.mxu0 %v8583
        %12421 = vmatpush.bf16.msra.mxu0 %v8575
        %12422 = vmatpush.bf16.msra.mxu0 %v8567
        %12423 = vmatpush.bf16.msra.mxu0 %v8559
        %12424 = vmatmul.bf16.gmra.mxu0 %v2114
        %v12425 = vpop.f32.mrf.mxu0
        %v12426 = vadd.f32 %v12413, %v12425
        %v12427 = vpop.f32.mrf.mxu0
        %12428 = vdwg.mxu0
        %12429 = vmatpush.bf16.msra.mxu0 %v8679
        %12430 = vmatpush.bf16.msra.mxu0 %v8671
        %12431 = vmatpush.bf16.msra.mxu0 %v8663
        %12432 = vmatpush.bf16.msra.mxu0 %v8655
        %12433 = vmatpush.bf16.msra.mxu0 %v8647
        %12434 = vmatpush.bf16.msra.mxu0 %v8639
        %12435 = vmatpush.bf16.msra.mxu0 %v8631
        %12436 = vmatpush.bf16.msra.mxu0 %v8623
        %12437 = vmatmul.bf16.gmra.mxu0 %v2115
        %v12438 = vpop.f32.mrf.mxu0
        %v12439 = vadd.f32 %v12426, %v12438
        %v12440 = vpop.f32.mrf.mxu0
        %12441 = vdwg.mxu0
        %12442 = vmatpush.bf16.msra.mxu0 %v8743
        %12443 = vmatpush.bf16.msra.mxu0 %v8735
        %12444 = vmatpush.bf16.msra.mxu0 %v8727
        %12445 = vmatpush.bf16.msra.mxu0 %v8719
        %12446 = vmatpush.bf16.msra.mxu0 %v8711
        %12447 = vmatpush.bf16.msra.mxu0 %v8703
        %12448 = vmatpush.bf16.msra.mxu0 %v8695
        %12449 = vmatpush.bf16.msra.mxu0 %v8687
        %12450 = vmatmul.bf16.gmra.mxu0 %v2116
        %v12451 = vpop.f32.mrf.mxu0
        %v12452 = vadd.f32 %v12439, %v12451
        %v12453 = vpop.f32.mrf.mxu0
        %12454 = vdwg.mxu0
        %12455 = vmatpush.bf16.msra.mxu0 %v8807
        %12456 = vmatpush.bf16.msra.mxu0 %v8799
        %12457 = vmatpush.bf16.msra.mxu0 %v8791
        %12458 = vmatpush.bf16.msra.mxu0 %v8783
        %12459 = vmatpush.bf16.msra.mxu0 %v8775
        %12460 = vmatpush.bf16.msra.mxu0 %v8767
        %12461 = vmatpush.bf16.msra.mxu0 %v8759
        %12462 = vmatpush.bf16.msra.mxu0 %v8751
        %12463 = vmatmul.bf16.gmra.mxu0 %v2117
        %v12464 = vpop.f32.mrf.mxu0
        %v12465 = vadd.f32 %v12452, %v12464
        %v12466 = vpop.f32.mrf.mxu0
        %12467 = vdwg.mxu0
        %12468 = vmatpush.bf16.msra.mxu0 %v8871
        %12469 = vmatpush.bf16.msra.mxu0 %v8863
        %12470 = vmatpush.bf16.msra.mxu0 %v8855
        %12471 = vmatpush.bf16.msra.mxu0 %v8847
        %12472 = vmatpush.bf16.msra.mxu0 %v8839
        %12473 = vmatpush.bf16.msra.mxu0 %v8831
        %12474 = vmatpush.bf16.msra.mxu0 %v8823
        %12475 = vmatpush.bf16.msra.mxu0 %v8815
        %12476 = vmatmul.bf16.gmra.mxu0 %v2118
        %v12477 = vpop.f32.mrf.mxu0
        %v12478 = vadd.f32 %v12465, %v12477
        %v12479 = vpop.f32.mrf.mxu0
        %12480 = vdwg.mxu0
        %12481 = vmatpush.bf16.msra.mxu0 %v8935
        %12482 = vmatpush.bf16.msra.mxu0 %v8927
        %12483 = vmatpush.bf16.msra.mxu0 %v8919
        %12484 = vmatpush.bf16.msra.mxu0 %v8911
        %12485 = vmatpush.bf16.msra.mxu0 %v8903
        %12486 = vmatpush.bf16.msra.mxu0 %v8895
        %12487 = vmatpush.bf16.msra.mxu0 %v8887
        %12488 = vmatpush.bf16.msra.mxu0 %v8879
        %12489 = vmatmul.bf16.gmra.mxu0 %v2119
        %v12490 = vpop.f32.mrf.mxu0
        %v12491 = vadd.f32 %v12478, %v12490
        %v12492 = vpop.f32.mrf.mxu0
        %12493 = vdwg.mxu0
        %12494 = vmatpush.bf16.msra.mxu0 %v8999
        %12495 = vmatpush.bf16.msra.mxu0 %v8991
        %12496 = vmatpush.bf16.msra.mxu0 %v8983
        %12497 = vmatpush.bf16.msra.mxu0 %v8975
        %12498 = vmatpush.bf16.msra.mxu0 %v8967
        %12499 = vmatpush.bf16.msra.mxu0 %v8959
        %12500 = vmatpush.bf16.msra.mxu0 %v8951
        %12501 = vmatpush.bf16.msra.mxu0 %v8943
        %12502 = vmatmul.bf16.gmra.mxu0 %v2120
        %v12503 = vpop.f32.mrf.mxu0
        %v12504 = vadd.f32 %v12491, %v12503
        %v12505 = vpop.f32.mrf.mxu0
        %12506 = vdwg.mxu0
        %12507 = vmatpush.bf16.msra.mxu0 %v9063
        %12508 = vmatpush.bf16.msra.mxu0 %v9055
        %12509 = vmatpush.bf16.msra.mxu0 %v9047
        %12510 = vmatpush.bf16.msra.mxu0 %v9039
        %12511 = vmatpush.bf16.msra.mxu0 %v9031
        %12512 = vmatpush.bf16.msra.mxu0 %v9023
        %12513 = vmatpush.bf16.msra.mxu0 %v9015
        %12514 = vmatpush.bf16.msra.mxu0 %v9007
        %12515 = vmatmul.bf16.gmra.mxu0 %v2121
        %v12516 = vpop.f32.mrf.mxu0
        %v12517 = vadd.f32 %v12504, %v12516
        %v12518 = vpop.f32.mrf.mxu0
        %12519 = vdwg.mxu0
        %12520 = vmatpush.bf16.msra.mxu0 %v9127
        %12521 = vmatpush.bf16.msra.mxu0 %v9119
        %12522 = vmatpush.bf16.msra.mxu0 %v9111
        %12523 = vmatpush.bf16.msra.mxu0 %v9103
        %12524 = vmatpush.bf16.msra.mxu0 %v9095
        %12525 = vmatpush.bf16.msra.mxu0 %v9087
        %12526 = vmatpush.bf16.msra.mxu0 %v9079
        %12527 = vmatpush.bf16.msra.mxu0 %v9071
        %12528 = vmatmul.bf16.gmra.mxu0 %v2124
        %v12529 = vpop.f32.mrf.mxu0
        %v12530 = vadd.f32 %v12517, %v12529
        %v12531 = vpop.f32.mrf.mxu0
        %12532 = vdwg.mxu0
        %12533 = vmatpush.bf16.msra.mxu0 %v9191
        %12534 = vmatpush.bf16.msra.mxu0 %v9183
        %12535 = vmatpush.bf16.msra.mxu0 %v9175
        %12536 = vmatpush.bf16.msra.mxu0 %v9167
        %12537 = vmatpush.bf16.msra.mxu0 %v9159
        %12538 = vmatpush.bf16.msra.mxu0 %v9151
        %12539 = vmatpush.bf16.msra.mxu0 %v9143
        %12540 = vmatpush.bf16.msra.mxu0 %v9135
        %12541 = vmatmul.bf16.gmra.mxu0 %v2125
        %v12542 = vpop.f32.mrf.mxu0
        %v12543 = vadd.f32 %v12530, %v12542
        %v12544 = vpop.f32.mrf.mxu0
        %12545 = vdwg.mxu0
        %12546 = vmatpush.bf16.msra.mxu0 %v9255
        %12547 = vmatpush.bf16.msra.mxu0 %v9247
        %12548 = vmatpush.bf16.msra.mxu0 %v9239
        %12549 = vmatpush.bf16.msra.mxu0 %v9231
        %12550 = vmatpush.bf16.msra.mxu0 %v9223
        %12551 = vmatpush.bf16.msra.mxu0 %v9215
        %12552 = vmatpush.bf16.msra.mxu0 %v9207
        %12553 = vmatpush.bf16.msra.mxu0 %v9199
        %12554 = vmatmul.bf16.gmra.mxu0 %v2126
        %v12555 = vpop.f32.mrf.mxu0
        %v12556 = vadd.f32 %v12543, %v12555
        %v12557 = vpop.f32.mrf.mxu0
        %12558 = vdwg.mxu0
        %12559 = vmatpush.bf16.msra.mxu0 %v9319
        %12560 = vmatpush.bf16.msra.mxu0 %v9311
        %12561 = vmatpush.bf16.msra.mxu0 %v9303
        %12562 = vmatpush.bf16.msra.mxu0 %v9295
        %12563 = vmatpush.bf16.msra.mxu0 %v9287
        %12564 = vmatpush.bf16.msra.mxu0 %v9279
        %12565 = vmatpush.bf16.msra.mxu0 %v9271
        %12566 = vmatpush.bf16.msra.mxu0 %v9263
        %12567 = vmatmul.bf16.gmra.mxu0 %v2127
        %v12568 = vpop.f32.mrf.mxu0
        %v12569 = vadd.f32 %v12556, %v12568
        %v12570 = vpop.f32.mrf.mxu0
        %12571 = vdwg.mxu0
        %12572 = vmatpush.bf16.msra.mxu0 %v7592
        %12573 = vmatpush.bf16.msra.mxu0 %v7584
        %12574 = vmatpush.bf16.msra.mxu0 %v7576
        %12575 = vmatpush.bf16.msra.mxu0 %v7568
        %12576 = vmatpush.bf16.msra.mxu0 %v7560
        %12577 = vmatpush.bf16.msra.mxu0 %v7552
        %12578 = vmatpush.bf16.msra.mxu0 %v7544
        %12579 = vmatpush.bf16.msra.mxu0 %v7536
        %12580 = vmatmul.bf16.gmra.mxu0 %v2094
        %v12581 = vpop.f32.mrf.mxu0
        %v12582 = vadd.f32 0.0, %v12581
        %v12583 = vpop.f32.mrf.mxu0
        %12584 = vdwg.mxu0
        %12585 = vmatpush.bf16.msra.mxu0 %v7656
        %12586 = vmatpush.bf16.msra.mxu0 %v7648
        %12587 = vmatpush.bf16.msra.mxu0 %v7640
        %12588 = vmatpush.bf16.msra.mxu0 %v7632
        %12589 = vmatpush.bf16.msra.mxu0 %v7624
        %12590 = vmatpush.bf16.msra.mxu0 %v7616
        %12591 = vmatpush.bf16.msra.mxu0 %v7608
        %12592 = vmatpush.bf16.msra.mxu0 %v7600
        %12593 = vmatmul.bf16.gmra.mxu0 %v2095
        %v12594 = vpop.f32.mrf.mxu0
        %v12595 = vadd.f32 %v12582, %v12594
        %v12596 = vpop.f32.mrf.mxu0
        %12597 = vdwg.mxu0
        %12598 = vmatpush.bf16.msra.mxu0 %v7720
        %12599 = vmatpush.bf16.msra.mxu0 %v7712
        %12600 = vmatpush.bf16.msra.mxu0 %v7704
        %12601 = vmatpush.bf16.msra.mxu0 %v7696
        %12602 = vmatpush.bf16.msra.mxu0 %v7688
        %12603 = vmatpush.bf16.msra.mxu0 %v7680
        %12604 = vmatpush.bf16.msra.mxu0 %v7672
        %12605 = vmatpush.bf16.msra.mxu0 %v7664
        %12606 = vmatmul.bf16.gmra.mxu0 %v2096
        %v12607 = vpop.f32.mrf.mxu0
        %v12608 = vadd.f32 %v12595, %v12607
        %v12609 = vpop.f32.mrf.mxu0
        %12610 = vdwg.mxu0
        %12611 = vmatpush.bf16.msra.mxu0 %v7784
        %12612 = vmatpush.bf16.msra.mxu0 %v7776
        %12613 = vmatpush.bf16.msra.mxu0 %v7768
        %12614 = vmatpush.bf16.msra.mxu0 %v7760
        %12615 = vmatpush.bf16.msra.mxu0 %v7752
        %12616 = vmatpush.bf16.msra.mxu0 %v7744
        %12617 = vmatpush.bf16.msra.mxu0 %v7736
        %12618 = vmatpush.bf16.msra.mxu0 %v7728
        %12619 = vmatmul.bf16.gmra.mxu0 %v2097
        %v12620 = vpop.f32.mrf.mxu0
        %v12621 = vadd.f32 %v12608, %v12620
        %v12622 = vpop.f32.mrf.mxu0
        %12623 = vdwg.mxu0
        %12624 = vmatpush.bf16.msra.mxu0 %v7848
        %12625 = vmatpush.bf16.msra.mxu0 %v7840
        %12626 = vmatpush.bf16.msra.mxu0 %v7832
        %12627 = vmatpush.bf16.msra.mxu0 %v7824
        %12628 = vmatpush.bf16.msra.mxu0 %v7816
        %12629 = vmatpush.bf16.msra.mxu0 %v7808
        %12630 = vmatpush.bf16.msra.mxu0 %v7800
        %12631 = vmatpush.bf16.msra.mxu0 %v7792
        %12632 = vmatmul.bf16.gmra.mxu0 %v2098
        %v12633 = vpop.f32.mrf.mxu0
        %v12634 = vadd.f32 %v12621, %v12633
        %v12635 = vpop.f32.mrf.mxu0
        %12636 = vdwg.mxu0
        %12637 = vmatpush.bf16.msra.mxu0 %v7912
        %12638 = vmatpush.bf16.msra.mxu0 %v7904
        %12639 = vmatpush.bf16.msra.mxu0 %v7896
        %12640 = vmatpush.bf16.msra.mxu0 %v7888
        %12641 = vmatpush.bf16.msra.mxu0 %v7880
        %12642 = vmatpush.bf16.msra.mxu0 %v7872
        %12643 = vmatpush.bf16.msra.mxu0 %v7864
        %12644 = vmatpush.bf16.msra.mxu0 %v7856
        %12645 = vmatmul.bf16.gmra.mxu0 %v2099
        %v12646 = vpop.f32.mrf.mxu0
        %v12647 = vadd.f32 %v12634, %v12646
        %v12648 = vpop.f32.mrf.mxu0
        %12649 = vdwg.mxu0
        %12650 = vmatpush.bf16.msra.mxu0 %v7976
        %12651 = vmatpush.bf16.msra.mxu0 %v7968
        %12652 = vmatpush.bf16.msra.mxu0 %v7960
        %12653 = vmatpush.bf16.msra.mxu0 %v7952
        %12654 = vmatpush.bf16.msra.mxu0 %v7944
        %12655 = vmatpush.bf16.msra.mxu0 %v7936
        %12656 = vmatpush.bf16.msra.mxu0 %v7928
        %12657 = vmatpush.bf16.msra.mxu0 %v7920
        %12658 = vmatmul.bf16.gmra.mxu0 %v2100
        %v12659 = vpop.f32.mrf.mxu0
        %v12660 = vadd.f32 %v12647, %v12659
        %v12661 = vpop.f32.mrf.mxu0
        %12662 = vdwg.mxu0
        %12663 = vmatpush.bf16.msra.mxu0 %v8040
        %12664 = vmatpush.bf16.msra.mxu0 %v8032
        %12665 = vmatpush.bf16.msra.mxu0 %v8024
        %12666 = vmatpush.bf16.msra.mxu0 %v8016
        %12667 = vmatpush.bf16.msra.mxu0 %v8008
        %12668 = vmatpush.bf16.msra.mxu0 %v8000
        %12669 = vmatpush.bf16.msra.mxu0 %v7992
        %12670 = vmatpush.bf16.msra.mxu0 %v7984
        %12671 = vmatmul.bf16.gmra.mxu0 %v2101
        %v12672 = vpop.f32.mrf.mxu0
        %v12673 = vadd.f32 %v12660, %v12672
        %v12674 = vpop.f32.mrf.mxu0
        %12675 = vdwg.mxu0
        %12676 = vmatpush.bf16.msra.mxu0 %v8104
        %12677 = vmatpush.bf16.msra.mxu0 %v8096
        %12678 = vmatpush.bf16.msra.mxu0 %v8088
        %12679 = vmatpush.bf16.msra.mxu0 %v8080
        %12680 = vmatpush.bf16.msra.mxu0 %v8072
        %12681 = vmatpush.bf16.msra.mxu0 %v8064
        %12682 = vmatpush.bf16.msra.mxu0 %v8056
        %12683 = vmatpush.bf16.msra.mxu0 %v8048
        %12684 = vmatmul.bf16.gmra.mxu0 %v2104
        %v12685 = vpop.f32.mrf.mxu0
        %v12686 = vadd.f32 %v12673, %v12685
        %v12687 = vpop.f32.mrf.mxu0
        %12688 = vdwg.mxu0
        %12689 = vmatpush.bf16.msra.mxu0 %v8168
        %12690 = vmatpush.bf16.msra.mxu0 %v8160
        %12691 = vmatpush.bf16.msra.mxu0 %v8152
        %12692 = vmatpush.bf16.msra.mxu0 %v8144
        %12693 = vmatpush.bf16.msra.mxu0 %v8136
        %12694 = vmatpush.bf16.msra.mxu0 %v8128
        %12695 = vmatpush.bf16.msra.mxu0 %v8120
        %12696 = vmatpush.bf16.msra.mxu0 %v8112
        %12697 = vmatmul.bf16.gmra.mxu0 %v2105
        %v12698 = vpop.f32.mrf.mxu0
        %v12699 = vadd.f32 %v12686, %v12698
        %v12700 = vpop.f32.mrf.mxu0
        %12701 = vdwg.mxu0
        %12702 = vmatpush.bf16.msra.mxu0 %v8232
        %12703 = vmatpush.bf16.msra.mxu0 %v8224
        %12704 = vmatpush.bf16.msra.mxu0 %v8216
        %12705 = vmatpush.bf16.msra.mxu0 %v8208
        %12706 = vmatpush.bf16.msra.mxu0 %v8200
        %12707 = vmatpush.bf16.msra.mxu0 %v8192
        %12708 = vmatpush.bf16.msra.mxu0 %v8184
        %12709 = vmatpush.bf16.msra.mxu0 %v8176
        %12710 = vmatmul.bf16.gmra.mxu0 %v2106
        %v12711 = vpop.f32.mrf.mxu0
        %v12712 = vadd.f32 %v12699, %v12711
        %v12713 = vpop.f32.mrf.mxu0
        %12714 = vdwg.mxu0
        %12715 = vmatpush.bf16.msra.mxu0 %v8296
        %12716 = vmatpush.bf16.msra.mxu0 %v8288
        %12717 = vmatpush.bf16.msra.mxu0 %v8280
        %12718 = vmatpush.bf16.msra.mxu0 %v8272
        %12719 = vmatpush.bf16.msra.mxu0 %v8264
        %12720 = vmatpush.bf16.msra.mxu0 %v8256
        %12721 = vmatpush.bf16.msra.mxu0 %v8248
        %12722 = vmatpush.bf16.msra.mxu0 %v8240
        %12723 = vmatmul.bf16.gmra.mxu0 %v2107
        %v12724 = vpop.f32.mrf.mxu0
        %v12725 = vadd.f32 %v12712, %v12724
        %v12726 = vpop.f32.mrf.mxu0
        %12727 = vdwg.mxu0
        %12728 = vmatpush.bf16.msra.mxu0 %v8360
        %12729 = vmatpush.bf16.msra.mxu0 %v8352
        %12730 = vmatpush.bf16.msra.mxu0 %v8344
        %12731 = vmatpush.bf16.msra.mxu0 %v8336
        %12732 = vmatpush.bf16.msra.mxu0 %v8328
        %12733 = vmatpush.bf16.msra.mxu0 %v8320
        %12734 = vmatpush.bf16.msra.mxu0 %v8312
        %12735 = vmatpush.bf16.msra.mxu0 %v8304
        %12736 = vmatmul.bf16.gmra.mxu0 %v2108
        %v12737 = vpop.f32.mrf.mxu0
        %v12738 = vadd.f32 %v12725, %v12737
        %v12739 = vpop.f32.mrf.mxu0
        %12740 = vdwg.mxu0
        %12741 = vmatpush.bf16.msra.mxu0 %v8424
        %12742 = vmatpush.bf16.msra.mxu0 %v8416
        %12743 = vmatpush.bf16.msra.mxu0 %v8408
        %12744 = vmatpush.bf16.msra.mxu0 %v8400
        %12745 = vmatpush.bf16.msra.mxu0 %v8392
        %12746 = vmatpush.bf16.msra.mxu0 %v8384
        %12747 = vmatpush.bf16.msra.mxu0 %v8376
        %12748 = vmatpush.bf16.msra.mxu0 %v8368
        %12749 = vmatmul.bf16.gmra.mxu0 %v2109
        %v12750 = vpop.f32.mrf.mxu0
        %v12751 = vadd.f32 %v12738, %v12750
        %v12752 = vpop.f32.mrf.mxu0
        %12753 = vdwg.mxu0
        %12754 = vmatpush.bf16.msra.mxu0 %v8488
        %12755 = vmatpush.bf16.msra.mxu0 %v8480
        %12756 = vmatpush.bf16.msra.mxu0 %v8472
        %12757 = vmatpush.bf16.msra.mxu0 %v8464
        %12758 = vmatpush.bf16.msra.mxu0 %v8456
        %12759 = vmatpush.bf16.msra.mxu0 %v8448
        %12760 = vmatpush.bf16.msra.mxu0 %v8440
        %12761 = vmatpush.bf16.msra.mxu0 %v8432
        %12762 = vmatmul.bf16.gmra.mxu0 %v2110
        %v12763 = vpop.f32.mrf.mxu0
        %v12764 = vadd.f32 %v12751, %v12763
        %v12765 = vpop.f32.mrf.mxu0
        %12766 = vdwg.mxu0
        %12767 = vmatpush.bf16.msra.mxu0 %v8552
        %12768 = vmatpush.bf16.msra.mxu0 %v8544
        %12769 = vmatpush.bf16.msra.mxu0 %v8536
        %12770 = vmatpush.bf16.msra.mxu0 %v8528
        %12771 = vmatpush.bf16.msra.mxu0 %v8520
        %12772 = vmatpush.bf16.msra.mxu0 %v8512
        %12773 = vmatpush.bf16.msra.mxu0 %v8504
        %12774 = vmatpush.bf16.msra.mxu0 %v8496
        %12775 = vmatmul.bf16.gmra.mxu0 %v2111
        %v12776 = vpop.f32.mrf.mxu0
        %v12777 = vadd.f32 %v12764, %v12776
        %v12778 = vpop.f32.mrf.mxu0
        %12779 = vdwg.mxu0
        %12780 = vmatpush.bf16.msra.mxu0 %v8616
        %12781 = vmatpush.bf16.msra.mxu0 %v8608
        %12782 = vmatpush.bf16.msra.mxu0 %v8600
        %12783 = vmatpush.bf16.msra.mxu0 %v8592
        %12784 = vmatpush.bf16.msra.mxu0 %v8584
        %12785 = vmatpush.bf16.msra.mxu0 %v8576
        %12786 = vmatpush.bf16.msra.mxu0 %v8568
        %12787 = vmatpush.bf16.msra.mxu0 %v8560
        %12788 = vmatmul.bf16.gmra.mxu0 %v2114
        %v12789 = vpop.f32.mrf.mxu0
        %v12790 = vadd.f32 %v12777, %v12789
        %v12791 = vpop.f32.mrf.mxu0
        %12792 = vdwg.mxu0
        %12793 = vmatpush.bf16.msra.mxu0 %v8680
        %12794 = vmatpush.bf16.msra.mxu0 %v8672
        %12795 = vmatpush.bf16.msra.mxu0 %v8664
        %12796 = vmatpush.bf16.msra.mxu0 %v8656
        %12797 = vmatpush.bf16.msra.mxu0 %v8648
        %12798 = vmatpush.bf16.msra.mxu0 %v8640
        %12799 = vmatpush.bf16.msra.mxu0 %v8632
        %12800 = vmatpush.bf16.msra.mxu0 %v8624
        %12801 = vmatmul.bf16.gmra.mxu0 %v2115
        %v12802 = vpop.f32.mrf.mxu0
        %v12803 = vadd.f32 %v12790, %v12802
        %v12804 = vpop.f32.mrf.mxu0
        %12805 = vdwg.mxu0
        %12806 = vmatpush.bf16.msra.mxu0 %v8744
        %12807 = vmatpush.bf16.msra.mxu0 %v8736
        %12808 = vmatpush.bf16.msra.mxu0 %v8728
        %12809 = vmatpush.bf16.msra.mxu0 %v8720
        %12810 = vmatpush.bf16.msra.mxu0 %v8712
        %12811 = vmatpush.bf16.msra.mxu0 %v8704
        %12812 = vmatpush.bf16.msra.mxu0 %v8696
        %12813 = vmatpush.bf16.msra.mxu0 %v8688
        %12814 = vmatmul.bf16.gmra.mxu0 %v2116
        %v12815 = vpop.f32.mrf.mxu0
        %v12816 = vadd.f32 %v12803, %v12815
        %v12817 = vpop.f32.mrf.mxu0
        %12818 = vdwg.mxu0
        %12819 = vmatpush.bf16.msra.mxu0 %v8808
        %12820 = vmatpush.bf16.msra.mxu0 %v8800
        %12821 = vmatpush.bf16.msra.mxu0 %v8792
        %12822 = vmatpush.bf16.msra.mxu0 %v8784
        %12823 = vmatpush.bf16.msra.mxu0 %v8776
        %12824 = vmatpush.bf16.msra.mxu0 %v8768
        %12825 = vmatpush.bf16.msra.mxu0 %v8760
        %12826 = vmatpush.bf16.msra.mxu0 %v8752
        %12827 = vmatmul.bf16.gmra.mxu0 %v2117
        %v12828 = vpop.f32.mrf.mxu0
        %v12829 = vadd.f32 %v12816, %v12828
        %v12830 = vpop.f32.mrf.mxu0
        %12831 = vdwg.mxu0
        %12832 = vmatpush.bf16.msra.mxu0 %v8872
        %12833 = vmatpush.bf16.msra.mxu0 %v8864
        %12834 = vmatpush.bf16.msra.mxu0 %v8856
        %12835 = vmatpush.bf16.msra.mxu0 %v8848
        %12836 = vmatpush.bf16.msra.mxu0 %v8840
        %12837 = vmatpush.bf16.msra.mxu0 %v8832
        %12838 = vmatpush.bf16.msra.mxu0 %v8824
        %12839 = vmatpush.bf16.msra.mxu0 %v8816
        %12840 = vmatmul.bf16.gmra.mxu0 %v2118
        %v12841 = vpop.f32.mrf.mxu0
        %v12842 = vadd.f32 %v12829, %v12841
        %v12843 = vpop.f32.mrf.mxu0
        %12844 = vdwg.mxu0
        %12845 = vmatpush.bf16.msra.mxu0 %v8936
        %12846 = vmatpush.bf16.msra.mxu0 %v8928
        %12847 = vmatpush.bf16.msra.mxu0 %v8920
        %12848 = vmatpush.bf16.msra.mxu0 %v8912
        %12849 = vmatpush.bf16.msra.mxu0 %v8904
        %12850 = vmatpush.bf16.msra.mxu0 %v8896
        %12851 = vmatpush.bf16.msra.mxu0 %v8888
        %12852 = vmatpush.bf16.msra.mxu0 %v8880
        %12853 = vmatmul.bf16.gmra.mxu0 %v2119
        %v12854 = vpop.f32.mrf.mxu0
        %v12855 = vadd.f32 %v12842, %v12854
        %v12856 = vpop.f32.mrf.mxu0
        %12857 = vdwg.mxu0
        %12858 = vmatpush.bf16.msra.mxu0 %v9000
        %12859 = vmatpush.bf16.msra.mxu0 %v8992
        %12860 = vmatpush.bf16.msra.mxu0 %v8984
        %12861 = vmatpush.bf16.msra.mxu0 %v8976
        %12862 = vmatpush.bf16.msra.mxu0 %v8968
        %12863 = vmatpush.bf16.msra.mxu0 %v8960
        %12864 = vmatpush.bf16.msra.mxu0 %v8952
        %12865 = vmatpush.bf16.msra.mxu0 %v8944
        %12866 = vmatmul.bf16.gmra.mxu0 %v2120
        %v12867 = vpop.f32.mrf.mxu0
        %v12868 = vadd.f32 %v12855, %v12867
        %v12869 = vpop.f32.mrf.mxu0
        %12870 = vdwg.mxu0
        %12871 = vmatpush.bf16.msra.mxu0 %v9064
        %12872 = vmatpush.bf16.msra.mxu0 %v9056
        %12873 = vmatpush.bf16.msra.mxu0 %v9048
        %12874 = vmatpush.bf16.msra.mxu0 %v9040
        %12875 = vmatpush.bf16.msra.mxu0 %v9032
        %12876 = vmatpush.bf16.msra.mxu0 %v9024
        %12877 = vmatpush.bf16.msra.mxu0 %v9016
        %12878 = vmatpush.bf16.msra.mxu0 %v9008
        %12879 = vmatmul.bf16.gmra.mxu0 %v2121
        %v12880 = vpop.f32.mrf.mxu0
        %v12881 = vadd.f32 %v12868, %v12880
        %v12882 = vpop.f32.mrf.mxu0
        %12883 = vdwg.mxu0
        %12884 = vmatpush.bf16.msra.mxu0 %v9128
        %12885 = vmatpush.bf16.msra.mxu0 %v9120
        %12886 = vmatpush.bf16.msra.mxu0 %v9112
        %12887 = vmatpush.bf16.msra.mxu0 %v9104
        %12888 = vmatpush.bf16.msra.mxu0 %v9096
        %12889 = vmatpush.bf16.msra.mxu0 %v9088
        %12890 = vmatpush.bf16.msra.mxu0 %v9080
        %12891 = vmatpush.bf16.msra.mxu0 %v9072
        %12892 = vmatmul.bf16.gmra.mxu0 %v2124
        %v12893 = vpop.f32.mrf.mxu0
        %v12894 = vadd.f32 %v12881, %v12893
        %v12895 = vpop.f32.mrf.mxu0
        %12896 = vdwg.mxu0
        %12897 = vmatpush.bf16.msra.mxu0 %v9192
        %12898 = vmatpush.bf16.msra.mxu0 %v9184
        %12899 = vmatpush.bf16.msra.mxu0 %v9176
        %12900 = vmatpush.bf16.msra.mxu0 %v9168
        %12901 = vmatpush.bf16.msra.mxu0 %v9160
        %12902 = vmatpush.bf16.msra.mxu0 %v9152
        %12903 = vmatpush.bf16.msra.mxu0 %v9144
        %12904 = vmatpush.bf16.msra.mxu0 %v9136
        %12905 = vmatmul.bf16.gmra.mxu0 %v2125
        %v12906 = vpop.f32.mrf.mxu0
        %v12907 = vadd.f32 %v12894, %v12906
        %v12908 = vpop.f32.mrf.mxu0
        %12909 = vdwg.mxu0
        %12910 = vmatpush.bf16.msra.mxu0 %v9256
        %12911 = vmatpush.bf16.msra.mxu0 %v9248
        %12912 = vmatpush.bf16.msra.mxu0 %v9240
        %12913 = vmatpush.bf16.msra.mxu0 %v9232
        %12914 = vmatpush.bf16.msra.mxu0 %v9224
        %12915 = vmatpush.bf16.msra.mxu0 %v9216
        %12916 = vmatpush.bf16.msra.mxu0 %v9208
        %12917 = vmatpush.bf16.msra.mxu0 %v9200
        %12918 = vmatmul.bf16.gmra.mxu0 %v2126
        %v12919 = vpop.f32.mrf.mxu0
        %v12920 = vadd.f32 %v12907, %v12919
        %v12921 = vpop.f32.mrf.mxu0
        %12922 = vdwg.mxu0
        %12923 = vmatpush.bf16.msra.mxu0 %v9320
        %12924 = vmatpush.bf16.msra.mxu0 %v9312
        %12925 = vmatpush.bf16.msra.mxu0 %v9304
        %12926 = vmatpush.bf16.msra.mxu0 %v9296
        %12927 = vmatpush.bf16.msra.mxu0 %v9288
        %12928 = vmatpush.bf16.msra.mxu0 %v9280
        %12929 = vmatpush.bf16.msra.mxu0 %v9272
        %12930 = vmatpush.bf16.msra.mxu0 %v9264
        %12931 = vmatmul.bf16.gmra.mxu0 %v2127
        %v12932 = vpop.f32.mrf.mxu0
        %v12933 = vadd.f32 %v12920, %v12932
        %v12934 = vpop.f32.mrf.mxu0
        %12935 = vdwg.mxu0
        %12936 = vmatpush.bf16.msra.mxu0 %v7593
        %12937 = vmatpush.bf16.msra.mxu0 %v7585
        %12938 = vmatpush.bf16.msra.mxu0 %v7577
        %12939 = vmatpush.bf16.msra.mxu0 %v7569
        %12940 = vmatpush.bf16.msra.mxu0 %v7561
        %12941 = vmatpush.bf16.msra.mxu0 %v7553
        %12942 = vmatpush.bf16.msra.mxu0 %v7545
        %12943 = vmatpush.bf16.msra.mxu0 %v7537
        %12944 = vmatmul.bf16.gmra.mxu0 %v2094
        %v12945 = vpop.f32.mrf.mxu0
        %v12946 = vadd.f32 0.0, %v12945
        %v12947 = vpop.f32.mrf.mxu0
        %12948 = vdwg.mxu0
        %12949 = vmatpush.bf16.msra.mxu0 %v7657
        %12950 = vmatpush.bf16.msra.mxu0 %v7649
        %12951 = vmatpush.bf16.msra.mxu0 %v7641
        %12952 = vmatpush.bf16.msra.mxu0 %v7633
        %12953 = vmatpush.bf16.msra.mxu0 %v7625
        %12954 = vmatpush.bf16.msra.mxu0 %v7617
        %12955 = vmatpush.bf16.msra.mxu0 %v7609
        %12956 = vmatpush.bf16.msra.mxu0 %v7601
        %12957 = vmatmul.bf16.gmra.mxu0 %v2095
        %v12958 = vpop.f32.mrf.mxu0
        %v12959 = vadd.f32 %v12946, %v12958
        %v12960 = vpop.f32.mrf.mxu0
        %12961 = vdwg.mxu0
        %12962 = vmatpush.bf16.msra.mxu0 %v7721
        %12963 = vmatpush.bf16.msra.mxu0 %v7713
        %12964 = vmatpush.bf16.msra.mxu0 %v7705
        %12965 = vmatpush.bf16.msra.mxu0 %v7697
        %12966 = vmatpush.bf16.msra.mxu0 %v7689
        %12967 = vmatpush.bf16.msra.mxu0 %v7681
        %12968 = vmatpush.bf16.msra.mxu0 %v7673
        %12969 = vmatpush.bf16.msra.mxu0 %v7665
        %12970 = vmatmul.bf16.gmra.mxu0 %v2096
        %v12971 = vpop.f32.mrf.mxu0
        %v12972 = vadd.f32 %v12959, %v12971
        %v12973 = vpop.f32.mrf.mxu0
        %12974 = vdwg.mxu0
        %12975 = vmatpush.bf16.msra.mxu0 %v7785
        %12976 = vmatpush.bf16.msra.mxu0 %v7777
        %12977 = vmatpush.bf16.msra.mxu0 %v7769
        %12978 = vmatpush.bf16.msra.mxu0 %v7761
        %12979 = vmatpush.bf16.msra.mxu0 %v7753
        %12980 = vmatpush.bf16.msra.mxu0 %v7745
        %12981 = vmatpush.bf16.msra.mxu0 %v7737
        %12982 = vmatpush.bf16.msra.mxu0 %v7729
        %12983 = vmatmul.bf16.gmra.mxu0 %v2097
        %v12984 = vpop.f32.mrf.mxu0
        %v12985 = vadd.f32 %v12972, %v12984
        %v12986 = vpop.f32.mrf.mxu0
        %12987 = vdwg.mxu0
        %12988 = vmatpush.bf16.msra.mxu0 %v7849
        %12989 = vmatpush.bf16.msra.mxu0 %v7841
        %12990 = vmatpush.bf16.msra.mxu0 %v7833
        %12991 = vmatpush.bf16.msra.mxu0 %v7825
        %12992 = vmatpush.bf16.msra.mxu0 %v7817
        %12993 = vmatpush.bf16.msra.mxu0 %v7809
        %12994 = vmatpush.bf16.msra.mxu0 %v7801
        %12995 = vmatpush.bf16.msra.mxu0 %v7793
        %12996 = vmatmul.bf16.gmra.mxu0 %v2098
        %v12997 = vpop.f32.mrf.mxu0
        %v12998 = vadd.f32 %v12985, %v12997
        %v12999 = vpop.f32.mrf.mxu0
        %13000 = vdwg.mxu0
        %13001 = vmatpush.bf16.msra.mxu0 %v7913
        %13002 = vmatpush.bf16.msra.mxu0 %v7905
        %13003 = vmatpush.bf16.msra.mxu0 %v7897
        %13004 = vmatpush.bf16.msra.mxu0 %v7889
        %13005 = vmatpush.bf16.msra.mxu0 %v7881
        %13006 = vmatpush.bf16.msra.mxu0 %v7873
        %13007 = vmatpush.bf16.msra.mxu0 %v7865
        %13008 = vmatpush.bf16.msra.mxu0 %v7857
        %13009 = vmatmul.bf16.gmra.mxu0 %v2099
        %v13010 = vpop.f32.mrf.mxu0
        %v13011 = vadd.f32 %v12998, %v13010
        %v13012 = vpop.f32.mrf.mxu0
        %13013 = vdwg.mxu0
        %13014 = vmatpush.bf16.msra.mxu0 %v7977
        %13015 = vmatpush.bf16.msra.mxu0 %v7969
        %13016 = vmatpush.bf16.msra.mxu0 %v7961
        %13017 = vmatpush.bf16.msra.mxu0 %v7953
        %13018 = vmatpush.bf16.msra.mxu0 %v7945
        %13019 = vmatpush.bf16.msra.mxu0 %v7937
        %13020 = vmatpush.bf16.msra.mxu0 %v7929
        %13021 = vmatpush.bf16.msra.mxu0 %v7921
        %13022 = vmatmul.bf16.gmra.mxu0 %v2100
        %v13023 = vpop.f32.mrf.mxu0
        %v13024 = vadd.f32 %v13011, %v13023
        %v13025 = vpop.f32.mrf.mxu0
        %13026 = vdwg.mxu0
        %13027 = vmatpush.bf16.msra.mxu0 %v8041
        %13028 = vmatpush.bf16.msra.mxu0 %v8033
        %13029 = vmatpush.bf16.msra.mxu0 %v8025
        %13030 = vmatpush.bf16.msra.mxu0 %v8017
        %13031 = vmatpush.bf16.msra.mxu0 %v8009
        %13032 = vmatpush.bf16.msra.mxu0 %v8001
        %13033 = vmatpush.bf16.msra.mxu0 %v7993
        %13034 = vmatpush.bf16.msra.mxu0 %v7985
        %13035 = vmatmul.bf16.gmra.mxu0 %v2101
        %v13036 = vpop.f32.mrf.mxu0
        %v13037 = vadd.f32 %v13024, %v13036
        %v13038 = vpop.f32.mrf.mxu0
        %13039 = vdwg.mxu0
        %13040 = vmatpush.bf16.msra.mxu0 %v8105
        %13041 = vmatpush.bf16.msra.mxu0 %v8097
        %13042 = vmatpush.bf16.msra.mxu0 %v8089
        %13043 = vmatpush.bf16.msra.mxu0 %v8081
        %13044 = vmatpush.bf16.msra.mxu0 %v8073
        %13045 = vmatpush.bf16.msra.mxu0 %v8065
        %13046 = vmatpush.bf16.msra.mxu0 %v8057
        %13047 = vmatpush.bf16.msra.mxu0 %v8049
        %13048 = vmatmul.bf16.gmra.mxu0 %v2104
        %v13049 = vpop.f32.mrf.mxu0
        %v13050 = vadd.f32 %v13037, %v13049
        %v13051 = vpop.f32.mrf.mxu0
        %13052 = vdwg.mxu0
        %13053 = vmatpush.bf16.msra.mxu0 %v8169
        %13054 = vmatpush.bf16.msra.mxu0 %v8161
        %13055 = vmatpush.bf16.msra.mxu0 %v8153
        %13056 = vmatpush.bf16.msra.mxu0 %v8145
        %13057 = vmatpush.bf16.msra.mxu0 %v8137
        %13058 = vmatpush.bf16.msra.mxu0 %v8129
        %13059 = vmatpush.bf16.msra.mxu0 %v8121
        %13060 = vmatpush.bf16.msra.mxu0 %v8113
        %13061 = vmatmul.bf16.gmra.mxu0 %v2105
        %v13062 = vpop.f32.mrf.mxu0
        %v13063 = vadd.f32 %v13050, %v13062
        %v13064 = vpop.f32.mrf.mxu0
        %13065 = vdwg.mxu0
        %13066 = vmatpush.bf16.msra.mxu0 %v8233
        %13067 = vmatpush.bf16.msra.mxu0 %v8225
        %13068 = vmatpush.bf16.msra.mxu0 %v8217
        %13069 = vmatpush.bf16.msra.mxu0 %v8209
        %13070 = vmatpush.bf16.msra.mxu0 %v8201
        %13071 = vmatpush.bf16.msra.mxu0 %v8193
        %13072 = vmatpush.bf16.msra.mxu0 %v8185
        %13073 = vmatpush.bf16.msra.mxu0 %v8177
        %13074 = vmatmul.bf16.gmra.mxu0 %v2106
        %v13075 = vpop.f32.mrf.mxu0
        %v13076 = vadd.f32 %v13063, %v13075
        %v13077 = vpop.f32.mrf.mxu0
        %13078 = vdwg.mxu0
        %13079 = vmatpush.bf16.msra.mxu0 %v8297
        %13080 = vmatpush.bf16.msra.mxu0 %v8289
        %13081 = vmatpush.bf16.msra.mxu0 %v8281
        %13082 = vmatpush.bf16.msra.mxu0 %v8273
        %13083 = vmatpush.bf16.msra.mxu0 %v8265
        %13084 = vmatpush.bf16.msra.mxu0 %v8257
        %13085 = vmatpush.bf16.msra.mxu0 %v8249
        %13086 = vmatpush.bf16.msra.mxu0 %v8241
        %13087 = vmatmul.bf16.gmra.mxu0 %v2107
        %v13088 = vpop.f32.mrf.mxu0
        %v13089 = vadd.f32 %v13076, %v13088
        %v13090 = vpop.f32.mrf.mxu0
        %13091 = vdwg.mxu0
        %13092 = vmatpush.bf16.msra.mxu0 %v8361
        %13093 = vmatpush.bf16.msra.mxu0 %v8353
        %13094 = vmatpush.bf16.msra.mxu0 %v8345
        %13095 = vmatpush.bf16.msra.mxu0 %v8337
        %13096 = vmatpush.bf16.msra.mxu0 %v8329
        %13097 = vmatpush.bf16.msra.mxu0 %v8321
        %13098 = vmatpush.bf16.msra.mxu0 %v8313
        %13099 = vmatpush.bf16.msra.mxu0 %v8305
        %13100 = vmatmul.bf16.gmra.mxu0 %v2108
        %v13101 = vpop.f32.mrf.mxu0
        %v13102 = vadd.f32 %v13089, %v13101
        %v13103 = vpop.f32.mrf.mxu0
        %13104 = vdwg.mxu0
        %13105 = vmatpush.bf16.msra.mxu0 %v8425
        %13106 = vmatpush.bf16.msra.mxu0 %v8417
        %13107 = vmatpush.bf16.msra.mxu0 %v8409
        %13108 = vmatpush.bf16.msra.mxu0 %v8401
        %13109 = vmatpush.bf16.msra.mxu0 %v8393
        %13110 = vmatpush.bf16.msra.mxu0 %v8385
        %13111 = vmatpush.bf16.msra.mxu0 %v8377
        %13112 = vmatpush.bf16.msra.mxu0 %v8369
        %13113 = vmatmul.bf16.gmra.mxu0 %v2109
        %v13114 = vpop.f32.mrf.mxu0
        %v13115 = vadd.f32 %v13102, %v13114
        %v13116 = vpop.f32.mrf.mxu0
        %13117 = vdwg.mxu0
        %13118 = vmatpush.bf16.msra.mxu0 %v8489
        %13119 = vmatpush.bf16.msra.mxu0 %v8481
        %13120 = vmatpush.bf16.msra.mxu0 %v8473
        %13121 = vmatpush.bf16.msra.mxu0 %v8465
        %13122 = vmatpush.bf16.msra.mxu0 %v8457
        %13123 = vmatpush.bf16.msra.mxu0 %v8449
        %13124 = vmatpush.bf16.msra.mxu0 %v8441
        %13125 = vmatpush.bf16.msra.mxu0 %v8433
        %13126 = vmatmul.bf16.gmra.mxu0 %v2110
        %v13127 = vpop.f32.mrf.mxu0
        %v13128 = vadd.f32 %v13115, %v13127
        %v13129 = vpop.f32.mrf.mxu0
        %13130 = vdwg.mxu0
        %13131 = vmatpush.bf16.msra.mxu0 %v8553
        %13132 = vmatpush.bf16.msra.mxu0 %v8545
        %13133 = vmatpush.bf16.msra.mxu0 %v8537
        %13134 = vmatpush.bf16.msra.mxu0 %v8529
        %13135 = vmatpush.bf16.msra.mxu0 %v8521
        %13136 = vmatpush.bf16.msra.mxu0 %v8513
        %13137 = vmatpush.bf16.msra.mxu0 %v8505
        %13138 = vmatpush.bf16.msra.mxu0 %v8497
        %13139 = vmatmul.bf16.gmra.mxu0 %v2111
        %v13140 = vpop.f32.mrf.mxu0
        %v13141 = vadd.f32 %v13128, %v13140
        %v13142 = vpop.f32.mrf.mxu0
        %13143 = vdwg.mxu0
        %13144 = vmatpush.bf16.msra.mxu0 %v8617
        %13145 = vmatpush.bf16.msra.mxu0 %v8609
        %13146 = vmatpush.bf16.msra.mxu0 %v8601
        %13147 = vmatpush.bf16.msra.mxu0 %v8593
        %13148 = vmatpush.bf16.msra.mxu0 %v8585
        %13149 = vmatpush.bf16.msra.mxu0 %v8577
        %13150 = vmatpush.bf16.msra.mxu0 %v8569
        %13151 = vmatpush.bf16.msra.mxu0 %v8561
        %13152 = vmatmul.bf16.gmra.mxu0 %v2114
        %v13153 = vpop.f32.mrf.mxu0
        %v13154 = vadd.f32 %v13141, %v13153
        %v13155 = vpop.f32.mrf.mxu0
        %13156 = vdwg.mxu0
        %13157 = vmatpush.bf16.msra.mxu0 %v8681
        %13158 = vmatpush.bf16.msra.mxu0 %v8673
        %13159 = vmatpush.bf16.msra.mxu0 %v8665
        %13160 = vmatpush.bf16.msra.mxu0 %v8657
        %13161 = vmatpush.bf16.msra.mxu0 %v8649
        %13162 = vmatpush.bf16.msra.mxu0 %v8641
        %13163 = vmatpush.bf16.msra.mxu0 %v8633
        %13164 = vmatpush.bf16.msra.mxu0 %v8625
        %13165 = vmatmul.bf16.gmra.mxu0 %v2115
        %v13166 = vpop.f32.mrf.mxu0
        %v13167 = vadd.f32 %v13154, %v13166
        %v13168 = vpop.f32.mrf.mxu0
        %13169 = vdwg.mxu0
        %13170 = vmatpush.bf16.msra.mxu0 %v8745
        %13171 = vmatpush.bf16.msra.mxu0 %v8737
        %13172 = vmatpush.bf16.msra.mxu0 %v8729
        %13173 = vmatpush.bf16.msra.mxu0 %v8721
        %13174 = vmatpush.bf16.msra.mxu0 %v8713
        %13175 = vmatpush.bf16.msra.mxu0 %v8705
        %13176 = vmatpush.bf16.msra.mxu0 %v8697
        %13177 = vmatpush.bf16.msra.mxu0 %v8689
        %13178 = vmatmul.bf16.gmra.mxu0 %v2116
        %v13179 = vpop.f32.mrf.mxu0
        %v13180 = vadd.f32 %v13167, %v13179
        %v13181 = vpop.f32.mrf.mxu0
        %13182 = vdwg.mxu0
        %13183 = vmatpush.bf16.msra.mxu0 %v8809
        %13184 = vmatpush.bf16.msra.mxu0 %v8801
        %13185 = vmatpush.bf16.msra.mxu0 %v8793
        %13186 = vmatpush.bf16.msra.mxu0 %v8785
        %13187 = vmatpush.bf16.msra.mxu0 %v8777
        %13188 = vmatpush.bf16.msra.mxu0 %v8769
        %13189 = vmatpush.bf16.msra.mxu0 %v8761
        %13190 = vmatpush.bf16.msra.mxu0 %v8753
        %13191 = vmatmul.bf16.gmra.mxu0 %v2117
        %v13192 = vpop.f32.mrf.mxu0
        %v13193 = vadd.f32 %v13180, %v13192
        %v13194 = vpop.f32.mrf.mxu0
        %13195 = vdwg.mxu0
        %13196 = vmatpush.bf16.msra.mxu0 %v8873
        %13197 = vmatpush.bf16.msra.mxu0 %v8865
        %13198 = vmatpush.bf16.msra.mxu0 %v8857
        %13199 = vmatpush.bf16.msra.mxu0 %v8849
        %13200 = vmatpush.bf16.msra.mxu0 %v8841
        %13201 = vmatpush.bf16.msra.mxu0 %v8833
        %13202 = vmatpush.bf16.msra.mxu0 %v8825
        %13203 = vmatpush.bf16.msra.mxu0 %v8817
        %13204 = vmatmul.bf16.gmra.mxu0 %v2118
        %v13205 = vpop.f32.mrf.mxu0
        %v13206 = vadd.f32 %v13193, %v13205
        %v13207 = vpop.f32.mrf.mxu0
        %13208 = vdwg.mxu0
        %13209 = vmatpush.bf16.msra.mxu0 %v8937
        %13210 = vmatpush.bf16.msra.mxu0 %v8929
        %13211 = vmatpush.bf16.msra.mxu0 %v8921
        %13212 = vmatpush.bf16.msra.mxu0 %v8913
        %13213 = vmatpush.bf16.msra.mxu0 %v8905
        %13214 = vmatpush.bf16.msra.mxu0 %v8897
        %13215 = vmatpush.bf16.msra.mxu0 %v8889
        %13216 = vmatpush.bf16.msra.mxu0 %v8881
        %13217 = vmatmul.bf16.gmra.mxu0 %v2119
        %v13218 = vpop.f32.mrf.mxu0
        %v13219 = vadd.f32 %v13206, %v13218
        %v13220 = vpop.f32.mrf.mxu0
        %13221 = vdwg.mxu0
        %13222 = vmatpush.bf16.msra.mxu0 %v9001
        %13223 = vmatpush.bf16.msra.mxu0 %v8993
        %13224 = vmatpush.bf16.msra.mxu0 %v8985
        %13225 = vmatpush.bf16.msra.mxu0 %v8977
        %13226 = vmatpush.bf16.msra.mxu0 %v8969
        %13227 = vmatpush.bf16.msra.mxu0 %v8961
        %13228 = vmatpush.bf16.msra.mxu0 %v8953
        %13229 = vmatpush.bf16.msra.mxu0 %v8945
        %13230 = vmatmul.bf16.gmra.mxu0 %v2120
        %v13231 = vpop.f32.mrf.mxu0
        %v13232 = vadd.f32 %v13219, %v13231
        %v13233 = vpop.f32.mrf.mxu0
        %13234 = vdwg.mxu0
        %13235 = vmatpush.bf16.msra.mxu0 %v9065
        %13236 = vmatpush.bf16.msra.mxu0 %v9057
        %13237 = vmatpush.bf16.msra.mxu0 %v9049
        %13238 = vmatpush.bf16.msra.mxu0 %v9041
        %13239 = vmatpush.bf16.msra.mxu0 %v9033
        %13240 = vmatpush.bf16.msra.mxu0 %v9025
        %13241 = vmatpush.bf16.msra.mxu0 %v9017
        %13242 = vmatpush.bf16.msra.mxu0 %v9009
        %13243 = vmatmul.bf16.gmra.mxu0 %v2121
        %v13244 = vpop.f32.mrf.mxu0
        %v13245 = vadd.f32 %v13232, %v13244
        %v13246 = vpop.f32.mrf.mxu0
        %13247 = vdwg.mxu0
        %13248 = vmatpush.bf16.msra.mxu0 %v9129
        %13249 = vmatpush.bf16.msra.mxu0 %v9121
        %13250 = vmatpush.bf16.msra.mxu0 %v9113
        %13251 = vmatpush.bf16.msra.mxu0 %v9105
        %13252 = vmatpush.bf16.msra.mxu0 %v9097
        %13253 = vmatpush.bf16.msra.mxu0 %v9089
        %13254 = vmatpush.bf16.msra.mxu0 %v9081
        %13255 = vmatpush.bf16.msra.mxu0 %v9073
        %13256 = vmatmul.bf16.gmra.mxu0 %v2124
        %v13257 = vpop.f32.mrf.mxu0
        %v13258 = vadd.f32 %v13245, %v13257
        %v13259 = vpop.f32.mrf.mxu0
        %13260 = vdwg.mxu0
        %13261 = vmatpush.bf16.msra.mxu0 %v9193
        %13262 = vmatpush.bf16.msra.mxu0 %v9185
        %13263 = vmatpush.bf16.msra.mxu0 %v9177
        %13264 = vmatpush.bf16.msra.mxu0 %v9169
        %13265 = vmatpush.bf16.msra.mxu0 %v9161
        %13266 = vmatpush.bf16.msra.mxu0 %v9153
        %13267 = vmatpush.bf16.msra.mxu0 %v9145
        %13268 = vmatpush.bf16.msra.mxu0 %v9137
        %13269 = vmatmul.bf16.gmra.mxu0 %v2125
        %v13270 = vpop.f32.mrf.mxu0
        %v13271 = vadd.f32 %v13258, %v13270
        %v13272 = vpop.f32.mrf.mxu0
        %13273 = vdwg.mxu0
        %13274 = vmatpush.bf16.msra.mxu0 %v9257
        %13275 = vmatpush.bf16.msra.mxu0 %v9249
        %13276 = vmatpush.bf16.msra.mxu0 %v9241
        %13277 = vmatpush.bf16.msra.mxu0 %v9233
        %13278 = vmatpush.bf16.msra.mxu0 %v9225
        %13279 = vmatpush.bf16.msra.mxu0 %v9217
        %13280 = vmatpush.bf16.msra.mxu0 %v9209
        %13281 = vmatpush.bf16.msra.mxu0 %v9201
        %13282 = vmatmul.bf16.gmra.mxu0 %v2126
        %v13283 = vpop.f32.mrf.mxu0
        %v13284 = vadd.f32 %v13271, %v13283
        %v13285 = vpop.f32.mrf.mxu0
        %13286 = vdwg.mxu0
        %13287 = vmatpush.bf16.msra.mxu0 %v9321
        %13288 = vmatpush.bf16.msra.mxu0 %v9313
        %13289 = vmatpush.bf16.msra.mxu0 %v9305
        %13290 = vmatpush.bf16.msra.mxu0 %v9297
        %13291 = vmatpush.bf16.msra.mxu0 %v9289
        %13292 = vmatpush.bf16.msra.mxu0 %v9281
        %13293 = vmatpush.bf16.msra.mxu0 %v9273
        %13294 = vmatpush.bf16.msra.mxu0 %v9265
        %13295 = vmatmul.bf16.gmra.mxu0 %v2127
        %v13296 = vpop.f32.mrf.mxu0
        %v13297 = vadd.f32 %v13284, %v13296
        %v13298 = vpop.f32.mrf.mxu0
        %13299 = vdwg.mxu0
        %13300 = vmatpush.bf16.msra.mxu0 %v7594
        %13301 = vmatpush.bf16.msra.mxu0 %v7586
        %13302 = vmatpush.bf16.msra.mxu0 %v7578
        %13303 = vmatpush.bf16.msra.mxu0 %v7570
        %13304 = vmatpush.bf16.msra.mxu0 %v7562
        %13305 = vmatpush.bf16.msra.mxu0 %v7554
        %13306 = vmatpush.bf16.msra.mxu0 %v7546
        %13307 = vmatpush.bf16.msra.mxu0 %v7538
        %13308 = vmatmul.bf16.gmra.mxu0 %v2094
        %v13309 = vpop.f32.mrf.mxu0
        %v13310 = vadd.f32 0.0, %v13309
        %v13311 = vpop.f32.mrf.mxu0
        %13312 = vdwg.mxu0
        %13313 = vmatpush.bf16.msra.mxu0 %v7658
        %13314 = vmatpush.bf16.msra.mxu0 %v7650
        %13315 = vmatpush.bf16.msra.mxu0 %v7642
        %13316 = vmatpush.bf16.msra.mxu0 %v7634
        %13317 = vmatpush.bf16.msra.mxu0 %v7626
        %13318 = vmatpush.bf16.msra.mxu0 %v7618
        %13319 = vmatpush.bf16.msra.mxu0 %v7610
        %13320 = vmatpush.bf16.msra.mxu0 %v7602
        %13321 = vmatmul.bf16.gmra.mxu0 %v2095
        %v13322 = vpop.f32.mrf.mxu0
        %v13323 = vadd.f32 %v13310, %v13322
        %v13324 = vpop.f32.mrf.mxu0
        %13325 = vdwg.mxu0
        %13326 = vmatpush.bf16.msra.mxu0 %v7722
        %13327 = vmatpush.bf16.msra.mxu0 %v7714
        %13328 = vmatpush.bf16.msra.mxu0 %v7706
        %13329 = vmatpush.bf16.msra.mxu0 %v7698
        %13330 = vmatpush.bf16.msra.mxu0 %v7690
        %13331 = vmatpush.bf16.msra.mxu0 %v7682
        %13332 = vmatpush.bf16.msra.mxu0 %v7674
        %13333 = vmatpush.bf16.msra.mxu0 %v7666
        %13334 = vmatmul.bf16.gmra.mxu0 %v2096
        %v13335 = vpop.f32.mrf.mxu0
        %v13336 = vadd.f32 %v13323, %v13335
        %v13337 = vpop.f32.mrf.mxu0
        %13338 = vdwg.mxu0
        %13339 = vmatpush.bf16.msra.mxu0 %v7786
        %13340 = vmatpush.bf16.msra.mxu0 %v7778
        %13341 = vmatpush.bf16.msra.mxu0 %v7770
        %13342 = vmatpush.bf16.msra.mxu0 %v7762
        %13343 = vmatpush.bf16.msra.mxu0 %v7754
        %13344 = vmatpush.bf16.msra.mxu0 %v7746
        %13345 = vmatpush.bf16.msra.mxu0 %v7738
        %13346 = vmatpush.bf16.msra.mxu0 %v7730
        %13347 = vmatmul.bf16.gmra.mxu0 %v2097
        %v13348 = vpop.f32.mrf.mxu0
        %v13349 = vadd.f32 %v13336, %v13348
        %v13350 = vpop.f32.mrf.mxu0
        %13351 = vdwg.mxu0
        %13352 = vmatpush.bf16.msra.mxu0 %v7850
        %13353 = vmatpush.bf16.msra.mxu0 %v7842
        %13354 = vmatpush.bf16.msra.mxu0 %v7834
        %13355 = vmatpush.bf16.msra.mxu0 %v7826
        %13356 = vmatpush.bf16.msra.mxu0 %v7818
        %13357 = vmatpush.bf16.msra.mxu0 %v7810
        %13358 = vmatpush.bf16.msra.mxu0 %v7802
        %13359 = vmatpush.bf16.msra.mxu0 %v7794
        %13360 = vmatmul.bf16.gmra.mxu0 %v2098
        %v13361 = vpop.f32.mrf.mxu0
        %v13362 = vadd.f32 %v13349, %v13361
        %v13363 = vpop.f32.mrf.mxu0
        %13364 = vdwg.mxu0
        %13365 = vmatpush.bf16.msra.mxu0 %v7914
        %13366 = vmatpush.bf16.msra.mxu0 %v7906
        %13367 = vmatpush.bf16.msra.mxu0 %v7898
        %13368 = vmatpush.bf16.msra.mxu0 %v7890
        %13369 = vmatpush.bf16.msra.mxu0 %v7882
        %13370 = vmatpush.bf16.msra.mxu0 %v7874
        %13371 = vmatpush.bf16.msra.mxu0 %v7866
        %13372 = vmatpush.bf16.msra.mxu0 %v7858
        %13373 = vmatmul.bf16.gmra.mxu0 %v2099
        %v13374 = vpop.f32.mrf.mxu0
        %v13375 = vadd.f32 %v13362, %v13374
        %v13376 = vpop.f32.mrf.mxu0
        %13377 = vdwg.mxu0
        %13378 = vmatpush.bf16.msra.mxu0 %v7978
        %13379 = vmatpush.bf16.msra.mxu0 %v7970
        %13380 = vmatpush.bf16.msra.mxu0 %v7962
        %13381 = vmatpush.bf16.msra.mxu0 %v7954
        %13382 = vmatpush.bf16.msra.mxu0 %v7946
        %13383 = vmatpush.bf16.msra.mxu0 %v7938
        %13384 = vmatpush.bf16.msra.mxu0 %v7930
        %13385 = vmatpush.bf16.msra.mxu0 %v7922
        %13386 = vmatmul.bf16.gmra.mxu0 %v2100
        %v13387 = vpop.f32.mrf.mxu0
        %v13388 = vadd.f32 %v13375, %v13387
        %v13389 = vpop.f32.mrf.mxu0
        %13390 = vdwg.mxu0
        %13391 = vmatpush.bf16.msra.mxu0 %v8042
        %13392 = vmatpush.bf16.msra.mxu0 %v8034
        %13393 = vmatpush.bf16.msra.mxu0 %v8026
        %13394 = vmatpush.bf16.msra.mxu0 %v8018
        %13395 = vmatpush.bf16.msra.mxu0 %v8010
        %13396 = vmatpush.bf16.msra.mxu0 %v8002
        %13397 = vmatpush.bf16.msra.mxu0 %v7994
        %13398 = vmatpush.bf16.msra.mxu0 %v7986
        %13399 = vmatmul.bf16.gmra.mxu0 %v2101
        %v13400 = vpop.f32.mrf.mxu0
        %v13401 = vadd.f32 %v13388, %v13400
        %v13402 = vpop.f32.mrf.mxu0
        %13403 = vdwg.mxu0
        %13404 = vmatpush.bf16.msra.mxu0 %v8106
        %13405 = vmatpush.bf16.msra.mxu0 %v8098
        %13406 = vmatpush.bf16.msra.mxu0 %v8090
        %13407 = vmatpush.bf16.msra.mxu0 %v8082
        %13408 = vmatpush.bf16.msra.mxu0 %v8074
        %13409 = vmatpush.bf16.msra.mxu0 %v8066
        %13410 = vmatpush.bf16.msra.mxu0 %v8058
        %13411 = vmatpush.bf16.msra.mxu0 %v8050
        %13412 = vmatmul.bf16.gmra.mxu0 %v2104
        %v13413 = vpop.f32.mrf.mxu0
        %v13414 = vadd.f32 %v13401, %v13413
        %v13415 = vpop.f32.mrf.mxu0
        %13416 = vdwg.mxu0
        %13417 = vmatpush.bf16.msra.mxu0 %v8170
        %13418 = vmatpush.bf16.msra.mxu0 %v8162
        %13419 = vmatpush.bf16.msra.mxu0 %v8154
        %13420 = vmatpush.bf16.msra.mxu0 %v8146
        %13421 = vmatpush.bf16.msra.mxu0 %v8138
        %13422 = vmatpush.bf16.msra.mxu0 %v8130
        %13423 = vmatpush.bf16.msra.mxu0 %v8122
        %13424 = vmatpush.bf16.msra.mxu0 %v8114
        %13425 = vmatmul.bf16.gmra.mxu0 %v2105
        %v13426 = vpop.f32.mrf.mxu0
        %v13427 = vadd.f32 %v13414, %v13426
        %v13428 = vpop.f32.mrf.mxu0
        %13429 = vdwg.mxu0
        %13430 = vmatpush.bf16.msra.mxu0 %v8234
        %13431 = vmatpush.bf16.msra.mxu0 %v8226
        %13432 = vmatpush.bf16.msra.mxu0 %v8218
        %13433 = vmatpush.bf16.msra.mxu0 %v8210
        %13434 = vmatpush.bf16.msra.mxu0 %v8202
        %13435 = vmatpush.bf16.msra.mxu0 %v8194
        %13436 = vmatpush.bf16.msra.mxu0 %v8186
        %13437 = vmatpush.bf16.msra.mxu0 %v8178
        %13438 = vmatmul.bf16.gmra.mxu0 %v2106
        %v13439 = vpop.f32.mrf.mxu0
        %v13440 = vadd.f32 %v13427, %v13439
        %v13441 = vpop.f32.mrf.mxu0
        %13442 = vdwg.mxu0
        %13443 = vmatpush.bf16.msra.mxu0 %v8298
        %13444 = vmatpush.bf16.msra.mxu0 %v8290
        %13445 = vmatpush.bf16.msra.mxu0 %v8282
        %13446 = vmatpush.bf16.msra.mxu0 %v8274
        %13447 = vmatpush.bf16.msra.mxu0 %v8266
        %13448 = vmatpush.bf16.msra.mxu0 %v8258
        %13449 = vmatpush.bf16.msra.mxu0 %v8250
        %13450 = vmatpush.bf16.msra.mxu0 %v8242
        %13451 = vmatmul.bf16.gmra.mxu0 %v2107
        %v13452 = vpop.f32.mrf.mxu0
        %v13453 = vadd.f32 %v13440, %v13452
        %v13454 = vpop.f32.mrf.mxu0
        %13455 = vdwg.mxu0
        %13456 = vmatpush.bf16.msra.mxu0 %v8362
        %13457 = vmatpush.bf16.msra.mxu0 %v8354
        %13458 = vmatpush.bf16.msra.mxu0 %v8346
        %13459 = vmatpush.bf16.msra.mxu0 %v8338
        %13460 = vmatpush.bf16.msra.mxu0 %v8330
        %13461 = vmatpush.bf16.msra.mxu0 %v8322
        %13462 = vmatpush.bf16.msra.mxu0 %v8314
        %13463 = vmatpush.bf16.msra.mxu0 %v8306
        %13464 = vmatmul.bf16.gmra.mxu0 %v2108
        %v13465 = vpop.f32.mrf.mxu0
        %v13466 = vadd.f32 %v13453, %v13465
        %v13467 = vpop.f32.mrf.mxu0
        %13468 = vdwg.mxu0
        %13469 = vmatpush.bf16.msra.mxu0 %v8426
        %13470 = vmatpush.bf16.msra.mxu0 %v8418
        %13471 = vmatpush.bf16.msra.mxu0 %v8410
        %13472 = vmatpush.bf16.msra.mxu0 %v8402
        %13473 = vmatpush.bf16.msra.mxu0 %v8394
        %13474 = vmatpush.bf16.msra.mxu0 %v8386
        %13475 = vmatpush.bf16.msra.mxu0 %v8378
        %13476 = vmatpush.bf16.msra.mxu0 %v8370
        %13477 = vmatmul.bf16.gmra.mxu0 %v2109
        %v13478 = vpop.f32.mrf.mxu0
        %v13479 = vadd.f32 %v13466, %v13478
        %v13480 = vpop.f32.mrf.mxu0
        %13481 = vdwg.mxu0
        %13482 = vmatpush.bf16.msra.mxu0 %v8490
        %13483 = vmatpush.bf16.msra.mxu0 %v8482
        %13484 = vmatpush.bf16.msra.mxu0 %v8474
        %13485 = vmatpush.bf16.msra.mxu0 %v8466
        %13486 = vmatpush.bf16.msra.mxu0 %v8458
        %13487 = vmatpush.bf16.msra.mxu0 %v8450
        %13488 = vmatpush.bf16.msra.mxu0 %v8442
        %13489 = vmatpush.bf16.msra.mxu0 %v8434
        %13490 = vmatmul.bf16.gmra.mxu0 %v2110
        %v13491 = vpop.f32.mrf.mxu0
        %v13492 = vadd.f32 %v13479, %v13491
        %v13493 = vpop.f32.mrf.mxu0
        %13494 = vdwg.mxu0
        %13495 = vmatpush.bf16.msra.mxu0 %v8554
        %13496 = vmatpush.bf16.msra.mxu0 %v8546
        %13497 = vmatpush.bf16.msra.mxu0 %v8538
        %13498 = vmatpush.bf16.msra.mxu0 %v8530
        %13499 = vmatpush.bf16.msra.mxu0 %v8522
        %13500 = vmatpush.bf16.msra.mxu0 %v8514
        %13501 = vmatpush.bf16.msra.mxu0 %v8506
        %13502 = vmatpush.bf16.msra.mxu0 %v8498
        %13503 = vmatmul.bf16.gmra.mxu0 %v2111
        %v13504 = vpop.f32.mrf.mxu0
        %v13505 = vadd.f32 %v13492, %v13504
        %v13506 = vpop.f32.mrf.mxu0
        %13507 = vdwg.mxu0
        %13508 = vmatpush.bf16.msra.mxu0 %v8618
        %13509 = vmatpush.bf16.msra.mxu0 %v8610
        %13510 = vmatpush.bf16.msra.mxu0 %v8602
        %13511 = vmatpush.bf16.msra.mxu0 %v8594
        %13512 = vmatpush.bf16.msra.mxu0 %v8586
        %13513 = vmatpush.bf16.msra.mxu0 %v8578
        %13514 = vmatpush.bf16.msra.mxu0 %v8570
        %13515 = vmatpush.bf16.msra.mxu0 %v8562
        %13516 = vmatmul.bf16.gmra.mxu0 %v2114
        %v13517 = vpop.f32.mrf.mxu0
        %v13518 = vadd.f32 %v13505, %v13517
        %v13519 = vpop.f32.mrf.mxu0
        %13520 = vdwg.mxu0
        %13521 = vmatpush.bf16.msra.mxu0 %v8682
        %13522 = vmatpush.bf16.msra.mxu0 %v8674
        %13523 = vmatpush.bf16.msra.mxu0 %v8666
        %13524 = vmatpush.bf16.msra.mxu0 %v8658
        %13525 = vmatpush.bf16.msra.mxu0 %v8650
        %13526 = vmatpush.bf16.msra.mxu0 %v8642
        %13527 = vmatpush.bf16.msra.mxu0 %v8634
        %13528 = vmatpush.bf16.msra.mxu0 %v8626
        %13529 = vmatmul.bf16.gmra.mxu0 %v2115
        %v13530 = vpop.f32.mrf.mxu0
        %v13531 = vadd.f32 %v13518, %v13530
        %v13532 = vpop.f32.mrf.mxu0
        %13533 = vdwg.mxu0
        %13534 = vmatpush.bf16.msra.mxu0 %v8746
        %13535 = vmatpush.bf16.msra.mxu0 %v8738
        %13536 = vmatpush.bf16.msra.mxu0 %v8730
        %13537 = vmatpush.bf16.msra.mxu0 %v8722
        %13538 = vmatpush.bf16.msra.mxu0 %v8714
        %13539 = vmatpush.bf16.msra.mxu0 %v8706
        %13540 = vmatpush.bf16.msra.mxu0 %v8698
        %13541 = vmatpush.bf16.msra.mxu0 %v8690
        %13542 = vmatmul.bf16.gmra.mxu0 %v2116
        %v13543 = vpop.f32.mrf.mxu0
        %v13544 = vadd.f32 %v13531, %v13543
        %v13545 = vpop.f32.mrf.mxu0
        %13546 = vdwg.mxu0
        %13547 = vmatpush.bf16.msra.mxu0 %v8810
        %13548 = vmatpush.bf16.msra.mxu0 %v8802
        %13549 = vmatpush.bf16.msra.mxu0 %v8794
        %13550 = vmatpush.bf16.msra.mxu0 %v8786
        %13551 = vmatpush.bf16.msra.mxu0 %v8778
        %13552 = vmatpush.bf16.msra.mxu0 %v8770
        %13553 = vmatpush.bf16.msra.mxu0 %v8762
        %13554 = vmatpush.bf16.msra.mxu0 %v8754
        %13555 = vmatmul.bf16.gmra.mxu0 %v2117
        %v13556 = vpop.f32.mrf.mxu0
        %v13557 = vadd.f32 %v13544, %v13556
        %v13558 = vpop.f32.mrf.mxu0
        %13559 = vdwg.mxu0
        %13560 = vmatpush.bf16.msra.mxu0 %v8874
        %13561 = vmatpush.bf16.msra.mxu0 %v8866
        %13562 = vmatpush.bf16.msra.mxu0 %v8858
        %13563 = vmatpush.bf16.msra.mxu0 %v8850
        %13564 = vmatpush.bf16.msra.mxu0 %v8842
        %13565 = vmatpush.bf16.msra.mxu0 %v8834
        %13566 = vmatpush.bf16.msra.mxu0 %v8826
        %13567 = vmatpush.bf16.msra.mxu0 %v8818
        %13568 = vmatmul.bf16.gmra.mxu0 %v2118
        %v13569 = vpop.f32.mrf.mxu0
        %v13570 = vadd.f32 %v13557, %v13569
        %v13571 = vpop.f32.mrf.mxu0
        %13572 = vdwg.mxu0
        %13573 = vmatpush.bf16.msra.mxu0 %v8938
        %13574 = vmatpush.bf16.msra.mxu0 %v8930
        %13575 = vmatpush.bf16.msra.mxu0 %v8922
        %13576 = vmatpush.bf16.msra.mxu0 %v8914
        %13577 = vmatpush.bf16.msra.mxu0 %v8906
        %13578 = vmatpush.bf16.msra.mxu0 %v8898
        %13579 = vmatpush.bf16.msra.mxu0 %v8890
        %13580 = vmatpush.bf16.msra.mxu0 %v8882
        %13581 = vmatmul.bf16.gmra.mxu0 %v2119
        %v13582 = vpop.f32.mrf.mxu0
        %v13583 = vadd.f32 %v13570, %v13582
        %v13584 = vpop.f32.mrf.mxu0
        %13585 = vdwg.mxu0
        %13586 = vmatpush.bf16.msra.mxu0 %v9002
        %13587 = vmatpush.bf16.msra.mxu0 %v8994
        %13588 = vmatpush.bf16.msra.mxu0 %v8986
        %13589 = vmatpush.bf16.msra.mxu0 %v8978
        %13590 = vmatpush.bf16.msra.mxu0 %v8970
        %13591 = vmatpush.bf16.msra.mxu0 %v8962
        %13592 = vmatpush.bf16.msra.mxu0 %v8954
        %13593 = vmatpush.bf16.msra.mxu0 %v8946
        %13594 = vmatmul.bf16.gmra.mxu0 %v2120
        %v13595 = vpop.f32.mrf.mxu0
        %v13596 = vadd.f32 %v13583, %v13595
        %v13597 = vpop.f32.mrf.mxu0
        %13598 = vdwg.mxu0
        %13599 = vmatpush.bf16.msra.mxu0 %v9066
        %13600 = vmatpush.bf16.msra.mxu0 %v9058
        %13601 = vmatpush.bf16.msra.mxu0 %v9050
        %13602 = vmatpush.bf16.msra.mxu0 %v9042
        %13603 = vmatpush.bf16.msra.mxu0 %v9034
        %13604 = vmatpush.bf16.msra.mxu0 %v9026
        %13605 = vmatpush.bf16.msra.mxu0 %v9018
        %13606 = vmatpush.bf16.msra.mxu0 %v9010
        %13607 = vmatmul.bf16.gmra.mxu0 %v2121
        %v13608 = vpop.f32.mrf.mxu0
        %v13609 = vadd.f32 %v13596, %v13608
        %v13610 = vpop.f32.mrf.mxu0
        %13611 = vdwg.mxu0
        %13612 = vmatpush.bf16.msra.mxu0 %v9130
        %13613 = vmatpush.bf16.msra.mxu0 %v9122
        %13614 = vmatpush.bf16.msra.mxu0 %v9114
        %13615 = vmatpush.bf16.msra.mxu0 %v9106
        %13616 = vmatpush.bf16.msra.mxu0 %v9098
        %13617 = vmatpush.bf16.msra.mxu0 %v9090
        %13618 = vmatpush.bf16.msra.mxu0 %v9082
        %13619 = vmatpush.bf16.msra.mxu0 %v9074
        %13620 = vmatmul.bf16.gmra.mxu0 %v2124
        %v13621 = vpop.f32.mrf.mxu0
        %v13622 = vadd.f32 %v13609, %v13621
        %v13623 = vpop.f32.mrf.mxu0
        %13624 = vdwg.mxu0
        %13625 = vmatpush.bf16.msra.mxu0 %v9194
        %13626 = vmatpush.bf16.msra.mxu0 %v9186
        %13627 = vmatpush.bf16.msra.mxu0 %v9178
        %13628 = vmatpush.bf16.msra.mxu0 %v9170
        %13629 = vmatpush.bf16.msra.mxu0 %v9162
        %13630 = vmatpush.bf16.msra.mxu0 %v9154
        %13631 = vmatpush.bf16.msra.mxu0 %v9146
        %13632 = vmatpush.bf16.msra.mxu0 %v9138
        %13633 = vmatmul.bf16.gmra.mxu0 %v2125
        %v13634 = vpop.f32.mrf.mxu0
        %v13635 = vadd.f32 %v13622, %v13634
        %v13636 = vpop.f32.mrf.mxu0
        %13637 = vdwg.mxu0
        %13638 = vmatpush.bf16.msra.mxu0 %v9258
        %13639 = vmatpush.bf16.msra.mxu0 %v9250
        %13640 = vmatpush.bf16.msra.mxu0 %v9242
        %13641 = vmatpush.bf16.msra.mxu0 %v9234
        %13642 = vmatpush.bf16.msra.mxu0 %v9226
        %13643 = vmatpush.bf16.msra.mxu0 %v9218
        %13644 = vmatpush.bf16.msra.mxu0 %v9210
        %13645 = vmatpush.bf16.msra.mxu0 %v9202
        %13646 = vmatmul.bf16.gmra.mxu0 %v2126
        %v13647 = vpop.f32.mrf.mxu0
        %v13648 = vadd.f32 %v13635, %v13647
        %v13649 = vpop.f32.mrf.mxu0
        %13650 = vdwg.mxu0
        %13651 = vmatpush.bf16.msra.mxu0 %v9322
        %13652 = vmatpush.bf16.msra.mxu0 %v9314
        %13653 = vmatpush.bf16.msra.mxu0 %v9306
        %13654 = vmatpush.bf16.msra.mxu0 %v9298
        %13655 = vmatpush.bf16.msra.mxu0 %v9290
        %13656 = vmatpush.bf16.msra.mxu0 %v9282
        %13657 = vmatpush.bf16.msra.mxu0 %v9274
        %13658 = vmatpush.bf16.msra.mxu0 %v9266
        %13659 = vmatmul.bf16.gmra.mxu0 %v2127
        %v13660 = vpop.f32.mrf.mxu0
        %v13661 = vadd.f32 %v13648, %v13660
        %v13662 = vpop.f32.mrf.mxu0
        %13663 = vdwg.mxu0
        %13664 = vmatpush.bf16.msra.mxu0 %v7595
        %13665 = vmatpush.bf16.msra.mxu0 %v7587
        %13666 = vmatpush.bf16.msra.mxu0 %v7579
        %13667 = vmatpush.bf16.msra.mxu0 %v7571
        %13668 = vmatpush.bf16.msra.mxu0 %v7563
        %13669 = vmatpush.bf16.msra.mxu0 %v7555
        %13670 = vmatpush.bf16.msra.mxu0 %v7547
        %13671 = vmatpush.bf16.msra.mxu0 %v7539
        %13672 = vmatmul.bf16.gmra.mxu0 %v2094
        %v13673 = vpop.f32.mrf.mxu0
        %v13674 = vadd.f32 0.0, %v13673
        %v13675 = vpop.f32.mrf.mxu0
        %13676 = vdwg.mxu0
        %13677 = vmatpush.bf16.msra.mxu0 %v7659
        %13678 = vmatpush.bf16.msra.mxu0 %v7651
        %13679 = vmatpush.bf16.msra.mxu0 %v7643
        %13680 = vmatpush.bf16.msra.mxu0 %v7635
        %13681 = vmatpush.bf16.msra.mxu0 %v7627
        %13682 = vmatpush.bf16.msra.mxu0 %v7619
        %13683 = vmatpush.bf16.msra.mxu0 %v7611
        %13684 = vmatpush.bf16.msra.mxu0 %v7603
        %13685 = vmatmul.bf16.gmra.mxu0 %v2095
        %v13686 = vpop.f32.mrf.mxu0
        %v13687 = vadd.f32 %v13674, %v13686
        %v13688 = vpop.f32.mrf.mxu0
        %13689 = vdwg.mxu0
        %13690 = vmatpush.bf16.msra.mxu0 %v7723
        %13691 = vmatpush.bf16.msra.mxu0 %v7715
        %13692 = vmatpush.bf16.msra.mxu0 %v7707
        %13693 = vmatpush.bf16.msra.mxu0 %v7699
        %13694 = vmatpush.bf16.msra.mxu0 %v7691
        %13695 = vmatpush.bf16.msra.mxu0 %v7683
        %13696 = vmatpush.bf16.msra.mxu0 %v7675
        %13697 = vmatpush.bf16.msra.mxu0 %v7667
        %13698 = vmatmul.bf16.gmra.mxu0 %v2096
        %v13699 = vpop.f32.mrf.mxu0
        %v13700 = vadd.f32 %v13687, %v13699
        %v13701 = vpop.f32.mrf.mxu0
        %13702 = vdwg.mxu0
        %13703 = vmatpush.bf16.msra.mxu0 %v7787
        %13704 = vmatpush.bf16.msra.mxu0 %v7779
        %13705 = vmatpush.bf16.msra.mxu0 %v7771
        %13706 = vmatpush.bf16.msra.mxu0 %v7763
        %13707 = vmatpush.bf16.msra.mxu0 %v7755
        %13708 = vmatpush.bf16.msra.mxu0 %v7747
        %13709 = vmatpush.bf16.msra.mxu0 %v7739
        %13710 = vmatpush.bf16.msra.mxu0 %v7731
        %13711 = vmatmul.bf16.gmra.mxu0 %v2097
        %v13712 = vpop.f32.mrf.mxu0
        %v13713 = vadd.f32 %v13700, %v13712
        %v13714 = vpop.f32.mrf.mxu0
        %13715 = vdwg.mxu0
        %13716 = vmatpush.bf16.msra.mxu0 %v7851
        %13717 = vmatpush.bf16.msra.mxu0 %v7843
        %13718 = vmatpush.bf16.msra.mxu0 %v7835
        %13719 = vmatpush.bf16.msra.mxu0 %v7827
        %13720 = vmatpush.bf16.msra.mxu0 %v7819
        %13721 = vmatpush.bf16.msra.mxu0 %v7811
        %13722 = vmatpush.bf16.msra.mxu0 %v7803
        %13723 = vmatpush.bf16.msra.mxu0 %v7795
        %13724 = vmatmul.bf16.gmra.mxu0 %v2098
        %v13725 = vpop.f32.mrf.mxu0
        %v13726 = vadd.f32 %v13713, %v13725
        %v13727 = vpop.f32.mrf.mxu0
        %13728 = vdwg.mxu0
        %13729 = vmatpush.bf16.msra.mxu0 %v7915
        %13730 = vmatpush.bf16.msra.mxu0 %v7907
        %13731 = vmatpush.bf16.msra.mxu0 %v7899
        %13732 = vmatpush.bf16.msra.mxu0 %v7891
        %13733 = vmatpush.bf16.msra.mxu0 %v7883
        %13734 = vmatpush.bf16.msra.mxu0 %v7875
        %13735 = vmatpush.bf16.msra.mxu0 %v7867
        %13736 = vmatpush.bf16.msra.mxu0 %v7859
        %13737 = vmatmul.bf16.gmra.mxu0 %v2099
        %v13738 = vpop.f32.mrf.mxu0
        %v13739 = vadd.f32 %v13726, %v13738
        %v13740 = vpop.f32.mrf.mxu0
        %13741 = vdwg.mxu0
        %13742 = vmatpush.bf16.msra.mxu0 %v7979
        %13743 = vmatpush.bf16.msra.mxu0 %v7971
        %13744 = vmatpush.bf16.msra.mxu0 %v7963
        %13745 = vmatpush.bf16.msra.mxu0 %v7955
        %13746 = vmatpush.bf16.msra.mxu0 %v7947
        %13747 = vmatpush.bf16.msra.mxu0 %v7939
        %13748 = vmatpush.bf16.msra.mxu0 %v7931
        %13749 = vmatpush.bf16.msra.mxu0 %v7923
        %13750 = vmatmul.bf16.gmra.mxu0 %v2100
        %v13751 = vpop.f32.mrf.mxu0
        %v13752 = vadd.f32 %v13739, %v13751
        %v13753 = vpop.f32.mrf.mxu0
        %13754 = vdwg.mxu0
        %13755 = vmatpush.bf16.msra.mxu0 %v8043
        %13756 = vmatpush.bf16.msra.mxu0 %v8035
        %13757 = vmatpush.bf16.msra.mxu0 %v8027
        %13758 = vmatpush.bf16.msra.mxu0 %v8019
        %13759 = vmatpush.bf16.msra.mxu0 %v8011
        %13760 = vmatpush.bf16.msra.mxu0 %v8003
        %13761 = vmatpush.bf16.msra.mxu0 %v7995
        %13762 = vmatpush.bf16.msra.mxu0 %v7987
        %13763 = vmatmul.bf16.gmra.mxu0 %v2101
        %v13764 = vpop.f32.mrf.mxu0
        %v13765 = vadd.f32 %v13752, %v13764
        %v13766 = vpop.f32.mrf.mxu0
        %13767 = vdwg.mxu0
        %13768 = vmatpush.bf16.msra.mxu0 %v8107
        %13769 = vmatpush.bf16.msra.mxu0 %v8099
        %13770 = vmatpush.bf16.msra.mxu0 %v8091
        %13771 = vmatpush.bf16.msra.mxu0 %v8083
        %13772 = vmatpush.bf16.msra.mxu0 %v8075
        %13773 = vmatpush.bf16.msra.mxu0 %v8067
        %13774 = vmatpush.bf16.msra.mxu0 %v8059
        %13775 = vmatpush.bf16.msra.mxu0 %v8051
        %13776 = vmatmul.bf16.gmra.mxu0 %v2104
        %v13777 = vpop.f32.mrf.mxu0
        %v13778 = vadd.f32 %v13765, %v13777
        %v13779 = vpop.f32.mrf.mxu0
        %13780 = vdwg.mxu0
        %13781 = vmatpush.bf16.msra.mxu0 %v8171
        %13782 = vmatpush.bf16.msra.mxu0 %v8163
        %13783 = vmatpush.bf16.msra.mxu0 %v8155
        %13784 = vmatpush.bf16.msra.mxu0 %v8147
        %13785 = vmatpush.bf16.msra.mxu0 %v8139
        %13786 = vmatpush.bf16.msra.mxu0 %v8131
        %13787 = vmatpush.bf16.msra.mxu0 %v8123
        %13788 = vmatpush.bf16.msra.mxu0 %v8115
        %13789 = vmatmul.bf16.gmra.mxu0 %v2105
        %v13790 = vpop.f32.mrf.mxu0
        %v13791 = vadd.f32 %v13778, %v13790
        %v13792 = vpop.f32.mrf.mxu0
        %13793 = vdwg.mxu0
        %13794 = vmatpush.bf16.msra.mxu0 %v8235
        %13795 = vmatpush.bf16.msra.mxu0 %v8227
        %13796 = vmatpush.bf16.msra.mxu0 %v8219
        %13797 = vmatpush.bf16.msra.mxu0 %v8211
        %13798 = vmatpush.bf16.msra.mxu0 %v8203
        %13799 = vmatpush.bf16.msra.mxu0 %v8195
        %13800 = vmatpush.bf16.msra.mxu0 %v8187
        %13801 = vmatpush.bf16.msra.mxu0 %v8179
        %13802 = vmatmul.bf16.gmra.mxu0 %v2106
        %v13803 = vpop.f32.mrf.mxu0
        %v13804 = vadd.f32 %v13791, %v13803
        %v13805 = vpop.f32.mrf.mxu0
        %13806 = vdwg.mxu0
        %13807 = vmatpush.bf16.msra.mxu0 %v8299
        %13808 = vmatpush.bf16.msra.mxu0 %v8291
        %13809 = vmatpush.bf16.msra.mxu0 %v8283
        %13810 = vmatpush.bf16.msra.mxu0 %v8275
        %13811 = vmatpush.bf16.msra.mxu0 %v8267
        %13812 = vmatpush.bf16.msra.mxu0 %v8259
        %13813 = vmatpush.bf16.msra.mxu0 %v8251
        %13814 = vmatpush.bf16.msra.mxu0 %v8243
        %13815 = vmatmul.bf16.gmra.mxu0 %v2107
        %v13816 = vpop.f32.mrf.mxu0
        %v13817 = vadd.f32 %v13804, %v13816
        %v13818 = vpop.f32.mrf.mxu0
        %13819 = vdwg.mxu0
        %13820 = vmatpush.bf16.msra.mxu0 %v8363
        %13821 = vmatpush.bf16.msra.mxu0 %v8355
        %13822 = vmatpush.bf16.msra.mxu0 %v8347
        %13823 = vmatpush.bf16.msra.mxu0 %v8339
        %13824 = vmatpush.bf16.msra.mxu0 %v8331
        %13825 = vmatpush.bf16.msra.mxu0 %v8323
        %13826 = vmatpush.bf16.msra.mxu0 %v8315
        %13827 = vmatpush.bf16.msra.mxu0 %v8307
        %13828 = vmatmul.bf16.gmra.mxu0 %v2108
        %v13829 = vpop.f32.mrf.mxu0
        %v13830 = vadd.f32 %v13817, %v13829
        %v13831 = vpop.f32.mrf.mxu0
        %13832 = vdwg.mxu0
        %13833 = vmatpush.bf16.msra.mxu0 %v8427
        %13834 = vmatpush.bf16.msra.mxu0 %v8419
        %13835 = vmatpush.bf16.msra.mxu0 %v8411
        %13836 = vmatpush.bf16.msra.mxu0 %v8403
        %13837 = vmatpush.bf16.msra.mxu0 %v8395
        %13838 = vmatpush.bf16.msra.mxu0 %v8387
        %13839 = vmatpush.bf16.msra.mxu0 %v8379
        %13840 = vmatpush.bf16.msra.mxu0 %v8371
        %13841 = vmatmul.bf16.gmra.mxu0 %v2109
        %v13842 = vpop.f32.mrf.mxu0
        %v13843 = vadd.f32 %v13830, %v13842
        %v13844 = vpop.f32.mrf.mxu0
        %13845 = vdwg.mxu0
        %13846 = vmatpush.bf16.msra.mxu0 %v8491
        %13847 = vmatpush.bf16.msra.mxu0 %v8483
        %13848 = vmatpush.bf16.msra.mxu0 %v8475
        %13849 = vmatpush.bf16.msra.mxu0 %v8467
        %13850 = vmatpush.bf16.msra.mxu0 %v8459
        %13851 = vmatpush.bf16.msra.mxu0 %v8451
        %13852 = vmatpush.bf16.msra.mxu0 %v8443
        %13853 = vmatpush.bf16.msra.mxu0 %v8435
        %13854 = vmatmul.bf16.gmra.mxu0 %v2110
        %v13855 = vpop.f32.mrf.mxu0
        %v13856 = vadd.f32 %v13843, %v13855
        %v13857 = vpop.f32.mrf.mxu0
        %13858 = vdwg.mxu0
        %13859 = vmatpush.bf16.msra.mxu0 %v8555
        %13860 = vmatpush.bf16.msra.mxu0 %v8547
        %13861 = vmatpush.bf16.msra.mxu0 %v8539
        %13862 = vmatpush.bf16.msra.mxu0 %v8531
        %13863 = vmatpush.bf16.msra.mxu0 %v8523
        %13864 = vmatpush.bf16.msra.mxu0 %v8515
        %13865 = vmatpush.bf16.msra.mxu0 %v8507
        %13866 = vmatpush.bf16.msra.mxu0 %v8499
        %13867 = vmatmul.bf16.gmra.mxu0 %v2111
        %v13868 = vpop.f32.mrf.mxu0
        %v13869 = vadd.f32 %v13856, %v13868
        %v13870 = vpop.f32.mrf.mxu0
        %13871 = vdwg.mxu0
        %13872 = vmatpush.bf16.msra.mxu0 %v8619
        %13873 = vmatpush.bf16.msra.mxu0 %v8611
        %13874 = vmatpush.bf16.msra.mxu0 %v8603
        %13875 = vmatpush.bf16.msra.mxu0 %v8595
        %13876 = vmatpush.bf16.msra.mxu0 %v8587
        %13877 = vmatpush.bf16.msra.mxu0 %v8579
        %13878 = vmatpush.bf16.msra.mxu0 %v8571
        %13879 = vmatpush.bf16.msra.mxu0 %v8563
        %13880 = vmatmul.bf16.gmra.mxu0 %v2114
        %v13881 = vpop.f32.mrf.mxu0
        %v13882 = vadd.f32 %v13869, %v13881
        %v13883 = vpop.f32.mrf.mxu0
        %13884 = vdwg.mxu0
        %13885 = vmatpush.bf16.msra.mxu0 %v8683
        %13886 = vmatpush.bf16.msra.mxu0 %v8675
        %13887 = vmatpush.bf16.msra.mxu0 %v8667
        %13888 = vmatpush.bf16.msra.mxu0 %v8659
        %13889 = vmatpush.bf16.msra.mxu0 %v8651
        %13890 = vmatpush.bf16.msra.mxu0 %v8643
        %13891 = vmatpush.bf16.msra.mxu0 %v8635
        %13892 = vmatpush.bf16.msra.mxu0 %v8627
        %13893 = vmatmul.bf16.gmra.mxu0 %v2115
        %v13894 = vpop.f32.mrf.mxu0
        %v13895 = vadd.f32 %v13882, %v13894
        %v13896 = vpop.f32.mrf.mxu0
        %13897 = vdwg.mxu0
        %13898 = vmatpush.bf16.msra.mxu0 %v8747
        %13899 = vmatpush.bf16.msra.mxu0 %v8739
        %13900 = vmatpush.bf16.msra.mxu0 %v8731
        %13901 = vmatpush.bf16.msra.mxu0 %v8723
        %13902 = vmatpush.bf16.msra.mxu0 %v8715
        %13903 = vmatpush.bf16.msra.mxu0 %v8707
        %13904 = vmatpush.bf16.msra.mxu0 %v8699
        %13905 = vmatpush.bf16.msra.mxu0 %v8691
        %13906 = vmatmul.bf16.gmra.mxu0 %v2116
        %v13907 = vpop.f32.mrf.mxu0
        %v13908 = vadd.f32 %v13895, %v13907
        %v13909 = vpop.f32.mrf.mxu0
        %13910 = vdwg.mxu0
        %13911 = vmatpush.bf16.msra.mxu0 %v8811
        %13912 = vmatpush.bf16.msra.mxu0 %v8803
        %13913 = vmatpush.bf16.msra.mxu0 %v8795
        %13914 = vmatpush.bf16.msra.mxu0 %v8787
        %13915 = vmatpush.bf16.msra.mxu0 %v8779
        %13916 = vmatpush.bf16.msra.mxu0 %v8771
        %13917 = vmatpush.bf16.msra.mxu0 %v8763
        %13918 = vmatpush.bf16.msra.mxu0 %v8755
        %13919 = vmatmul.bf16.gmra.mxu0 %v2117
        %v13920 = vpop.f32.mrf.mxu0
        %v13921 = vadd.f32 %v13908, %v13920
        %v13922 = vpop.f32.mrf.mxu0
        %13923 = vdwg.mxu0
        %13924 = vmatpush.bf16.msra.mxu0 %v8875
        %13925 = vmatpush.bf16.msra.mxu0 %v8867
        %13926 = vmatpush.bf16.msra.mxu0 %v8859
        %13927 = vmatpush.bf16.msra.mxu0 %v8851
        %13928 = vmatpush.bf16.msra.mxu0 %v8843
        %13929 = vmatpush.bf16.msra.mxu0 %v8835
        %13930 = vmatpush.bf16.msra.mxu0 %v8827
        %13931 = vmatpush.bf16.msra.mxu0 %v8819
        %13932 = vmatmul.bf16.gmra.mxu0 %v2118
        %v13933 = vpop.f32.mrf.mxu0
        %v13934 = vadd.f32 %v13921, %v13933
        %v13935 = vpop.f32.mrf.mxu0
        %13936 = vdwg.mxu0
        %13937 = vmatpush.bf16.msra.mxu0 %v8939
        %13938 = vmatpush.bf16.msra.mxu0 %v8931
        %13939 = vmatpush.bf16.msra.mxu0 %v8923
        %13940 = vmatpush.bf16.msra.mxu0 %v8915
        %13941 = vmatpush.bf16.msra.mxu0 %v8907
        %13942 = vmatpush.bf16.msra.mxu0 %v8899
        %13943 = vmatpush.bf16.msra.mxu0 %v8891
        %13944 = vmatpush.bf16.msra.mxu0 %v8883
        %13945 = vmatmul.bf16.gmra.mxu0 %v2119
        %v13946 = vpop.f32.mrf.mxu0
        %v13947 = vadd.f32 %v13934, %v13946
        %v13948 = vpop.f32.mrf.mxu0
        %13949 = vdwg.mxu0
        %13950 = vmatpush.bf16.msra.mxu0 %v9003
        %13951 = vmatpush.bf16.msra.mxu0 %v8995
        %13952 = vmatpush.bf16.msra.mxu0 %v8987
        %13953 = vmatpush.bf16.msra.mxu0 %v8979
        %13954 = vmatpush.bf16.msra.mxu0 %v8971
        %13955 = vmatpush.bf16.msra.mxu0 %v8963
        %13956 = vmatpush.bf16.msra.mxu0 %v8955
        %13957 = vmatpush.bf16.msra.mxu0 %v8947
        %13958 = vmatmul.bf16.gmra.mxu0 %v2120
        %v13959 = vpop.f32.mrf.mxu0
        %v13960 = vadd.f32 %v13947, %v13959
        %v13961 = vpop.f32.mrf.mxu0
        %13962 = vdwg.mxu0
        %13963 = vmatpush.bf16.msra.mxu0 %v9067
        %13964 = vmatpush.bf16.msra.mxu0 %v9059
        %13965 = vmatpush.bf16.msra.mxu0 %v9051
        %13966 = vmatpush.bf16.msra.mxu0 %v9043
        %13967 = vmatpush.bf16.msra.mxu0 %v9035
        %13968 = vmatpush.bf16.msra.mxu0 %v9027
        %13969 = vmatpush.bf16.msra.mxu0 %v9019
        %13970 = vmatpush.bf16.msra.mxu0 %v9011
        %13971 = vmatmul.bf16.gmra.mxu0 %v2121
        %v13972 = vpop.f32.mrf.mxu0
        %v13973 = vadd.f32 %v13960, %v13972
        %v13974 = vpop.f32.mrf.mxu0
        %13975 = vdwg.mxu0
        %13976 = vmatpush.bf16.msra.mxu0 %v9131
        %13977 = vmatpush.bf16.msra.mxu0 %v9123
        %13978 = vmatpush.bf16.msra.mxu0 %v9115
        %13979 = vmatpush.bf16.msra.mxu0 %v9107
        %13980 = vmatpush.bf16.msra.mxu0 %v9099
        %13981 = vmatpush.bf16.msra.mxu0 %v9091
        %13982 = vmatpush.bf16.msra.mxu0 %v9083
        %13983 = vmatpush.bf16.msra.mxu0 %v9075
        %13984 = vmatmul.bf16.gmra.mxu0 %v2124
        %v13985 = vpop.f32.mrf.mxu0
        %v13986 = vadd.f32 %v13973, %v13985
        %v13987 = vpop.f32.mrf.mxu0
        %13988 = vdwg.mxu0
        %13989 = vmatpush.bf16.msra.mxu0 %v9195
        %13990 = vmatpush.bf16.msra.mxu0 %v9187
        %13991 = vmatpush.bf16.msra.mxu0 %v9179
        %13992 = vmatpush.bf16.msra.mxu0 %v9171
        %13993 = vmatpush.bf16.msra.mxu0 %v9163
        %13994 = vmatpush.bf16.msra.mxu0 %v9155
        %13995 = vmatpush.bf16.msra.mxu0 %v9147
        %13996 = vmatpush.bf16.msra.mxu0 %v9139
        %13997 = vmatmul.bf16.gmra.mxu0 %v2125
        %v13998 = vpop.f32.mrf.mxu0
        %v13999 = vadd.f32 %v13986, %v13998
        %v14000 = vpop.f32.mrf.mxu0
        %14001 = vdwg.mxu0
        %14002 = vmatpush.bf16.msra.mxu0 %v9259
        %14003 = vmatpush.bf16.msra.mxu0 %v9251
        %14004 = vmatpush.bf16.msra.mxu0 %v9243
        %14005 = vmatpush.bf16.msra.mxu0 %v9235
        %14006 = vmatpush.bf16.msra.mxu0 %v9227
        %14007 = vmatpush.bf16.msra.mxu0 %v9219
        %14008 = vmatpush.bf16.msra.mxu0 %v9211
        %14009 = vmatpush.bf16.msra.mxu0 %v9203
        %14010 = vmatmul.bf16.gmra.mxu0 %v2126
        %v14011 = vpop.f32.mrf.mxu0
        %v14012 = vadd.f32 %v13999, %v14011
        %v14013 = vpop.f32.mrf.mxu0
        %14014 = vdwg.mxu0
        %14015 = vmatpush.bf16.msra.mxu0 %v9323
        %14016 = vmatpush.bf16.msra.mxu0 %v9315
        %14017 = vmatpush.bf16.msra.mxu0 %v9307
        %14018 = vmatpush.bf16.msra.mxu0 %v9299
        %14019 = vmatpush.bf16.msra.mxu0 %v9291
        %14020 = vmatpush.bf16.msra.mxu0 %v9283
        %14021 = vmatpush.bf16.msra.mxu0 %v9275
        %14022 = vmatpush.bf16.msra.mxu0 %v9267
        %14023 = vmatmul.bf16.gmra.mxu0 %v2127
        %v14024 = vpop.f32.mrf.mxu0
        %v14025 = vadd.f32 %v14012, %v14024
        %v14026 = vpop.f32.mrf.mxu0
        %14027 = vdwg.mxu0
        %v14036 = vrot.slane %v11841, 6
        %v14037 = vrot.slane %v12205, 4
        %v14038 = vrot.slane %v12569, 2
        %v14039 = vrot.slane %v13297, 6
        %v14040 = vrot.slane %v13661, 4
        %v14041 = vrot.slane %v14025, 2
        %vm14042 = vcmask 1041408
        %v14043 = vsel %vm14042, %v11477, %v14036
        %vm14044 = vcmask 1045508
        %v14045 = vsel %vm14044, %v14037, %v14038
        %vm14046 = vcmask 1043456
        %v14047 = vsel %vm14046, %v14043, %v14045
        %v14048 = vsel %vm14042, %v12933, %v14039
        %v14049 = vsel %vm14044, %v14040, %v14041
        %v14050 = vsel %vm14046, %v14048, %v14049
        %v14053 = vadd.f32 %v294, %v14047
        %v14054 = vadd.f32 %v295, %v14050
        %14055 = vst [vmem:[#allocation2] sm:$0xff] %v14053
        %14056 = vst [vmem:[#allocation2 + $0x8] sm:$0xff] %v14054
        %p14057 = scmp.eq.s32.totalorder %s28, 6
        // Predicated region
        $region49: #{tpu_custom_call.1} parent=31 // pred_check
          %p14058 = pneg %p14057
        $region50: #{tpu_custom_call.1} parent=31 // pred_check_branch
          %14060 = sbr.rel (%p14058) target = $region52
        $region51: #{tpu_custom_call.1} parent=31 // pred_region
          %v14061 = vld [vmem:[#allocation2] sm:$0xff]
          %v14062 = vld [vmem:[#allocation2 + $0x8] sm:$0xff]
          %v14063 = vld [vmem:[%s249] sm:$0xff]
          %v14065 = vperm.slane %v14063, 0
          %v14066 = vperm.slane %v14063, 1
          %v14067 = vperm.slane %v14063, 2
          %v14068 = vperm.slane %v14063, 3
          %v14069 = vperm.slane %v14063, 4
          %v14070 = vperm.slane %v14063, 5
          %v14071 = vperm.slane %v14063, 6
          %v14072 = vperm.slane %v14063, 7
          %v14073 = vrot.slane %v14066, 6
          %v14074 = vrot.slane %v14067, 4
          %v14075 = vrot.slane %v14068, 2
          %v14076 = vrot.slane %v14070, 6
          %v14077 = vrot.slane %v14071, 4
          %v14078 = vrot.slane %v14072, 2
          %v14079 = vsel %vm14042, %v14065, %v14073
          %v14080 = vsel %vm14044, %v14074, %v14075
          %v14081 = vsel %vm14046, %v14079, %v14080
          %v14082 = vsel %vm14042, %v14069, %v14076
          %v14083 = vsel %vm14044, %v14077, %v14078
          %v14084 = vsel %vm14046, %v14082, %v14083
          %v14087 = vadd.f32 %v14061, %v14081
          %v14088 = vadd.f32 %v14062, %v14084
          %v14089 = vmax.f32 %v14087, 0.0
          %v14090 = vmax.f32 %v14088, 0.0
          %14093 = vst [vmem:[#allocation1] ss:$4 sm:$0xff] %v14089
          %s14094 = scalar_lea.vmem [#allocation1], 32
          %14095 = vst [vmem:[%s14094] ss:$4 sm:$0xff] %v14090
          %v14096 = vld.sshfl [vmem:[#allocation1] sm:$0xff pattern:$0x73625140]
          %v14097 = vld.sshfl [vmem:[#allocation1 + $0x8] sm:$0xff pattern:$0x73625140]
          %v14098 = vld.sshfl [vmem:[#allocation1 + $0x10] sm:$0xff pattern:$0x73625140]
          %v14099 = vld.sshfl [vmem:[#allocation1 + $0x18] sm:$0xff pattern:$0x73625140]
          %v14100 = vld.sshfl [vmem:[#allocation1 + $0x20] sm:$0xff pattern:$0x73625140]
          %v14101 = vld.sshfl [vmem:[#allocation1 + $0x28] sm:$0xff pattern:$0x73625140]
          %v14102 = vld.sshfl [vmem:[#allocation1 + $0x30] sm:$0xff pattern:$0x73625140]
          %v14103 = vld.sshfl [vmem:[#allocation1 + $0x38] sm:$0xff pattern:$0x73625140]
          %v14112 = vpack.c.bf16 %v14097, %v14096
          %v14113 = vpack.c.bf16 %v14099, %v14098
          %v14114 = vpack.c.bf16 %v14101, %v14100
          %v14115 = vpack.c.bf16 %v14103, %v14102
          %v14120 = vrot.slane %v14112, 3
          %v14121 = vrot.slane %v14113, 6
          %v14122 = vrot.slane %v14113, 1
          %v14123 = vrot.slane %v14114, 4
          %v14124 = vrot.slane %v14114, 7
          %v14125 = vrot.slane %v14115, 2
          %v14126 = vrot.slane %v14115, 5
          %vm14127 = vcmask 1040384
          %v14130 = vsel %vm14127, %v14112, %v14120
          %vm14131 = vcmask 1042434
          %v14134 = vsel %vm14131, %v14121, %v14122
          %v14135 = vsel %vm14042, %v14130, %v14134
          %vm14136 = vcmask 1044484
          %v14139 = vsel %vm14136, %v14123, %v14124
          %vm14140 = vcmask 1046534
          %v14143 = vsel %vm14140, %v14125, %v14126
          %v14144 = vsel %vm14044, %v14139, %v14143
          %v14145 = vsel %vm14046, %v14135, %v14144
          %14147 = vst [vmem:[%s282] sm:$0xff] %v14145
        $region52: #{tpu_custom_call.1} parent=31 // pred_fallthru
          _
        %s14148 = sand.u32 %s123, 1
        %s14149 = scalar_lea.sflag [#allocation5], %s14148
        %s14150 = sand.u32 %s123, 1
        %s14151 = smul.addr %s14150, 8
        %s14152 = scalar_lea.vmem [#allocation9], %s14151
        // Predicated region
        $region53: #{tpu_custom_call.1} parent=31 // pred_check
          %p14153 = pneg %p133
        $region54: #{tpu_custom_call.1} parent=31 // pred_check_branch
          %14155 = sbr.rel (%p14153) target = $region56
        $region55: #{tpu_custom_call.1} parent=31 // pred_region
          %s14156 = smul.u32 8, %s27
          %14158 = vsyncadd %s14149, 0
          %s14159 = scalar_lea.hbm %s3, %s14156
          %s14161 = sshll.u32 %s14152, 4
          %s14162 = int_to_ptr.vmem [resolvable:$true] %s14161
          %s14163 = sshll.u32 %s14159, 4
          %s14164 = int_to_ptr.hbm [resolvable:$true] %s14163
          %14166 = dma.vmem_to_hbm [thread:$0]  %s14162, 128, %s14164, %s14149
        $region56: #{tpu_custom_call.1} parent=31 // pred_fallthru
          _
      $region32: #{tpu_custom_call.1} parent=5 // pred_fallthru
        _
      %p14167 = scmp.le.s32.totalorder 2, %s18
      // Predicated region
      $region57: #{tpu_custom_call.1} parent=5 // pred_check
        %p14168 = pneg %p14167
      $region58: #{tpu_custom_call.1} parent=5 // pred_check_branch
        %14170 = sbr.rel (%p14168) target = $region60
      $region59: #{tpu_custom_call.1} parent=5 // pred_region
        %s14171 = ssub.s32 %s18, 2
        // Predicated region
        $region61: #{tpu_custom_call.1} parent=59 // pred_check
          %p14172 = pneg %p139
        $region62: #{tpu_custom_call.1} parent=59 // pred_check_branch
          %14174 = sbr.rel (%p14172) target = $region64
        $region63: #{tpu_custom_call.1} parent=59 // pred_region
          %s14175 = sand.u32 %s124, 1
          %s14176 = scalar_lea.sflag [#allocation5], %s14175
          %s14177 = sand.u32 %s124, 1
          %s14178 = smul.addr %s14177, 8
          %s14179 = scalar_lea.vmem [#allocation9], %s14178
          %14181 = dma.done %s14176, 128
        $region64: #{tpu_custom_call.1} parent=59 // pred_fallthru
          _
      $region60: #{tpu_custom_call.1} parent=5 // pred_fallthru
        _
    $region6: #{tpu_custom_call.1} parent=1 // loop_footer
      %s22 = sadd.s32 1, %s18
    $region7: #{tpu_custom_call.1} parent=1 // loop_footer_branch
      %17 = sbr.rel target = $region3
    $region8: #{tpu_custom_call.1} parent=1 // loop_exit
      _
    %14182 = vsyncpa [#allocation4], 1
    %s14183 = scalar_lea.sflag [#allocation4], 1
    %14184 = vsyncpa %s14183, 1
    %14185 = vsyncpa [#allocation7], 1
    %s14186 = scalar_lea.sflag [#allocation7], 1
    %14187 = vsyncpa %s14186, 1
    %14188 = vsyncpa [#allocation5], 1
    %s14189 = scalar_lea.sflag [#allocation5], 1
    %14190 = vsyncpa %s14189, 1

</llo_original>
